<compile_context>
chip_gen: v7x
topology: tpu7x:2x2x1
jax: 0.10.0
libtpu: 0.0.40
codegen_flags: <defaults>
</compile_context>

<pallas_src>
import functools

import jax
import jax.numpy as jnp
import numpy as np
from jax.experimental import pallas as pl
from jax.experimental.pallas import tpu as pltpu


LANE = 128
SUBLANE = 8
# bf16 weights / matmul LHS: single-pass MXU matmuls (vs multi-pass f32
# emulation) and half the weight footprint.  Set to jnp.float32 on v5e if
# tighter agreement with an f32 reference is required.
WEIGHT_DTYPE = jnp.bfloat16


def _round_up(n, m):
    return ((n + m - 1) // m) * m


# ----------------------------------------------------------------------------
# Fused network kernel: all LSTM layers + linear head in one pallas_call.
# ----------------------------------------------------------------------------
def _net_kernel(L, T, Bp, Hp, *refs):
    # refs layout:
    #   inputs : x, (wih_0, whh_0, b_0), ..., (wih_{L-1}, whh_{L-1}, b_{L-1}),
    #            w_lin, b_lin, h0, c0
    #   outputs: y, hn, cn
    #   scratch: gx_ref (T*Bp, 4*Hp) f32, seq_ref (T*Bp, Hp) f32
    n_in = 1 + 3 * L + 4
    x_ref = refs[0]
    wih = [refs[1 + 3 * l] for l in range(L)]
    whh = [refs[2 + 3 * l] for l in range(L)]
    bia = [refs[3 + 3 * l] for l in range(L)]
    wlin_ref = refs[1 + 3 * L]
    blin_ref = refs[2 + 3 * L]
    h0_ref = refs[3 + 3 * L]
    c0_ref = refs[4 + 3 * L]
    y_ref, hn_ref, cn_ref = refs[n_in:n_in + 3]
    gx_ref, seq_ref = refs[n_in + 3], refs[n_in + 4]

    # Hoisted layer-0 input projection: ONE (T*Bp, I) GEMM; result parked in
    # VMEM scratch (not vregs), re-read per step with (8,128)-aligned slices.
    gx_ref[...] = (jnp.dot(x_ref[...], wih[0][...],
                           preferred_element_type=jnp.float32)
                   + bia[0][...])

    def cell(gates, c):
        # Lane-aligned 128-wide gate slices, PyTorch order i, f, g, o.
        i_g = jax.nn.sigmoid(gates[:, 0 * Hp:1 * Hp])
        f_g = jax.nn.sigmoid(gates[:, 1 * Hp:2 * Hp])
        g_g = jnp.tanh(gates[:, 2 * Hp:3 * Hp])
        o_g = jax.nn.sigmoid(gates[:, 3 * Hp:4 * Hp])
        c_new = f_g * c + i_g * g_g
        h_new = o_g * jnp.tanh(c_new)
        return h_new, c_new

    # Per-layer running state; (Bp, Hp) f32 each stays in vregs.
    h_st = [h0_ref[l] for l in range(L)]
    c_st = [c0_ref[l] for l in range(L)]

    # Software wavefront over (layer, time): at wavefront step s, layer l
    # processes time t = s - l.  Layer l's input at time t is layer l-1's
    # output at time t, computed one wavefront earlier, so the active cells
    # within one wavefront are mutually independent chains.
    for s in range(T + L - 1):
        feed = list(h_st)            # snapshot of inputs for this wavefront
        upd_h, upd_c = {}, {}
        for l in range(L):
            t = s - l
            if not (0 <= t < T):
                continue
            if l == 0:
                gx = gx_ref[t * Bp:(t + 1) * Bp, :]
            else:
                # Per-step input projection of the wavefronted deeper layer:
                # (Bp, Hp) @ (Hp, 4*Hp); weight read directly at the dot site.
                gx = (jnp.dot(feed[l - 1].astype(WEIGHT_DTYPE), wih[l][...],
                              preferred_element_type=jnp.float32)
                      + bia[l][...])
            gates = gx + jnp.dot(h_st[l].astype(WEIGHT_DTYPE), whh[l][...],
                                 preferred_element_type=jnp.float32)
            h_new, c_new = cell(gates, c_st[l])
            upd_h[l], upd_c[l] = h_new, c_new
            if l == L - 1:
                # Only the last layer's sequence is needed (for the head);
                # aligned 8-sublane store rides an otherwise-free vst slot.
                seq_ref[t * Bp:(t + 1) * Bp, :] = h_new
        for l in upd_h:
            h_st[l] = upd_h[l]
            c_st[l] = upd_c[l]

    # Final hidden / cell state written once per layer.
    for l in range(L):
        hn_ref[l] = h_st[l]
        cn_ref[l] = c_st[l]

    # Linear regression head over all timesteps: one lane-dense GEMM + store.
    y_ref[...] = (jnp.dot(seq_ref[...].astype(WEIGHT_DTYPE), wlin_ref[...],
                          preferred_element_type=jnp.float32)
                  + blin_ref[...]).astype(y_ref.dtype)


# ----------------------------------------------------------------------------
# Forward pass (mirrors Net.forward). x: (B, T, input_size), batch_first.
# ----------------------------------------------------------------------------
@functools.partial(jax.jit, static_argnames=("hidden_size", "output_size"))
def net_forward(x, kparams, hidden=None, *, hidden_size, output_size):
    B, T, I = x.shape
    L = len(kparams["lstm"])
    Hp = kparams["lstm"][0]["w_hh_t"].shape[0]
    Op = kparams["w_lin_t"].shape[1]
    H, O = hidden_size, output_size
    Bp = _round_up(B, SUBLANE)    # 8-sublane batch padding -> aligned steps

    if hidden is None:
        h0p = jnp.zeros((L, Bp, Hp), jnp.float32)
        c0p = jnp.zeros((L, Bp, Hp), jnp.float32)
    else:
        h0, c0 = hidden                                   # (L, B, H) each
        pad = ((0, 0), (0, Bp - B), (0, Hp - H))
        h0p = jnp.pad(h0.astype(jnp.float32), pad)
        c0p = jnp.pad(c0.astype(jnp.float32), pad)

    # Time-major with batch padded to 8 sublanes: row t*Bp + b == x[b, t, :].
    x_tm = jnp.transpose(x, (1, 0, 2))
    x_tm = jnp.pad(x_tm, ((0, 0), (0, Bp - B), (0, 0)))
    x_tm = x_tm.reshape(T * Bp, I).astype(WEIGHT_DTYPE)

    inputs = [x_tm]
    for p in kparams["lstm"]:
        inputs += [p["w_ih_t"], p["w_hh_t"], p["b"]]
    inputs += [kparams["w_lin_t"], kparams["b_lin"], h0p, c0p]

    vmem = pl.BlockSpec(memory_space=pltpu.MemorySpace.VMEM)
    out_shapes = (
        jax.ShapeDtypeStruct((T * Bp, Op), jnp.float32),
        jax.ShapeDtypeStruct((L, Bp, Hp), jnp.float32),
        jax.ShapeDtypeStruct((L, Bp, Hp), jnp.float32),
    )
    # Total resident VMEM here is well under 2 MiB, so no vmem_limit_bytes /
    # grid tiling needed on any of v5e/v6e/v7x at these sizes (see TODOs).
    y_p, hn_p, cn_p = pl.pallas_call(
        functools.partial(_net_kernel, L, T, Bp, Hp),
        out_shape=out_shapes,
        in_specs=[vmem] * len(inputs),
        out_specs=(vmem, vmem, vmem),
        scratch_shapes=[
            pltpu.VMEM((T * Bp, 4 * Hp), jnp.float32),    # gx_ref
            pltpu.VMEM((T * Bp, Hp), jnp.float32),        # seq_ref
        ],
    )(*inputs)

    y = jnp.transpose(y_p.reshape(T, Bp, Op)[:, :B, :O], (1, 0, 2))  # (B,T,O)
    return y, (hn_p[:, :B, :H], cn_p[:, :B, :H])


# ----------------------------------------------------------------------------
# Parameters: PyTorch-style raw weights + lane/sublane-padded kernel layout.
# ----------------------------------------------------------------------------
def init_raw_params(key, input_size, hidden_size, num_layers, output_size):
    """PyTorch-layout weights (w_ih: (4H, in), w_hh: (4H, H), gate order i,f,g,o)."""
    params = {"lstm": []}
    k = 1.0 / np.sqrt(hidden_size)
    keys = jax.random.split(key, num_layers + 1)
    for l in range(num_layers):
        in_sz = input_size if l == 0 else hidden_size
        k0, k1, k2, k3 = jax.random.split(keys[l], 4)
        params["lstm"].append({
            "w_ih": jax.random.uniform(k0, (4 * hidden_size, in_sz),
                                       jnp.float32, -k, k),
            "w_hh": jax.random.uniform(k1, (4 * hidden_size, hidden_size),
                                       jnp.float32, -k, k),
            "b_ih": jax.random.uniform(k2, (4 * hidden_size,),
                                       jnp.float32, -k, k),
            "b_hh": jax.random.uniform(k3, (4 * hidden_size,),
                                       jnp.float32, -k, k),
        })
    k0, k1 = jax.random.split(keys[-1], 2)
    params["w_lin"] = jax.random.uniform(k0, (output_size, hidden_size),
                                         jnp.float32, -k, k)
    params["b_lin"] = jax.random.uniform(k1, (output_size,),
                                         jnp.float32, -k, k)
    return params


def _pad_gate_cols(w_t, H, Hp):
    """(rows, 4H) with gate blocks [i,f,g,o] -> (rows, 4*Hp), each gate zero-padded."""
    rows = w_t.shape[0]
    out = jnp.zeros((rows, 4 * Hp), jnp.float32)
    for g in range(4):
        out = out.at[:, g * Hp:g * Hp + H].set(w_t[:, g * H:(g + 1) * H])
    return out


def _pad_rows(w, rows_p):
    return jnp.zeros((rows_p, w.shape[1]), w.dtype).at[:w.shape[0]].set(w)


def prepare_kernel_params(raw):
    """Transpose + zero-pad raw PyTorch weights to the lane-aligned kernel layout.

    The zero padding is load-bearing: padded gate/hidden lanes and padded batch
    rows never contaminate real lanes because padded weight rows/cols, biases,
    h0 and c0 are exactly 0 (exact in bf16 too).  Non-zero padding here would
    silently corrupt the (sliced-off) padding lanes of hn/cn.
    """
    H = raw["lstm"][0]["w_hh"].shape[1]
    O = raw["w_lin"].shape[0]
    Hp = _round_up(H, LANE)
    Op = _round_up(O, LANE)
    kp = {"lstm": []}
    for l, p in enumerate(raw["lstm"]):
        w_ih_t = _pad_gate_cols(p["w_ih"].T, H, Hp)          # (in, 4*Hp)
        if l > 0:
            w_ih_t = _pad_rows(w_ih_t, Hp)                   # input of layer l>0 is padded h
        w_hh_t = _pad_rows(_pad_gate_cols(p["w_hh"].T, H, Hp), Hp)
        b = _pad_gate_cols((p["b_ih"] + p["b_hh"]).reshape(1, -1), H, Hp)
        kp["lstm"].append({"w_ih_t": w_ih_t.astype(WEIGHT_DTYPE),
                           "w_hh_t": w_hh_t.astype(WEIGHT_DTYPE),
                           "b": b})                          # bias stays f32
    kp["w_lin_t"] = (jnp.zeros((Hp, Op), jnp.float32)
                     .at[:H, :O].set(raw["w_lin"].T).astype(WEIGHT_DTYPE))
    kp["b_lin"] = jnp.zeros((1, Op), jnp.float32).at[0, :O].set(raw["b_lin"])
    return kp


# ----------------------------------------------------------------------------
# Pure-JAX f32 reference (directly from raw PyTorch-layout weights)
# ----------------------------------------------------------------------------
def ref_forward(x, raw, hidden=None):
    B, T, _ = x.shape
    L = len(raw["lstm"])
    H = raw["lstm"][0]["w_hh"].shape[1]
    if hidden is None:
        h0 = jnp.zeros((L, B, H), jnp.float32)
        c0 = jnp.zeros((L, B, H), jnp.float32)
    else:
        h0, c0 = hidden
    cur = jnp.transpose(x, (1, 0, 2))                     # (T, B, I)
    h_n, c_n = [], []
    for l, p in enumerate(raw["lstm"]):
        wih_t, whh_t = p["w_ih"].T, p["w_hh"].T
        b = (p["b_ih"] + p["b_hh"]).reshape(1, -1)

        def step(carry, x_t, wih_t=wih_t, whh_t=whh_t, b=b):
            h, c = carry
            gates = x_t @ wih_t + h @ whh_t + b
            i = jax.nn.sigmoid(gates[:, 0 * H:1 * H])
            f = jax.nn.sigmoid(gates[:, 1 * H:2 * H])
            g = jnp.tanh(gates[:, 2 * H:3 * H])
            o = jax.nn.sigmoid(gates[:, 3 * H:4 * H])
            c = f * c + i * g
            h = o * jnp.tanh(c)
            return (h, c), h

        (hT, cT), ys = jax.lax.scan(step, (h0[l], c0[l]), cur)
        cur = ys
        h_n.append(hT)
        c_n.append(cT)
    # TODO(synk): nn.LSTM inter-layer dropout is training-mode only; both this
    # reference and the kernel implement eval() semantics (dropout disabled).
    y = jnp.transpose(cur, (1, 0, 2)) @ raw["w_lin"].T + raw["b_lin"]
    return y, (jnp.stack(h_n, axis=0), jnp.stack(c_n, axis=0))


if __name__ == "__main__":
    # Small config consistent with the module's constructor.
    B, T = 2, 8
    INPUT_SIZE, HIDDEN_SIZE, LSTM_LAYERS, OUTPUT_SIZE = 4, 32, 2, 1

    key = jax.random.PRNGKey(0)
    pkey, xkey, hkey, ckey = jax.random.split(key, 4)
    raw = init_raw_params(pkey, INPUT_SIZE, HIDDEN_SIZE, LSTM_LAYERS, OUTPUT_SIZE)
    kparams = prepare_kernel_params(raw)
    x = jax.random.normal(xkey, (B, T, INPUT_SIZE), jnp.float32)

    # Tolerance reflects bf16 weights / bf16 matmul LHS (f32 accumulation);
    # the pure-JAX reference is full f32.
    TOL = dict(rtol=2e-2, atol=2e-2)

    # --- default (zero) initial hidden state ---
    y, (h_n, c_n) = net_forward(x, kparams,
                                hidden_size=HIDDEN_SIZE, output_size=OUTPUT_SIZE)
    jax.block_until_ready((y, h_n, c_n))

    assert y.shape == (B, T, OUTPUT_SIZE)
    assert h_n.shape == (LSTM_LAYERS, B, HIDDEN_SIZE)
    assert c_n.shape == (LSTM_LAYERS, B, HIDDEN_SIZE)

    y_ref, (h_ref, c_ref) = ref_forward(x, raw)
    np.testing.assert_allclose(np.asarray(y), np.asarray(y_ref), **TOL)
    np.testing.assert_allclose(np.asarray(h_n), np.asarray(h_ref), **TOL)
    np.testing.assert_allclose(np.asarray(c_n), np.asarray(c_ref), **TOL)

    # --- user-provided initial hidden state (exercises the padding path) ---
    h0 = 0.1 * jax.random.normal(hkey, (LSTM_LAYERS, B, HIDDEN_SIZE), jnp.float32)
    c0 = 0.1 * jax.random.normal(ckey, (LSTM_LAYERS, B, HIDDEN_SIZE), jnp.float32)
    y2, (h2, c2) = net_forward(x, kparams, (h0, c0),
                               hidden_size=HIDDEN_SIZE, output_size=OUTPUT_SIZE)
    jax.block_until_ready((y2, h2, c2))
    y2_ref, (h2_ref, c2_ref) = ref_forward(x, raw, (h0, c0))
    np.testing.assert_allclose(np.asarray(y2), np.asarray(y2_ref), **TOL)
    np.testing.assert_allclose(np.asarray(h2), np.asarray(h2_ref), **TOL)
    np.testing.assert_allclose(np.asarray(c2), np.asarray(c2_ref), **TOL)

    print("KERNEL_OK")
</pallas_src>

<mosaic_0001>
module attributes {stable_mosaic.version = 11 : i64} {
  func.func @_net_kernel(%arg0: memref<64x4xbf16, #tpu.memory_space<vmem>>, %arg1: memref<4x512xbf16, #tpu.memory_space<vmem>>, %arg2: memref<128x512xbf16, #tpu.memory_space<vmem>>, %arg3: memref<1x512xf32, #tpu.memory_space<vmem>>, %arg4: memref<128x512xbf16, #tpu.memory_space<vmem>>, %arg5: memref<128x512xbf16, #tpu.memory_space<vmem>>, %arg6: memref<1x512xf32, #tpu.memory_space<vmem>>, %arg7: memref<128x128xbf16, #tpu.memory_space<vmem>>, %arg8: memref<1x128xf32, #tpu.memory_space<vmem>>, %arg9: memref<2x8x128xf32, #tpu.memory_space<vmem>>, %arg10: memref<2x8x128xf32, #tpu.memory_space<vmem>>, %arg11: memref<64x128xf32, #tpu.memory_space<vmem>>, %arg12: memref<2x8x128xf32, #tpu.memory_space<vmem>>, %arg13: memref<2x8x128xf32, #tpu.memory_space<vmem>>, %arg14: memref<64x512xf32, #tpu.memory_space<vmem>>, %arg15: memref<64x128xf32, #tpu.memory_space<vmem>>) attributes {dimension_semantics = [], scalar_prefetch = 0 : i64, scratch_operands = 2 : i64, tpu.core_type = #tpu.core_type<tc>} {
    %c0 = arith.constant 0 : index
    %c0_0 = arith.constant 0 : index
    %0 = vector.load %arg0[%c0, %c0_0] : memref<64x4xbf16, #tpu.memory_space<vmem>>, vector<64x4xbf16>
    %c0_1 = arith.constant 0 : index
    %c0_2 = arith.constant 0 : index
    %1 = vector.load %arg1[%c0_1, %c0_2] : memref<4x512xbf16, #tpu.memory_space<vmem>>, vector<4x512xbf16>
    %cst = arith.constant dense<0.000000e+00> : vector<64x512xf32>
    %2 = tpu.matmul %0, %1, %cst {dimension_numbers = #tpu.dot_dimension_numbers<[1], [0], [0], [1], [0, 0, 1, 1], [], []>} : vector<64x4xbf16>, vector<4x512xbf16>, vector<64x512xf32> -> vector<64x512xf32>
    %c0_3 = arith.constant 0 : index
    %c0_4 = arith.constant 0 : index
    %3 = vector.load %arg3[%c0_3, %c0_4] : memref<1x512xf32, #tpu.memory_space<vmem>>, vector<1x512xf32>
    %4 = vector.broadcast %3 : vector<1x512xf32> to vector<64x512xf32>
    %5 = arith.addf %2, %4 : vector<64x512xf32>
    %c0_5 = arith.constant 0 : index
    %c0_6 = arith.constant 0 : index
    %6 = vector.load %arg14[%c0_5, %c0_6] : memref<64x512xf32, #tpu.memory_space<vmem>>, vector<64x512xf32>
    tpu.vector_store %arg14[%c0_5, %c0_6], %5 {strides = array<i32>} : memref<64x512xf32, #tpu.memory_space<vmem>>, vector<64x512xf32>,
    %c0_7 = arith.constant 0 : index
    %c0_8 = arith.constant 0 : index
    %c0_9 = arith.constant 0 : index
    %7 = vector.load %arg9[%c0_7, %c0_8, %c0_9] : memref<2x8x128xf32, #tpu.memory_space<vmem>>, vector<1x8x128xf32>
    %8 = vector.shape_cast %7 : vector<1x8x128xf32> to vector<8x128xf32>
    %c1 = arith.constant 1 : index
    %c0_10 = arith.constant 0 : index
    %c0_11 = arith.constant 0 : index
    %9 = vector.load %arg9[%c1, %c0_10, %c0_11] : memref<2x8x128xf32, #tpu.memory_space<vmem>>, vector<1x8x128xf32>
    %10 = vector.shape_cast %9 : vector<1x8x128xf32> to vector<8x128xf32>
    %c0_12 = arith.constant 0 : index
    %c0_13 = arith.constant 0 : index
    %c0_14 = arith.constant 0 : index
    %11 = vector.load %arg10[%c0_12, %c0_13, %c0_14] : memref<2x8x128xf32, #tpu.memory_space<vmem>>, vector<1x8x128xf32>
    %12 = vector.shape_cast %11 : vector<1x8x128xf32> to vector<8x128xf32>
    %c1_15 = arith.constant 1 : index
    %c0_16 = arith.constant 0 : index
    %c0_17 = arith.constant 0 : index
    %13 = vector.load %arg10[%c1_15, %c0_16, %c0_17] : memref<2x8x128xf32, #tpu.memory_space<vmem>>, vector<1x8x128xf32>
    %14 = vector.shape_cast %13 : vector<1x8x128xf32> to vector<8x128xf32>
    %c0_18 = arith.constant 0 : index
    %c0_19 = arith.constant 0 : index
    %15 = vector.load %arg14[%c0_18, %c0_19] : memref<64x512xf32, #tpu.memory_space<vmem>>, vector<8x512xf32>
    %16 = arith.truncf %8 : vector<8x128xf32> to vector<8x128xbf16>
    %c0_20 = arith.constant 0 : index
    %c0_21 = arith.constant 0 : index
    %17 = vector.load %arg2[%c0_20, %c0_21] : memref<128x512xbf16, #tpu.memory_space<vmem>>, vector<128x512xbf16>
    %cst_22 = arith.constant dense<0.000000e+00> : vector<8x512xf32>
    %18 = tpu.matmul %16, %17, %cst_22 {dimension_numbers = #tpu.dot_dimension_numbers<[1], [0], [0], [1], [0, 0, 1, 1], [], []>} : vector<8x128xbf16>, vector<128x512xbf16>, vector<8x512xf32> -> vector<8x512xf32>
    %19 = arith.addf %15, %18 : vector<8x512xf32>
    %20 = vector.extract_strided_slice %19 {offsets = [0, 0], sizes = [8, 128], strides = [1, 1]} : vector<8x512xf32> to vector<8x128xf32>
    %21 = arith.negf %20 : vector<8x128xf32>
    %22 = math.exp %21 : vector<8x128xf32>
    %cst_23 = arith.constant 1.000000e+00 : f32
    %23 = vector.broadcast %cst_23 : f32 to vector<8x128xf32>
    %24 = arith.addf %23, %22 : vector<8x128xf32>
    %25 = arith.divf %23, %24 : vector<8x128xf32>
    %26 = vector.extract_strided_slice %19 {offsets = [0, 128], sizes = [8, 128], strides = [1, 1]} : vector<8x512xf32> to vector<8x128xf32>
    %27 = arith.negf %26 : vector<8x128xf32>
    %28 = math.exp %27 : vector<8x128xf32>
    %cst_24 = arith.constant 1.000000e+00 : f32
    %29 = vector.broadcast %cst_24 : f32 to vector<8x128xf32>
    %30 = arith.addf %29, %28 : vector<8x128xf32>
    %31 = arith.divf %29, %30 : vector<8x128xf32>
    %32 = vector.extract_strided_slice %19 {offsets = [0, 256], sizes = [8, 128], strides = [1, 1]} : vector<8x512xf32> to vector<8x128xf32>
    %33 = math.tanh %32 : vector<8x128xf32>
    %34 = vector.extract_strided_slice %19 {offsets = [0, 384], sizes = [8, 128], strides = [1, 1]} : vector<8x512xf32> to vector<8x128xf32>
    %35 = arith.negf %34 : vector<8x128xf32>
    %36 = math.exp %35 : vector<8x128xf32>
    %cst_25 = arith.constant 1.000000e+00 : f32
    %37 = vector.broadcast %cst_25 : f32 to vector<8x128xf32>
    %38 = arith.addf %37, %36 : vector<8x128xf32>
    %39 = arith.divf %37, %38 : vector<8x128xf32>
    %40 = arith.mulf %31, %12 : vector<8x128xf32>
    %41 = arith.mulf %25, %33 : vector<8x128xf32>
    %42 = arith.addf %40, %41 : vector<8x128xf32>
    %43 = math.tanh %42 : vector<8x128xf32>
    %44 = arith.mulf %39, %43 : vector<8x128xf32>
    %c8 = arith.constant 8 : index
    %c0_26 = arith.constant 0 : index
    %45 = vector.load %arg14[%c8, %c0_26] : memref<64x512xf32, #tpu.memory_space<vmem>>, vector<8x512xf32>
    %46 = arith.truncf %44 : vector<8x128xf32> to vector<8x128xbf16>
    %c0_27 = arith.constant 0 : index
    %c0_28 = arith.constant 0 : index
    %47 = vector.load %arg2[%c0_27, %c0_28] : memref<128x512xbf16, #tpu.memory_space<vmem>>, vector<128x512xbf16>
    %cst_29 = arith.constant dense<0.000000e+00> : vector<8x512xf32>
    %48 = tpu.matmul %46, %47, %cst_29 {dimension_numbers = #tpu.dot_dimension_numbers<[1], [0], [0], [1], [0, 0, 1, 1], [], []>} : vector<8x128xbf16>, vector<128x512xbf16>, vector<8x512xf32> -> vector<8x512xf32>
    %49 = arith.addf %45, %48 : vector<8x512xf32>
    %50 = vector.extract_strided_slice %49 {offsets = [0, 0], sizes = [8, 128], strides = [1, 1]} : vector<8x512xf32> to vector<8x128xf32>
    %51 = arith.negf %50 : vector<8x128xf32>
    %52 = math.exp %51 : vector<8x128xf32>
    %cst_30 = arith.constant 1.000000e+00 : f32
    %53 = vector.broadcast %cst_30 : f32 to vector<8x128xf32>
    %54 = arith.addf %53, %52 : vector<8x128xf32>
    %55 = arith.divf %53, %54 : vector<8x128xf32>
    %56 = vector.extract_strided_slice %49 {offsets = [0, 128], sizes = [8, 128], strides = [1, 1]} : vector<8x512xf32> to vector<8x128xf32>
    %57 = arith.negf %56 : vector<8x128xf32>
    %58 = math.exp %57 : vector<8x128xf32>
    %cst_31 = arith.constant 1.000000e+00 : f32
    %59 = vector.broadcast %cst_31 : f32 to vector<8x128xf32>
    %60 = arith.addf %59, %58 : vector<8x128xf32>
    %61 = arith.divf %59, %60 : vector<8x128xf32>
    %62 = vector.extract_strided_slice %49 {offsets = [0, 256], sizes = [8, 128], strides = [1, 1]} : vector<8x512xf32> to vector<8x128xf32>
    %63 = math.tanh %62 : vector<8x128xf32>
    %64 = vector.extract_strided_slice %49 {offsets = [0, 384], sizes = [8, 128], strides = [1, 1]} : vector<8x512xf32> to vector<8x128xf32>
    %65 = arith.negf %64 : vector<8x128xf32>
    %66 = math.exp %65 : vector<8x128xf32>
    %cst_32 = arith.constant 1.000000e+00 : f32
    %67 = vector.broadcast %cst_32 : f32 to vector<8x128xf32>
    %68 = arith.addf %67, %66 : vector<8x128xf32>
    %69 = arith.divf %67, %68 : vector<8x128xf32>
    %70 = arith.mulf %61, %42 : vector<8x128xf32>
    %71 = arith.mulf %55, %63 : vector<8x128xf32>
    %72 = arith.addf %70, %71 : vector<8x128xf32>
    %73 = math.tanh %72 : vector<8x128xf32>
    %74 = arith.mulf %69, %73 : vector<8x128xf32>
    %75 = arith.truncf %44 : vector<8x128xf32> to vector<8x128xbf16>
    %c0_33 = arith.constant 0 : index
    %c0_34 = arith.constant 0 : index
    %76 = vector.load %arg4[%c0_33, %c0_34] : memref<128x512xbf16, #tpu.memory_space<vmem>>, vector<128x512xbf16>
    %cst_35 = arith.constant dense<0.000000e+00> : vector<8x512xf32>
    %77 = tpu.matmul %75, %76, %cst_35 {dimension_numbers = #tpu.dot_dimension_numbers<[1], [0], [0], [1], [0, 0, 1, 1], [], []>} : vector<8x128xbf16>, vector<128x512xbf16>, vector<8x512xf32> -> vector<8x512xf32>
    %c0_36 = arith.constant 0 : index
    %c0_37 = arith.constant 0 : index
    %78 = vector.load %arg6[%c0_36, %c0_37] : memref<1x512xf32, #tpu.memory_space<vmem>>, vector<1x512xf32>
    %79 = vector.broadcast %78 : vector<1x512xf32> to vector<8x512xf32>
    %80 = arith.addf %77, %79 : vector<8x512xf32>
    %81 = arith.truncf %10 : vector<8x128xf32> to vector<8x128xbf16>
    %c0_38 = arith.constant 0 : index
    %c0_39 = arith.constant 0 : index
    %82 = vector.load %arg5[%c0_38, %c0_39] : memref<128x512xbf16, #tpu.memory_space<vmem>>, vector<128x512xbf16>
    %cst_40 = arith.constant dense<0.000000e+00> : vector<8x512xf32>
    %83 = tpu.matmul %81, %82, %cst_40 {dimension_numbers = #tpu.dot_dimension_numbers<[1], [0], [0], [1], [0, 0, 1, 1], [], []>} : vector<8x128xbf16>, vector<128x512xbf16>, vector<8x512xf32> -> vector<8x512xf32>
    %84 = arith.addf %80, %83 : vector<8x512xf32>
    %85 = vector.extract_strided_slice %84 {offsets = [0, 0], sizes = [8, 128], strides = [1, 1]} : vector<8x512xf32> to vector<8x128xf32>
    %86 = arith.negf %85 : vector<8x128xf32>
    %87 = math.exp %86 : vector<8x128xf32>
    %cst_41 = arith.constant 1.000000e+00 : f32
    %88 = vector.broadcast %cst_41 : f32 to vector<8x128xf32>
    %89 = arith.addf %88, %87 : vector<8x128xf32>
    %90 = arith.divf %88, %89 : vector<8x128xf32>
    %91 = vector.extract_strided_slice %84 {offsets = [0, 128], sizes = [8, 128], strides = [1, 1]} : vector<8x512xf32> to vector<8x128xf32>
    %92 = arith.negf %91 : vector<8x128xf32>
    %93 = math.exp %92 : vector<8x128xf32>
    %cst_42 = arith.constant 1.000000e+00 : f32
    %94 = vector.broadcast %cst_42 : f32 to vector<8x128xf32>
    %95 = arith.addf %94, %93 : vector<8x128xf32>
    %96 = arith.divf %94, %95 : vector<8x128xf32>
    %97 = vector.extract_strided_slice %84 {offsets = [0, 256], sizes = [8, 128], strides = [1, 1]} : vector<8x512xf32> to vector<8x128xf32>
    %98 = math.tanh %97 : vector<8x128xf32>
    %99 = vector.extract_strided_slice %84 {offsets = [0, 384], sizes = [8, 128], strides = [1, 1]} : vector<8x512xf32> to vector<8x128xf32>
    %100 = arith.negf %99 : vector<8x128xf32>
    %101 = math.exp %100 : vector<8x128xf32>
    %cst_43 = arith.constant 1.000000e+00 : f32
    %102 = vector.broadcast %cst_43 : f32 to vector<8x128xf32>
    %103 = arith.addf %102, %101 : vector<8x128xf32>
    %104 = arith.divf %102, %103 : vector<8x128xf32>
    %105 = arith.mulf %96, %14 : vector<8x128xf32>
    %106 = arith.mulf %90, %98 : vector<8x128xf32>
    %107 = arith.addf %105, %106 : vector<8x128xf32>
    %108 = math.tanh %107 : vector<8x128xf32>
    %109 = arith.mulf %104, %108 : vector<8x128xf32>
    %c0_44 = arith.constant 0 : index
    %c0_45 = arith.constant 0 : index
    %110 = vector.load %arg15[%c0_44, %c0_45] : memref<64x128xf32, #tpu.memory_space<vmem>>, vector<8x128xf32>
    tpu.vector_store %arg15[%c0_44, %c0_45], %109 {strides = array<i32>} : memref<64x128xf32, #tpu.memory_space<vmem>>, vector<8x128xf32>,
    %c16 = arith.constant 16 : index
    %c0_46 = arith.constant 0 : index
    %111 = vector.load %arg14[%c16, %c0_46] : memref<64x512xf32, #tpu.memory_space<vmem>>, vector<8x512xf32>
    %112 = arith.truncf %74 : vector<8x128xf32> to vector<8x128xbf16>
    %c0_47 = arith.constant 0 : index
    %c0_48 = arith.constant 0 : index
    %113 = vector.load %arg2[%c0_47, %c0_48] : memref<128x512xbf16, #tpu.memory_space<vmem>>, vector<128x512xbf16>
    %cst_49 = arith.constant dense<0.000000e+00> : vector<8x512xf32>
    %114 = tpu.matmul %112, %113, %cst_49 {dimension_numbers = #tpu.dot_dimension_numbers<[1], [0], [0], [1], [0, 0, 1, 1], [], []>} : vector<8x128xbf16>, vector<128x512xbf16>, vector<8x512xf32> -> vector<8x512xf32>
    %115 = arith.addf %111, %114 : vector<8x512xf32>
    %116 = vector.extract_strided_slice %115 {offsets = [0, 0], sizes = [8, 128], strides = [1, 1]} : vector<8x512xf32> to vector<8x128xf32>
    %117 = arith.negf %116 : vector<8x128xf32>
    %118 = math.exp %117 : vector<8x128xf32>
    %cst_50 = arith.constant 1.000000e+00 : f32
    %119 = vector.broadcast %cst_50 : f32 to vector<8x128xf32>
    %120 = arith.addf %119, %118 : vector<8x128xf32>
    %121 = arith.divf %119, %120 : vector<8x128xf32>
    %122 = vector.extract_strided_slice %115 {offsets = [0, 128], sizes = [8, 128], strides = [1, 1]} : vector<8x512xf32> to vector<8x128xf32>
    %123 = arith.negf %122 : vector<8x128xf32>
    %124 = math.exp %123 : vector<8x128xf32>
    %cst_51 = arith.constant 1.000000e+00 : f32
    %125 = vector.broadcast %cst_51 : f32 to vector<8x128xf32>
    %126 = arith.addf %125, %124 : vector<8x128xf32>
    %127 = arith.divf %125, %126 : vector<8x128xf32>
    %128 = vector.extract_strided_slice %115 {offsets = [0, 256], sizes = [8, 128], strides = [1, 1]} : vector<8x512xf32> to vector<8x128xf32>
    %129 = math.tanh %128 : vector<8x128xf32>
    %130 = vector.extract_strided_slice %115 {offsets = [0, 384], sizes = [8, 128], strides = [1, 1]} : vector<8x512xf32> to vector<8x128xf32>
    %131 = arith.negf %130 : vector<8x128xf32>
    %132 = math.exp %131 : vector<8x128xf32>
    %cst_52 = arith.constant 1.000000e+00 : f32
    %133 = vector.broadcast %cst_52 : f32 to vector<8x128xf32>
    %134 = arith.addf %133, %132 : vector<8x128xf32>
    %135 = arith.divf %133, %134 : vector<8x128xf32>
    %136 = arith.mulf %127, %72 : vector<8x128xf32>
    %137 = arith.mulf %121, %129 : vector<8x128xf32>
    %138 = arith.addf %136, %137 : vector<8x128xf32>
    %139 = math.tanh %138 : vector<8x128xf32>
    %140 = arith.mulf %135, %139 : vector<8x128xf32>
    %141 = arith.truncf %74 : vector<8x128xf32> to vector<8x128xbf16>
    %c0_53 = arith.constant 0 : index
    %c0_54 = arith.constant 0 : index
    %142 = vector.load %arg4[%c0_53, %c0_54] : memref<128x512xbf16, #tpu.memory_space<vmem>>, vector<128x512xbf16>
    %cst_55 = arith.constant dense<0.000000e+00> : vector<8x512xf32>
    %143 = tpu.matmul %141, %142, %cst_55 {dimension_numbers = #tpu.dot_dimension_numbers<[1], [0], [0], [1], [0, 0, 1, 1], [], []>} : vector<8x128xbf16>, vector<128x512xbf16>, vector<8x512xf32> -> vector<8x512xf32>
    %c0_56 = arith.constant 0 : index
    %c0_57 = arith.constant 0 : index
    %144 = vector.load %arg6[%c0_56, %c0_57] : memref<1x512xf32, #tpu.memory_space<vmem>>, vector<1x512xf32>
    %145 = vector.broadcast %144 : vector<1x512xf32> to vector<8x512xf32>
    %146 = arith.addf %143, %145 : vector<8x512xf32>
    %147 = arith.truncf %109 : vector<8x128xf32> to vector<8x128xbf16>
    %c0_58 = arith.constant 0 : index
    %c0_59 = arith.constant 0 : index
    %148 = vector.load %arg5[%c0_58, %c0_59] : memref<128x512xbf16, #tpu.memory_space<vmem>>, vector<128x512xbf16>
    %cst_60 = arith.constant dense<0.000000e+00> : vector<8x512xf32>
    %149 = tpu.matmul %147, %148, %cst_60 {dimension_numbers = #tpu.dot_dimension_numbers<[1], [0], [0], [1], [0, 0, 1, 1], [], []>} : vector<8x128xbf16>, vector<128x512xbf16>, vector<8x512xf32> -> vector<8x512xf32>
    %150 = arith.addf %146, %149 : vector<8x512xf32>
    %151 = vector.extract_strided_slice %150 {offsets = [0, 0], sizes = [8, 128], strides = [1, 1]} : vector<8x512xf32> to vector<8x128xf32>
    %152 = arith.negf %151 : vector<8x128xf32>
    %153 = math.exp %152 : vector<8x128xf32>
    %cst_61 = arith.constant 1.000000e+00 : f32
    %154 = vector.broadcast %cst_61 : f32 to vector<8x128xf32>
    %155 = arith.addf %154, %153 : vector<8x128xf32>
    %156 = arith.divf %154, %155 : vector<8x128xf32>
    %157 = vector.extract_strided_slice %150 {offsets = [0, 128], sizes = [8, 128], strides = [1, 1]} : vector<8x512xf32> to vector<8x128xf32>
    %158 = arith.negf %157 : vector<8x128xf32>
    %159 = math.exp %158 : vector<8x128xf32>
    %cst_62 = arith.constant 1.000000e+00 : f32
    %160 = vector.broadcast %cst_62 : f32 to vector<8x128xf32>
    %161 = arith.addf %160, %159 : vector<8x128xf32>
    %162 = arith.divf %160, %161 : vector<8x128xf32>
    %163 = vector.extract_strided_slice %150 {offsets = [0, 256], sizes = [8, 128], strides = [1, 1]} : vector<8x512xf32> to vector<8x128xf32>
    %164 = math.tanh %163 : vector<8x128xf32>
    %165 = vector.extract_strided_slice %150 {offsets = [0, 384], sizes = [8, 128], strides = [1, 1]} : vector<8x512xf32> to vector<8x128xf32>
    %166 = arith.negf %165 : vector<8x128xf32>
    %167 = math.exp %166 : vector<8x128xf32>
    %cst_63 = arith.constant 1.000000e+00 : f32
    %168 = vector.broadcast %cst_63 : f32 to vector<8x128xf32>
    %169 = arith.addf %168, %167 : vector<8x128xf32>
    %170 = arith.divf %168, %169 : vector<8x128xf32>
    %171 = arith.mulf %162, %107 : vector<8x128xf32>
    %172 = arith.mulf %156, %164 : vector<8x128xf32>
    %173 = arith.addf %171, %172 : vector<8x128xf32>
    %174 = math.tanh %173 : vector<8x128xf32>
    %175 = arith.mulf %170, %174 : vector<8x128xf32>
    %c8_64 = arith.constant 8 : index
    %c0_65 = arith.constant 0 : index
    %176 = vector.load %arg15[%c8_64, %c0_65] : memref<64x128xf32, #tpu.memory_space<vmem>>, vector<8x128xf32>
    tpu.vector_store %arg15[%c8_64, %c0_65], %175 {strides = array<i32>} : memref<64x128xf32, #tpu.memory_space<vmem>>, vector<8x128xf32>,
    %c24 = arith.constant 24 : index
    %c0_66 = arith.constant 0 : index
    %177 = vector.load %arg14[%c24, %c0_66] : memref<64x512xf32, #tpu.memory_space<vmem>>, vector<8x512xf32>
    %178 = arith.truncf %140 : vector<8x128xf32> to vector<8x128xbf16>
    %c0_67 = arith.constant 0 : index
    %c0_68 = arith.constant 0 : index
    %179 = vector.load %arg2[%c0_67, %c0_68] : memref<128x512xbf16, #tpu.memory_space<vmem>>, vector<128x512xbf16>
    %cst_69 = arith.constant dense<0.000000e+00> : vector<8x512xf32>
    %180 = tpu.matmul %178, %179, %cst_69 {dimension_numbers = #tpu.dot_dimension_numbers<[1], [0], [0], [1], [0, 0, 1, 1], [], []>} : vector<8x128xbf16>, vector<128x512xbf16>, vector<8x512xf32> -> vector<8x512xf32>
    %181 = arith.addf %177, %180 : vector<8x512xf32>
    %182 = vector.extract_strided_slice %181 {offsets = [0, 0], sizes = [8, 128], strides = [1, 1]} : vector<8x512xf32> to vector<8x128xf32>
    %183 = arith.negf %182 : vector<8x128xf32>
    %184 = math.exp %183 : vector<8x128xf32>
    %cst_70 = arith.constant 1.000000e+00 : f32
    %185 = vector.broadcast %cst_70 : f32 to vector<8x128xf32>
    %186 = arith.addf %185, %184 : vector<8x128xf32>
    %187 = arith.divf %185, %186 : vector<8x128xf32>
    %188 = vector.extract_strided_slice %181 {offsets = [0, 128], sizes = [8, 128], strides = [1, 1]} : vector<8x512xf32> to vector<8x128xf32>
    %189 = arith.negf %188 : vector<8x128xf32>
    %190 = math.exp %189 : vector<8x128xf32>
    %cst_71 = arith.constant 1.000000e+00 : f32
    %191 = vector.broadcast %cst_71 : f32 to vector<8x128xf32>
    %192 = arith.addf %191, %190 : vector<8x128xf32>
    %193 = arith.divf %191, %192 : vector<8x128xf32>
    %194 = vector.extract_strided_slice %181 {offsets = [0, 256], sizes = [8, 128], strides = [1, 1]} : vector<8x512xf32> to vector<8x128xf32>
    %195 = math.tanh %194 : vector<8x128xf32>
    %196 = vector.extract_strided_slice %181 {offsets = [0, 384], sizes = [8, 128], strides = [1, 1]} : vector<8x512xf32> to vector<8x128xf32>
    %197 = arith.negf %196 : vector<8x128xf32>
    %198 = math.exp %197 : vector<8x128xf32>
    %cst_72 = arith.constant 1.000000e+00 : f32
    %199 = vector.broadcast %cst_72 : f32 to vector<8x128xf32>
    %200 = arith.addf %199, %198 : vector<8x128xf32>
    %201 = arith.divf %199, %200 : vector<8x128xf32>
    %202 = arith.mulf %193, %138 : vector<8x128xf32>
    %203 = arith.mulf %187, %195 : vector<8x128xf32>
    %204 = arith.addf %202, %203 : vector<8x128xf32>
    %205 = math.tanh %204 : vector<8x128xf32>
    %206 = arith.mulf %201, %205 : vector<8x128xf32>
    %207 = arith.truncf %140 : vector<8x128xf32> to vector<8x128xbf16>
    %c0_73 = arith.constant 0 : index
    %c0_74 = arith.constant 0 : index
    %208 = vector.load %arg4[%c0_73, %c0_74] : memref<128x512xbf16, #tpu.memory_space<vmem>>, vector<128x512xbf16>
    %cst_75 = arith.constant dense<0.000000e+00> : vector<8x512xf32>
    %209 = tpu.matmul %207, %208, %cst_75 {dimension_numbers = #tpu.dot_dimension_numbers<[1], [0], [0], [1], [0, 0, 1, 1], [], []>} : vector<8x128xbf16>, vector<128x512xbf16>, vector<8x512xf32> -> vector<8x512xf32>
    %c0_76 = arith.constant 0 : index
    %c0_77 = arith.constant 0 : index
    %210 = vector.load %arg6[%c0_76, %c0_77] : memref<1x512xf32, #tpu.memory_space<vmem>>, vector<1x512xf32>
    %211 = vector.broadcast %210 : vector<1x512xf32> to vector<8x512xf32>
    %212 = arith.addf %209, %211 : vector<8x512xf32>
    %213 = arith.truncf %175 : vector<8x128xf32> to vector<8x128xbf16>
    %c0_78 = arith.constant 0 : index
    %c0_79 = arith.constant 0 : index
    %214 = vector.load %arg5[%c0_78, %c0_79] : memref<128x512xbf16, #tpu.memory_space<vmem>>, vector<128x512xbf16>
    %cst_80 = arith.constant dense<0.000000e+00> : vector<8x512xf32>
    %215 = tpu.matmul %213, %214, %cst_80 {dimension_numbers = #tpu.dot_dimension_numbers<[1], [0], [0], [1], [0, 0, 1, 1], [], []>} : vector<8x128xbf16>, vector<128x512xbf16>, vector<8x512xf32> -> vector<8x512xf32>
    %216 = arith.addf %212, %215 : vector<8x512xf32>
    %217 = vector.extract_strided_slice %216 {offsets = [0, 0], sizes = [8, 128], strides = [1, 1]} : vector<8x512xf32> to vector<8x128xf32>
    %218 = arith.negf %217 : vector<8x128xf32>
    %219 = math.exp %218 : vector<8x128xf32>
    %cst_81 = arith.constant 1.000000e+00 : f32
    %220 = vector.broadcast %cst_81 : f32 to vector<8x128xf32>
    %221 = arith.addf %220, %219 : vector<8x128xf32>
    %222 = arith.divf %220, %221 : vector<8x128xf32>
    %223 = vector.extract_strided_slice %216 {offsets = [0, 128], sizes = [8, 128], strides = [1, 1]} : vector<8x512xf32> to vector<8x128xf32>
    %224 = arith.negf %223 : vector<8x128xf32>
    %225 = math.exp %224 : vector<8x128xf32>
    %cst_82 = arith.constant 1.000000e+00 : f32
    %226 = vector.broadcast %cst_82 : f32 to vector<8x128xf32>
    %227 = arith.addf %226, %225 : vector<8x128xf32>
    %228 = arith.divf %226, %227 : vector<8x128xf32>
    %229 = vector.extract_strided_slice %216 {offsets = [0, 256], sizes = [8, 128], strides = [1, 1]} : vector<8x512xf32> to vector<8x128xf32>
    %230 = math.tanh %229 : vector<8x128xf32>
    %231 = vector.extract_strided_slice %216 {offsets = [0, 384], sizes = [8, 128], strides = [1, 1]} : vector<8x512xf32> to vector<8x128xf32>
    %232 = arith.negf %231 : vector<8x128xf32>
    %233 = math.exp %232 : vector<8x128xf32>
    %cst_83 = arith.constant 1.000000e+00 : f32
    %234 = vector.broadcast %cst_83 : f32 to vector<8x128xf32>
    %235 = arith.addf %234, %233 : vector<8x128xf32>
    %236 = arith.divf %234, %235 : vector<8x128xf32>
    %237 = arith.mulf %228, %173 : vector<8x128xf32>
    %238 = arith.mulf %222, %230 : vector<8x128xf32>
    %239 = arith.addf %237, %238 : vector<8x128xf32>
    %240 = math.tanh %239 : vector<8x128xf32>
    %241 = arith.mulf %236, %240 : vector<8x128xf32>
    %c16_84 = arith.constant 16 : index
    %c0_85 = arith.constant 0 : index
    %242 = vector.load %arg15[%c16_84, %c0_85] : memref<64x128xf32, #tpu.memory_space<vmem>>, vector<8x128xf32>
    tpu.vector_store %arg15[%c16_84, %c0_85], %241 {strides = array<i32>} : memref<64x128xf32, #tpu.memory_space<vmem>>, vector<8x128xf32>,
    %c32 = arith.constant 32 : index
    %c0_86 = arith.constant 0 : index
    %243 = vector.load %arg14[%c32, %c0_86] : memref<64x512xf32, #tpu.memory_space<vmem>>, vector<8x512xf32>
    %244 = arith.truncf %206 : vector<8x128xf32> to vector<8x128xbf16>
    %c0_87 = arith.constant 0 : index
    %c0_88 = arith.constant 0 : index
    %245 = vector.load %arg2[%c0_87, %c0_88] : memref<128x512xbf16, #tpu.memory_space<vmem>>, vector<128x512xbf16>
    %cst_89 = arith.constant dense<0.000000e+00> : vector<8x512xf32>
    %246 = tpu.matmul %244, %245, %cst_89 {dimension_numbers = #tpu.dot_dimension_numbers<[1], [0], [0], [1], [0, 0, 1, 1], [], []>} : vector<8x128xbf16>, vector<128x512xbf16>, vector<8x512xf32> -> vector<8x512xf32>
    %247 = arith.addf %243, %246 : vector<8x512xf32>
    %248 = vector.extract_strided_slice %247 {offsets = [0, 0], sizes = [8, 128], strides = [1, 1]} : vector<8x512xf32> to vector<8x128xf32>
    %249 = arith.negf %248 : vector<8x128xf32>
    %250 = math.exp %249 : vector<8x128xf32>
    %cst_90 = arith.constant 1.000000e+00 : f32
    %251 = vector.broadcast %cst_90 : f32 to vector<8x128xf32>
    %252 = arith.addf %251, %250 : vector<8x128xf32>
    %253 = arith.divf %251, %252 : vector<8x128xf32>
    %254 = vector.extract_strided_slice %247 {offsets = [0, 128], sizes = [8, 128], strides = [1, 1]} : vector<8x512xf32> to vector<8x128xf32>
    %255 = arith.negf %254 : vector<8x128xf32>
    %256 = math.exp %255 : vector<8x128xf32>
    %cst_91 = arith.constant 1.000000e+00 : f32
    %257 = vector.broadcast %cst_91 : f32 to vector<8x128xf32>
    %258 = arith.addf %257, %256 : vector<8x128xf32>
    %259 = arith.divf %257, %258 : vector<8x128xf32>
    %260 = vector.extract_strided_slice %247 {offsets = [0, 256], sizes = [8, 128], strides = [1, 1]} : vector<8x512xf32> to vector<8x128xf32>
    %261 = math.tanh %260 : vector<8x128xf32>
    %262 = vector.extract_strided_slice %247 {offsets = [0, 384], sizes = [8, 128], strides = [1, 1]} : vector<8x512xf32> to vector<8x128xf32>
    %263 = arith.negf %262 : vector<8x128xf32>
    %264 = math.exp %263 : vector<8x128xf32>
    %cst_92 = arith.constant 1.000000e+00 : f32
    %265 = vector.broadcast %cst_92 : f32 to vector<8x128xf32>
    %266 = arith.addf %265, %264 : vector<8x128xf32>
    %267 = arith.divf %265, %266 : vector<8x128xf32>
    %268 = arith.mulf %259, %204 : vector<8x128xf32>
    %269 = arith.mulf %253, %261 : vector<8x128xf32>
    %270 = arith.addf %268, %269 : vector<8x128xf32>
    %271 = math.tanh %270 : vector<8x128xf32>
    %272 = arith.mulf %267, %271 : vector<8x128xf32>
    %273 = arith.truncf %206 : vector<8x128xf32> to vector<8x128xbf16>
    %c0_93 = arith.constant 0 : index
    %c0_94 = arith.constant 0 : index
    %274 = vector.load %arg4[%c0_93, %c0_94] : memref<128x512xbf16, #tpu.memory_space<vmem>>, vector<128x512xbf16>
    %cst_95 = arith.constant dense<0.000000e+00> : vector<8x512xf32>
    %275 = tpu.matmul %273, %274, %cst_95 {dimension_numbers = #tpu.dot_dimension_numbers<[1], [0], [0], [1], [0, 0, 1, 1], [], []>} : vector<8x128xbf16>, vector<128x512xbf16>, vector<8x512xf32> -> vector<8x512xf32>
    %c0_96 = arith.constant 0 : index
    %c0_97 = arith.constant 0 : index
    %276 = vector.load %arg6[%c0_96, %c0_97] : memref<1x512xf32, #tpu.memory_space<vmem>>, vector<1x512xf32>
    %277 = vector.broadcast %276 : vector<1x512xf32> to vector<8x512xf32>
    %278 = arith.addf %275, %277 : vector<8x512xf32>
    %279 = arith.truncf %241 : vector<8x128xf32> to vector<8x128xbf16>
    %c0_98 = arith.constant 0 : index
    %c0_99 = arith.constant 0 : index
    %280 = vector.load %arg5[%c0_98, %c0_99] : memref<128x512xbf16, #tpu.memory_space<vmem>>, vector<128x512xbf16>
    %cst_100 = arith.constant dense<0.000000e+00> : vector<8x512xf32>
    %281 = tpu.matmul %279, %280, %cst_100 {dimension_numbers = #tpu.dot_dimension_numbers<[1], [0], [0], [1], [0, 0, 1, 1], [], []>} : vector<8x128xbf16>, vector<128x512xbf16>, vector<8x512xf32> -> vector<8x512xf32>
    %282 = arith.addf %278, %281 : vector<8x512xf32>
    %283 = vector.extract_strided_slice %282 {offsets = [0, 0], sizes = [8, 128], strides = [1, 1]} : vector<8x512xf32> to vector<8x128xf32>
    %284 = arith.negf %283 : vector<8x128xf32>
    %285 = math.exp %284 : vector<8x128xf32>
    %cst_101 = arith.constant 1.000000e+00 : f32
    %286 = vector.broadcast %cst_101 : f32 to vector<8x128xf32>
    %287 = arith.addf %286, %285 : vector<8x128xf32>
    %288 = arith.divf %286, %287 : vector<8x128xf32>
    %289 = vector.extract_strided_slice %282 {offsets = [0, 128], sizes = [8, 128], strides = [1, 1]} : vector<8x512xf32> to vector<8x128xf32>
    %290 = arith.negf %289 : vector<8x128xf32>
    %291 = math.exp %290 : vector<8x128xf32>
    %cst_102 = arith.constant 1.000000e+00 : f32
    %292 = vector.broadcast %cst_102 : f32 to vector<8x128xf32>
    %293 = arith.addf %292, %291 : vector<8x128xf32>
    %294 = arith.divf %292, %293 : vector<8x128xf32>
    %295 = vector.extract_strided_slice %282 {offsets = [0, 256], sizes = [8, 128], strides = [1, 1]} : vector<8x512xf32> to vector<8x128xf32>
    %296 = math.tanh %295 : vector<8x128xf32>
    %297 = vector.extract_strided_slice %282 {offsets = [0, 384], sizes = [8, 128], strides = [1, 1]} : vector<8x512xf32> to vector<8x128xf32>
    %298 = arith.negf %297 : vector<8x128xf32>
    %299 = math.exp %298 : vector<8x128xf32>
    %cst_103 = arith.constant 1.000000e+00 : f32
    %300 = vector.broadcast %cst_103 : f32 to vector<8x128xf32>
    %301 = arith.addf %300, %299 : vector<8x128xf32>
    %302 = arith.divf %300, %301 : vector<8x128xf32>
    %303 = arith.mulf %294, %239 : vector<8x128xf32>
    %304 = arith.mulf %288, %296 : vector<8x128xf32>
    %305 = arith.addf %303, %304 : vector<8x128xf32>
    %306 = math.tanh %305 : vector<8x128xf32>
    %307 = arith.mulf %302, %306 : vector<8x128xf32>
    %c24_104 = arith.constant 24 : index
    %c0_105 = arith.constant 0 : index
    %308 = vector.load %arg15[%c24_104, %c0_105] : memref<64x128xf32, #tpu.memory_space<vmem>>, vector<8x128xf32>
    tpu.vector_store %arg15[%c24_104, %c0_105], %307 {strides = array<i32>} : memref<64x128xf32, #tpu.memory_space<vmem>>, vector<8x128xf32>,
    %c40 = arith.constant 40 : index
    %c0_106 = arith.constant 0 : index
    %309 = vector.load %arg14[%c40, %c0_106] : memref<64x512xf32, #tpu.memory_space<vmem>>, vector<8x512xf32>
    %310 = arith.truncf %272 : vector<8x128xf32> to vector<8x128xbf16>
    %c0_107 = arith.constant 0 : index
    %c0_108 = arith.constant 0 : index
    %311 = vector.load %arg2[%c0_107, %c0_108] : memref<128x512xbf16, #tpu.memory_space<vmem>>, vector<128x512xbf16>
    %cst_109 = arith.constant dense<0.000000e+00> : vector<8x512xf32>
    %312 = tpu.matmul %310, %311, %cst_109 {dimension_numbers = #tpu.dot_dimension_numbers<[1], [0], [0], [1], [0, 0, 1, 1], [], []>} : vector<8x128xbf16>, vector<128x512xbf16>, vector<8x512xf32> -> vector<8x512xf32>
    %313 = arith.addf %309, %312 : vector<8x512xf32>
    %314 = vector.extract_strided_slice %313 {offsets = [0, 0], sizes = [8, 128], strides = [1, 1]} : vector<8x512xf32> to vector<8x128xf32>
    %315 = arith.negf %314 : vector<8x128xf32>
    %316 = math.exp %315 : vector<8x128xf32>
    %cst_110 = arith.constant 1.000000e+00 : f32
    %317 = vector.broadcast %cst_110 : f32 to vector<8x128xf32>
    %318 = arith.addf %317, %316 : vector<8x128xf32>
    %319 = arith.divf %317, %318 : vector<8x128xf32>
    %320 = vector.extract_strided_slice %313 {offsets = [0, 128], sizes = [8, 128], strides = [1, 1]} : vector<8x512xf32> to vector<8x128xf32>
    %321 = arith.negf %320 : vector<8x128xf32>
    %322 = math.exp %321 : vector<8x128xf32>
    %cst_111 = arith.constant 1.000000e+00 : f32
    %323 = vector.broadcast %cst_111 : f32 to vector<8x128xf32>
    %324 = arith.addf %323, %322 : vector<8x128xf32>
    %325 = arith.divf %323, %324 : vector<8x128xf32>
    %326 = vector.extract_strided_slice %313 {offsets = [0, 256], sizes = [8, 128], strides = [1, 1]} : vector<8x512xf32> to vector<8x128xf32>
    %327 = math.tanh %326 : vector<8x128xf32>
    %328 = vector.extract_strided_slice %313 {offsets = [0, 384], sizes = [8, 128], strides = [1, 1]} : vector<8x512xf32> to vector<8x128xf32>
    %329 = arith.negf %328 : vector<8x128xf32>
    %330 = math.exp %329 : vector<8x128xf32>
    %cst_112 = arith.constant 1.000000e+00 : f32
    %331 = vector.broadcast %cst_112 : f32 to vector<8x128xf32>
    %332 = arith.addf %331, %330 : vector<8x128xf32>
    %333 = arith.divf %331, %332 : vector<8x128xf32>
    %334 = arith.mulf %325, %270 : vector<8x128xf32>
    %335 = arith.mulf %319, %327 : vector<8x128xf32>
    %336 = arith.addf %334, %335 : vector<8x128xf32>
    %337 = math.tanh %336 : vector<8x128xf32>
    %338 = arith.mulf %333, %337 : vector<8x128xf32>
    %339 = arith.truncf %272 : vector<8x128xf32> to vector<8x128xbf16>
    %c0_113 = arith.constant 0 : index
    %c0_114 = arith.constant 0 : index
    %340 = vector.load %arg4[%c0_113, %c0_114] : memref<128x512xbf16, #tpu.memory_space<vmem>>, vector<128x512xbf16>
    %cst_115 = arith.constant dense<0.000000e+00> : vector<8x512xf32>
    %341 = tpu.matmul %339, %340, %cst_115 {dimension_numbers = #tpu.dot_dimension_numbers<[1], [0], [0], [1], [0, 0, 1, 1], [], []>} : vector<8x128xbf16>, vector<128x512xbf16>, vector<8x512xf32> -> vector<8x512xf32>
    %c0_116 = arith.constant 0 : index
    %c0_117 = arith.constant 0 : index
    %342 = vector.load %arg6[%c0_116, %c0_117] : memref<1x512xf32, #tpu.memory_space<vmem>>, vector<1x512xf32>
    %343 = vector.broadcast %342 : vector<1x512xf32> to vector<8x512xf32>
    %344 = arith.addf %341, %343 : vector<8x512xf32>
    %345 = arith.truncf %307 : vector<8x128xf32> to vector<8x128xbf16>
    %c0_118 = arith.constant 0 : index
    %c0_119 = arith.constant 0 : index
    %346 = vector.load %arg5[%c0_118, %c0_119] : memref<128x512xbf16, #tpu.memory_space<vmem>>, vector<128x512xbf16>
    %cst_120 = arith.constant dense<0.000000e+00> : vector<8x512xf32>
    %347 = tpu.matmul %345, %346, %cst_120 {dimension_numbers = #tpu.dot_dimension_numbers<[1], [0], [0], [1], [0, 0, 1, 1], [], []>} : vector<8x128xbf16>, vector<128x512xbf16>, vector<8x512xf32> -> vector<8x512xf32>
    %348 = arith.addf %344, %347 : vector<8x512xf32>
    %349 = vector.extract_strided_slice %348 {offsets = [0, 0], sizes = [8, 128], strides = [1, 1]} : vector<8x512xf32> to vector<8x128xf32>
    %350 = arith.negf %349 : vector<8x128xf32>
    %351 = math.exp %350 : vector<8x128xf32>
    %cst_121 = arith.constant 1.000000e+00 : f32
    %352 = vector.broadcast %cst_121 : f32 to vector<8x128xf32>
    %353 = arith.addf %352, %351 : vector<8x128xf32>
    %354 = arith.divf %352, %353 : vector<8x128xf32>
    %355 = vector.extract_strided_slice %348 {offsets = [0, 128], sizes = [8, 128], strides = [1, 1]} : vector<8x512xf32> to vector<8x128xf32>
    %356 = arith.negf %355 : vector<8x128xf32>
    %357 = math.exp %356 : vector<8x128xf32>
    %cst_122 = arith.constant 1.000000e+00 : f32
    %358 = vector.broadcast %cst_122 : f32 to vector<8x128xf32>
    %359 = arith.addf %358, %357 : vector<8x128xf32>
    %360 = arith.divf %358, %359 : vector<8x128xf32>
    %361 = vector.extract_strided_slice %348 {offsets = [0, 256], sizes = [8, 128], strides = [1, 1]} : vector<8x512xf32> to vector<8x128xf32>
    %362 = math.tanh %361 : vector<8x128xf32>
    %363 = vector.extract_strided_slice %348 {offsets = [0, 384], sizes = [8, 128], strides = [1, 1]} : vector<8x512xf32> to vector<8x128xf32>
    %364 = arith.negf %363 : vector<8x128xf32>
    %365 = math.exp %364 : vector<8x128xf32>
    %cst_123 = arith.constant 1.000000e+00 : f32
    %366 = vector.broadcast %cst_123 : f32 to vector<8x128xf32>
    %367 = arith.addf %366, %365 : vector<8x128xf32>
    %368 = arith.divf %366, %367 : vector<8x128xf32>
    %369 = arith.mulf %360, %305 : vector<8x128xf32>
    %370 = arith.mulf %354, %362 : vector<8x128xf32>
    %371 = arith.addf %369, %370 : vector<8x128xf32>
    %372 = math.tanh %371 : vector<8x128xf32>
    %373 = arith.mulf %368, %372 : vector<8x128xf32>
    %c32_124 = arith.constant 32 : index
    %c0_125 = arith.constant 0 : index
    %374 = vector.load %arg15[%c32_124, %c0_125] : memref<64x128xf32, #tpu.memory_space<vmem>>, vector<8x128xf32>
    tpu.vector_store %arg15[%c32_124, %c0_125], %373 {strides = array<i32>} : memref<64x128xf32, #tpu.memory_space<vmem>>, vector<8x128xf32>,
    %c48 = arith.constant 48 : index
    %c0_126 = arith.constant 0 : index
    %375 = vector.load %arg14[%c48, %c0_126] : memref<64x512xf32, #tpu.memory_space<vmem>>, vector<8x512xf32>
    %376 = arith.truncf %338 : vector<8x128xf32> to vector<8x128xbf16>
    %c0_127 = arith.constant 0 : index
    %c0_128 = arith.constant 0 : index
    %377 = vector.load %arg2[%c0_127, %c0_128] : memref<128x512xbf16, #tpu.memory_space<vmem>>, vector<128x512xbf16>
    %cst_129 = arith.constant dense<0.000000e+00> : vector<8x512xf32>
    %378 = tpu.matmul %376, %377, %cst_129 {dimension_numbers = #tpu.dot_dimension_numbers<[1], [0], [0], [1], [0, 0, 1, 1], [], []>} : vector<8x128xbf16>, vector<128x512xbf16>, vector<8x512xf32> -> vector<8x512xf32>
    %379 = arith.addf %375, %378 : vector<8x512xf32>
    %380 = vector.extract_strided_slice %379 {offsets = [0, 0], sizes = [8, 128], strides = [1, 1]} : vector<8x512xf32> to vector<8x128xf32>
    %381 = arith.negf %380 : vector<8x128xf32>
    %382 = math.exp %381 : vector<8x128xf32>
    %cst_130 = arith.constant 1.000000e+00 : f32
    %383 = vector.broadcast %cst_130 : f32 to vector<8x128xf32>
    %384 = arith.addf %383, %382 : vector<8x128xf32>
    %385 = arith.divf %383, %384 : vector<8x128xf32>
    %386 = vector.extract_strided_slice %379 {offsets = [0, 128], sizes = [8, 128], strides = [1, 1]} : vector<8x512xf32> to vector<8x128xf32>
    %387 = arith.negf %386 : vector<8x128xf32>
    %388 = math.exp %387 : vector<8x128xf32>
    %cst_131 = arith.constant 1.000000e+00 : f32
    %389 = vector.broadcast %cst_131 : f32 to vector<8x128xf32>
    %390 = arith.addf %389, %388 : vector<8x128xf32>
    %391 = arith.divf %389, %390 : vector<8x128xf32>
    %392 = vector.extract_strided_slice %379 {offsets = [0, 256], sizes = [8, 128], strides = [1, 1]} : vector<8x512xf32> to vector<8x128xf32>
    %393 = math.tanh %392 : vector<8x128xf32>
    %394 = vector.extract_strided_slice %379 {offsets = [0, 384], sizes = [8, 128], strides = [1, 1]} : vector<8x512xf32> to vector<8x128xf32>
    %395 = arith.negf %394 : vector<8x128xf32>
    %396 = math.exp %395 : vector<8x128xf32>
    %cst_132 = arith.constant 1.000000e+00 : f32
    %397 = vector.broadcast %cst_132 : f32 to vector<8x128xf32>
    %398 = arith.addf %397, %396 : vector<8x128xf32>
    %399 = arith.divf %397, %398 : vector<8x128xf32>
    %400 = arith.mulf %391, %336 : vector<8x128xf32>
    %401 = arith.mulf %385, %393 : vector<8x128xf32>
    %402 = arith.addf %400, %401 : vector<8x128xf32>
    %403 = math.tanh %402 : vector<8x128xf32>
    %404 = arith.mulf %399, %403 : vector<8x128xf32>
    %405 = arith.truncf %338 : vector<8x128xf32> to vector<8x128xbf16>
    %c0_133 = arith.constant 0 : index
    %c0_134 = arith.constant 0 : index
    %406 = vector.load %arg4[%c0_133, %c0_134] : memref<128x512xbf16, #tpu.memory_space<vmem>>, vector<128x512xbf16>
    %cst_135 = arith.constant dense<0.000000e+00> : vector<8x512xf32>
    %407 = tpu.matmul %405, %406, %cst_135 {dimension_numbers = #tpu.dot_dimension_numbers<[1], [0], [0], [1], [0, 0, 1, 1], [], []>} : vector<8x128xbf16>, vector<128x512xbf16>, vector<8x512xf32> -> vector<8x512xf32>
    %c0_136 = arith.constant 0 : index
    %c0_137 = arith.constant 0 : index
    %408 = vector.load %arg6[%c0_136, %c0_137] : memref<1x512xf32, #tpu.memory_space<vmem>>, vector<1x512xf32>
    %409 = vector.broadcast %408 : vector<1x512xf32> to vector<8x512xf32>
    %410 = arith.addf %407, %409 : vector<8x512xf32>
    %411 = arith.truncf %373 : vector<8x128xf32> to vector<8x128xbf16>
    %c0_138 = arith.constant 0 : index
    %c0_139 = arith.constant 0 : index
    %412 = vector.load %arg5[%c0_138, %c0_139] : memref<128x512xbf16, #tpu.memory_space<vmem>>, vector<128x512xbf16>
    %cst_140 = arith.constant dense<0.000000e+00> : vector<8x512xf32>
    %413 = tpu.matmul %411, %412, %cst_140 {dimension_numbers = #tpu.dot_dimension_numbers<[1], [0], [0], [1], [0, 0, 1, 1], [], []>} : vector<8x128xbf16>, vector<128x512xbf16>, vector<8x512xf32> -> vector<8x512xf32>
    %414 = arith.addf %410, %413 : vector<8x512xf32>
    %415 = vector.extract_strided_slice %414 {offsets = [0, 0], sizes = [8, 128], strides = [1, 1]} : vector<8x512xf32> to vector<8x128xf32>
    %416 = arith.negf %415 : vector<8x128xf32>
    %417 = math.exp %416 : vector<8x128xf32>
    %cst_141 = arith.constant 1.000000e+00 : f32
    %418 = vector.broadcast %cst_141 : f32 to vector<8x128xf32>
    %419 = arith.addf %418, %417 : vector<8x128xf32>
    %420 = arith.divf %418, %419 : vector<8x128xf32>
    %421 = vector.extract_strided_slice %414 {offsets = [0, 128], sizes = [8, 128], strides = [1, 1]} : vector<8x512xf32> to vector<8x128xf32>
    %422 = arith.negf %421 : vector<8x128xf32>
    %423 = math.exp %422 : vector<8x128xf32>
    %cst_142 = arith.constant 1.000000e+00 : f32
    %424 = vector.broadcast %cst_142 : f32 to vector<8x128xf32>
    %425 = arith.addf %424, %423 : vector<8x128xf32>
    %426 = arith.divf %424, %425 : vector<8x128xf32>
    %427 = vector.extract_strided_slice %414 {offsets = [0, 256], sizes = [8, 128], strides = [1, 1]} : vector<8x512xf32> to vector<8x128xf32>
    %428 = math.tanh %427 : vector<8x128xf32>
    %429 = vector.extract_strided_slice %414 {offsets = [0, 384], sizes = [8, 128], strides = [1, 1]} : vector<8x512xf32> to vector<8x128xf32>
    %430 = arith.negf %429 : vector<8x128xf32>
    %431 = math.exp %430 : vector<8x128xf32>
    %cst_143 = arith.constant 1.000000e+00 : f32
    %432 = vector.broadcast %cst_143 : f32 to vector<8x128xf32>
    %433 = arith.addf %432, %431 : vector<8x128xf32>
    %434 = arith.divf %432, %433 : vector<8x128xf32>
    %435 = arith.mulf %426, %371 : vector<8x128xf32>
    %436 = arith.mulf %420, %428 : vector<8x128xf32>
    %437 = arith.addf %435, %436 : vector<8x128xf32>
    %438 = math.tanh %437 : vector<8x128xf32>
    %439 = arith.mulf %434, %438 : vector<8x128xf32>
    %c40_144 = arith.constant 40 : index
    %c0_145 = arith.constant 0 : index
    %440 = vector.load %arg15[%c40_144, %c0_145] : memref<64x128xf32, #tpu.memory_space<vmem>>, vector<8x128xf32>
    tpu.vector_store %arg15[%c40_144, %c0_145], %439 {strides = array<i32>} : memref<64x128xf32, #tpu.memory_space<vmem>>, vector<8x128xf32>,
    %c56 = arith.constant 56 : index
    %c0_146 = arith.constant 0 : index
    %441 = vector.load %arg14[%c56, %c0_146] : memref<64x512xf32, #tpu.memory_space<vmem>>, vector<8x512xf32>
    %442 = arith.truncf %404 : vector<8x128xf32> to vector<8x128xbf16>
    %c0_147 = arith.constant 0 : index
    %c0_148 = arith.constant 0 : index
    %443 = vector.load %arg2[%c0_147, %c0_148] : memref<128x512xbf16, #tpu.memory_space<vmem>>, vector<128x512xbf16>
    %cst_149 = arith.constant dense<0.000000e+00> : vector<8x512xf32>
    %444 = tpu.matmul %442, %443, %cst_149 {dimension_numbers = #tpu.dot_dimension_numbers<[1], [0], [0], [1], [0, 0, 1, 1], [], []>} : vector<8x128xbf16>, vector<128x512xbf16>, vector<8x512xf32> -> vector<8x512xf32>
    %445 = arith.addf %441, %444 : vector<8x512xf32>
    %446 = vector.extract_strided_slice %445 {offsets = [0, 0], sizes = [8, 128], strides = [1, 1]} : vector<8x512xf32> to vector<8x128xf32>
    %447 = arith.negf %446 : vector<8x128xf32>
    %448 = math.exp %447 : vector<8x128xf32>
    %cst_150 = arith.constant 1.000000e+00 : f32
    %449 = vector.broadcast %cst_150 : f32 to vector<8x128xf32>
    %450 = arith.addf %449, %448 : vector<8x128xf32>
    %451 = arith.divf %449, %450 : vector<8x128xf32>
    %452 = vector.extract_strided_slice %445 {offsets = [0, 128], sizes = [8, 128], strides = [1, 1]} : vector<8x512xf32> to vector<8x128xf32>
    %453 = arith.negf %452 : vector<8x128xf32>
    %454 = math.exp %453 : vector<8x128xf32>
    %cst_151 = arith.constant 1.000000e+00 : f32
    %455 = vector.broadcast %cst_151 : f32 to vector<8x128xf32>
    %456 = arith.addf %455, %454 : vector<8x128xf32>
    %457 = arith.divf %455, %456 : vector<8x128xf32>
    %458 = vector.extract_strided_slice %445 {offsets = [0, 256], sizes = [8, 128], strides = [1, 1]} : vector<8x512xf32> to vector<8x128xf32>
    %459 = math.tanh %458 : vector<8x128xf32>
    %460 = vector.extract_strided_slice %445 {offsets = [0, 384], sizes = [8, 128], strides = [1, 1]} : vector<8x512xf32> to vector<8x128xf32>
    %461 = arith.negf %460 : vector<8x128xf32>
    %462 = math.exp %461 : vector<8x128xf32>
    %cst_152 = arith.constant 1.000000e+00 : f32
    %463 = vector.broadcast %cst_152 : f32 to vector<8x128xf32>
    %464 = arith.addf %463, %462 : vector<8x128xf32>
    %465 = arith.divf %463, %464 : vector<8x128xf32>
    %466 = arith.mulf %457, %402 : vector<8x128xf32>
    %467 = arith.mulf %451, %459 : vector<8x128xf32>
    %468 = arith.addf %466, %467 : vector<8x128xf32>
    %469 = math.tanh %468 : vector<8x128xf32>
    %470 = arith.mulf %465, %469 : vector<8x128xf32>
    %471 = arith.truncf %404 : vector<8x128xf32> to vector<8x128xbf16>
    %c0_153 = arith.constant 0 : index
    %c0_154 = arith.constant 0 : index
    %472 = vector.load %arg4[%c0_153, %c0_154] : memref<128x512xbf16, #tpu.memory_space<vmem>>, vector<128x512xbf16>
    %cst_155 = arith.constant dense<0.000000e+00> : vector<8x512xf32>
    %473 = tpu.matmul %471, %472, %cst_155 {dimension_numbers = #tpu.dot_dimension_numbers<[1], [0], [0], [1], [0, 0, 1, 1], [], []>} : vector<8x128xbf16>, vector<128x512xbf16>, vector<8x512xf32> -> vector<8x512xf32>
    %c0_156 = arith.constant 0 : index
    %c0_157 = arith.constant 0 : index
    %474 = vector.load %arg6[%c0_156, %c0_157] : memref<1x512xf32, #tpu.memory_space<vmem>>, vector<1x512xf32>
    %475 = vector.broadcast %474 : vector<1x512xf32> to vector<8x512xf32>
    %476 = arith.addf %473, %475 : vector<8x512xf32>
    %477 = arith.truncf %439 : vector<8x128xf32> to vector<8x128xbf16>
    %c0_158 = arith.constant 0 : index
    %c0_159 = arith.constant 0 : index
    %478 = vector.load %arg5[%c0_158, %c0_159] : memref<128x512xbf16, #tpu.memory_space<vmem>>, vector<128x512xbf16>
    %cst_160 = arith.constant dense<0.000000e+00> : vector<8x512xf32>
    %479 = tpu.matmul %477, %478, %cst_160 {dimension_numbers = #tpu.dot_dimension_numbers<[1], [0], [0], [1], [0, 0, 1, 1], [], []>} : vector<8x128xbf16>, vector<128x512xbf16>, vector<8x512xf32> -> vector<8x512xf32>
    %480 = arith.addf %476, %479 : vector<8x512xf32>
    %481 = vector.extract_strided_slice %480 {offsets = [0, 0], sizes = [8, 128], strides = [1, 1]} : vector<8x512xf32> to vector<8x128xf32>
    %482 = arith.negf %481 : vector<8x128xf32>
    %483 = math.exp %482 : vector<8x128xf32>
    %cst_161 = arith.constant 1.000000e+00 : f32
    %484 = vector.broadcast %cst_161 : f32 to vector<8x128xf32>
    %485 = arith.addf %484, %483 : vector<8x128xf32>
    %486 = arith.divf %484, %485 : vector<8x128xf32>
    %487 = vector.extract_strided_slice %480 {offsets = [0, 128], sizes = [8, 128], strides = [1, 1]} : vector<8x512xf32> to vector<8x128xf32>
    %488 = arith.negf %487 : vector<8x128xf32>
    %489 = math.exp %488 : vector<8x128xf32>
    %cst_162 = arith.constant 1.000000e+00 : f32
    %490 = vector.broadcast %cst_162 : f32 to vector<8x128xf32>
    %491 = arith.addf %490, %489 : vector<8x128xf32>
    %492 = arith.divf %490, %491 : vector<8x128xf32>
    %493 = vector.extract_strided_slice %480 {offsets = [0, 256], sizes = [8, 128], strides = [1, 1]} : vector<8x512xf32> to vector<8x128xf32>
    %494 = math.tanh %493 : vector<8x128xf32>
    %495 = vector.extract_strided_slice %480 {offsets = [0, 384], sizes = [8, 128], strides = [1, 1]} : vector<8x512xf32> to vector<8x128xf32>
    %496 = arith.negf %495 : vector<8x128xf32>
    %497 = math.exp %496 : vector<8x128xf32>
    %cst_163 = arith.constant 1.000000e+00 : f32
    %498 = vector.broadcast %cst_163 : f32 to vector<8x128xf32>
    %499 = arith.addf %498, %497 : vector<8x128xf32>
    %500 = arith.divf %498, %499 : vector<8x128xf32>
    %501 = arith.mulf %492, %437 : vector<8x128xf32>
    %502 = arith.mulf %486, %494 : vector<8x128xf32>
    %503 = arith.addf %501, %502 : vector<8x128xf32>
    %504 = math.tanh %503 : vector<8x128xf32>
    %505 = arith.mulf %500, %504 : vector<8x128xf32>
    %c48_164 = arith.constant 48 : index
    %c0_165 = arith.constant 0 : index
    %506 = vector.load %arg15[%c48_164, %c0_165] : memref<64x128xf32, #tpu.memory_space<vmem>>, vector<8x128xf32>
    tpu.vector_store %arg15[%c48_164, %c0_165], %505 {strides = array<i32>} : memref<64x128xf32, #tpu.memory_space<vmem>>, vector<8x128xf32>,
    %507 = arith.truncf %470 : vector<8x128xf32> to vector<8x128xbf16>
    %c0_166 = arith.constant 0 : index
    %c0_167 = arith.constant 0 : index
    %508 = vector.load %arg4[%c0_166, %c0_167] : memref<128x512xbf16, #tpu.memory_space<vmem>>, vector<128x512xbf16>
    %cst_168 = arith.constant dense<0.000000e+00> : vector<8x512xf32>
    %509 = tpu.matmul %507, %508, %cst_168 {dimension_numbers = #tpu.dot_dimension_numbers<[1], [0], [0], [1], [0, 0, 1, 1], [], []>} : vector<8x128xbf16>, vector<128x512xbf16>, vector<8x512xf32> -> vector<8x512xf32>
    %c0_169 = arith.constant 0 : index
    %c0_170 = arith.constant 0 : index
    %510 = vector.load %arg6[%c0_169, %c0_170] : memref<1x512xf32, #tpu.memory_space<vmem>>, vector<1x512xf32>
    %511 = vector.broadcast %510 : vector<1x512xf32> to vector<8x512xf32>
    %512 = arith.addf %509, %511 : vector<8x512xf32>
    %513 = arith.truncf %505 : vector<8x128xf32> to vector<8x128xbf16>
    %c0_171 = arith.constant 0 : index
    %c0_172 = arith.constant 0 : index
    %514 = vector.load %arg5[%c0_171, %c0_172] : memref<128x512xbf16, #tpu.memory_space<vmem>>, vector<128x512xbf16>
    %cst_173 = arith.constant dense<0.000000e+00> : vector<8x512xf32>
    %515 = tpu.matmul %513, %514, %cst_173 {dimension_numbers = #tpu.dot_dimension_numbers<[1], [0], [0], [1], [0, 0, 1, 1], [], []>} : vector<8x128xbf16>, vector<128x512xbf16>, vector<8x512xf32> -> vector<8x512xf32>
    %516 = arith.addf %512, %515 : vector<8x512xf32>
    %517 = vector.extract_strided_slice %516 {offsets = [0, 0], sizes = [8, 128], strides = [1, 1]} : vector<8x512xf32> to vector<8x128xf32>
    %518 = arith.negf %517 : vector<8x128xf32>
    %519 = math.exp %518 : vector<8x128xf32>
    %cst_174 = arith.constant 1.000000e+00 : f32
    %520 = vector.broadcast %cst_174 : f32 to vector<8x128xf32>
    %521 = arith.addf %520, %519 : vector<8x128xf32>
    %522 = arith.divf %520, %521 : vector<8x128xf32>
    %523 = vector.extract_strided_slice %516 {offsets = [0, 128], sizes = [8, 128], strides = [1, 1]} : vector<8x512xf32> to vector<8x128xf32>
    %524 = arith.negf %523 : vector<8x128xf32>
    %525 = math.exp %524 : vector<8x128xf32>
    %cst_175 = arith.constant 1.000000e+00 : f32
    %526 = vector.broadcast %cst_175 : f32 to vector<8x128xf32>
    %527 = arith.addf %526, %525 : vector<8x128xf32>
    %528 = arith.divf %526, %527 : vector<8x128xf32>
    %529 = vector.extract_strided_slice %516 {offsets = [0, 256], sizes = [8, 128], strides = [1, 1]} : vector<8x512xf32> to vector<8x128xf32>
    %530 = math.tanh %529 : vector<8x128xf32>
    %531 = vector.extract_strided_slice %516 {offsets = [0, 384], sizes = [8, 128], strides = [1, 1]} : vector<8x512xf32> to vector<8x128xf32>
    %532 = arith.negf %531 : vector<8x128xf32>
    %533 = math.exp %532 : vector<8x128xf32>
    %cst_176 = arith.constant 1.000000e+00 : f32
    %534 = vector.broadcast %cst_176 : f32 to vector<8x128xf32>
    %535 = arith.addf %534, %533 : vector<8x128xf32>
    %536 = arith.divf %534, %535 : vector<8x128xf32>
    %537 = arith.mulf %528, %503 : vector<8x128xf32>
    %538 = arith.mulf %522, %530 : vector<8x128xf32>
    %539 = arith.addf %537, %538 : vector<8x128xf32>
    %540 = math.tanh %539 : vector<8x128xf32>
    %541 = arith.mulf %536, %540 : vector<8x128xf32>
    %c56_177 = arith.constant 56 : index
    %c0_178 = arith.constant 0 : index
    %542 = vector.load %arg15[%c56_177, %c0_178] : memref<64x128xf32, #tpu.memory_space<vmem>>, vector<8x128xf32>
    tpu.vector_store %arg15[%c56_177, %c0_178], %541 {strides = array<i32>} : memref<64x128xf32, #tpu.memory_space<vmem>>, vector<8x128xf32>,
    %c0_179 = arith.constant 0 : index
    %c0_180 = arith.constant 0 : index
    %c0_181 = arith.constant 0 : index
    %543 = vector.load %arg12[%c0_179, %c0_180, %c0_181] : memref<2x8x128xf32, #tpu.memory_space<vmem>>, vector<1x8x128xf32>
    %544 = vector.shape_cast %543 : vector<1x8x128xf32> to vector<8x128xf32>
    %545 = vector.shape_cast %470 : vector<8x128xf32> to vector<1x8x128xf32>
    tpu.vector_store %arg12[%c0_179, %c0_180, %c0_181], %545 {strides = array<i32>} : memref<2x8x128xf32, #tpu.memory_space<vmem>>, vector<1x8x128xf32>,
    %c0_182 = arith.constant 0 : index
    %c0_183 = arith.constant 0 : index
    %c0_184 = arith.constant 0 : index
    %546 = vector.load %arg13[%c0_182, %c0_183, %c0_184] : memref<2x8x128xf32, #tpu.memory_space<vmem>>, vector<1x8x128xf32>
    %547 = vector.shape_cast %546 : vector<1x8x128xf32> to vector<8x128xf32>
    %548 = vector.shape_cast %468 : vector<8x128xf32> to vector<1x8x128xf32>
    tpu.vector_store %arg13[%c0_182, %c0_183, %c0_184], %548 {strides = array<i32>} : memref<2x8x128xf32, #tpu.memory_space<vmem>>, vector<1x8x128xf32>,
    %c1_185 = arith.constant 1 : index
    %c0_186 = arith.constant 0 : index
    %c0_187 = arith.constant 0 : index
    %549 = vector.load %arg12[%c1_185, %c0_186, %c0_187] : memref<2x8x128xf32, #tpu.memory_space<vmem>>, vector<1x8x128xf32>
    %550 = vector.shape_cast %549 : vector<1x8x128xf32> to vector<8x128xf32>
    %551 = vector.shape_cast %541 : vector<8x128xf32> to vector<1x8x128xf32>
    tpu.vector_store %arg12[%c1_185, %c0_186, %c0_187], %551 {strides = array<i32>} : memref<2x8x128xf32, #tpu.memory_space<vmem>>, vector<1x8x128xf32>,
    %c1_188 = arith.constant 1 : index
    %c0_189 = arith.constant 0 : index
    %c0_190 = arith.constant 0 : index
    %552 = vector.load %arg13[%c1_188, %c0_189, %c0_190] : memref<2x8x128xf32, #tpu.memory_space<vmem>>, vector<1x8x128xf32>
    %553 = vector.shape_cast %552 : vector<1x8x128xf32> to vector<8x128xf32>
    %554 = vector.shape_cast %539 : vector<8x128xf32> to vector<1x8x128xf32>
    tpu.vector_store %arg13[%c1_188, %c0_189, %c0_190], %554 {strides = array<i32>} : memref<2x8x128xf32, #tpu.memory_space<vmem>>, vector<1x8x128xf32>,
    %c0_191 = arith.constant 0 : index
    %c0_192 = arith.constant 0 : index
    %555 = vector.load %arg15[%c0_191, %c0_192] : memref<64x128xf32, #tpu.memory_space<vmem>>, vector<64x128xf32>
    %556 = arith.truncf %555 : vector<64x128xf32> to vector<64x128xbf16>
    %c0_193 = arith.constant 0 : index
    %c0_194 = arith.constant 0 : index
    %557 = vector.load %arg7[%c0_193, %c0_194] : memref<128x128xbf16, #tpu.memory_space<vmem>>, vector<128x128xbf16>
    %cst_195 = arith.constant dense<0.000000e+00> : vector<64x128xf32>
    %558 = tpu.matmul %556, %557, %cst_195 {dimension_numbers = #tpu.dot_dimension_numbers<[1], [0], [0], [1], [0, 0, 1, 1], [], []>} : vector<64x128xbf16>, vector<128x128xbf16>, vector<64x128xf32> -> vector<64x128xf32>
    %c0_196 = arith.constant 0 : index
    %c0_197 = arith.constant 0 : index
    %559 = vector.load %arg8[%c0_196, %c0_197] : memref<1x128xf32, #tpu.memory_space<vmem>>, vector<1x128xf32>
    %560 = vector.broadcast %559 : vector<1x128xf32> to vector<64x128xf32>
    %561 = arith.addf %558, %560 : vector<64x128xf32>
    %c0_198 = arith.constant 0 : index
    %c0_199 = arith.constant 0 : index
    %562 = vector.load %arg11[%c0_198, %c0_199] : memref<64x128xf32, #tpu.memory_space<vmem>>, vector<64x128xf32>
    tpu.vector_store %arg11[%c0_198, %c0_199], %561 {strides = array<i32>} : memref<64x128xf32, #tpu.memory_space<vmem>>, vector<64x128xf32>,
    return
  }
}

</mosaic_0001>

<llo_original>
// kernel: net_forward.1
$region0: #{net_forward.1}
  #allocation0 [shape = 'u32[]', space=smem, size = 0x4, offset = 0x4, fixed_abs, tag = 'smem constant byte address 0x4 - core index']
  #allocation1 [shape = 'u32[144,128]{1,0:T(1,128)}', space=vmem, size = 0x12000, scoped, tag = 'internal scratch']
  #allocation2 [shape = 'f32[64,512]{1,0:T(8,128)}', space=vmem, size = 0x20000, scoped, tag = 'scratch operand']
  #allocation3 [shape = 'f32[64,128]{1,0:T(8,128)}', space=vmem, size = 0x8000, scoped, tag = 'scratch operand']
  %s0 = inlined_call_operand.vmem [shape: bf16[64,4], index: 0, kind: input, shape index: {}]
  %s1 = inlined_call_operand.vmem [shape: bf16[4,512], index: 1, kind: input, shape index: {}]
  %s2 = inlined_call_operand.hbm [shape: bf16[128,512], index: 2, kind: input, shape index: {}]
  %s3 = inlined_call_operand.vmem [shape: f32[1,512], index: 3, kind: input, shape index: {}]
  %s4 = inlined_call_operand.hbm [shape: bf16[128,512], index: 4, kind: input, shape index: {}]
  %s5 = inlined_call_operand.hbm [shape: bf16[128,512], index: 5, kind: input, shape index: {}]
  %s6 = inlined_call_operand.vmem [shape: f32[1,512], index: 6, kind: input, shape index: {}]
  %s7 = inlined_call_operand.vmem [shape: bf16[128,128], index: 7, kind: input, shape index: {}]
  %s8 = inlined_call_operand.vmem [shape: f32[1,128], index: 8, kind: input, shape index: {}]
  %s9 = inlined_call_operand.vmem [shape: f32[2,8,128], index: 9, kind: input, shape index: {}, may-alias: {9,10}]
  %s10 = inlined_call_operand.vmem [shape: f32[2,8,128], index: 10, kind: input, shape index: {}, may-alias: {9,10}]
  %s11 = inlined_call_operand.vmem [shape: f32[64,128], index: 11, kind: output, shape index: {0}]
  %s12 = inlined_call_operand.vmem [shape: f32[2,8,128], index: 12, kind: output, shape index: {1}]
  %s13 = inlined_call_operand.vmem [shape: f32[2,8,128], index: 13, kind: output, shape index: {2}]
  %14 = xla_tuple %s11, %s12, %s13
  %s15 = sld [smem:[#allocation0]]
  $region82: #{net_forward.1} parent=0
    _
  %s17 = ssub.s32 1, %s15
  %s18 = scalar_select 0, %s17, %s15
  $region1: #{net_forward.1} parent=0
    #allocation4 [shape = 'u8[131072]{0}', space=vmem, size = 0x20000, scoped, tag = 'input window, operand 2, single buffered']
    #allocation5 [shape = 's32[1]{0}', space=sflag, size = 0x4, scoped, tag = 'scoped memory for net_forward.1']
    #allocation6 [shape = 'u8[131072]{0}', space=vmem, size = 0x20000, scoped, tag = 'input window, operand 4, single buffered']
    #allocation7 [shape = 's32[1]{0}', space=sflag, size = 0x4, scoped, tag = 'scoped memory for net_forward.1']
    #allocation8 [shape = 'u8[131072]{0}', space=vmem, size = 0x20000, scoped, tag = 'input window, operand 5, single buffered']
    %19 = vsyncpa [#allocation5], 0
    %20 = vsyncpa [#allocation7], 0
    // Predicated region
    $region2: #{net_forward.1} parent=1 // pred_check
      _
    $region3: #{net_forward.1} parent=1 // pred_check_branch
      %22 = sbr.rel (0) target = $region5
    $region4: #{net_forward.1} parent=1 // pred_region
      _
    $region5: #{net_forward.1} parent=1 // pred_fallthru
      _
    // Predicated region
    $region6: #{net_forward.1} parent=1 // pred_check
      _
    $region7: #{net_forward.1} parent=1 // pred_check_branch
      %24 = sbr.rel (0) target = $region9
    $region8: #{net_forward.1} parent=1 // pred_region
      _
    $region9: #{net_forward.1} parent=1 // pred_fallthru
      _
    // Predicated region
    $region10: #{net_forward.1} parent=1 // pred_check
      _
    $region11: #{net_forward.1} parent=1 // pred_check_branch
      %26 = sbr.rel (0) target = $region13
    $region12: #{net_forward.1} parent=1 // pred_region
      %s28 = ssub.s32 4096, 4096
      %29 = vsyncadd [#allocation5], %s28
      %s30 = sshll.u32 [#allocation4], 4
      %s31 = int_to_ptr.vmem [resolvable:$true] %s30
      %36 = dma.hbm_to_vmem [thread:$0]  %s2, 4096, %s31, [#allocation5], 256, 256, 16
    $region13: #{net_forward.1} parent=1 // pred_fallthru
      _
    // Predicated region
    $region14: #{net_forward.1} parent=1 // pred_check
      _
    $region15: #{net_forward.1} parent=1 // pred_check_branch
      %38 = sbr.rel (0) target = $region17
    $region16: #{net_forward.1} parent=1 // pred_region
      _
    $region17: #{net_forward.1} parent=1 // pred_fallthru
      _
    // Predicated region
    $region18: #{net_forward.1} parent=1 // pred_check
      _
    $region19: #{net_forward.1} parent=1 // pred_check_branch
      %40 = sbr.rel (0) target = $region21
    $region20: #{net_forward.1} parent=1 // pred_region
      %s42 = ssub.s32 4096, 4096
      %43 = vsyncadd [#allocation7], %s42
      %s44 = sshll.u32 [#allocation6], 4
      %s45 = int_to_ptr.vmem [resolvable:$true] %s44
      %50 = dma.hbm_to_vmem [thread:$0]  %s4, 4096, %s45, [#allocation7], 256, 256, 16
    $region21: #{net_forward.1} parent=1 // pred_fallthru
      _
    // Predicated region
    $region22: #{net_forward.1} parent=1 // pred_check
      _
    $region23: #{net_forward.1} parent=1 // pred_check_branch
      %52 = sbr.rel (0) target = $region25
    $region24: #{net_forward.1} parent=1 // pred_region
      %s54 = ssub.s32 4096, 4096
      %55 = vsyncadd [#allocation7], %s54
      %s56 = sshll.u32 [#allocation8], 4
      %s57 = int_to_ptr.vmem [resolvable:$true] %s56
      %62 = dma.hbm_to_vmem [thread:$0]  %s5, 4096, %s57, [#allocation7], 256, 256, 16
    $region25: #{net_forward.1} parent=1 // pred_fallthru
      _
    // Predicated region
    $region26: #{net_forward.1} parent=1 // pred_check
      _
    $region27: #{net_forward.1} parent=1 // pred_check_branch
      %64 = sbr.rel (0) target = $region29
    $region28: #{net_forward.1} parent=1 // pred_region
      _
    $region29: #{net_forward.1} parent=1 // pred_fallthru
      _
    // Predicated region
    $region30: #{net_forward.1} parent=1 // pred_check
      _
    $region31: #{net_forward.1} parent=1 // pred_check_branch
      %66 = sbr.rel (0) target = $region33
    $region32: #{net_forward.1} parent=1 // pred_region
      _
    $region33: #{net_forward.1} parent=1 // pred_fallthru
      _
    // Predicated region
    $region34: #{net_forward.1} parent=1 // pred_check
      _
    $region35: #{net_forward.1} parent=1 // pred_check_branch
      %68 = sbr.rel (0) target = $region37
    $region36: #{net_forward.1} parent=1 // pred_region
      _
    $region37: #{net_forward.1} parent=1 // pred_fallthru
      _
    // Predicated region
    $region38: #{net_forward.1} parent=1 // pred_check
      _
    $region39: #{net_forward.1} parent=1 // pred_check_branch
      %70 = sbr.rel (0) target = $region41
    $region40: #{net_forward.1} parent=1 // pred_region
      _
    $region41: #{net_forward.1} parent=1 // pred_fallthru
      _
    // Predicated region
    $region42: #{net_forward.1} parent=1 // pred_check
      _
    $region43: #{net_forward.1} parent=1 // pred_check_branch
      %72 = sbr.rel (0) target = $region45
    $region44: #{net_forward.1} parent=1 // pred_region
      _
    $region45: #{net_forward.1} parent=1 // pred_fallthru
      _
    // Predicated region
    $region46: #{net_forward.1} parent=1 // pred_check
      _
    $region47: #{net_forward.1} parent=1 // pred_check_branch
      %74 = sbr.rel (0) target = $region49
    $region48: #{net_forward.1} parent=1 // pred_region
      %75 = dma.done [#allocation5], 4096
    $region49: #{net_forward.1} parent=1 // pred_fallthru
      _
    // Predicated region
    $region50: #{net_forward.1} parent=1 // pred_check
      _
    $region51: #{net_forward.1} parent=1 // pred_check_branch
      %77 = sbr.rel (0) target = $region53
    $region52: #{net_forward.1} parent=1 // pred_region
      %78 = dma.done [#allocation7], 4096
    $region53: #{net_forward.1} parent=1 // pred_fallthru
      _
    // Predicated region
    $region54: #{net_forward.1} parent=1 // pred_check
      _
    $region55: #{net_forward.1} parent=1 // pred_check_branch
      %80 = sbr.rel (0) target = $region57
    $region56: #{net_forward.1} parent=1 // pred_region
      %81 = dma.done [#allocation7], 4096
    $region57: #{net_forward.1} parent=1 // pred_fallthru
      _
    %v83 = vld [vmem:[%s0] sm:$0xf]
    %v84 = vld [vmem:[%s0 + $0x4] sm:$0xf]
    %v85 = vld [vmem:[%s0 + $0x8] sm:$0xf]
    %v86 = vld [vmem:[%s0 + $0xc] sm:$0xf]
    %v87 = vld [vmem:[%s0 + $0x10] sm:$0xf]
    %v88 = vld [vmem:[%s0 + $0x14] sm:$0xf]
    %v89 = vld [vmem:[%s0 + $0x18] sm:$0xf]
    %v90 = vld [vmem:[%s0 + $0x1c] sm:$0xf]
    %v91 = vld [vmem:[%s1] sm:$0xff]
    %v92 = vld [vmem:[%s3] sm:$0xf]
    %v94 = vlaneseq
    %v95 = vshrl.u32 %v94, 7
    %v96 = vsub.s32 0, %v95
    %v97 = vrot.slane %v92, %v96
    %v98 = vlaneseq
    %v99 = vshrl.u32 %v98, 7
    %v100 = vsub.s32 1, %v99
    %v101 = vrot.slane %v92, %v100
    %v102 = vlaneseq
    %v103 = vshrl.u32 %v102, 7
    %v104 = vsub.s32 2, %v103
    %v105 = vrot.slane %v92, %v104
    %v106 = vlaneseq
    %v107 = vshrl.u32 %v106, 7
    %v108 = vsub.s32 3, %v107
    %v109 = vrot.slane %v92, %v108
    %v122 = vunpack.c.l.b16 %v83
    %v123 = vunpack.c.l.b16 %v84
    %v124 = vunpack.c.l.b16 %v85
    %v125 = vunpack.c.l.b16 %v86
    %v126 = vunpack.c.l.b16 %v87
    %v127 = vunpack.c.l.b16 %v88
    %v128 = vunpack.c.l.b16 %v89
    %v129 = vunpack.c.l.b16 %v90
    %v130 = vpack.c.b16 %v123, %v122
    %v131 = vpack.c.b16 %v125, %v124
    %v132 = vpack.c.b16 %v127, %v126
    %v133 = vpack.c.b16 %v129, %v128
    %v135 = vcombine.high %v91, %v91
    %v137 = vunpack.c.l.s4 1983009808
    %v138 = vunpack.c.0.s8 %v137
    %v139 = vlaneseq
    %v140 = vshrl.u32 %v139, 7
    %v141 = vsub.s32 %v138, %v140
    %v142 = vrot.slane %v91, %v141
    %v144 = vunpack.c.l.s4 1983009808
    %v145 = vunpack.c.0.s8 %v144
    %v146 = vlaneseq
    %v147 = vshrl.u32 %v146, 7
    %v148 = vsub.s32 %v145, %v147
    %v149 = vrot.slane %v135, %v148
    %v150 = vcombine.high %v142, %v142
    %v151 = vcombine.high %v149, %v149
    %vm152 = vcmask 31744
    %v154 = vsel %vm152, %v130, 0
    %v157 = vsel %vm152, %v131, 0
    %v160 = vsel %vm152, %v132, 0
    %v163 = vsel %vm152, %v133, 0
    %vm165 = vcmask 1041408
    %v167 = vsel %vm165, %v142, 0
    %v170 = vsel %vm165, %v150, 0
    %v173 = vsel %vm165, %v149, 0
    %v176 = vsel %vm165, %v151, 0
    %178 = vmatprep.subr.bf16.mxu0 %v170
    %179 = vmatpush1.bf16.msra.mxu0 %v167
    %180 = vmatprep.subr.bf16.mxu0 0
    %181 = vmatpush1.bf16.msra.mxu0 0
    %182 = vmatprep.subr.bf16.mxu0 0
    %183 = vmatpush1.bf16.msra.mxu0 0
    %184 = vmatprep.subr.bf16.mxu0 0
    %185 = vmatpush1.bf16.msra.mxu0 0
    %186 = vmatprep.subr.bf16.mxu0 0
    %187 = vmatpush1.bf16.msra.mxu0 0
    %188 = vmatprep.subr.bf16.mxu0 0
    %189 = vmatpush1.bf16.msra.mxu0 0
    %190 = vmatprep.subr.bf16.mxu0 0
    %191 = vmatpush1.bf16.msra.mxu0 0
    %192 = vmatprep.subr.bf16.mxu0 0
    %193 = vmatpush1.bf16.msra.mxu0 0
    %194 = vmatprep.subr.bf16.mxu0 0
    %195 = vmatpush1.bf16.msra.mxu0 0
    %196 = vmatprep.subr.bf16.mxu0 0
    %197 = vmatpush1.bf16.msra.mxu0 0
    %198 = vmatprep.subr.bf16.mxu0 0
    %199 = vmatpush1.bf16.msra.mxu0 0
    %200 = vmatprep.subr.bf16.mxu0 0
    %201 = vmatpush1.bf16.msra.mxu0 0
    %202 = vmatprep.subr.bf16.mxu0 0
    %203 = vmatpush1.bf16.msra.mxu0 0
    %204 = vmatprep.subr.bf16.mxu0 0
    %205 = vmatpush1.bf16.msra.mxu0 0
    %206 = vmatprep.subr.bf16.mxu0 0
    %207 = vmatpush1.bf16.msra.mxu0 0
    %208 = vmatprep.subr.bf16.mxu0 0
    %209 = vmatpush1.bf16.msra.mxu0 0
    %210 = vmatprep.mubr.bf16.mxu0 0
    %211 = vmatmul.mubr.bf16.gmra.mrb[0].mxu0 %v154
    %v212 = vpop.f32.mrb[0].mxu0
    %v213 = vadd.f32 %v97, %v212
    %v214 = vpop.f32.mrb[0].mxu0
    %v215 = vadd.f32 %v101, %v214
    %v216 = vpop.f32.mrb[0].mxu0
    %v217 = vadd.f32 %v97, %v216
    %v218 = vpop.f32.mrb[0].mxu0
    %v219 = vadd.f32 %v101, %v218
    %220 = vmatprep.mubr.bf16.mxu0 0
    %221 = vmatmul.mubr.bf16.gmra.mrb[0].mxu0 %v157
    %v222 = vpop.f32.mrb[0].mxu0
    %v223 = vadd.f32 %v97, %v222
    %v224 = vpop.f32.mrb[0].mxu0
    %v225 = vadd.f32 %v101, %v224
    %v226 = vpop.f32.mrb[0].mxu0
    %v227 = vadd.f32 %v97, %v226
    %v228 = vpop.f32.mrb[0].mxu0
    %v229 = vadd.f32 %v101, %v228
    %230 = vmatprep.mubr.bf16.mxu0 0
    %231 = vmatmul.mubr.bf16.gmra.mrb[0].mxu0 %v160
    %v232 = vpop.f32.mrb[0].mxu0
    %v233 = vadd.f32 %v97, %v232
    %v234 = vpop.f32.mrb[0].mxu0
    %v235 = vadd.f32 %v101, %v234
    %v236 = vpop.f32.mrb[0].mxu0
    %v237 = vadd.f32 %v97, %v236
    %v238 = vpop.f32.mrb[0].mxu0
    %v239 = vadd.f32 %v101, %v238
    %240 = vmatprep.mubr.bf16.mxu0 0
    %241 = vmatmul.mubr.bf16.gmra.mrb[0].mxu0 %v163
    %v242 = vpop.f32.mrb[0].mxu0
    %v243 = vadd.f32 %v97, %v242
    %v244 = vpop.f32.mrb[0].mxu0
    %v245 = vadd.f32 %v101, %v244
    %v246 = vpop.f32.mrb[0].mxu0
    %v247 = vadd.f32 %v97, %v246
    %v248 = vpop.f32.mrb[0].mxu0
    %v249 = vadd.f32 %v101, %v248
    %250 = vdwg.mxu0
    %251 = vmatprep.subr.bf16.mxu0 %v176
    %252 = vmatpush1.bf16.msra.mxu0 %v173
    %253 = vmatprep.subr.bf16.mxu0 0
    %254 = vmatpush1.bf16.msra.mxu0 0
    %255 = vmatprep.subr.bf16.mxu0 0
    %256 = vmatpush1.bf16.msra.mxu0 0
    %257 = vmatprep.subr.bf16.mxu0 0
    %258 = vmatpush1.bf16.msra.mxu0 0
    %259 = vmatprep.subr.bf16.mxu0 0
    %260 = vmatpush1.bf16.msra.mxu0 0
    %261 = vmatprep.subr.bf16.mxu0 0
    %262 = vmatpush1.bf16.msra.mxu0 0
    %263 = vmatprep.subr.bf16.mxu0 0
    %264 = vmatpush1.bf16.msra.mxu0 0
    %265 = vmatprep.subr.bf16.mxu0 0
    %266 = vmatpush1.bf16.msra.mxu0 0
    %267 = vmatprep.subr.bf16.mxu0 0
    %268 = vmatpush1.bf16.msra.mxu0 0
    %269 = vmatprep.subr.bf16.mxu0 0
    %270 = vmatpush1.bf16.msra.mxu0 0
    %271 = vmatprep.subr.bf16.mxu0 0
    %272 = vmatpush1.bf16.msra.mxu0 0
    %273 = vmatprep.subr.bf16.mxu0 0
    %274 = vmatpush1.bf16.msra.mxu0 0
    %275 = vmatprep.subr.bf16.mxu0 0
    %276 = vmatpush1.bf16.msra.mxu0 0
    %277 = vmatprep.subr.bf16.mxu0 0
    %278 = vmatpush1.bf16.msra.mxu0 0
    %279 = vmatprep.subr.bf16.mxu0 0
    %280 = vmatpush1.bf16.msra.mxu0 0
    %281 = vmatprep.subr.bf16.mxu0 0
    %282 = vmatpush1.bf16.msra.mxu0 0
    %283 = vmatprep.mubr.bf16.mxu0 0
    %284 = vmatmul.mubr.bf16.gmra.mrb[0].mxu0 %v154
    %v285 = vpop.f32.mrb[0].mxu0
    %v286 = vadd.f32 %v105, %v285
    %v287 = vpop.f32.mrb[0].mxu0
    %v288 = vadd.f32 %v109, %v287
    %v289 = vpop.f32.mrb[0].mxu0
    %v290 = vadd.f32 %v105, %v289
    %v291 = vpop.f32.mrb[0].mxu0
    %v292 = vadd.f32 %v109, %v291
    %293 = vmatprep.mubr.bf16.mxu0 0
    %294 = vmatmul.mubr.bf16.gmra.mrb[0].mxu0 %v157
    %v295 = vpop.f32.mrb[0].mxu0
    %v296 = vadd.f32 %v105, %v295
    %v297 = vpop.f32.mrb[0].mxu0
    %v298 = vadd.f32 %v109, %v297
    %v299 = vpop.f32.mrb[0].mxu0
    %v300 = vadd.f32 %v105, %v299
    %v301 = vpop.f32.mrb[0].mxu0
    %v302 = vadd.f32 %v109, %v301
    %303 = vmatprep.mubr.bf16.mxu0 0
    %304 = vmatmul.mubr.bf16.gmra.mrb[0].mxu0 %v160
    %v305 = vpop.f32.mrb[0].mxu0
    %v306 = vadd.f32 %v105, %v305
    %v307 = vpop.f32.mrb[0].mxu0
    %v308 = vadd.f32 %v109, %v307
    %v309 = vpop.f32.mrb[0].mxu0
    %v310 = vadd.f32 %v105, %v309
    %v311 = vpop.f32.mrb[0].mxu0
    %v312 = vadd.f32 %v109, %v311
    %313 = vmatprep.mubr.bf16.mxu0 0
    %314 = vmatmul.mubr.bf16.gmra.mrb[0].mxu0 %v163
    %v315 = vpop.f32.mrb[0].mxu0
    %v316 = vadd.f32 %v105, %v315
    %v317 = vpop.f32.mrb[0].mxu0
    %v318 = vadd.f32 %v109, %v317
    %v319 = vpop.f32.mrb[0].mxu0
    %v320 = vadd.f32 %v105, %v319
    %v321 = vpop.f32.mrb[0].mxu0
    %v322 = vadd.f32 %v109, %v321
    %323 = vdwg.mxu0
    %324 = vst [vmem:[#allocation2] sm:$0xff] %v213
    %325 = vst [vmem:[#allocation2 + $0x8] sm:$0xff] %v215
    %326 = vst [vmem:[#allocation2 + $0x10] sm:$0xff] %v286
    %327 = vst [vmem:[#allocation2 + $0x18] sm:$0xff] %v288
    %328 = vst [vmem:[#allocation2 + $0x20] sm:$0xff] %v217
    %329 = vst [vmem:[#allocation2 + $0x28] sm:$0xff] %v219
    %330 = vst [vmem:[#allocation2 + $0x30] sm:$0xff] %v290
    %331 = vst [vmem:[#allocation2 + $0x38] sm:$0xff] %v292
    %332 = vst [vmem:[#allocation2 + $0x40] sm:$0xff] %v223
    %333 = vst [vmem:[#allocation2 + $0x48] sm:$0xff] %v225
    %334 = vst [vmem:[#allocation2 + $0x50] sm:$0xff] %v296
    %335 = vst [vmem:[#allocation2 + $0x58] sm:$0xff] %v298
    %336 = vst [vmem:[#allocation2 + $0x60] sm:$0xff] %v227
    %337 = vst [vmem:[#allocation2 + $0x68] sm:$0xff] %v229
    %338 = vst [vmem:[#allocation2 + $0x70] sm:$0xff] %v300
    %339 = vst [vmem:[#allocation2 + $0x78] sm:$0xff] %v302
    %340 = vst [vmem:[#allocation2 + $0x80] sm:$0xff] %v233
    %341 = vst [vmem:[#allocation2 + $0x88] sm:$0xff] %v235
    %342 = vst [vmem:[#allocation2 + $0x90] sm:$0xff] %v306
    %343 = vst [vmem:[#allocation2 + $0x98] sm:$0xff] %v308
    %344 = vst [vmem:[#allocation2 + $0xa0] sm:$0xff] %v237
    %345 = vst [vmem:[#allocation2 + $0xa8] sm:$0xff] %v239
    %346 = vst [vmem:[#allocation2 + $0xb0] sm:$0xff] %v310
    %347 = vst [vmem:[#allocation2 + $0xb8] sm:$0xff] %v312
    %348 = vst [vmem:[#allocation2 + $0xc0] sm:$0xff] %v243
    %349 = vst [vmem:[#allocation2 + $0xc8] sm:$0xff] %v245
    %350 = vst [vmem:[#allocation2 + $0xd0] sm:$0xff] %v316
    %351 = vst [vmem:[#allocation2 + $0xd8] sm:$0xff] %v318
    %352 = vst [vmem:[#allocation2 + $0xe0] sm:$0xff] %v247
    %353 = vst [vmem:[#allocation2 + $0xe8] sm:$0xff] %v249
    %354 = vst [vmem:[#allocation2 + $0xf0] sm:$0xff] %v320
    %355 = vst [vmem:[#allocation2 + $0xf8] sm:$0xff] %v322
    %v356 = vld [vmem:[%s9] sm:$0xff]
    %s357 = scalar_lea.vmem %s9, 8
    %v358 = vld [vmem:[%s357] sm:$0xff]
    %v359 = vld [vmem:[%s10] sm:$0xff]
    %s360 = scalar_lea.vmem %s10, 8
    %v361 = vld [vmem:[%s360] sm:$0xff]
    %v362 = vld [vmem:[#allocation2] sm:$0xff]
    %v363 = vld [vmem:[#allocation2 + $0x8] sm:$0xff]
    %v364 = vld [vmem:[#allocation2 + $0x10] sm:$0xff]
    %v365 = vld [vmem:[#allocation2 + $0x18] sm:$0xff]
    %v366 = vpack.c.bf16 %v356, %v356
    %v367 = vld [vmem:[#allocation4] sm:$0xff]
    %v368 = vld [vmem:[#allocation4 + $0x8] sm:$0xff]
    %v369 = vld [vmem:[#allocation4 + $0x10] sm:$0xff]
    %v370 = vld [vmem:[#allocation4 + $0x18] sm:$0xff]
    %v371 = vld [vmem:[#allocation4 + $0x20] sm:$0xff]
    %v372 = vld [vmem:[#allocation4 + $0x28] sm:$0xff]
    %v373 = vld [vmem:[#allocation4 + $0x30] sm:$0xff]
    %v374 = vld [vmem:[#allocation4 + $0x38] sm:$0xff]
    %v375 = vld [vmem:[#allocation4 + $0x40] sm:$0xff]
    %v376 = vld [vmem:[#allocation4 + $0x48] sm:$0xff]
    %v377 = vld [vmem:[#allocation4 + $0x50] sm:$0xff]
    %v378 = vld [vmem:[#allocation4 + $0x58] sm:$0xff]
    %v379 = vld [vmem:[#allocation4 + $0x60] sm:$0xff]
    %v380 = vld [vmem:[#allocation4 + $0x68] sm:$0xff]
    %v381 = vld [vmem:[#allocation4 + $0x70] sm:$0xff]
    %v382 = vld [vmem:[#allocation4 + $0x78] sm:$0xff]
    %v383 = vld [vmem:[#allocation4 + $0x80] sm:$0xff]
    %v384 = vld [vmem:[#allocation4 + $0x88] sm:$0xff]
    %v385 = vld [vmem:[#allocation4 + $0x90] sm:$0xff]
    %v386 = vld [vmem:[#allocation4 + $0x98] sm:$0xff]
    %v387 = vld [vmem:[#allocation4 + $0xa0] sm:$0xff]
    %v388 = vld [vmem:[#allocation4 + $0xa8] sm:$0xff]
    %v389 = vld [vmem:[#allocation4 + $0xb0] sm:$0xff]
    %v390 = vld [vmem:[#allocation4 + $0xb8] sm:$0xff]
    %v391 = vld [vmem:[#allocation4 + $0xc0] sm:$0xff]
    %v392 = vld [vmem:[#allocation4 + $0xc8] sm:$0xff]
    %v393 = vld [vmem:[#allocation4 + $0xd0] sm:$0xff]
    %v394 = vld [vmem:[#allocation4 + $0xd8] sm:$0xff]
    %v395 = vld [vmem:[#allocation4 + $0xe0] sm:$0xff]
    %v396 = vld [vmem:[#allocation4 + $0xe8] sm:$0xff]
    %v397 = vld [vmem:[#allocation4 + $0xf0] sm:$0xff]
    %v398 = vld [vmem:[#allocation4 + $0xf8] sm:$0xff]
    %v431 = vunpack.c.l.b16 %v367
    %v432 = vunpack.c.h.b16 %v367
    %v433 = vunpack.c.l.b16 %v368
    %v434 = vunpack.c.h.b16 %v368
    %v435 = vunpack.c.l.b16 %v369
    %v436 = vunpack.c.h.b16 %v369
    %v437 = vunpack.c.l.b16 %v370
    %v438 = vunpack.c.h.b16 %v370
    %v439 = vunpack.c.l.b16 %v371
    %v440 = vunpack.c.h.b16 %v371
    %v441 = vunpack.c.l.b16 %v372
    %v442 = vunpack.c.h.b16 %v372
    %v443 = vunpack.c.l.b16 %v373
    %v444 = vunpack.c.h.b16 %v373
    %v445 = vunpack.c.l.b16 %v374
    %v446 = vunpack.c.h.b16 %v374
    %v447 = vunpack.c.l.b16 %v375
    %v448 = vunpack.c.h.b16 %v375
    %v449 = vunpack.c.l.b16 %v376
    %v450 = vunpack.c.h.b16 %v376
    %v451 = vunpack.c.l.b16 %v377
    %v452 = vunpack.c.h.b16 %v377
    %v453 = vunpack.c.l.b16 %v378
    %v454 = vunpack.c.h.b16 %v378
    %v455 = vunpack.c.l.b16 %v379
    %v456 = vunpack.c.h.b16 %v379
    %v457 = vunpack.c.l.b16 %v380
    %v458 = vunpack.c.h.b16 %v380
    %v459 = vunpack.c.l.b16 %v381
    %v460 = vunpack.c.h.b16 %v381
    %v461 = vunpack.c.l.b16 %v382
    %v462 = vunpack.c.h.b16 %v382
    %v463 = vunpack.c.l.b16 %v383
    %v464 = vunpack.c.h.b16 %v383
    %v465 = vunpack.c.l.b16 %v384
    %v466 = vunpack.c.h.b16 %v384
    %v467 = vunpack.c.l.b16 %v385
    %v468 = vunpack.c.h.b16 %v385
    %v469 = vunpack.c.l.b16 %v386
    %v470 = vunpack.c.h.b16 %v386
    %v471 = vunpack.c.l.b16 %v387
    %v472 = vunpack.c.h.b16 %v387
    %v473 = vunpack.c.l.b16 %v388
    %v474 = vunpack.c.h.b16 %v388
    %v475 = vunpack.c.l.b16 %v389
    %v476 = vunpack.c.h.b16 %v389
    %v477 = vunpack.c.l.b16 %v390
    %v478 = vunpack.c.h.b16 %v390
    %v479 = vunpack.c.l.b16 %v391
    %v480 = vunpack.c.h.b16 %v391
    %v481 = vunpack.c.l.b16 %v392
    %v482 = vunpack.c.h.b16 %v392
    %v483 = vunpack.c.l.b16 %v393
    %v484 = vunpack.c.h.b16 %v393
    %v485 = vunpack.c.l.b16 %v394
    %v486 = vunpack.c.h.b16 %v394
    %v487 = vunpack.c.l.b16 %v395
    %v488 = vunpack.c.h.b16 %v395
    %v489 = vunpack.c.l.b16 %v396
    %v490 = vunpack.c.h.b16 %v396
    %v491 = vunpack.c.l.b16 %v397
    %v492 = vunpack.c.h.b16 %v397
    %v493 = vunpack.c.l.b16 %v398
    %v494 = vunpack.c.h.b16 %v398
    %v495 = vpack.c.b16 %v435, %v431
    %v496 = vpack.c.b16 %v436, %v432
    %v497 = vpack.c.b16 %v437, %v433
    %v498 = vpack.c.b16 %v438, %v434
    %v499 = vpack.c.b16 %v443, %v439
    %v500 = vpack.c.b16 %v444, %v440
    %v501 = vpack.c.b16 %v445, %v441
    %v502 = vpack.c.b16 %v446, %v442
    %v503 = vpack.c.b16 %v451, %v447
    %v504 = vpack.c.b16 %v452, %v448
    %v505 = vpack.c.b16 %v453, %v449
    %v506 = vpack.c.b16 %v454, %v450
    %v507 = vpack.c.b16 %v459, %v455
    %v508 = vpack.c.b16 %v460, %v456
    %v509 = vpack.c.b16 %v461, %v457
    %v510 = vpack.c.b16 %v462, %v458
    %v511 = vpack.c.b16 %v467, %v463
    %v512 = vpack.c.b16 %v468, %v464
    %v513 = vpack.c.b16 %v469, %v465
    %v514 = vpack.c.b16 %v470, %v466
    %v515 = vpack.c.b16 %v475, %v471
    %v516 = vpack.c.b16 %v476, %v472
    %v517 = vpack.c.b16 %v477, %v473
    %v518 = vpack.c.b16 %v478, %v474
    %v519 = vpack.c.b16 %v483, %v479
    %v520 = vpack.c.b16 %v484, %v480
    %v521 = vpack.c.b16 %v485, %v481
    %v522 = vpack.c.b16 %v486, %v482
    %v523 = vpack.c.b16 %v491, %v487
    %v524 = vpack.c.b16 %v492, %v488
    %v525 = vpack.c.b16 %v493, %v489
    %v526 = vpack.c.b16 %v494, %v490
    %559 = vmatprep.subr.bf16.mxu0 %v496
    %560 = vmatpush1.bf16.msra.mxu0 %v495
    %561 = vmatprep.subr.bf16.mxu0 %v500
    %562 = vmatpush1.bf16.msra.mxu0 %v499
    %563 = vmatprep.subr.bf16.mxu0 %v504
    %564 = vmatpush1.bf16.msra.mxu0 %v503
    %565 = vmatprep.subr.bf16.mxu0 %v508
    %566 = vmatpush1.bf16.msra.mxu0 %v507
    %567 = vmatprep.subr.bf16.mxu0 %v512
    %568 = vmatpush1.bf16.msra.mxu0 %v511
    %569 = vmatprep.subr.bf16.mxu0 %v516
    %570 = vmatpush1.bf16.msra.mxu0 %v515
    %571 = vmatprep.subr.bf16.mxu0 %v520
    %572 = vmatpush1.bf16.msra.mxu0 %v519
    %573 = vmatprep.subr.bf16.mxu0 %v524
    %574 = vmatpush1.bf16.msra.mxu0 %v523
    %575 = vmatprep.subr.bf16.mxu0 0
    %576 = vmatpush1.bf16.msra.mxu0 0
    %577 = vmatprep.subr.bf16.mxu0 0
    %578 = vmatpush1.bf16.msra.mxu0 0
    %579 = vmatprep.subr.bf16.mxu0 0
    %580 = vmatpush1.bf16.msra.mxu0 0
    %581 = vmatprep.subr.bf16.mxu0 0
    %582 = vmatpush1.bf16.msra.mxu0 0
    %583 = vmatprep.subr.bf16.mxu0 0
    %584 = vmatpush1.bf16.msra.mxu0 0
    %585 = vmatprep.subr.bf16.mxu0 0
    %586 = vmatpush1.bf16.msra.mxu0 0
    %587 = vmatprep.subr.bf16.mxu0 0
    %588 = vmatpush1.bf16.msra.mxu0 0
    %589 = vmatprep.subr.bf16.mxu0 0
    %590 = vmatpush1.bf16.msra.mxu0 0
    %591 = vmatprep.mubr.bf16.mxu0 0
    %592 = vmatmul.mubr.bf16.gmra.mrb[0].mxu0 %v366
    %v593 = vpop.f32.mrb[0].mxu0
    %v594 = vadd.f32 0.0, %v593
    %v595 = vpop.f32.mrb[0].mxu0
    %v596 = vadd.f32 0.0, %v595
    %v597 = vpop.f32.mrb[0].mxu0
    %v598 = vpop.f32.mrb[0].mxu0
    %599 = vdwg.mxu0
    %600 = vmatprep.subr.bf16.mxu0 %v498
    %601 = vmatpush1.bf16.msra.mxu0 %v497
    %602 = vmatprep.subr.bf16.mxu0 %v502
    %603 = vmatpush1.bf16.msra.mxu0 %v501
    %604 = vmatprep.subr.bf16.mxu0 %v506
    %605 = vmatpush1.bf16.msra.mxu0 %v505
    %606 = vmatprep.subr.bf16.mxu0 %v510
    %607 = vmatpush1.bf16.msra.mxu0 %v509
    %608 = vmatprep.subr.bf16.mxu0 %v514
    %609 = vmatpush1.bf16.msra.mxu0 %v513
    %610 = vmatprep.subr.bf16.mxu0 %v518
    %611 = vmatpush1.bf16.msra.mxu0 %v517
    %612 = vmatprep.subr.bf16.mxu0 %v522
    %613 = vmatpush1.bf16.msra.mxu0 %v521
    %614 = vmatprep.subr.bf16.mxu0 %v526
    %615 = vmatpush1.bf16.msra.mxu0 %v525
    %616 = vmatprep.subr.bf16.mxu0 0
    %617 = vmatpush1.bf16.msra.mxu0 0
    %618 = vmatprep.subr.bf16.mxu0 0
    %619 = vmatpush1.bf16.msra.mxu0 0
    %620 = vmatprep.subr.bf16.mxu0 0
    %621 = vmatpush1.bf16.msra.mxu0 0
    %622 = vmatprep.subr.bf16.mxu0 0
    %623 = vmatpush1.bf16.msra.mxu0 0
    %624 = vmatprep.subr.bf16.mxu0 0
    %625 = vmatpush1.bf16.msra.mxu0 0
    %626 = vmatprep.subr.bf16.mxu0 0
    %627 = vmatpush1.bf16.msra.mxu0 0
    %628 = vmatprep.subr.bf16.mxu0 0
    %629 = vmatpush1.bf16.msra.mxu0 0
    %630 = vmatprep.subr.bf16.mxu0 0
    %631 = vmatpush1.bf16.msra.mxu0 0
    %632 = vmatprep.mubr.bf16.mxu0 0
    %633 = vmatmul.mubr.bf16.gmra.mrb[0].mxu0 %v366
    %v634 = vpop.f32.mrb[0].mxu0
    %v635 = vadd.f32 0.0, %v634
    %v636 = vpop.f32.mrb[0].mxu0
    %v637 = vadd.f32 0.0, %v636
    %v638 = vpop.f32.mrb[0].mxu0
    %v639 = vpop.f32.mrb[0].mxu0
    %640 = vdwg.mxu0
    %v641 = vadd.f32 %v362, %v594
    %v642 = vadd.f32 %v363, %v596
    %v643 = vadd.f32 %v364, %v635
    %v644 = vadd.f32 %v365, %v637
    %v645 = vxor.u32 %v641, 2147483648
    %v646 = vmul.f32 %v645, 1.442695
    %v647 = vpow.pop %v646
    %v648 = vadd.f32 %v647, 1.0
    %v649 = vrcp.pop %v648
    %v650 = vmul.f32 1.0, %v649
    %v651 = vxor.u32 %v642, 2147483648
    %v652 = vmul.f32 %v651, 1.442695
    %v653 = vpow.pop %v652
    %v654 = vadd.f32 %v653, 1.0
    %v655 = vrcp.pop %v654
    %v656 = vmul.f32 1.0, %v655
    %v657 = vtanh.pop %v643
    %v658 = vxor.u32 %v644, 2147483648
    %v659 = vmul.f32 %v658, 1.442695
    %v660 = vpow.pop %v659
    %v661 = vadd.f32 %v660, 1.0
    %v662 = vrcp.pop %v661
    %v663 = vmul.f32 1.0, %v662
    %v664 = vmul.f32 %v656, %v359
    %v665 = vmul.f32 %v650, %v657
    %v666 = vadd.f32 %v664, %v665
    %v667 = vtanh.pop %v666
    %v668 = vmul.f32 %v663, %v667
    %v669 = vld [vmem:[#allocation2 + $0x20] sm:$0xff]
    %v670 = vld [vmem:[#allocation2 + $0x28] sm:$0xff]
    %v671 = vld [vmem:[#allocation2 + $0x30] sm:$0xff]
    %v672 = vld [vmem:[#allocation2 + $0x38] sm:$0xff]
    %v673 = vpack.c.bf16 %v668, %v668
    %674 = vmatprep.subr.bf16.mxu0 %v496
    %675 = vmatpush1.bf16.msra.mxu0 %v495
    %676 = vmatprep.subr.bf16.mxu0 %v500
    %677 = vmatpush1.bf16.msra.mxu0 %v499
    %678 = vmatprep.subr.bf16.mxu0 %v504
    %679 = vmatpush1.bf16.msra.mxu0 %v503
    %680 = vmatprep.subr.bf16.mxu0 %v508
    %681 = vmatpush1.bf16.msra.mxu0 %v507
    %682 = vmatprep.subr.bf16.mxu0 %v512
    %683 = vmatpush1.bf16.msra.mxu0 %v511
    %684 = vmatprep.subr.bf16.mxu0 %v516
    %685 = vmatpush1.bf16.msra.mxu0 %v515
    %686 = vmatprep.subr.bf16.mxu0 %v520
    %687 = vmatpush1.bf16.msra.mxu0 %v519
    %688 = vmatprep.subr.bf16.mxu0 %v524
    %689 = vmatpush1.bf16.msra.mxu0 %v523
    %690 = vmatprep.subr.bf16.mxu0 0
    %691 = vmatpush1.bf16.msra.mxu0 0
    %692 = vmatprep.subr.bf16.mxu0 0
    %693 = vmatpush1.bf16.msra.mxu0 0
    %694 = vmatprep.subr.bf16.mxu0 0
    %695 = vmatpush1.bf16.msra.mxu0 0
    %696 = vmatprep.subr.bf16.mxu0 0
    %697 = vmatpush1.bf16.msra.mxu0 0
    %698 = vmatprep.subr.bf16.mxu0 0
    %699 = vmatpush1.bf16.msra.mxu0 0
    %700 = vmatprep.subr.bf16.mxu0 0
    %701 = vmatpush1.bf16.msra.mxu0 0
    %702 = vmatprep.subr.bf16.mxu0 0
    %703 = vmatpush1.bf16.msra.mxu0 0
    %704 = vmatprep.subr.bf16.mxu0 0
    %705 = vmatpush1.bf16.msra.mxu0 0
    %706 = vmatprep.mubr.bf16.mxu0 0
    %707 = vmatmul.mubr.bf16.gmra.mrb[0].mxu0 %v673
    %v708 = vpop.f32.mrb[0].mxu0
    %v709 = vadd.f32 0.0, %v708
    %v710 = vpop.f32.mrb[0].mxu0
    %v711 = vadd.f32 0.0, %v710
    %v712 = vpop.f32.mrb[0].mxu0
    %v713 = vpop.f32.mrb[0].mxu0
    %714 = vdwg.mxu0
    %715 = vmatprep.subr.bf16.mxu0 %v498
    %716 = vmatpush1.bf16.msra.mxu0 %v497
    %717 = vmatprep.subr.bf16.mxu0 %v502
    %718 = vmatpush1.bf16.msra.mxu0 %v501
    %719 = vmatprep.subr.bf16.mxu0 %v506
    %720 = vmatpush1.bf16.msra.mxu0 %v505
    %721 = vmatprep.subr.bf16.mxu0 %v510
    %722 = vmatpush1.bf16.msra.mxu0 %v509
    %723 = vmatprep.subr.bf16.mxu0 %v514
    %724 = vmatpush1.bf16.msra.mxu0 %v513
    %725 = vmatprep.subr.bf16.mxu0 %v518
    %726 = vmatpush1.bf16.msra.mxu0 %v517
    %727 = vmatprep.subr.bf16.mxu0 %v522
    %728 = vmatpush1.bf16.msra.mxu0 %v521
    %729 = vmatprep.subr.bf16.mxu0 %v526
    %730 = vmatpush1.bf16.msra.mxu0 %v525
    %731 = vmatprep.subr.bf16.mxu0 0
    %732 = vmatpush1.bf16.msra.mxu0 0
    %733 = vmatprep.subr.bf16.mxu0 0
    %734 = vmatpush1.bf16.msra.mxu0 0
    %735 = vmatprep.subr.bf16.mxu0 0
    %736 = vmatpush1.bf16.msra.mxu0 0
    %737 = vmatprep.subr.bf16.mxu0 0
    %738 = vmatpush1.bf16.msra.mxu0 0
    %739 = vmatprep.subr.bf16.mxu0 0
    %740 = vmatpush1.bf16.msra.mxu0 0
    %741 = vmatprep.subr.bf16.mxu0 0
    %742 = vmatpush1.bf16.msra.mxu0 0
    %743 = vmatprep.subr.bf16.mxu0 0
    %744 = vmatpush1.bf16.msra.mxu0 0
    %745 = vmatprep.subr.bf16.mxu0 0
    %746 = vmatpush1.bf16.msra.mxu0 0
    %747 = vmatprep.mubr.bf16.mxu0 0
    %748 = vmatmul.mubr.bf16.gmra.mrb[0].mxu0 %v673
    %v749 = vpop.f32.mrb[0].mxu0
    %v750 = vadd.f32 0.0, %v749
    %v751 = vpop.f32.mrb[0].mxu0
    %v752 = vadd.f32 0.0, %v751
    %v753 = vpop.f32.mrb[0].mxu0
    %v754 = vpop.f32.mrb[0].mxu0
    %755 = vdwg.mxu0
    %v756 = vadd.f32 %v669, %v709
    %v757 = vadd.f32 %v670, %v711
    %v758 = vadd.f32 %v671, %v750
    %v759 = vadd.f32 %v672, %v752
    %v760 = vxor.u32 %v756, 2147483648
    %v761 = vmul.f32 %v760, 1.442695
    %v762 = vpow.pop %v761
    %v763 = vadd.f32 %v762, 1.0
    %v764 = vrcp.pop %v763
    %v765 = vmul.f32 1.0, %v764
    %v766 = vxor.u32 %v757, 2147483648
    %v767 = vmul.f32 %v766, 1.442695
    %v768 = vpow.pop %v767
    %v769 = vadd.f32 %v768, 1.0
    %v770 = vrcp.pop %v769
    %v771 = vmul.f32 1.0, %v770
    %v772 = vtanh.pop %v758
    %v773 = vxor.u32 %v759, 2147483648
    %v774 = vmul.f32 %v773, 1.442695
    %v775 = vpow.pop %v774
    %v776 = vadd.f32 %v775, 1.0
    %v777 = vrcp.pop %v776
    %v778 = vmul.f32 1.0, %v777
    %v779 = vmul.f32 %v771, %v666
    %v780 = vmul.f32 %v765, %v772
    %v781 = vadd.f32 %v779, %v780
    %v782 = vtanh.pop %v781
    %v783 = vmul.f32 %v778, %v782
    %v784 = vld [vmem:[#allocation6] sm:$0xff]
    %v785 = vld [vmem:[#allocation6 + $0x8] sm:$0xff]
    %v786 = vld [vmem:[#allocation6 + $0x10] sm:$0xff]
    %v787 = vld [vmem:[#allocation6 + $0x18] sm:$0xff]
    %v788 = vld [vmem:[#allocation6 + $0x20] sm:$0xff]
    %v789 = vld [vmem:[#allocation6 + $0x28] sm:$0xff]
    %v790 = vld [vmem:[#allocation6 + $0x30] sm:$0xff]
    %v791 = vld [vmem:[#allocation6 + $0x38] sm:$0xff]
    %v792 = vld [vmem:[#allocation6 + $0x40] sm:$0xff]
    %v793 = vld [vmem:[#allocation6 + $0x48] sm:$0xff]
    %v794 = vld [vmem:[#allocation6 + $0x50] sm:$0xff]
    %v795 = vld [vmem:[#allocation6 + $0x58] sm:$0xff]
    %v796 = vld [vmem:[#allocation6 + $0x60] sm:$0xff]
    %v797 = vld [vmem:[#allocation6 + $0x68] sm:$0xff]
    %v798 = vld [vmem:[#allocation6 + $0x70] sm:$0xff]
    %v799 = vld [vmem:[#allocation6 + $0x78] sm:$0xff]
    %v800 = vld [vmem:[#allocation6 + $0x80] sm:$0xff]
    %v801 = vld [vmem:[#allocation6 + $0x88] sm:$0xff]
    %v802 = vld [vmem:[#allocation6 + $0x90] sm:$0xff]
    %v803 = vld [vmem:[#allocation6 + $0x98] sm:$0xff]
    %v804 = vld [vmem:[#allocation6 + $0xa0] sm:$0xff]
    %v805 = vld [vmem:[#allocation6 + $0xa8] sm:$0xff]
    %v806 = vld [vmem:[#allocation6 + $0xb0] sm:$0xff]
    %v807 = vld [vmem:[#allocation6 + $0xb8] sm:$0xff]
    %v808 = vld [vmem:[#allocation6 + $0xc0] sm:$0xff]
    %v809 = vld [vmem:[#allocation6 + $0xc8] sm:$0xff]
    %v810 = vld [vmem:[#allocation6 + $0xd0] sm:$0xff]
    %v811 = vld [vmem:[#allocation6 + $0xd8] sm:$0xff]
    %v812 = vld [vmem:[#allocation6 + $0xe0] sm:$0xff]
    %v813 = vld [vmem:[#allocation6 + $0xe8] sm:$0xff]
    %v814 = vld [vmem:[#allocation6 + $0xf0] sm:$0xff]
    %v815 = vld [vmem:[#allocation6 + $0xf8] sm:$0xff]
    %v816 = vld [vmem:[%s6] sm:$0xf]
    %v818 = vlaneseq
    %v819 = vshrl.u32 %v818, 7
    %v820 = vsub.s32 0, %v819
    %v821 = vrot.slane %v816, %v820
    %v822 = vlaneseq
    %v823 = vshrl.u32 %v822, 7
    %v824 = vsub.s32 1, %v823
    %v825 = vrot.slane %v816, %v824
    %v826 = vlaneseq
    %v827 = vshrl.u32 %v826, 7
    %v828 = vsub.s32 2, %v827
    %v829 = vrot.slane %v816, %v828
    %v830 = vlaneseq
    %v831 = vshrl.u32 %v830, 7
    %v832 = vsub.s32 3, %v831
    %v833 = vrot.slane %v816, %v832
    %v870 = vunpack.c.l.b16 %v784
    %v871 = vunpack.c.h.b16 %v784
    %v872 = vunpack.c.l.b16 %v785
    %v873 = vunpack.c.h.b16 %v785
    %v874 = vunpack.c.l.b16 %v786
    %v875 = vunpack.c.h.b16 %v786
    %v876 = vunpack.c.l.b16 %v787
    %v877 = vunpack.c.h.b16 %v787
    %v878 = vunpack.c.l.b16 %v788
    %v879 = vunpack.c.h.b16 %v788
    %v880 = vunpack.c.l.b16 %v789
    %v881 = vunpack.c.h.b16 %v789
    %v882 = vunpack.c.l.b16 %v790
    %v883 = vunpack.c.h.b16 %v790
    %v884 = vunpack.c.l.b16 %v791
    %v885 = vunpack.c.h.b16 %v791
    %v886 = vunpack.c.l.b16 %v792
    %v887 = vunpack.c.h.b16 %v792
    %v888 = vunpack.c.l.b16 %v793
    %v889 = vunpack.c.h.b16 %v793
    %v890 = vunpack.c.l.b16 %v794
    %v891 = vunpack.c.h.b16 %v794
    %v892 = vunpack.c.l.b16 %v795
    %v893 = vunpack.c.h.b16 %v795
    %v894 = vunpack.c.l.b16 %v796
    %v895 = vunpack.c.h.b16 %v796
    %v896 = vunpack.c.l.b16 %v797
    %v897 = vunpack.c.h.b16 %v797
    %v898 = vunpack.c.l.b16 %v798
    %v899 = vunpack.c.h.b16 %v798
    %v900 = vunpack.c.l.b16 %v799
    %v901 = vunpack.c.h.b16 %v799
    %v902 = vunpack.c.l.b16 %v800
    %v903 = vunpack.c.h.b16 %v800
    %v904 = vunpack.c.l.b16 %v801
    %v905 = vunpack.c.h.b16 %v801
    %v906 = vunpack.c.l.b16 %v802
    %v907 = vunpack.c.h.b16 %v802
    %v908 = vunpack.c.l.b16 %v803
    %v909 = vunpack.c.h.b16 %v803
    %v910 = vunpack.c.l.b16 %v804
    %v911 = vunpack.c.h.b16 %v804
    %v912 = vunpack.c.l.b16 %v805
    %v913 = vunpack.c.h.b16 %v805
    %v914 = vunpack.c.l.b16 %v806
    %v915 = vunpack.c.h.b16 %v806
    %v916 = vunpack.c.l.b16 %v807
    %v917 = vunpack.c.h.b16 %v807
    %v918 = vunpack.c.l.b16 %v808
    %v919 = vunpack.c.h.b16 %v808
    %v920 = vunpack.c.l.b16 %v809
    %v921 = vunpack.c.h.b16 %v809
    %v922 = vunpack.c.l.b16 %v810
    %v923 = vunpack.c.h.b16 %v810
    %v924 = vunpack.c.l.b16 %v811
    %v925 = vunpack.c.h.b16 %v811
    %v926 = vunpack.c.l.b16 %v812
    %v927 = vunpack.c.h.b16 %v812
    %v928 = vunpack.c.l.b16 %v813
    %v929 = vunpack.c.h.b16 %v813
    %v930 = vunpack.c.l.b16 %v814
    %v931 = vunpack.c.h.b16 %v814
    %v932 = vunpack.c.l.b16 %v815
    %v933 = vunpack.c.h.b16 %v815
    %v934 = vpack.c.b16 %v874, %v870
    %v935 = vpack.c.b16 %v875, %v871
    %v936 = vpack.c.b16 %v876, %v872
    %v937 = vpack.c.b16 %v877, %v873
    %v938 = vpack.c.b16 %v882, %v878
    %v939 = vpack.c.b16 %v883, %v879
    %v940 = vpack.c.b16 %v884, %v880
    %v941 = vpack.c.b16 %v885, %v881
    %v942 = vpack.c.b16 %v890, %v886
    %v943 = vpack.c.b16 %v891, %v887
    %v944 = vpack.c.b16 %v892, %v888
    %v945 = vpack.c.b16 %v893, %v889
    %v946 = vpack.c.b16 %v898, %v894
    %v947 = vpack.c.b16 %v899, %v895
    %v948 = vpack.c.b16 %v900, %v896
    %v949 = vpack.c.b16 %v901, %v897
    %v950 = vpack.c.b16 %v906, %v902
    %v951 = vpack.c.b16 %v907, %v903
    %v952 = vpack.c.b16 %v908, %v904
    %v953 = vpack.c.b16 %v909, %v905
    %v954 = vpack.c.b16 %v914, %v910
    %v955 = vpack.c.b16 %v915, %v911
    %v956 = vpack.c.b16 %v916, %v912
    %v957 = vpack.c.b16 %v917, %v913
    %v958 = vpack.c.b16 %v922, %v918
    %v959 = vpack.c.b16 %v923, %v919
    %v960 = vpack.c.b16 %v924, %v920
    %v961 = vpack.c.b16 %v925, %v921
    %v962 = vpack.c.b16 %v930, %v926
    %v963 = vpack.c.b16 %v931, %v927
    %v964 = vpack.c.b16 %v932, %v928
    %v965 = vpack.c.b16 %v933, %v929
    %998 = vmatprep.subr.bf16.mxu0 %v935
    %999 = vmatpush1.bf16.msra.mxu0 %v934
    %1000 = vmatprep.subr.bf16.mxu0 %v939
    %1001 = vmatpush1.bf16.msra.mxu0 %v938
    %1002 = vmatprep.subr.bf16.mxu0 %v943
    %1003 = vmatpush1.bf16.msra.mxu0 %v942
    %1004 = vmatprep.subr.bf16.mxu0 %v947
    %1005 = vmatpush1.bf16.msra.mxu0 %v946
    %1006 = vmatprep.subr.bf16.mxu0 %v951
    %1007 = vmatpush1.bf16.msra.mxu0 %v950
    %1008 = vmatprep.subr.bf16.mxu0 %v955
    %1009 = vmatpush1.bf16.msra.mxu0 %v954
    %1010 = vmatprep.subr.bf16.mxu0 %v959
    %1011 = vmatpush1.bf16.msra.mxu0 %v958
    %1012 = vmatprep.subr.bf16.mxu0 %v963
    %1013 = vmatpush1.bf16.msra.mxu0 %v962
    %1014 = vmatprep.subr.bf16.mxu0 0
    %1015 = vmatpush1.bf16.msra.mxu0 0
    %1016 = vmatprep.subr.bf16.mxu0 0
    %1017 = vmatpush1.bf16.msra.mxu0 0
    %1018 = vmatprep.subr.bf16.mxu0 0
    %1019 = vmatpush1.bf16.msra.mxu0 0
    %1020 = vmatprep.subr.bf16.mxu0 0
    %1021 = vmatpush1.bf16.msra.mxu0 0
    %1022 = vmatprep.subr.bf16.mxu0 0
    %1023 = vmatpush1.bf16.msra.mxu0 0
    %1024 = vmatprep.subr.bf16.mxu0 0
    %1025 = vmatpush1.bf16.msra.mxu0 0
    %1026 = vmatprep.subr.bf16.mxu0 0
    %1027 = vmatpush1.bf16.msra.mxu0 0
    %1028 = vmatprep.subr.bf16.mxu0 0
    %1029 = vmatpush1.bf16.msra.mxu0 0
    %1030 = vmatprep.mubr.bf16.mxu0 0
    %1031 = vmatmul.mubr.bf16.gmra.mrb[0].mxu0 %v673
    %v1032 = vpop.f32.mrb[0].mxu0
    %v1033 = vadd.f32 %v821, %v1032
    %v1034 = vpop.f32.mrb[0].mxu0
    %v1035 = vadd.f32 %v825, %v1034
    %v1036 = vpop.f32.mrb[0].mxu0
    %v1037 = vpop.f32.mrb[0].mxu0
    %1038 = vdwg.mxu0
    %1039 = vmatprep.subr.bf16.mxu0 %v937
    %1040 = vmatpush1.bf16.msra.mxu0 %v936
    %1041 = vmatprep.subr.bf16.mxu0 %v941
    %1042 = vmatpush1.bf16.msra.mxu0 %v940
    %1043 = vmatprep.subr.bf16.mxu0 %v945
    %1044 = vmatpush1.bf16.msra.mxu0 %v944
    %1045 = vmatprep.subr.bf16.mxu0 %v949
    %1046 = vmatpush1.bf16.msra.mxu0 %v948
    %1047 = vmatprep.subr.bf16.mxu0 %v953
    %1048 = vmatpush1.bf16.msra.mxu0 %v952
    %1049 = vmatprep.subr.bf16.mxu0 %v957
    %1050 = vmatpush1.bf16.msra.mxu0 %v956
    %1051 = vmatprep.subr.bf16.mxu0 %v961
    %1052 = vmatpush1.bf16.msra.mxu0 %v960
    %1053 = vmatprep.subr.bf16.mxu0 %v965
    %1054 = vmatpush1.bf16.msra.mxu0 %v964
    %1055 = vmatprep.subr.bf16.mxu0 0
    %1056 = vmatpush1.bf16.msra.mxu0 0
    %1057 = vmatprep.subr.bf16.mxu0 0
    %1058 = vmatpush1.bf16.msra.mxu0 0
    %1059 = vmatprep.subr.bf16.mxu0 0
    %1060 = vmatpush1.bf16.msra.mxu0 0
    %1061 = vmatprep.subr.bf16.mxu0 0
    %1062 = vmatpush1.bf16.msra.mxu0 0
    %1063 = vmatprep.subr.bf16.mxu0 0
    %1064 = vmatpush1.bf16.msra.mxu0 0
    %1065 = vmatprep.subr.bf16.mxu0 0
    %1066 = vmatpush1.bf16.msra.mxu0 0
    %1067 = vmatprep.subr.bf16.mxu0 0
    %1068 = vmatpush1.bf16.msra.mxu0 0
    %1069 = vmatprep.subr.bf16.mxu0 0
    %1070 = vmatpush1.bf16.msra.mxu0 0
    %1071 = vmatprep.mubr.bf16.mxu0 0
    %1072 = vmatmul.mubr.bf16.gmra.mrb[0].mxu0 %v673
    %v1073 = vpop.f32.mrb[0].mxu0
    %v1074 = vadd.f32 %v829, %v1073
    %v1075 = vpop.f32.mrb[0].mxu0
    %v1076 = vadd.f32 %v833, %v1075
    %v1077 = vpop.f32.mrb[0].mxu0
    %v1078 = vpop.f32.mrb[0].mxu0
    %1079 = vdwg.mxu0
    %v1080 = vpack.c.bf16 %v358, %v358
    %v1081 = vld [vmem:[#allocation8] sm:$0xff]
    %v1082 = vld [vmem:[#allocation8 + $0x8] sm:$0xff]
    %v1083 = vld [vmem:[#allocation8 + $0x10] sm:$0xff]
    %v1084 = vld [vmem:[#allocation8 + $0x18] sm:$0xff]
    %v1085 = vld [vmem:[#allocation8 + $0x20] sm:$0xff]
    %v1086 = vld [vmem:[#allocation8 + $0x28] sm:$0xff]
    %v1087 = vld [vmem:[#allocation8 + $0x30] sm:$0xff]
    %v1088 = vld [vmem:[#allocation8 + $0x38] sm:$0xff]
    %v1089 = vld [vmem:[#allocation8 + $0x40] sm:$0xff]
    %v1090 = vld [vmem:[#allocation8 + $0x48] sm:$0xff]
    %v1091 = vld [vmem:[#allocation8 + $0x50] sm:$0xff]
    %v1092 = vld [vmem:[#allocation8 + $0x58] sm:$0xff]
    %v1093 = vld [vmem:[#allocation8 + $0x60] sm:$0xff]
    %v1094 = vld [vmem:[#allocation8 + $0x68] sm:$0xff]
    %v1095 = vld [vmem:[#allocation8 + $0x70] sm:$0xff]
    %v1096 = vld [vmem:[#allocation8 + $0x78] sm:$0xff]
    %v1097 = vld [vmem:[#allocation8 + $0x80] sm:$0xff]
    %v1098 = vld [vmem:[#allocation8 + $0x88] sm:$0xff]
    %v1099 = vld [vmem:[#allocation8 + $0x90] sm:$0xff]
    %v1100 = vld [vmem:[#allocation8 + $0x98] sm:$0xff]
    %v1101 = vld [vmem:[#allocation8 + $0xa0] sm:$0xff]
    %v1102 = vld [vmem:[#allocation8 + $0xa8] sm:$0xff]
    %v1103 = vld [vmem:[#allocation8 + $0xb0] sm:$0xff]
    %v1104 = vld [vmem:[#allocation8 + $0xb8] sm:$0xff]
    %v1105 = vld [vmem:[#allocation8 + $0xc0] sm:$0xff]
    %v1106 = vld [vmem:[#allocation8 + $0xc8] sm:$0xff]
    %v1107 = vld [vmem:[#allocation8 + $0xd0] sm:$0xff]
    %v1108 = vld [vmem:[#allocation8 + $0xd8] sm:$0xff]
    %v1109 = vld [vmem:[#allocation8 + $0xe0] sm:$0xff]
    %v1110 = vld [vmem:[#allocation8 + $0xe8] sm:$0xff]
    %v1111 = vld [vmem:[#allocation8 + $0xf0] sm:$0xff]
    %v1112 = vld [vmem:[#allocation8 + $0xf8] sm:$0xff]
    %v1145 = vunpack.c.l.b16 %v1081
    %v1146 = vunpack.c.h.b16 %v1081
    %v1147 = vunpack.c.l.b16 %v1082
    %v1148 = vunpack.c.h.b16 %v1082
    %v1149 = vunpack.c.l.b16 %v1083
    %v1150 = vunpack.c.h.b16 %v1083
    %v1151 = vunpack.c.l.b16 %v1084
    %v1152 = vunpack.c.h.b16 %v1084
    %v1153 = vunpack.c.l.b16 %v1085
    %v1154 = vunpack.c.h.b16 %v1085
    %v1155 = vunpack.c.l.b16 %v1086
    %v1156 = vunpack.c.h.b16 %v1086
    %v1157 = vunpack.c.l.b16 %v1087
    %v1158 = vunpack.c.h.b16 %v1087
    %v1159 = vunpack.c.l.b16 %v1088
    %v1160 = vunpack.c.h.b16 %v1088
    %v1161 = vunpack.c.l.b16 %v1089
    %v1162 = vunpack.c.h.b16 %v1089
    %v1163 = vunpack.c.l.b16 %v1090
    %v1164 = vunpack.c.h.b16 %v1090
    %v1165 = vunpack.c.l.b16 %v1091
    %v1166 = vunpack.c.h.b16 %v1091
    %v1167 = vunpack.c.l.b16 %v1092
    %v1168 = vunpack.c.h.b16 %v1092
    %v1169 = vunpack.c.l.b16 %v1093
    %v1170 = vunpack.c.h.b16 %v1093
    %v1171 = vunpack.c.l.b16 %v1094
    %v1172 = vunpack.c.h.b16 %v1094
    %v1173 = vunpack.c.l.b16 %v1095
    %v1174 = vunpack.c.h.b16 %v1095
    %v1175 = vunpack.c.l.b16 %v1096
    %v1176 = vunpack.c.h.b16 %v1096
    %v1177 = vunpack.c.l.b16 %v1097
    %v1178 = vunpack.c.h.b16 %v1097
    %v1179 = vunpack.c.l.b16 %v1098
    %v1180 = vunpack.c.h.b16 %v1098
    %v1181 = vunpack.c.l.b16 %v1099
    %v1182 = vunpack.c.h.b16 %v1099
    %v1183 = vunpack.c.l.b16 %v1100
    %v1184 = vunpack.c.h.b16 %v1100
    %v1185 = vunpack.c.l.b16 %v1101
    %v1186 = vunpack.c.h.b16 %v1101
    %v1187 = vunpack.c.l.b16 %v1102
    %v1188 = vunpack.c.h.b16 %v1102
    %v1189 = vunpack.c.l.b16 %v1103
    %v1190 = vunpack.c.h.b16 %v1103
    %v1191 = vunpack.c.l.b16 %v1104
    %v1192 = vunpack.c.h.b16 %v1104
    %v1193 = vunpack.c.l.b16 %v1105
    %v1194 = vunpack.c.h.b16 %v1105
    %v1195 = vunpack.c.l.b16 %v1106
    %v1196 = vunpack.c.h.b16 %v1106
    %v1197 = vunpack.c.l.b16 %v1107
    %v1198 = vunpack.c.h.b16 %v1107
    %v1199 = vunpack.c.l.b16 %v1108
    %v1200 = vunpack.c.h.b16 %v1108
    %v1201 = vunpack.c.l.b16 %v1109
    %v1202 = vunpack.c.h.b16 %v1109
    %v1203 = vunpack.c.l.b16 %v1110
    %v1204 = vunpack.c.h.b16 %v1110
    %v1205 = vunpack.c.l.b16 %v1111
    %v1206 = vunpack.c.h.b16 %v1111
    %v1207 = vunpack.c.l.b16 %v1112
    %v1208 = vunpack.c.h.b16 %v1112
    %v1209 = vpack.c.b16 %v1149, %v1145
    %v1210 = vpack.c.b16 %v1150, %v1146
    %v1211 = vpack.c.b16 %v1151, %v1147
    %v1212 = vpack.c.b16 %v1152, %v1148
    %v1213 = vpack.c.b16 %v1157, %v1153
    %v1214 = vpack.c.b16 %v1158, %v1154
    %v1215 = vpack.c.b16 %v1159, %v1155
    %v1216 = vpack.c.b16 %v1160, %v1156
    %v1217 = vpack.c.b16 %v1165, %v1161
    %v1218 = vpack.c.b16 %v1166, %v1162
    %v1219 = vpack.c.b16 %v1167, %v1163
    %v1220 = vpack.c.b16 %v1168, %v1164
    %v1221 = vpack.c.b16 %v1173, %v1169
    %v1222 = vpack.c.b16 %v1174, %v1170
    %v1223 = vpack.c.b16 %v1175, %v1171
    %v1224 = vpack.c.b16 %v1176, %v1172
    %v1225 = vpack.c.b16 %v1181, %v1177
    %v1226 = vpack.c.b16 %v1182, %v1178
    %v1227 = vpack.c.b16 %v1183, %v1179
    %v1228 = vpack.c.b16 %v1184, %v1180
    %v1229 = vpack.c.b16 %v1189, %v1185
    %v1230 = vpack.c.b16 %v1190, %v1186
    %v1231 = vpack.c.b16 %v1191, %v1187
    %v1232 = vpack.c.b16 %v1192, %v1188
    %v1233 = vpack.c.b16 %v1197, %v1193
    %v1234 = vpack.c.b16 %v1198, %v1194
    %v1235 = vpack.c.b16 %v1199, %v1195
    %v1236 = vpack.c.b16 %v1200, %v1196
    %v1237 = vpack.c.b16 %v1205, %v1201
    %v1238 = vpack.c.b16 %v1206, %v1202
    %v1239 = vpack.c.b16 %v1207, %v1203
    %v1240 = vpack.c.b16 %v1208, %v1204
    %1273 = vmatprep.subr.bf16.mxu0 %v1210
    %1274 = vmatpush1.bf16.msra.mxu0 %v1209
    %1275 = vmatprep.subr.bf16.mxu0 %v1214
    %1276 = vmatpush1.bf16.msra.mxu0 %v1213
    %1277 = vmatprep.subr.bf16.mxu0 %v1218
    %1278 = vmatpush1.bf16.msra.mxu0 %v1217
    %1279 = vmatprep.subr.bf16.mxu0 %v1222
    %1280 = vmatpush1.bf16.msra.mxu0 %v1221
    %1281 = vmatprep.subr.bf16.mxu0 %v1226
    %1282 = vmatpush1.bf16.msra.mxu0 %v1225
    %1283 = vmatprep.subr.bf16.mxu0 %v1230
    %1284 = vmatpush1.bf16.msra.mxu0 %v1229
    %1285 = vmatprep.subr.bf16.mxu0 %v1234
    %1286 = vmatpush1.bf16.msra.mxu0 %v1233
    %1287 = vmatprep.subr.bf16.mxu0 %v1238
    %1288 = vmatpush1.bf16.msra.mxu0 %v1237
    %1289 = vmatprep.subr.bf16.mxu0 0
    %1290 = vmatpush1.bf16.msra.mxu0 0
    %1291 = vmatprep.subr.bf16.mxu0 0
    %1292 = vmatpush1.bf16.msra.mxu0 0
    %1293 = vmatprep.subr.bf16.mxu0 0
    %1294 = vmatpush1.bf16.msra.mxu0 0
    %1295 = vmatprep.subr.bf16.mxu0 0
    %1296 = vmatpush1.bf16.msra.mxu0 0
    %1297 = vmatprep.subr.bf16.mxu0 0
    %1298 = vmatpush1.bf16.msra.mxu0 0
    %1299 = vmatprep.subr.bf16.mxu0 0
    %1300 = vmatpush1.bf16.msra.mxu0 0
    %1301 = vmatprep.subr.bf16.mxu0 0
    %1302 = vmatpush1.bf16.msra.mxu0 0
    %1303 = vmatprep.subr.bf16.mxu0 0
    %1304 = vmatpush1.bf16.msra.mxu0 0
    %1305 = vmatprep.mubr.bf16.mxu0 0
    %1306 = vmatmul.mubr.bf16.gmra.mrb[0].mxu0 %v1080
    %v1307 = vpop.f32.mrb[0].mxu0
    %v1308 = vadd.f32 0.0, %v1307
    %v1309 = vpop.f32.mrb[0].mxu0
    %v1310 = vadd.f32 0.0, %v1309
    %v1311 = vpop.f32.mrb[0].mxu0
    %v1312 = vpop.f32.mrb[0].mxu0
    %1313 = vdwg.mxu0
    %1314 = vmatprep.subr.bf16.mxu0 %v1212
    %1315 = vmatpush1.bf16.msra.mxu0 %v1211
    %1316 = vmatprep.subr.bf16.mxu0 %v1216
    %1317 = vmatpush1.bf16.msra.mxu0 %v1215
    %1318 = vmatprep.subr.bf16.mxu0 %v1220
    %1319 = vmatpush1.bf16.msra.mxu0 %v1219
    %1320 = vmatprep.subr.bf16.mxu0 %v1224
    %1321 = vmatpush1.bf16.msra.mxu0 %v1223
    %1322 = vmatprep.subr.bf16.mxu0 %v1228
    %1323 = vmatpush1.bf16.msra.mxu0 %v1227
    %1324 = vmatprep.subr.bf16.mxu0 %v1232
    %1325 = vmatpush1.bf16.msra.mxu0 %v1231
    %1326 = vmatprep.subr.bf16.mxu0 %v1236
    %1327 = vmatpush1.bf16.msra.mxu0 %v1235
    %1328 = vmatprep.subr.bf16.mxu0 %v1240
    %1329 = vmatpush1.bf16.msra.mxu0 %v1239
    %1330 = vmatprep.subr.bf16.mxu0 0
    %1331 = vmatpush1.bf16.msra.mxu0 0
    %1332 = vmatprep.subr.bf16.mxu0 0
    %1333 = vmatpush1.bf16.msra.mxu0 0
    %1334 = vmatprep.subr.bf16.mxu0 0
    %1335 = vmatpush1.bf16.msra.mxu0 0
    %1336 = vmatprep.subr.bf16.mxu0 0
    %1337 = vmatpush1.bf16.msra.mxu0 0
    %1338 = vmatprep.subr.bf16.mxu0 0
    %1339 = vmatpush1.bf16.msra.mxu0 0
    %1340 = vmatprep.subr.bf16.mxu0 0
    %1341 = vmatpush1.bf16.msra.mxu0 0
    %1342 = vmatprep.subr.bf16.mxu0 0
    %1343 = vmatpush1.bf16.msra.mxu0 0
    %1344 = vmatprep.subr.bf16.mxu0 0
    %1345 = vmatpush1.bf16.msra.mxu0 0
    %1346 = vmatprep.mubr.bf16.mxu0 0
    %1347 = vmatmul.mubr.bf16.gmra.mrb[0].mxu0 %v1080
    %v1348 = vpop.f32.mrb[0].mxu0
    %v1349 = vadd.f32 0.0, %v1348
    %v1350 = vpop.f32.mrb[0].mxu0
    %v1351 = vadd.f32 0.0, %v1350
    %v1352 = vpop.f32.mrb[0].mxu0
    %v1353 = vpop.f32.mrb[0].mxu0
    %1354 = vdwg.mxu0
    %v1355 = vadd.f32 %v1033, %v1308
    %v1356 = vadd.f32 %v1035, %v1310
    %v1357 = vadd.f32 %v1074, %v1349
    %v1358 = vadd.f32 %v1076, %v1351
    %v1359 = vxor.u32 %v1355, 2147483648
    %v1360 = vmul.f32 %v1359, 1.442695
    %v1361 = vpow.pop %v1360
    %v1362 = vadd.f32 %v1361, 1.0
    %v1363 = vrcp.pop %v1362
    %v1364 = vmul.f32 1.0, %v1363
    %v1365 = vxor.u32 %v1356, 2147483648
    %v1366 = vmul.f32 %v1365, 1.442695
    %v1367 = vpow.pop %v1366
    %v1368 = vadd.f32 %v1367, 1.0
    %v1369 = vrcp.pop %v1368
    %v1370 = vmul.f32 1.0, %v1369
    %v1371 = vtanh.pop %v1357
    %v1372 = vxor.u32 %v1358, 2147483648
    %v1373 = vmul.f32 %v1372, 1.442695
    %v1374 = vpow.pop %v1373
    %v1375 = vadd.f32 %v1374, 1.0
    %v1376 = vrcp.pop %v1375
    %v1377 = vmul.f32 1.0, %v1376
    %v1378 = vmul.f32 %v1370, %v361
    %v1379 = vmul.f32 %v1364, %v1371
    %v1380 = vadd.f32 %v1378, %v1379
    %v1381 = vtanh.pop %v1380
    %v1382 = vmul.f32 %v1377, %v1381
    %1383 = vst [vmem:[#allocation3] sm:$0xff] %v1382
    %v1384 = vld [vmem:[#allocation2 + $0x40] sm:$0xff]
    %v1385 = vld [vmem:[#allocation2 + $0x48] sm:$0xff]
    %v1386 = vld [vmem:[#allocation2 + $0x50] sm:$0xff]
    %v1387 = vld [vmem:[#allocation2 + $0x58] sm:$0xff]
    %v1388 = vpack.c.bf16 %v783, %v783
    %v1389 = vld [vmem:[#allocation4] sm:$0xff]
    %v1390 = vld [vmem:[#allocation4 + $0x8] sm:$0xff]
    %v1391 = vld [vmem:[#allocation4 + $0x10] sm:$0xff]
    %v1392 = vld [vmem:[#allocation4 + $0x18] sm:$0xff]
    %v1393 = vld [vmem:[#allocation4 + $0x20] sm:$0xff]
    %v1394 = vld [vmem:[#allocation4 + $0x28] sm:$0xff]
    %v1395 = vld [vmem:[#allocation4 + $0x30] sm:$0xff]
    %v1396 = vld [vmem:[#allocation4 + $0x38] sm:$0xff]
    %v1397 = vld [vmem:[#allocation4 + $0x40] sm:$0xff]
    %v1398 = vld [vmem:[#allocation4 + $0x48] sm:$0xff]
    %v1399 = vld [vmem:[#allocation4 + $0x50] sm:$0xff]
    %v1400 = vld [vmem:[#allocation4 + $0x58] sm:$0xff]
    %v1401 = vld [vmem:[#allocation4 + $0x60] sm:$0xff]
    %v1402 = vld [vmem:[#allocation4 + $0x68] sm:$0xff]
    %v1403 = vld [vmem:[#allocation4 + $0x70] sm:$0xff]
    %v1404 = vld [vmem:[#allocation4 + $0x78] sm:$0xff]
    %v1405 = vld [vmem:[#allocation4 + $0x80] sm:$0xff]
    %v1406 = vld [vmem:[#allocation4 + $0x88] sm:$0xff]
    %v1407 = vld [vmem:[#allocation4 + $0x90] sm:$0xff]
    %v1408 = vld [vmem:[#allocation4 + $0x98] sm:$0xff]
    %v1409 = vld [vmem:[#allocation4 + $0xa0] sm:$0xff]
    %v1410 = vld [vmem:[#allocation4 + $0xa8] sm:$0xff]
    %v1411 = vld [vmem:[#allocation4 + $0xb0] sm:$0xff]
    %v1412 = vld [vmem:[#allocation4 + $0xb8] sm:$0xff]
    %v1413 = vld [vmem:[#allocation4 + $0xc0] sm:$0xff]
    %v1414 = vld [vmem:[#allocation4 + $0xc8] sm:$0xff]
    %v1415 = vld [vmem:[#allocation4 + $0xd0] sm:$0xff]
    %v1416 = vld [vmem:[#allocation4 + $0xd8] sm:$0xff]
    %v1417 = vld [vmem:[#allocation4 + $0xe0] sm:$0xff]
    %v1418 = vld [vmem:[#allocation4 + $0xe8] sm:$0xff]
    %v1419 = vld [vmem:[#allocation4 + $0xf0] sm:$0xff]
    %v1420 = vld [vmem:[#allocation4 + $0xf8] sm:$0xff]
    %v1453 = vunpack.c.l.b16 %v1389
    %v1454 = vunpack.c.h.b16 %v1389
    %v1455 = vunpack.c.l.b16 %v1390
    %v1456 = vunpack.c.h.b16 %v1390
    %v1457 = vunpack.c.l.b16 %v1391
    %v1458 = vunpack.c.h.b16 %v1391
    %v1459 = vunpack.c.l.b16 %v1392
    %v1460 = vunpack.c.h.b16 %v1392
    %v1461 = vunpack.c.l.b16 %v1393
    %v1462 = vunpack.c.h.b16 %v1393
    %v1463 = vunpack.c.l.b16 %v1394
    %v1464 = vunpack.c.h.b16 %v1394
    %v1465 = vunpack.c.l.b16 %v1395
    %v1466 = vunpack.c.h.b16 %v1395
    %v1467 = vunpack.c.l.b16 %v1396
    %v1468 = vunpack.c.h.b16 %v1396
    %v1469 = vunpack.c.l.b16 %v1397
    %v1470 = vunpack.c.h.b16 %v1397
    %v1471 = vunpack.c.l.b16 %v1398
    %v1472 = vunpack.c.h.b16 %v1398
    %v1473 = vunpack.c.l.b16 %v1399
    %v1474 = vunpack.c.h.b16 %v1399
    %v1475 = vunpack.c.l.b16 %v1400
    %v1476 = vunpack.c.h.b16 %v1400
    %v1477 = vunpack.c.l.b16 %v1401
    %v1478 = vunpack.c.h.b16 %v1401
    %v1479 = vunpack.c.l.b16 %v1402
    %v1480 = vunpack.c.h.b16 %v1402
    %v1481 = vunpack.c.l.b16 %v1403
    %v1482 = vunpack.c.h.b16 %v1403
    %v1483 = vunpack.c.l.b16 %v1404
    %v1484 = vunpack.c.h.b16 %v1404
    %v1485 = vunpack.c.l.b16 %v1405
    %v1486 = vunpack.c.h.b16 %v1405
    %v1487 = vunpack.c.l.b16 %v1406
    %v1488 = vunpack.c.h.b16 %v1406
    %v1489 = vunpack.c.l.b16 %v1407
    %v1490 = vunpack.c.h.b16 %v1407
    %v1491 = vunpack.c.l.b16 %v1408
    %v1492 = vunpack.c.h.b16 %v1408
    %v1493 = vunpack.c.l.b16 %v1409
    %v1494 = vunpack.c.h.b16 %v1409
    %v1495 = vunpack.c.l.b16 %v1410
    %v1496 = vunpack.c.h.b16 %v1410
    %v1497 = vunpack.c.l.b16 %v1411
    %v1498 = vunpack.c.h.b16 %v1411
    %v1499 = vunpack.c.l.b16 %v1412
    %v1500 = vunpack.c.h.b16 %v1412
    %v1501 = vunpack.c.l.b16 %v1413
    %v1502 = vunpack.c.h.b16 %v1413
    %v1503 = vunpack.c.l.b16 %v1414
    %v1504 = vunpack.c.h.b16 %v1414
    %v1505 = vunpack.c.l.b16 %v1415
    %v1506 = vunpack.c.h.b16 %v1415
    %v1507 = vunpack.c.l.b16 %v1416
    %v1508 = vunpack.c.h.b16 %v1416
    %v1509 = vunpack.c.l.b16 %v1417
    %v1510 = vunpack.c.h.b16 %v1417
    %v1511 = vunpack.c.l.b16 %v1418
    %v1512 = vunpack.c.h.b16 %v1418
    %v1513 = vunpack.c.l.b16 %v1419
    %v1514 = vunpack.c.h.b16 %v1419
    %v1515 = vunpack.c.l.b16 %v1420
    %v1516 = vunpack.c.h.b16 %v1420
    %v1517 = vpack.c.b16 %v1457, %v1453
    %v1518 = vpack.c.b16 %v1458, %v1454
    %v1519 = vpack.c.b16 %v1459, %v1455
    %v1520 = vpack.c.b16 %v1460, %v1456
    %v1521 = vpack.c.b16 %v1465, %v1461
    %v1522 = vpack.c.b16 %v1466, %v1462
    %v1523 = vpack.c.b16 %v1467, %v1463
    %v1524 = vpack.c.b16 %v1468, %v1464
    %v1525 = vpack.c.b16 %v1473, %v1469
    %v1526 = vpack.c.b16 %v1474, %v1470
    %v1527 = vpack.c.b16 %v1475, %v1471
    %v1528 = vpack.c.b16 %v1476, %v1472
    %v1529 = vpack.c.b16 %v1481, %v1477
    %v1530 = vpack.c.b16 %v1482, %v1478
    %v1531 = vpack.c.b16 %v1483, %v1479
    %v1532 = vpack.c.b16 %v1484, %v1480
    %v1533 = vpack.c.b16 %v1489, %v1485
    %v1534 = vpack.c.b16 %v1490, %v1486
    %v1535 = vpack.c.b16 %v1491, %v1487
    %v1536 = vpack.c.b16 %v1492, %v1488
    %v1537 = vpack.c.b16 %v1497, %v1493
    %v1538 = vpack.c.b16 %v1498, %v1494
    %v1539 = vpack.c.b16 %v1499, %v1495
    %v1540 = vpack.c.b16 %v1500, %v1496
    %v1541 = vpack.c.b16 %v1505, %v1501
    %v1542 = vpack.c.b16 %v1506, %v1502
    %v1543 = vpack.c.b16 %v1507, %v1503
    %v1544 = vpack.c.b16 %v1508, %v1504
    %v1545 = vpack.c.b16 %v1513, %v1509
    %v1546 = vpack.c.b16 %v1514, %v1510
    %v1547 = vpack.c.b16 %v1515, %v1511
    %v1548 = vpack.c.b16 %v1516, %v1512
    %1581 = vmatprep.subr.bf16.mxu0 %v1518
    %1582 = vmatpush1.bf16.msra.mxu0 %v1517
    %1583 = vmatprep.subr.bf16.mxu0 %v1522
    %1584 = vmatpush1.bf16.msra.mxu0 %v1521
    %1585 = vmatprep.subr.bf16.mxu0 %v1526
    %1586 = vmatpush1.bf16.msra.mxu0 %v1525
    %1587 = vmatprep.subr.bf16.mxu0 %v1530
    %1588 = vmatpush1.bf16.msra.mxu0 %v1529
    %1589 = vmatprep.subr.bf16.mxu0 %v1534
    %1590 = vmatpush1.bf16.msra.mxu0 %v1533
    %1591 = vmatprep.subr.bf16.mxu0 %v1538
    %1592 = vmatpush1.bf16.msra.mxu0 %v1537
    %1593 = vmatprep.subr.bf16.mxu0 %v1542
    %1594 = vmatpush1.bf16.msra.mxu0 %v1541
    %1595 = vmatprep.subr.bf16.mxu0 %v1546
    %1596 = vmatpush1.bf16.msra.mxu0 %v1545
    %1597 = vmatprep.subr.bf16.mxu0 0
    %1598 = vmatpush1.bf16.msra.mxu0 0
    %1599 = vmatprep.subr.bf16.mxu0 0
    %1600 = vmatpush1.bf16.msra.mxu0 0
    %1601 = vmatprep.subr.bf16.mxu0 0
    %1602 = vmatpush1.bf16.msra.mxu0 0
    %1603 = vmatprep.subr.bf16.mxu0 0
    %1604 = vmatpush1.bf16.msra.mxu0 0
    %1605 = vmatprep.subr.bf16.mxu0 0
    %1606 = vmatpush1.bf16.msra.mxu0 0
    %1607 = vmatprep.subr.bf16.mxu0 0
    %1608 = vmatpush1.bf16.msra.mxu0 0
    %1609 = vmatprep.subr.bf16.mxu0 0
    %1610 = vmatpush1.bf16.msra.mxu0 0
    %1611 = vmatprep.subr.bf16.mxu0 0
    %1612 = vmatpush1.bf16.msra.mxu0 0
    %1613 = vmatprep.mubr.bf16.mxu0 0
    %1614 = vmatmul.mubr.bf16.gmra.mrb[0].mxu0 %v1388
    %v1615 = vpop.f32.mrb[0].mxu0
    %v1616 = vadd.f32 0.0, %v1615
    %v1617 = vpop.f32.mrb[0].mxu0
    %v1618 = vadd.f32 0.0, %v1617
    %v1619 = vpop.f32.mrb[0].mxu0
    %v1620 = vpop.f32.mrb[0].mxu0
    %1621 = vdwg.mxu0
    %1622 = vmatprep.subr.bf16.mxu0 %v1520
    %1623 = vmatpush1.bf16.msra.mxu0 %v1519
    %1624 = vmatprep.subr.bf16.mxu0 %v1524
    %1625 = vmatpush1.bf16.msra.mxu0 %v1523
    %1626 = vmatprep.subr.bf16.mxu0 %v1528
    %1627 = vmatpush1.bf16.msra.mxu0 %v1527
    %1628 = vmatprep.subr.bf16.mxu0 %v1532
    %1629 = vmatpush1.bf16.msra.mxu0 %v1531
    %1630 = vmatprep.subr.bf16.mxu0 %v1536
    %1631 = vmatpush1.bf16.msra.mxu0 %v1535
    %1632 = vmatprep.subr.bf16.mxu0 %v1540
    %1633 = vmatpush1.bf16.msra.mxu0 %v1539
    %1634 = vmatprep.subr.bf16.mxu0 %v1544
    %1635 = vmatpush1.bf16.msra.mxu0 %v1543
    %1636 = vmatprep.subr.bf16.mxu0 %v1548
    %1637 = vmatpush1.bf16.msra.mxu0 %v1547
    %1638 = vmatprep.subr.bf16.mxu0 0
    %1639 = vmatpush1.bf16.msra.mxu0 0
    %1640 = vmatprep.subr.bf16.mxu0 0
    %1641 = vmatpush1.bf16.msra.mxu0 0
    %1642 = vmatprep.subr.bf16.mxu0 0
    %1643 = vmatpush1.bf16.msra.mxu0 0
    %1644 = vmatprep.subr.bf16.mxu0 0
    %1645 = vmatpush1.bf16.msra.mxu0 0
    %1646 = vmatprep.subr.bf16.mxu0 0
    %1647 = vmatpush1.bf16.msra.mxu0 0
    %1648 = vmatprep.subr.bf16.mxu0 0
    %1649 = vmatpush1.bf16.msra.mxu0 0
    %1650 = vmatprep.subr.bf16.mxu0 0
    %1651 = vmatpush1.bf16.msra.mxu0 0
    %1652 = vmatprep.subr.bf16.mxu0 0
    %1653 = vmatpush1.bf16.msra.mxu0 0
    %1654 = vmatprep.mubr.bf16.mxu0 0
    %1655 = vmatmul.mubr.bf16.gmra.mrb[0].mxu0 %v1388
    %v1656 = vpop.f32.mrb[0].mxu0
    %v1657 = vadd.f32 0.0, %v1656
    %v1658 = vpop.f32.mrb[0].mxu0
    %v1659 = vadd.f32 0.0, %v1658
    %v1660 = vpop.f32.mrb[0].mxu0
    %v1661 = vpop.f32.mrb[0].mxu0
    %1662 = vdwg.mxu0
    %v1663 = vadd.f32 %v1384, %v1616
    %v1664 = vadd.f32 %v1385, %v1618
    %v1665 = vadd.f32 %v1386, %v1657
    %v1666 = vadd.f32 %v1387, %v1659
    %v1667 = vxor.u32 %v1663, 2147483648
    %v1668 = vmul.f32 %v1667, 1.442695
    %v1669 = vpow.pop %v1668
    %v1670 = vadd.f32 %v1669, 1.0
    %v1671 = vrcp.pop %v1670
    %v1672 = vmul.f32 1.0, %v1671
    %v1673 = vxor.u32 %v1664, 2147483648
    %v1674 = vmul.f32 %v1673, 1.442695
    %v1675 = vpow.pop %v1674
    %v1676 = vadd.f32 %v1675, 1.0
    %v1677 = vrcp.pop %v1676
    %v1678 = vmul.f32 1.0, %v1677
    %v1679 = vtanh.pop %v1665
    %v1680 = vxor.u32 %v1666, 2147483648
    %v1681 = vmul.f32 %v1680, 1.442695
    %v1682 = vpow.pop %v1681
    %v1683 = vadd.f32 %v1682, 1.0
    %v1684 = vrcp.pop %v1683
    %v1685 = vmul.f32 1.0, %v1684
    %v1686 = vmul.f32 %v1678, %v781
    %v1687 = vmul.f32 %v1672, %v1679
    %v1688 = vadd.f32 %v1686, %v1687
    %v1689 = vtanh.pop %v1688
    %v1690 = vmul.f32 %v1685, %v1689
    %v1691 = vld [vmem:[#allocation6] sm:$0xff]
    %v1692 = vld [vmem:[#allocation6 + $0x8] sm:$0xff]
    %v1693 = vld [vmem:[#allocation6 + $0x10] sm:$0xff]
    %v1694 = vld [vmem:[#allocation6 + $0x18] sm:$0xff]
    %v1695 = vld [vmem:[#allocation6 + $0x20] sm:$0xff]
    %v1696 = vld [vmem:[#allocation6 + $0x28] sm:$0xff]
    %v1697 = vld [vmem:[#allocation6 + $0x30] sm:$0xff]
    %v1698 = vld [vmem:[#allocation6 + $0x38] sm:$0xff]
    %v1699 = vld [vmem:[#allocation6 + $0x40] sm:$0xff]
    %v1700 = vld [vmem:[#allocation6 + $0x48] sm:$0xff]
    %v1701 = vld [vmem:[#allocation6 + $0x50] sm:$0xff]
    %v1702 = vld [vmem:[#allocation6 + $0x58] sm:$0xff]
    %v1703 = vld [vmem:[#allocation6 + $0x60] sm:$0xff]
    %v1704 = vld [vmem:[#allocation6 + $0x68] sm:$0xff]
    %v1705 = vld [vmem:[#allocation6 + $0x70] sm:$0xff]
    %v1706 = vld [vmem:[#allocation6 + $0x78] sm:$0xff]
    %v1707 = vld [vmem:[#allocation6 + $0x80] sm:$0xff]
    %v1708 = vld [vmem:[#allocation6 + $0x88] sm:$0xff]
    %v1709 = vld [vmem:[#allocation6 + $0x90] sm:$0xff]
    %v1710 = vld [vmem:[#allocation6 + $0x98] sm:$0xff]
    %v1711 = vld [vmem:[#allocation6 + $0xa0] sm:$0xff]
    %v1712 = vld [vmem:[#allocation6 + $0xa8] sm:$0xff]
    %v1713 = vld [vmem:[#allocation6 + $0xb0] sm:$0xff]
    %v1714 = vld [vmem:[#allocation6 + $0xb8] sm:$0xff]
    %v1715 = vld [vmem:[#allocation6 + $0xc0] sm:$0xff]
    %v1716 = vld [vmem:[#allocation6 + $0xc8] sm:$0xff]
    %v1717 = vld [vmem:[#allocation6 + $0xd0] sm:$0xff]
    %v1718 = vld [vmem:[#allocation6 + $0xd8] sm:$0xff]
    %v1719 = vld [vmem:[#allocation6 + $0xe0] sm:$0xff]
    %v1720 = vld [vmem:[#allocation6 + $0xe8] sm:$0xff]
    %v1721 = vld [vmem:[#allocation6 + $0xf0] sm:$0xff]
    %v1722 = vld [vmem:[#allocation6 + $0xf8] sm:$0xff]
    %v1723 = vld [vmem:[%s6] sm:$0xf]
    %v1725 = vlaneseq
    %v1726 = vshrl.u32 %v1725, 7
    %v1727 = vsub.s32 0, %v1726
    %v1728 = vrot.slane %v1723, %v1727
    %v1729 = vlaneseq
    %v1730 = vshrl.u32 %v1729, 7
    %v1731 = vsub.s32 1, %v1730
    %v1732 = vrot.slane %v1723, %v1731
    %v1733 = vlaneseq
    %v1734 = vshrl.u32 %v1733, 7
    %v1735 = vsub.s32 2, %v1734
    %v1736 = vrot.slane %v1723, %v1735
    %v1737 = vlaneseq
    %v1738 = vshrl.u32 %v1737, 7
    %v1739 = vsub.s32 3, %v1738
    %v1740 = vrot.slane %v1723, %v1739
    %v1777 = vunpack.c.l.b16 %v1691
    %v1778 = vunpack.c.h.b16 %v1691
    %v1779 = vunpack.c.l.b16 %v1692
    %v1780 = vunpack.c.h.b16 %v1692
    %v1781 = vunpack.c.l.b16 %v1693
    %v1782 = vunpack.c.h.b16 %v1693
    %v1783 = vunpack.c.l.b16 %v1694
    %v1784 = vunpack.c.h.b16 %v1694
    %v1785 = vunpack.c.l.b16 %v1695
    %v1786 = vunpack.c.h.b16 %v1695
    %v1787 = vunpack.c.l.b16 %v1696
    %v1788 = vunpack.c.h.b16 %v1696
    %v1789 = vunpack.c.l.b16 %v1697
    %v1790 = vunpack.c.h.b16 %v1697
    %v1791 = vunpack.c.l.b16 %v1698
    %v1792 = vunpack.c.h.b16 %v1698
    %v1793 = vunpack.c.l.b16 %v1699
    %v1794 = vunpack.c.h.b16 %v1699
    %v1795 = vunpack.c.l.b16 %v1700
    %v1796 = vunpack.c.h.b16 %v1700
    %v1797 = vunpack.c.l.b16 %v1701
    %v1798 = vunpack.c.h.b16 %v1701
    %v1799 = vunpack.c.l.b16 %v1702
    %v1800 = vunpack.c.h.b16 %v1702
    %v1801 = vunpack.c.l.b16 %v1703
    %v1802 = vunpack.c.h.b16 %v1703
    %v1803 = vunpack.c.l.b16 %v1704
    %v1804 = vunpack.c.h.b16 %v1704
    %v1805 = vunpack.c.l.b16 %v1705
    %v1806 = vunpack.c.h.b16 %v1705
    %v1807 = vunpack.c.l.b16 %v1706
    %v1808 = vunpack.c.h.b16 %v1706
    %v1809 = vunpack.c.l.b16 %v1707
    %v1810 = vunpack.c.h.b16 %v1707
    %v1811 = vunpack.c.l.b16 %v1708
    %v1812 = vunpack.c.h.b16 %v1708
    %v1813 = vunpack.c.l.b16 %v1709
    %v1814 = vunpack.c.h.b16 %v1709
    %v1815 = vunpack.c.l.b16 %v1710
    %v1816 = vunpack.c.h.b16 %v1710
    %v1817 = vunpack.c.l.b16 %v1711
    %v1818 = vunpack.c.h.b16 %v1711
    %v1819 = vunpack.c.l.b16 %v1712
    %v1820 = vunpack.c.h.b16 %v1712
    %v1821 = vunpack.c.l.b16 %v1713
    %v1822 = vunpack.c.h.b16 %v1713
    %v1823 = vunpack.c.l.b16 %v1714
    %v1824 = vunpack.c.h.b16 %v1714
    %v1825 = vunpack.c.l.b16 %v1715
    %v1826 = vunpack.c.h.b16 %v1715
    %v1827 = vunpack.c.l.b16 %v1716
    %v1828 = vunpack.c.h.b16 %v1716
    %v1829 = vunpack.c.l.b16 %v1717
    %v1830 = vunpack.c.h.b16 %v1717
    %v1831 = vunpack.c.l.b16 %v1718
    %v1832 = vunpack.c.h.b16 %v1718
    %v1833 = vunpack.c.l.b16 %v1719
    %v1834 = vunpack.c.h.b16 %v1719
    %v1835 = vunpack.c.l.b16 %v1720
    %v1836 = vunpack.c.h.b16 %v1720
    %v1837 = vunpack.c.l.b16 %v1721
    %v1838 = vunpack.c.h.b16 %v1721
    %v1839 = vunpack.c.l.b16 %v1722
    %v1840 = vunpack.c.h.b16 %v1722
    %v1841 = vpack.c.b16 %v1781, %v1777
    %v1842 = vpack.c.b16 %v1782, %v1778
    %v1843 = vpack.c.b16 %v1783, %v1779
    %v1844 = vpack.c.b16 %v1784, %v1780
    %v1845 = vpack.c.b16 %v1789, %v1785
    %v1846 = vpack.c.b16 %v1790, %v1786
    %v1847 = vpack.c.b16 %v1791, %v1787
    %v1848 = vpack.c.b16 %v1792, %v1788
    %v1849 = vpack.c.b16 %v1797, %v1793
    %v1850 = vpack.c.b16 %v1798, %v1794
    %v1851 = vpack.c.b16 %v1799, %v1795
    %v1852 = vpack.c.b16 %v1800, %v1796
    %v1853 = vpack.c.b16 %v1805, %v1801
    %v1854 = vpack.c.b16 %v1806, %v1802
    %v1855 = vpack.c.b16 %v1807, %v1803
    %v1856 = vpack.c.b16 %v1808, %v1804
    %v1857 = vpack.c.b16 %v1813, %v1809
    %v1858 = vpack.c.b16 %v1814, %v1810
    %v1859 = vpack.c.b16 %v1815, %v1811
    %v1860 = vpack.c.b16 %v1816, %v1812
    %v1861 = vpack.c.b16 %v1821, %v1817
    %v1862 = vpack.c.b16 %v1822, %v1818
    %v1863 = vpack.c.b16 %v1823, %v1819
    %v1864 = vpack.c.b16 %v1824, %v1820
    %v1865 = vpack.c.b16 %v1829, %v1825
    %v1866 = vpack.c.b16 %v1830, %v1826
    %v1867 = vpack.c.b16 %v1831, %v1827
    %v1868 = vpack.c.b16 %v1832, %v1828
    %v1869 = vpack.c.b16 %v1837, %v1833
    %v1870 = vpack.c.b16 %v1838, %v1834
    %v1871 = vpack.c.b16 %v1839, %v1835
    %v1872 = vpack.c.b16 %v1840, %v1836
    %1905 = vmatprep.subr.bf16.mxu0 %v1842
    %1906 = vmatpush1.bf16.msra.mxu0 %v1841
    %1907 = vmatprep.subr.bf16.mxu0 %v1846
    %1908 = vmatpush1.bf16.msra.mxu0 %v1845
    %1909 = vmatprep.subr.bf16.mxu0 %v1850
    %1910 = vmatpush1.bf16.msra.mxu0 %v1849
    %1911 = vmatprep.subr.bf16.mxu0 %v1854
    %1912 = vmatpush1.bf16.msra.mxu0 %v1853
    %1913 = vmatprep.subr.bf16.mxu0 %v1858
    %1914 = vmatpush1.bf16.msra.mxu0 %v1857
    %1915 = vmatprep.subr.bf16.mxu0 %v1862
    %1916 = vmatpush1.bf16.msra.mxu0 %v1861
    %1917 = vmatprep.subr.bf16.mxu0 %v1866
    %1918 = vmatpush1.bf16.msra.mxu0 %v1865
    %1919 = vmatprep.subr.bf16.mxu0 %v1870
    %1920 = vmatpush1.bf16.msra.mxu0 %v1869
    %1921 = vmatprep.subr.bf16.mxu0 0
    %1922 = vmatpush1.bf16.msra.mxu0 0
    %1923 = vmatprep.subr.bf16.mxu0 0
    %1924 = vmatpush1.bf16.msra.mxu0 0
    %1925 = vmatprep.subr.bf16.mxu0 0
    %1926 = vmatpush1.bf16.msra.mxu0 0
    %1927 = vmatprep.subr.bf16.mxu0 0
    %1928 = vmatpush1.bf16.msra.mxu0 0
    %1929 = vmatprep.subr.bf16.mxu0 0
    %1930 = vmatpush1.bf16.msra.mxu0 0
    %1931 = vmatprep.subr.bf16.mxu0 0
    %1932 = vmatpush1.bf16.msra.mxu0 0
    %1933 = vmatprep.subr.bf16.mxu0 0
    %1934 = vmatpush1.bf16.msra.mxu0 0
    %1935 = vmatprep.subr.bf16.mxu0 0
    %1936 = vmatpush1.bf16.msra.mxu0 0
    %1937 = vmatprep.mubr.bf16.mxu0 0
    %1938 = vmatmul.mubr.bf16.gmra.mrb[0].mxu0 %v1388
    %v1939 = vpop.f32.mrb[0].mxu0
    %v1940 = vadd.f32 %v1728, %v1939
    %v1941 = vpop.f32.mrb[0].mxu0
    %v1942 = vadd.f32 %v1732, %v1941
    %v1943 = vpop.f32.mrb[0].mxu0
    %v1944 = vpop.f32.mrb[0].mxu0
    %1945 = vdwg.mxu0
    %1946 = vmatprep.subr.bf16.mxu0 %v1844
    %1947 = vmatpush1.bf16.msra.mxu0 %v1843
    %1948 = vmatprep.subr.bf16.mxu0 %v1848
    %1949 = vmatpush1.bf16.msra.mxu0 %v1847
    %1950 = vmatprep.subr.bf16.mxu0 %v1852
    %1951 = vmatpush1.bf16.msra.mxu0 %v1851
    %1952 = vmatprep.subr.bf16.mxu0 %v1856
    %1953 = vmatpush1.bf16.msra.mxu0 %v1855
    %1954 = vmatprep.subr.bf16.mxu0 %v1860
    %1955 = vmatpush1.bf16.msra.mxu0 %v1859
    %1956 = vmatprep.subr.bf16.mxu0 %v1864
    %1957 = vmatpush1.bf16.msra.mxu0 %v1863
    %1958 = vmatprep.subr.bf16.mxu0 %v1868
    %1959 = vmatpush1.bf16.msra.mxu0 %v1867
    %1960 = vmatprep.subr.bf16.mxu0 %v1872
    %1961 = vmatpush1.bf16.msra.mxu0 %v1871
    %1962 = vmatprep.subr.bf16.mxu0 0
    %1963 = vmatpush1.bf16.msra.mxu0 0
    %1964 = vmatprep.subr.bf16.mxu0 0
    %1965 = vmatpush1.bf16.msra.mxu0 0
    %1966 = vmatprep.subr.bf16.mxu0 0
    %1967 = vmatpush1.bf16.msra.mxu0 0
    %1968 = vmatprep.subr.bf16.mxu0 0
    %1969 = vmatpush1.bf16.msra.mxu0 0
    %1970 = vmatprep.subr.bf16.mxu0 0
    %1971 = vmatpush1.bf16.msra.mxu0 0
    %1972 = vmatprep.subr.bf16.mxu0 0
    %1973 = vmatpush1.bf16.msra.mxu0 0
    %1974 = vmatprep.subr.bf16.mxu0 0
    %1975 = vmatpush1.bf16.msra.mxu0 0
    %1976 = vmatprep.subr.bf16.mxu0 0
    %1977 = vmatpush1.bf16.msra.mxu0 0
    %1978 = vmatprep.mubr.bf16.mxu0 0
    %1979 = vmatmul.mubr.bf16.gmra.mrb[0].mxu0 %v1388
    %v1980 = vpop.f32.mrb[0].mxu0
    %v1981 = vadd.f32 %v1736, %v1980
    %v1982 = vpop.f32.mrb[0].mxu0
    %v1983 = vadd.f32 %v1740, %v1982
    %v1984 = vpop.f32.mrb[0].mxu0
    %v1985 = vpop.f32.mrb[0].mxu0
    %1986 = vdwg.mxu0
    %v1987 = vpack.c.bf16 %v1382, %v1382
    %v1988 = vld [vmem:[#allocation8] sm:$0xff]
    %v1989 = vld [vmem:[#allocation8 + $0x8] sm:$0xff]
    %v1990 = vld [vmem:[#allocation8 + $0x10] sm:$0xff]
    %v1991 = vld [vmem:[#allocation8 + $0x18] sm:$0xff]
    %v1992 = vld [vmem:[#allocation8 + $0x20] sm:$0xff]
    %v1993 = vld [vmem:[#allocation8 + $0x28] sm:$0xff]
    %v1994 = vld [vmem:[#allocation8 + $0x30] sm:$0xff]
    %v1995 = vld [vmem:[#allocation8 + $0x38] sm:$0xff]
    %v1996 = vld [vmem:[#allocation8 + $0x40] sm:$0xff]
    %v1997 = vld [vmem:[#allocation8 + $0x48] sm:$0xff]
    %v1998 = vld [vmem:[#allocation8 + $0x50] sm:$0xff]
    %v1999 = vld [vmem:[#allocation8 + $0x58] sm:$0xff]
    %v2000 = vld [vmem:[#allocation8 + $0x60] sm:$0xff]
    %v2001 = vld [vmem:[#allocation8 + $0x68] sm:$0xff]
    %v2002 = vld [vmem:[#allocation8 + $0x70] sm:$0xff]
    %v2003 = vld [vmem:[#allocation8 + $0x78] sm:$0xff]
    %v2004 = vld [vmem:[#allocation8 + $0x80] sm:$0xff]
    %v2005 = vld [vmem:[#allocation8 + $0x88] sm:$0xff]
    %v2006 = vld [vmem:[#allocation8 + $0x90] sm:$0xff]
    %v2007 = vld [vmem:[#allocation8 + $0x98] sm:$0xff]
    %v2008 = vld [vmem:[#allocation8 + $0xa0] sm:$0xff]
    %v2009 = vld [vmem:[#allocation8 + $0xa8] sm:$0xff]
    %v2010 = vld [vmem:[#allocation8 + $0xb0] sm:$0xff]
    %v2011 = vld [vmem:[#allocation8 + $0xb8] sm:$0xff]
    %v2012 = vld [vmem:[#allocation8 + $0xc0] sm:$0xff]
    %v2013 = vld [vmem:[#allocation8 + $0xc8] sm:$0xff]
    %v2014 = vld [vmem:[#allocation8 + $0xd0] sm:$0xff]
    %v2015 = vld [vmem:[#allocation8 + $0xd8] sm:$0xff]
    %v2016 = vld [vmem:[#allocation8 + $0xe0] sm:$0xff]
    %v2017 = vld [vmem:[#allocation8 + $0xe8] sm:$0xff]
    %v2018 = vld [vmem:[#allocation8 + $0xf0] sm:$0xff]
    %v2019 = vld [vmem:[#allocation8 + $0xf8] sm:$0xff]
    %v2052 = vunpack.c.l.b16 %v1988
    %v2053 = vunpack.c.h.b16 %v1988
    %v2054 = vunpack.c.l.b16 %v1989
    %v2055 = vunpack.c.h.b16 %v1989
    %v2056 = vunpack.c.l.b16 %v1990
    %v2057 = vunpack.c.h.b16 %v1990
    %v2058 = vunpack.c.l.b16 %v1991
    %v2059 = vunpack.c.h.b16 %v1991
    %v2060 = vunpack.c.l.b16 %v1992
    %v2061 = vunpack.c.h.b16 %v1992
    %v2062 = vunpack.c.l.b16 %v1993
    %v2063 = vunpack.c.h.b16 %v1993
    %v2064 = vunpack.c.l.b16 %v1994
    %v2065 = vunpack.c.h.b16 %v1994
    %v2066 = vunpack.c.l.b16 %v1995
    %v2067 = vunpack.c.h.b16 %v1995
    %v2068 = vunpack.c.l.b16 %v1996
    %v2069 = vunpack.c.h.b16 %v1996
    %v2070 = vunpack.c.l.b16 %v1997
    %v2071 = vunpack.c.h.b16 %v1997
    %v2072 = vunpack.c.l.b16 %v1998
    %v2073 = vunpack.c.h.b16 %v1998
    %v2074 = vunpack.c.l.b16 %v1999
    %v2075 = vunpack.c.h.b16 %v1999
    %v2076 = vunpack.c.l.b16 %v2000
    %v2077 = vunpack.c.h.b16 %v2000
    %v2078 = vunpack.c.l.b16 %v2001
    %v2079 = vunpack.c.h.b16 %v2001
    %v2080 = vunpack.c.l.b16 %v2002
    %v2081 = vunpack.c.h.b16 %v2002
    %v2082 = vunpack.c.l.b16 %v2003
    %v2083 = vunpack.c.h.b16 %v2003
    %v2084 = vunpack.c.l.b16 %v2004
    %v2085 = vunpack.c.h.b16 %v2004
    %v2086 = vunpack.c.l.b16 %v2005
    %v2087 = vunpack.c.h.b16 %v2005
    %v2088 = vunpack.c.l.b16 %v2006
    %v2089 = vunpack.c.h.b16 %v2006
    %v2090 = vunpack.c.l.b16 %v2007
    %v2091 = vunpack.c.h.b16 %v2007
    %v2092 = vunpack.c.l.b16 %v2008
    %v2093 = vunpack.c.h.b16 %v2008
    %v2094 = vunpack.c.l.b16 %v2009
    %v2095 = vunpack.c.h.b16 %v2009
    %v2096 = vunpack.c.l.b16 %v2010
    %v2097 = vunpack.c.h.b16 %v2010
    %v2098 = vunpack.c.l.b16 %v2011
    %v2099 = vunpack.c.h.b16 %v2011
    %v2100 = vunpack.c.l.b16 %v2012
    %v2101 = vunpack.c.h.b16 %v2012
    %v2102 = vunpack.c.l.b16 %v2013
    %v2103 = vunpack.c.h.b16 %v2013
    %v2104 = vunpack.c.l.b16 %v2014
    %v2105 = vunpack.c.h.b16 %v2014
    %v2106 = vunpack.c.l.b16 %v2015
    %v2107 = vunpack.c.h.b16 %v2015
    %v2108 = vunpack.c.l.b16 %v2016
    %v2109 = vunpack.c.h.b16 %v2016
    %v2110 = vunpack.c.l.b16 %v2017
    %v2111 = vunpack.c.h.b16 %v2017
    %v2112 = vunpack.c.l.b16 %v2018
    %v2113 = vunpack.c.h.b16 %v2018
    %v2114 = vunpack.c.l.b16 %v2019
    %v2115 = vunpack.c.h.b16 %v2019
    %v2116 = vpack.c.b16 %v2056, %v2052
    %v2117 = vpack.c.b16 %v2057, %v2053
    %v2118 = vpack.c.b16 %v2058, %v2054
    %v2119 = vpack.c.b16 %v2059, %v2055
    %v2120 = vpack.c.b16 %v2064, %v2060
    %v2121 = vpack.c.b16 %v2065, %v2061
    %v2122 = vpack.c.b16 %v2066, %v2062
    %v2123 = vpack.c.b16 %v2067, %v2063
    %v2124 = vpack.c.b16 %v2072, %v2068
    %v2125 = vpack.c.b16 %v2073, %v2069
    %v2126 = vpack.c.b16 %v2074, %v2070
    %v2127 = vpack.c.b16 %v2075, %v2071
    %v2128 = vpack.c.b16 %v2080, %v2076
    %v2129 = vpack.c.b16 %v2081, %v2077
    %v2130 = vpack.c.b16 %v2082, %v2078
    %v2131 = vpack.c.b16 %v2083, %v2079
    %v2132 = vpack.c.b16 %v2088, %v2084
    %v2133 = vpack.c.b16 %v2089, %v2085
    %v2134 = vpack.c.b16 %v2090, %v2086
    %v2135 = vpack.c.b16 %v2091, %v2087
    %v2136 = vpack.c.b16 %v2096, %v2092
    %v2137 = vpack.c.b16 %v2097, %v2093
    %v2138 = vpack.c.b16 %v2098, %v2094
    %v2139 = vpack.c.b16 %v2099, %v2095
    %v2140 = vpack.c.b16 %v2104, %v2100
    %v2141 = vpack.c.b16 %v2105, %v2101
    %v2142 = vpack.c.b16 %v2106, %v2102
    %v2143 = vpack.c.b16 %v2107, %v2103
    %v2144 = vpack.c.b16 %v2112, %v2108
    %v2145 = vpack.c.b16 %v2113, %v2109
    %v2146 = vpack.c.b16 %v2114, %v2110
    %v2147 = vpack.c.b16 %v2115, %v2111
    %2180 = vmatprep.subr.bf16.mxu0 %v2117
    %2181 = vmatpush1.bf16.msra.mxu0 %v2116
    %2182 = vmatprep.subr.bf16.mxu0 %v2121
    %2183 = vmatpush1.bf16.msra.mxu0 %v2120
    %2184 = vmatprep.subr.bf16.mxu0 %v2125
    %2185 = vmatpush1.bf16.msra.mxu0 %v2124
    %2186 = vmatprep.subr.bf16.mxu0 %v2129
    %2187 = vmatpush1.bf16.msra.mxu0 %v2128
    %2188 = vmatprep.subr.bf16.mxu0 %v2133
    %2189 = vmatpush1.bf16.msra.mxu0 %v2132
    %2190 = vmatprep.subr.bf16.mxu0 %v2137
    %2191 = vmatpush1.bf16.msra.mxu0 %v2136
    %2192 = vmatprep.subr.bf16.mxu0 %v2141
    %2193 = vmatpush1.bf16.msra.mxu0 %v2140
    %2194 = vmatprep.subr.bf16.mxu0 %v2145
    %2195 = vmatpush1.bf16.msra.mxu0 %v2144
    %2196 = vmatprep.subr.bf16.mxu0 0
    %2197 = vmatpush1.bf16.msra.mxu0 0
    %2198 = vmatprep.subr.bf16.mxu0 0
    %2199 = vmatpush1.bf16.msra.mxu0 0
    %2200 = vmatprep.subr.bf16.mxu0 0
    %2201 = vmatpush1.bf16.msra.mxu0 0
    %2202 = vmatprep.subr.bf16.mxu0 0
    %2203 = vmatpush1.bf16.msra.mxu0 0
    %2204 = vmatprep.subr.bf16.mxu0 0
    %2205 = vmatpush1.bf16.msra.mxu0 0
    %2206 = vmatprep.subr.bf16.mxu0 0
    %2207 = vmatpush1.bf16.msra.mxu0 0
    %2208 = vmatprep.subr.bf16.mxu0 0
    %2209 = vmatpush1.bf16.msra.mxu0 0
    %2210 = vmatprep.subr.bf16.mxu0 0
    %2211 = vmatpush1.bf16.msra.mxu0 0
    %2212 = vmatprep.mubr.bf16.mxu0 0
    %2213 = vmatmul.mubr.bf16.gmra.mrb[0].mxu0 %v1987
    %v2214 = vpop.f32.mrb[0].mxu0
    %v2215 = vadd.f32 0.0, %v2214
    %v2216 = vpop.f32.mrb[0].mxu0
    %v2217 = vadd.f32 0.0, %v2216
    %v2218 = vpop.f32.mrb[0].mxu0
    %v2219 = vpop.f32.mrb[0].mxu0
    %2220 = vdwg.mxu0
    %2221 = vmatprep.subr.bf16.mxu0 %v2119
    %2222 = vmatpush1.bf16.msra.mxu0 %v2118
    %2223 = vmatprep.subr.bf16.mxu0 %v2123
    %2224 = vmatpush1.bf16.msra.mxu0 %v2122
    %2225 = vmatprep.subr.bf16.mxu0 %v2127
    %2226 = vmatpush1.bf16.msra.mxu0 %v2126
    %2227 = vmatprep.subr.bf16.mxu0 %v2131
    %2228 = vmatpush1.bf16.msra.mxu0 %v2130
    %2229 = vmatprep.subr.bf16.mxu0 %v2135
    %2230 = vmatpush1.bf16.msra.mxu0 %v2134
    %2231 = vmatprep.subr.bf16.mxu0 %v2139
    %2232 = vmatpush1.bf16.msra.mxu0 %v2138
    %2233 = vmatprep.subr.bf16.mxu0 %v2143
    %2234 = vmatpush1.bf16.msra.mxu0 %v2142
    %2235 = vmatprep.subr.bf16.mxu0 %v2147
    %2236 = vmatpush1.bf16.msra.mxu0 %v2146
    %2237 = vmatprep.subr.bf16.mxu0 0
    %2238 = vmatpush1.bf16.msra.mxu0 0
    %2239 = vmatprep.subr.bf16.mxu0 0
    %2240 = vmatpush1.bf16.msra.mxu0 0
    %2241 = vmatprep.subr.bf16.mxu0 0
    %2242 = vmatpush1.bf16.msra.mxu0 0
    %2243 = vmatprep.subr.bf16.mxu0 0
    %2244 = vmatpush1.bf16.msra.mxu0 0
    %2245 = vmatprep.subr.bf16.mxu0 0
    %2246 = vmatpush1.bf16.msra.mxu0 0
    %2247 = vmatprep.subr.bf16.mxu0 0
    %2248 = vmatpush1.bf16.msra.mxu0 0
    %2249 = vmatprep.subr.bf16.mxu0 0
    %2250 = vmatpush1.bf16.msra.mxu0 0
    %2251 = vmatprep.subr.bf16.mxu0 0
    %2252 = vmatpush1.bf16.msra.mxu0 0
    %2253 = vmatprep.mubr.bf16.mxu0 0
    %2254 = vmatmul.mubr.bf16.gmra.mrb[0].mxu0 %v1987
    %v2255 = vpop.f32.mrb[0].mxu0
    %v2256 = vadd.f32 0.0, %v2255
    %v2257 = vpop.f32.mrb[0].mxu0
    %v2258 = vadd.f32 0.0, %v2257
    %v2259 = vpop.f32.mrb[0].mxu0
    %v2260 = vpop.f32.mrb[0].mxu0
    %2261 = vdwg.mxu0
    %v2262 = vadd.f32 %v1940, %v2215
    %v2263 = vadd.f32 %v1942, %v2217
    %v2264 = vadd.f32 %v1981, %v2256
    %v2265 = vadd.f32 %v1983, %v2258
    %v2266 = vxor.u32 %v2262, 2147483648
    %v2267 = vmul.f32 %v2266, 1.442695
    %v2268 = vpow.pop %v2267
    %v2269 = vadd.f32 %v2268, 1.0
    %v2270 = vrcp.pop %v2269
    %v2271 = vmul.f32 1.0, %v2270
    %v2272 = vxor.u32 %v2263, 2147483648
    %v2273 = vmul.f32 %v2272, 1.442695
    %v2274 = vpow.pop %v2273
    %v2275 = vadd.f32 %v2274, 1.0
    %v2276 = vrcp.pop %v2275
    %v2277 = vmul.f32 1.0, %v2276
    %v2278 = vtanh.pop %v2264
    %v2279 = vxor.u32 %v2265, 2147483648
    %v2280 = vmul.f32 %v2279, 1.442695
    %v2281 = vpow.pop %v2280
    %v2282 = vadd.f32 %v2281, 1.0
    %v2283 = vrcp.pop %v2282
    %v2284 = vmul.f32 1.0, %v2283
    %v2285 = vmul.f32 %v2277, %v1380
    %v2286 = vmul.f32 %v2271, %v2278
    %v2287 = vadd.f32 %v2285, %v2286
    %v2288 = vtanh.pop %v2287
    %v2289 = vmul.f32 %v2284, %v2288
    %2290 = vst [vmem:[#allocation3 + $0x8] sm:$0xff] %v2289
    %v2291 = vld [vmem:[#allocation2 + $0x60] sm:$0xff]
    %v2292 = vld [vmem:[#allocation2 + $0x68] sm:$0xff]
    %v2293 = vld [vmem:[#allocation2 + $0x70] sm:$0xff]
    %v2294 = vld [vmem:[#allocation2 + $0x78] sm:$0xff]
    %v2295 = vpack.c.bf16 %v1690, %v1690
    %v2296 = vld [vmem:[#allocation4] sm:$0xff]
    %v2297 = vld [vmem:[#allocation4 + $0x8] sm:$0xff]
    %v2298 = vld [vmem:[#allocation4 + $0x10] sm:$0xff]
    %v2299 = vld [vmem:[#allocation4 + $0x18] sm:$0xff]
    %v2300 = vld [vmem:[#allocation4 + $0x20] sm:$0xff]
    %v2301 = vld [vmem:[#allocation4 + $0x28] sm:$0xff]
    %v2302 = vld [vmem:[#allocation4 + $0x30] sm:$0xff]
    %v2303 = vld [vmem:[#allocation4 + $0x38] sm:$0xff]
    %v2304 = vld [vmem:[#allocation4 + $0x40] sm:$0xff]
    %v2305 = vld [vmem:[#allocation4 + $0x48] sm:$0xff]
    %v2306 = vld [vmem:[#allocation4 + $0x50] sm:$0xff]
    %v2307 = vld [vmem:[#allocation4 + $0x58] sm:$0xff]
    %v2308 = vld [vmem:[#allocation4 + $0x60] sm:$0xff]
    %v2309 = vld [vmem:[#allocation4 + $0x68] sm:$0xff]
    %v2310 = vld [vmem:[#allocation4 + $0x70] sm:$0xff]
    %v2311 = vld [vmem:[#allocation4 + $0x78] sm:$0xff]
    %v2312 = vld [vmem:[#allocation4 + $0x80] sm:$0xff]
    %v2313 = vld [vmem:[#allocation4 + $0x88] sm:$0xff]
    %v2314 = vld [vmem:[#allocation4 + $0x90] sm:$0xff]
    %v2315 = vld [vmem:[#allocation4 + $0x98] sm:$0xff]
    %v2316 = vld [vmem:[#allocation4 + $0xa0] sm:$0xff]
    %v2317 = vld [vmem:[#allocation4 + $0xa8] sm:$0xff]
    %v2318 = vld [vmem:[#allocation4 + $0xb0] sm:$0xff]
    %v2319 = vld [vmem:[#allocation4 + $0xb8] sm:$0xff]
    %v2320 = vld [vmem:[#allocation4 + $0xc0] sm:$0xff]
    %v2321 = vld [vmem:[#allocation4 + $0xc8] sm:$0xff]
    %v2322 = vld [vmem:[#allocation4 + $0xd0] sm:$0xff]
    %v2323 = vld [vmem:[#allocation4 + $0xd8] sm:$0xff]
    %v2324 = vld [vmem:[#allocation4 + $0xe0] sm:$0xff]
    %v2325 = vld [vmem:[#allocation4 + $0xe8] sm:$0xff]
    %v2326 = vld [vmem:[#allocation4 + $0xf0] sm:$0xff]
    %v2327 = vld [vmem:[#allocation4 + $0xf8] sm:$0xff]
    %v2360 = vunpack.c.l.b16 %v2296
    %v2361 = vunpack.c.h.b16 %v2296
    %v2362 = vunpack.c.l.b16 %v2297
    %v2363 = vunpack.c.h.b16 %v2297
    %v2364 = vunpack.c.l.b16 %v2298
    %v2365 = vunpack.c.h.b16 %v2298
    %v2366 = vunpack.c.l.b16 %v2299
    %v2367 = vunpack.c.h.b16 %v2299
    %v2368 = vunpack.c.l.b16 %v2300
    %v2369 = vunpack.c.h.b16 %v2300
    %v2370 = vunpack.c.l.b16 %v2301
    %v2371 = vunpack.c.h.b16 %v2301
    %v2372 = vunpack.c.l.b16 %v2302
    %v2373 = vunpack.c.h.b16 %v2302
    %v2374 = vunpack.c.l.b16 %v2303
    %v2375 = vunpack.c.h.b16 %v2303
    %v2376 = vunpack.c.l.b16 %v2304
    %v2377 = vunpack.c.h.b16 %v2304
    %v2378 = vunpack.c.l.b16 %v2305
    %v2379 = vunpack.c.h.b16 %v2305
    %v2380 = vunpack.c.l.b16 %v2306
    %v2381 = vunpack.c.h.b16 %v2306
    %v2382 = vunpack.c.l.b16 %v2307
    %v2383 = vunpack.c.h.b16 %v2307
    %v2384 = vunpack.c.l.b16 %v2308
    %v2385 = vunpack.c.h.b16 %v2308
    %v2386 = vunpack.c.l.b16 %v2309
    %v2387 = vunpack.c.h.b16 %v2309
    %v2388 = vunpack.c.l.b16 %v2310
    %v2389 = vunpack.c.h.b16 %v2310
    %v2390 = vunpack.c.l.b16 %v2311
    %v2391 = vunpack.c.h.b16 %v2311
    %v2392 = vunpack.c.l.b16 %v2312
    %v2393 = vunpack.c.h.b16 %v2312
    %v2394 = vunpack.c.l.b16 %v2313
    %v2395 = vunpack.c.h.b16 %v2313
    %v2396 = vunpack.c.l.b16 %v2314
    %v2397 = vunpack.c.h.b16 %v2314
    %v2398 = vunpack.c.l.b16 %v2315
    %v2399 = vunpack.c.h.b16 %v2315
    %v2400 = vunpack.c.l.b16 %v2316
    %v2401 = vunpack.c.h.b16 %v2316
    %v2402 = vunpack.c.l.b16 %v2317
    %v2403 = vunpack.c.h.b16 %v2317
    %v2404 = vunpack.c.l.b16 %v2318
    %v2405 = vunpack.c.h.b16 %v2318
    %v2406 = vunpack.c.l.b16 %v2319
    %v2407 = vunpack.c.h.b16 %v2319
    %v2408 = vunpack.c.l.b16 %v2320
    %v2409 = vunpack.c.h.b16 %v2320
    %v2410 = vunpack.c.l.b16 %v2321
    %v2411 = vunpack.c.h.b16 %v2321
    %v2412 = vunpack.c.l.b16 %v2322
    %v2413 = vunpack.c.h.b16 %v2322
    %v2414 = vunpack.c.l.b16 %v2323
    %v2415 = vunpack.c.h.b16 %v2323
    %v2416 = vunpack.c.l.b16 %v2324
    %v2417 = vunpack.c.h.b16 %v2324
    %v2418 = vunpack.c.l.b16 %v2325
    %v2419 = vunpack.c.h.b16 %v2325
    %v2420 = vunpack.c.l.b16 %v2326
    %v2421 = vunpack.c.h.b16 %v2326
    %v2422 = vunpack.c.l.b16 %v2327
    %v2423 = vunpack.c.h.b16 %v2327
    %v2424 = vpack.c.b16 %v2364, %v2360
    %v2425 = vpack.c.b16 %v2365, %v2361
    %v2426 = vpack.c.b16 %v2366, %v2362
    %v2427 = vpack.c.b16 %v2367, %v2363
    %v2428 = vpack.c.b16 %v2372, %v2368
    %v2429 = vpack.c.b16 %v2373, %v2369
    %v2430 = vpack.c.b16 %v2374, %v2370
    %v2431 = vpack.c.b16 %v2375, %v2371
    %v2432 = vpack.c.b16 %v2380, %v2376
    %v2433 = vpack.c.b16 %v2381, %v2377
    %v2434 = vpack.c.b16 %v2382, %v2378
    %v2435 = vpack.c.b16 %v2383, %v2379
    %v2436 = vpack.c.b16 %v2388, %v2384
    %v2437 = vpack.c.b16 %v2389, %v2385
    %v2438 = vpack.c.b16 %v2390, %v2386
    %v2439 = vpack.c.b16 %v2391, %v2387
    %v2440 = vpack.c.b16 %v2396, %v2392
    %v2441 = vpack.c.b16 %v2397, %v2393
    %v2442 = vpack.c.b16 %v2398, %v2394
    %v2443 = vpack.c.b16 %v2399, %v2395
    %v2444 = vpack.c.b16 %v2404, %v2400
    %v2445 = vpack.c.b16 %v2405, %v2401
    %v2446 = vpack.c.b16 %v2406, %v2402
    %v2447 = vpack.c.b16 %v2407, %v2403
    %v2448 = vpack.c.b16 %v2412, %v2408
    %v2449 = vpack.c.b16 %v2413, %v2409
    %v2450 = vpack.c.b16 %v2414, %v2410
    %v2451 = vpack.c.b16 %v2415, %v2411
    %v2452 = vpack.c.b16 %v2420, %v2416
    %v2453 = vpack.c.b16 %v2421, %v2417
    %v2454 = vpack.c.b16 %v2422, %v2418
    %v2455 = vpack.c.b16 %v2423, %v2419
    %2488 = vmatprep.subr.bf16.mxu0 %v2425
    %2489 = vmatpush1.bf16.msra.mxu0 %v2424
    %2490 = vmatprep.subr.bf16.mxu0 %v2429
    %2491 = vmatpush1.bf16.msra.mxu0 %v2428
    %2492 = vmatprep.subr.bf16.mxu0 %v2433
    %2493 = vmatpush1.bf16.msra.mxu0 %v2432
    %2494 = vmatprep.subr.bf16.mxu0 %v2437
    %2495 = vmatpush1.bf16.msra.mxu0 %v2436
    %2496 = vmatprep.subr.bf16.mxu0 %v2441
    %2497 = vmatpush1.bf16.msra.mxu0 %v2440
    %2498 = vmatprep.subr.bf16.mxu0 %v2445
    %2499 = vmatpush1.bf16.msra.mxu0 %v2444
    %2500 = vmatprep.subr.bf16.mxu0 %v2449
    %2501 = vmatpush1.bf16.msra.mxu0 %v2448
    %2502 = vmatprep.subr.bf16.mxu0 %v2453
    %2503 = vmatpush1.bf16.msra.mxu0 %v2452
    %2504 = vmatprep.subr.bf16.mxu0 0
    %2505 = vmatpush1.bf16.msra.mxu0 0
    %2506 = vmatprep.subr.bf16.mxu0 0
    %2507 = vmatpush1.bf16.msra.mxu0 0
    %2508 = vmatprep.subr.bf16.mxu0 0
    %2509 = vmatpush1.bf16.msra.mxu0 0
    %2510 = vmatprep.subr.bf16.mxu0 0
    %2511 = vmatpush1.bf16.msra.mxu0 0
    %2512 = vmatprep.subr.bf16.mxu0 0
    %2513 = vmatpush1.bf16.msra.mxu0 0
    %2514 = vmatprep.subr.bf16.mxu0 0
    %2515 = vmatpush1.bf16.msra.mxu0 0
    %2516 = vmatprep.subr.bf16.mxu0 0
    %2517 = vmatpush1.bf16.msra.mxu0 0
    %2518 = vmatprep.subr.bf16.mxu0 0
    %2519 = vmatpush1.bf16.msra.mxu0 0
    %2520 = vmatprep.mubr.bf16.mxu0 0
    %2521 = vmatmul.mubr.bf16.gmra.mrb[0].mxu0 %v2295
    %v2522 = vpop.f32.mrb[0].mxu0
    %v2523 = vadd.f32 0.0, %v2522
    %v2524 = vpop.f32.mrb[0].mxu0
    %v2525 = vadd.f32 0.0, %v2524
    %v2526 = vpop.f32.mrb[0].mxu0
    %v2527 = vpop.f32.mrb[0].mxu0
    %2528 = vdwg.mxu0
    %2529 = vmatprep.subr.bf16.mxu0 %v2427
    %2530 = vmatpush1.bf16.msra.mxu0 %v2426
    %2531 = vmatprep.subr.bf16.mxu0 %v2431
    %2532 = vmatpush1.bf16.msra.mxu0 %v2430
    %2533 = vmatprep.subr.bf16.mxu0 %v2435
    %2534 = vmatpush1.bf16.msra.mxu0 %v2434
    %2535 = vmatprep.subr.bf16.mxu0 %v2439
    %2536 = vmatpush1.bf16.msra.mxu0 %v2438
    %2537 = vmatprep.subr.bf16.mxu0 %v2443
    %2538 = vmatpush1.bf16.msra.mxu0 %v2442
    %2539 = vmatprep.subr.bf16.mxu0 %v2447
    %2540 = vmatpush1.bf16.msra.mxu0 %v2446
    %2541 = vmatprep.subr.bf16.mxu0 %v2451
    %2542 = vmatpush1.bf16.msra.mxu0 %v2450
    %2543 = vmatprep.subr.bf16.mxu0 %v2455
    %2544 = vmatpush1.bf16.msra.mxu0 %v2454
    %2545 = vmatprep.subr.bf16.mxu0 0
    %2546 = vmatpush1.bf16.msra.mxu0 0
    %2547 = vmatprep.subr.bf16.mxu0 0
    %2548 = vmatpush1.bf16.msra.mxu0 0
    %2549 = vmatprep.subr.bf16.mxu0 0
    %2550 = vmatpush1.bf16.msra.mxu0 0
    %2551 = vmatprep.subr.bf16.mxu0 0
    %2552 = vmatpush1.bf16.msra.mxu0 0
    %2553 = vmatprep.subr.bf16.mxu0 0
    %2554 = vmatpush1.bf16.msra.mxu0 0
    %2555 = vmatprep.subr.bf16.mxu0 0
    %2556 = vmatpush1.bf16.msra.mxu0 0
    %2557 = vmatprep.subr.bf16.mxu0 0
    %2558 = vmatpush1.bf16.msra.mxu0 0
    %2559 = vmatprep.subr.bf16.mxu0 0
    %2560 = vmatpush1.bf16.msra.mxu0 0
    %2561 = vmatprep.mubr.bf16.mxu0 0
    %2562 = vmatmul.mubr.bf16.gmra.mrb[0].mxu0 %v2295
    %v2563 = vpop.f32.mrb[0].mxu0
    %v2564 = vadd.f32 0.0, %v2563
    %v2565 = vpop.f32.mrb[0].mxu0
    %v2566 = vadd.f32 0.0, %v2565
    %v2567 = vpop.f32.mrb[0].mxu0
    %v2568 = vpop.f32.mrb[0].mxu0
    %2569 = vdwg.mxu0
    %v2570 = vadd.f32 %v2291, %v2523
    %v2571 = vadd.f32 %v2292, %v2525
    %v2572 = vadd.f32 %v2293, %v2564
    %v2573 = vadd.f32 %v2294, %v2566
    %v2574 = vxor.u32 %v2570, 2147483648
    %v2575 = vmul.f32 %v2574, 1.442695
    %v2576 = vpow.pop %v2575
    %v2577 = vadd.f32 %v2576, 1.0
    %v2578 = vrcp.pop %v2577
    %v2579 = vmul.f32 1.0, %v2578
    %v2580 = vxor.u32 %v2571, 2147483648
    %v2581 = vmul.f32 %v2580, 1.442695
    %v2582 = vpow.pop %v2581
    %v2583 = vadd.f32 %v2582, 1.0
    %v2584 = vrcp.pop %v2583
    %v2585 = vmul.f32 1.0, %v2584
    %v2586 = vtanh.pop %v2572
    %v2587 = vxor.u32 %v2573, 2147483648
    %v2588 = vmul.f32 %v2587, 1.442695
    %v2589 = vpow.pop %v2588
    %v2590 = vadd.f32 %v2589, 1.0
    %v2591 = vrcp.pop %v2590
    %v2592 = vmul.f32 1.0, %v2591
    %v2593 = vmul.f32 %v2585, %v1688
    %v2594 = vmul.f32 %v2579, %v2586
    %v2595 = vadd.f32 %v2593, %v2594
    %v2596 = vtanh.pop %v2595
    %v2597 = vmul.f32 %v2592, %v2596
    %v2598 = vld [vmem:[#allocation6] sm:$0xff]
    %v2599 = vld [vmem:[#allocation6 + $0x8] sm:$0xff]
    %v2600 = vld [vmem:[#allocation6 + $0x10] sm:$0xff]
    %v2601 = vld [vmem:[#allocation6 + $0x18] sm:$0xff]
    %v2602 = vld [vmem:[#allocation6 + $0x20] sm:$0xff]
    %v2603 = vld [vmem:[#allocation6 + $0x28] sm:$0xff]
    %v2604 = vld [vmem:[#allocation6 + $0x30] sm:$0xff]
    %v2605 = vld [vmem:[#allocation6 + $0x38] sm:$0xff]
    %v2606 = vld [vmem:[#allocation6 + $0x40] sm:$0xff]
    %v2607 = vld [vmem:[#allocation6 + $0x48] sm:$0xff]
    %v2608 = vld [vmem:[#allocation6 + $0x50] sm:$0xff]
    %v2609 = vld [vmem:[#allocation6 + $0x58] sm:$0xff]
    %v2610 = vld [vmem:[#allocation6 + $0x60] sm:$0xff]
    %v2611 = vld [vmem:[#allocation6 + $0x68] sm:$0xff]
    %v2612 = vld [vmem:[#allocation6 + $0x70] sm:$0xff]
    %v2613 = vld [vmem:[#allocation6 + $0x78] sm:$0xff]
    %v2614 = vld [vmem:[#allocation6 + $0x80] sm:$0xff]
    %v2615 = vld [vmem:[#allocation6 + $0x88] sm:$0xff]
    %v2616 = vld [vmem:[#allocation6 + $0x90] sm:$0xff]
    %v2617 = vld [vmem:[#allocation6 + $0x98] sm:$0xff]
    %v2618 = vld [vmem:[#allocation6 + $0xa0] sm:$0xff]
    %v2619 = vld [vmem:[#allocation6 + $0xa8] sm:$0xff]
    %v2620 = vld [vmem:[#allocation6 + $0xb0] sm:$0xff]
    %v2621 = vld [vmem:[#allocation6 + $0xb8] sm:$0xff]
    %v2622 = vld [vmem:[#allocation6 + $0xc0] sm:$0xff]
    %v2623 = vld [vmem:[#allocation6 + $0xc8] sm:$0xff]
    %v2624 = vld [vmem:[#allocation6 + $0xd0] sm:$0xff]
    %v2625 = vld [vmem:[#allocation6 + $0xd8] sm:$0xff]
    %v2626 = vld [vmem:[#allocation6 + $0xe0] sm:$0xff]
    %v2627 = vld [vmem:[#allocation6 + $0xe8] sm:$0xff]
    %v2628 = vld [vmem:[#allocation6 + $0xf0] sm:$0xff]
    %v2629 = vld [vmem:[#allocation6 + $0xf8] sm:$0xff]
    %v2630 = vld [vmem:[%s6] sm:$0xf]
    %v2632 = vlaneseq
    %v2633 = vshrl.u32 %v2632, 7
    %v2634 = vsub.s32 0, %v2633
    %v2635 = vrot.slane %v2630, %v2634
    %v2636 = vlaneseq
    %v2637 = vshrl.u32 %v2636, 7
    %v2638 = vsub.s32 1, %v2637
    %v2639 = vrot.slane %v2630, %v2638
    %v2640 = vlaneseq
    %v2641 = vshrl.u32 %v2640, 7
    %v2642 = vsub.s32 2, %v2641
    %v2643 = vrot.slane %v2630, %v2642
    %v2644 = vlaneseq
    %v2645 = vshrl.u32 %v2644, 7
    %v2646 = vsub.s32 3, %v2645
    %v2647 = vrot.slane %v2630, %v2646
    %v2684 = vunpack.c.l.b16 %v2598
    %v2685 = vunpack.c.h.b16 %v2598
    %v2686 = vunpack.c.l.b16 %v2599
    %v2687 = vunpack.c.h.b16 %v2599
    %v2688 = vunpack.c.l.b16 %v2600
    %v2689 = vunpack.c.h.b16 %v2600
    %v2690 = vunpack.c.l.b16 %v2601
    %v2691 = vunpack.c.h.b16 %v2601
    %v2692 = vunpack.c.l.b16 %v2602
    %v2693 = vunpack.c.h.b16 %v2602
    %v2694 = vunpack.c.l.b16 %v2603
    %v2695 = vunpack.c.h.b16 %v2603
    %v2696 = vunpack.c.l.b16 %v2604
    %v2697 = vunpack.c.h.b16 %v2604
    %v2698 = vunpack.c.l.b16 %v2605
    %v2699 = vunpack.c.h.b16 %v2605
    %v2700 = vunpack.c.l.b16 %v2606
    %v2701 = vunpack.c.h.b16 %v2606
    %v2702 = vunpack.c.l.b16 %v2607
    %v2703 = vunpack.c.h.b16 %v2607
    %v2704 = vunpack.c.l.b16 %v2608
    %v2705 = vunpack.c.h.b16 %v2608
    %v2706 = vunpack.c.l.b16 %v2609
    %v2707 = vunpack.c.h.b16 %v2609
    %v2708 = vunpack.c.l.b16 %v2610
    %v2709 = vunpack.c.h.b16 %v2610
    %v2710 = vunpack.c.l.b16 %v2611
    %v2711 = vunpack.c.h.b16 %v2611
    %v2712 = vunpack.c.l.b16 %v2612
    %v2713 = vunpack.c.h.b16 %v2612
    %v2714 = vunpack.c.l.b16 %v2613
    %v2715 = vunpack.c.h.b16 %v2613
    %v2716 = vunpack.c.l.b16 %v2614
    %v2717 = vunpack.c.h.b16 %v2614
    %v2718 = vunpack.c.l.b16 %v2615
    %v2719 = vunpack.c.h.b16 %v2615
    %v2720 = vunpack.c.l.b16 %v2616
    %v2721 = vunpack.c.h.b16 %v2616
    %v2722 = vunpack.c.l.b16 %v2617
    %v2723 = vunpack.c.h.b16 %v2617
    %v2724 = vunpack.c.l.b16 %v2618
    %v2725 = vunpack.c.h.b16 %v2618
    %v2726 = vunpack.c.l.b16 %v2619
    %v2727 = vunpack.c.h.b16 %v2619
    %v2728 = vunpack.c.l.b16 %v2620
    %v2729 = vunpack.c.h.b16 %v2620
    %v2730 = vunpack.c.l.b16 %v2621
    %v2731 = vunpack.c.h.b16 %v2621
    %v2732 = vunpack.c.l.b16 %v2622
    %v2733 = vunpack.c.h.b16 %v2622
    %v2734 = vunpack.c.l.b16 %v2623
    %v2735 = vunpack.c.h.b16 %v2623
    %v2736 = vunpack.c.l.b16 %v2624
    %v2737 = vunpack.c.h.b16 %v2624
    %v2738 = vunpack.c.l.b16 %v2625
    %v2739 = vunpack.c.h.b16 %v2625
    %v2740 = vunpack.c.l.b16 %v2626
    %v2741 = vunpack.c.h.b16 %v2626
    %v2742 = vunpack.c.l.b16 %v2627
    %v2743 = vunpack.c.h.b16 %v2627
    %v2744 = vunpack.c.l.b16 %v2628
    %v2745 = vunpack.c.h.b16 %v2628
    %v2746 = vunpack.c.l.b16 %v2629
    %v2747 = vunpack.c.h.b16 %v2629
    %v2748 = vpack.c.b16 %v2688, %v2684
    %v2749 = vpack.c.b16 %v2689, %v2685
    %v2750 = vpack.c.b16 %v2690, %v2686
    %v2751 = vpack.c.b16 %v2691, %v2687
    %v2752 = vpack.c.b16 %v2696, %v2692
    %v2753 = vpack.c.b16 %v2697, %v2693
    %v2754 = vpack.c.b16 %v2698, %v2694
    %v2755 = vpack.c.b16 %v2699, %v2695
    %v2756 = vpack.c.b16 %v2704, %v2700
    %v2757 = vpack.c.b16 %v2705, %v2701
    %v2758 = vpack.c.b16 %v2706, %v2702
    %v2759 = vpack.c.b16 %v2707, %v2703
    %v2760 = vpack.c.b16 %v2712, %v2708
    %v2761 = vpack.c.b16 %v2713, %v2709
    %v2762 = vpack.c.b16 %v2714, %v2710
    %v2763 = vpack.c.b16 %v2715, %v2711
    %v2764 = vpack.c.b16 %v2720, %v2716
    %v2765 = vpack.c.b16 %v2721, %v2717
    %v2766 = vpack.c.b16 %v2722, %v2718
    %v2767 = vpack.c.b16 %v2723, %v2719
    %v2768 = vpack.c.b16 %v2728, %v2724
    %v2769 = vpack.c.b16 %v2729, %v2725
    %v2770 = vpack.c.b16 %v2730, %v2726
    %v2771 = vpack.c.b16 %v2731, %v2727
    %v2772 = vpack.c.b16 %v2736, %v2732
    %v2773 = vpack.c.b16 %v2737, %v2733
    %v2774 = vpack.c.b16 %v2738, %v2734
    %v2775 = vpack.c.b16 %v2739, %v2735
    %v2776 = vpack.c.b16 %v2744, %v2740
    %v2777 = vpack.c.b16 %v2745, %v2741
    %v2778 = vpack.c.b16 %v2746, %v2742
    %v2779 = vpack.c.b16 %v2747, %v2743
    %2812 = vmatprep.subr.bf16.mxu0 %v2749
    %2813 = vmatpush1.bf16.msra.mxu0 %v2748
    %2814 = vmatprep.subr.bf16.mxu0 %v2753
    %2815 = vmatpush1.bf16.msra.mxu0 %v2752
    %2816 = vmatprep.subr.bf16.mxu0 %v2757
    %2817 = vmatpush1.bf16.msra.mxu0 %v2756
    %2818 = vmatprep.subr.bf16.mxu0 %v2761
    %2819 = vmatpush1.bf16.msra.mxu0 %v2760
    %2820 = vmatprep.subr.bf16.mxu0 %v2765
    %2821 = vmatpush1.bf16.msra.mxu0 %v2764
    %2822 = vmatprep.subr.bf16.mxu0 %v2769
    %2823 = vmatpush1.bf16.msra.mxu0 %v2768
    %2824 = vmatprep.subr.bf16.mxu0 %v2773
    %2825 = vmatpush1.bf16.msra.mxu0 %v2772
    %2826 = vmatprep.subr.bf16.mxu0 %v2777
    %2827 = vmatpush1.bf16.msra.mxu0 %v2776
    %2828 = vmatprep.subr.bf16.mxu0 0
    %2829 = vmatpush1.bf16.msra.mxu0 0
    %2830 = vmatprep.subr.bf16.mxu0 0
    %2831 = vmatpush1.bf16.msra.mxu0 0
    %2832 = vmatprep.subr.bf16.mxu0 0
    %2833 = vmatpush1.bf16.msra.mxu0 0
    %2834 = vmatprep.subr.bf16.mxu0 0
    %2835 = vmatpush1.bf16.msra.mxu0 0
    %2836 = vmatprep.subr.bf16.mxu0 0
    %2837 = vmatpush1.bf16.msra.mxu0 0
    %2838 = vmatprep.subr.bf16.mxu0 0
    %2839 = vmatpush1.bf16.msra.mxu0 0
    %2840 = vmatprep.subr.bf16.mxu0 0
    %2841 = vmatpush1.bf16.msra.mxu0 0
    %2842 = vmatprep.subr.bf16.mxu0 0
    %2843 = vmatpush1.bf16.msra.mxu0 0
    %2844 = vmatprep.mubr.bf16.mxu0 0
    %2845 = vmatmul.mubr.bf16.gmra.mrb[0].mxu0 %v2295
    %v2846 = vpop.f32.mrb[0].mxu0
    %v2847 = vadd.f32 %v2635, %v2846
    %v2848 = vpop.f32.mrb[0].mxu0
    %v2849 = vadd.f32 %v2639, %v2848
    %v2850 = vpop.f32.mrb[0].mxu0
    %v2851 = vpop.f32.mrb[0].mxu0
    %2852 = vdwg.mxu0
    %2853 = vmatprep.subr.bf16.mxu0 %v2751
    %2854 = vmatpush1.bf16.msra.mxu0 %v2750
    %2855 = vmatprep.subr.bf16.mxu0 %v2755
    %2856 = vmatpush1.bf16.msra.mxu0 %v2754
    %2857 = vmatprep.subr.bf16.mxu0 %v2759
    %2858 = vmatpush1.bf16.msra.mxu0 %v2758
    %2859 = vmatprep.subr.bf16.mxu0 %v2763
    %2860 = vmatpush1.bf16.msra.mxu0 %v2762
    %2861 = vmatprep.subr.bf16.mxu0 %v2767
    %2862 = vmatpush1.bf16.msra.mxu0 %v2766
    %2863 = vmatprep.subr.bf16.mxu0 %v2771
    %2864 = vmatpush1.bf16.msra.mxu0 %v2770
    %2865 = vmatprep.subr.bf16.mxu0 %v2775
    %2866 = vmatpush1.bf16.msra.mxu0 %v2774
    %2867 = vmatprep.subr.bf16.mxu0 %v2779
    %2868 = vmatpush1.bf16.msra.mxu0 %v2778
    %2869 = vmatprep.subr.bf16.mxu0 0
    %2870 = vmatpush1.bf16.msra.mxu0 0
    %2871 = vmatprep.subr.bf16.mxu0 0
    %2872 = vmatpush1.bf16.msra.mxu0 0
    %2873 = vmatprep.subr.bf16.mxu0 0
    %2874 = vmatpush1.bf16.msra.mxu0 0
    %2875 = vmatprep.subr.bf16.mxu0 0
    %2876 = vmatpush1.bf16.msra.mxu0 0
    %2877 = vmatprep.subr.bf16.mxu0 0
    %2878 = vmatpush1.bf16.msra.mxu0 0
    %2879 = vmatprep.subr.bf16.mxu0 0
    %2880 = vmatpush1.bf16.msra.mxu0 0
    %2881 = vmatprep.subr.bf16.mxu0 0
    %2882 = vmatpush1.bf16.msra.mxu0 0
    %2883 = vmatprep.subr.bf16.mxu0 0
    %2884 = vmatpush1.bf16.msra.mxu0 0
    %2885 = vmatprep.mubr.bf16.mxu0 0
    %2886 = vmatmul.mubr.bf16.gmra.mrb[0].mxu0 %v2295
    %v2887 = vpop.f32.mrb[0].mxu0
    %v2888 = vadd.f32 %v2643, %v2887
    %v2889 = vpop.f32.mrb[0].mxu0
    %v2890 = vadd.f32 %v2647, %v2889
    %v2891 = vpop.f32.mrb[0].mxu0
    %v2892 = vpop.f32.mrb[0].mxu0
    %2893 = vdwg.mxu0
    %v2894 = vpack.c.bf16 %v2289, %v2289
    %v2895 = vld [vmem:[#allocation8] sm:$0xff]
    %v2896 = vld [vmem:[#allocation8 + $0x8] sm:$0xff]
    %v2897 = vld [vmem:[#allocation8 + $0x10] sm:$0xff]
    %v2898 = vld [vmem:[#allocation8 + $0x18] sm:$0xff]
    %v2899 = vld [vmem:[#allocation8 + $0x20] sm:$0xff]
    %v2900 = vld [vmem:[#allocation8 + $0x28] sm:$0xff]
    %v2901 = vld [vmem:[#allocation8 + $0x30] sm:$0xff]
    %v2902 = vld [vmem:[#allocation8 + $0x38] sm:$0xff]
    %v2903 = vld [vmem:[#allocation8 + $0x40] sm:$0xff]
    %v2904 = vld [vmem:[#allocation8 + $0x48] sm:$0xff]
    %v2905 = vld [vmem:[#allocation8 + $0x50] sm:$0xff]
    %v2906 = vld [vmem:[#allocation8 + $0x58] sm:$0xff]
    %v2907 = vld [vmem:[#allocation8 + $0x60] sm:$0xff]
    %v2908 = vld [vmem:[#allocation8 + $0x68] sm:$0xff]
    %v2909 = vld [vmem:[#allocation8 + $0x70] sm:$0xff]
    %v2910 = vld [vmem:[#allocation8 + $0x78] sm:$0xff]
    %v2911 = vld [vmem:[#allocation8 + $0x80] sm:$0xff]
    %v2912 = vld [vmem:[#allocation8 + $0x88] sm:$0xff]
    %v2913 = vld [vmem:[#allocation8 + $0x90] sm:$0xff]
    %v2914 = vld [vmem:[#allocation8 + $0x98] sm:$0xff]
    %v2915 = vld [vmem:[#allocation8 + $0xa0] sm:$0xff]
    %v2916 = vld [vmem:[#allocation8 + $0xa8] sm:$0xff]
    %v2917 = vld [vmem:[#allocation8 + $0xb0] sm:$0xff]
    %v2918 = vld [vmem:[#allocation8 + $0xb8] sm:$0xff]
    %v2919 = vld [vmem:[#allocation8 + $0xc0] sm:$0xff]
    %v2920 = vld [vmem:[#allocation8 + $0xc8] sm:$0xff]
    %v2921 = vld [vmem:[#allocation8 + $0xd0] sm:$0xff]
    %v2922 = vld [vmem:[#allocation8 + $0xd8] sm:$0xff]
    %v2923 = vld [vmem:[#allocation8 + $0xe0] sm:$0xff]
    %v2924 = vld [vmem:[#allocation8 + $0xe8] sm:$0xff]
    %v2925 = vld [vmem:[#allocation8 + $0xf0] sm:$0xff]
    %v2926 = vld [vmem:[#allocation8 + $0xf8] sm:$0xff]
    %v2959 = vunpack.c.l.b16 %v2895
    %v2960 = vunpack.c.h.b16 %v2895
    %v2961 = vunpack.c.l.b16 %v2896
    %v2962 = vunpack.c.h.b16 %v2896
    %v2963 = vunpack.c.l.b16 %v2897
    %v2964 = vunpack.c.h.b16 %v2897
    %v2965 = vunpack.c.l.b16 %v2898
    %v2966 = vunpack.c.h.b16 %v2898
    %v2967 = vunpack.c.l.b16 %v2899
    %v2968 = vunpack.c.h.b16 %v2899
    %v2969 = vunpack.c.l.b16 %v2900
    %v2970 = vunpack.c.h.b16 %v2900
    %v2971 = vunpack.c.l.b16 %v2901
    %v2972 = vunpack.c.h.b16 %v2901
    %v2973 = vunpack.c.l.b16 %v2902
    %v2974 = vunpack.c.h.b16 %v2902
    %v2975 = vunpack.c.l.b16 %v2903
    %v2976 = vunpack.c.h.b16 %v2903
    %v2977 = vunpack.c.l.b16 %v2904
    %v2978 = vunpack.c.h.b16 %v2904
    %v2979 = vunpack.c.l.b16 %v2905
    %v2980 = vunpack.c.h.b16 %v2905
    %v2981 = vunpack.c.l.b16 %v2906
    %v2982 = vunpack.c.h.b16 %v2906
    %v2983 = vunpack.c.l.b16 %v2907
    %v2984 = vunpack.c.h.b16 %v2907
    %v2985 = vunpack.c.l.b16 %v2908
    %v2986 = vunpack.c.h.b16 %v2908
    %v2987 = vunpack.c.l.b16 %v2909
    %v2988 = vunpack.c.h.b16 %v2909
    %v2989 = vunpack.c.l.b16 %v2910
    %v2990 = vunpack.c.h.b16 %v2910
    %v2991 = vunpack.c.l.b16 %v2911
    %v2992 = vunpack.c.h.b16 %v2911
    %v2993 = vunpack.c.l.b16 %v2912
    %v2994 = vunpack.c.h.b16 %v2912
    %v2995 = vunpack.c.l.b16 %v2913
    %v2996 = vunpack.c.h.b16 %v2913
    %v2997 = vunpack.c.l.b16 %v2914
    %v2998 = vunpack.c.h.b16 %v2914
    %v2999 = vunpack.c.l.b16 %v2915
    %v3000 = vunpack.c.h.b16 %v2915
    %v3001 = vunpack.c.l.b16 %v2916
    %v3002 = vunpack.c.h.b16 %v2916
    %v3003 = vunpack.c.l.b16 %v2917
    %v3004 = vunpack.c.h.b16 %v2917
    %v3005 = vunpack.c.l.b16 %v2918
    %v3006 = vunpack.c.h.b16 %v2918
    %v3007 = vunpack.c.l.b16 %v2919
    %v3008 = vunpack.c.h.b16 %v2919
    %v3009 = vunpack.c.l.b16 %v2920
    %v3010 = vunpack.c.h.b16 %v2920
    %v3011 = vunpack.c.l.b16 %v2921
    %v3012 = vunpack.c.h.b16 %v2921
    %v3013 = vunpack.c.l.b16 %v2922
    %v3014 = vunpack.c.h.b16 %v2922
    %v3015 = vunpack.c.l.b16 %v2923
    %v3016 = vunpack.c.h.b16 %v2923
    %v3017 = vunpack.c.l.b16 %v2924
    %v3018 = vunpack.c.h.b16 %v2924
    %v3019 = vunpack.c.l.b16 %v2925
    %v3020 = vunpack.c.h.b16 %v2925
    %v3021 = vunpack.c.l.b16 %v2926
    %v3022 = vunpack.c.h.b16 %v2926
    %v3023 = vpack.c.b16 %v2963, %v2959
    %v3024 = vpack.c.b16 %v2964, %v2960
    %v3025 = vpack.c.b16 %v2965, %v2961
    %v3026 = vpack.c.b16 %v2966, %v2962
    %v3027 = vpack.c.b16 %v2971, %v2967
    %v3028 = vpack.c.b16 %v2972, %v2968
    %v3029 = vpack.c.b16 %v2973, %v2969
    %v3030 = vpack.c.b16 %v2974, %v2970
    %v3031 = vpack.c.b16 %v2979, %v2975
    %v3032 = vpack.c.b16 %v2980, %v2976
    %v3033 = vpack.c.b16 %v2981, %v2977
    %v3034 = vpack.c.b16 %v2982, %v2978
    %v3035 = vpack.c.b16 %v2987, %v2983
    %v3036 = vpack.c.b16 %v2988, %v2984
    %v3037 = vpack.c.b16 %v2989, %v2985
    %v3038 = vpack.c.b16 %v2990, %v2986
    %v3039 = vpack.c.b16 %v2995, %v2991
    %v3040 = vpack.c.b16 %v2996, %v2992
    %v3041 = vpack.c.b16 %v2997, %v2993
    %v3042 = vpack.c.b16 %v2998, %v2994
    %v3043 = vpack.c.b16 %v3003, %v2999
    %v3044 = vpack.c.b16 %v3004, %v3000
    %v3045 = vpack.c.b16 %v3005, %v3001
    %v3046 = vpack.c.b16 %v3006, %v3002
    %v3047 = vpack.c.b16 %v3011, %v3007
    %v3048 = vpack.c.b16 %v3012, %v3008
    %v3049 = vpack.c.b16 %v3013, %v3009
    %v3050 = vpack.c.b16 %v3014, %v3010
    %v3051 = vpack.c.b16 %v3019, %v3015
    %v3052 = vpack.c.b16 %v3020, %v3016
    %v3053 = vpack.c.b16 %v3021, %v3017
    %v3054 = vpack.c.b16 %v3022, %v3018
    %3087 = vmatprep.subr.bf16.mxu0 %v3024
    %3088 = vmatpush1.bf16.msra.mxu0 %v3023
    %3089 = vmatprep.subr.bf16.mxu0 %v3028
    %3090 = vmatpush1.bf16.msra.mxu0 %v3027
    %3091 = vmatprep.subr.bf16.mxu0 %v3032
    %3092 = vmatpush1.bf16.msra.mxu0 %v3031
    %3093 = vmatprep.subr.bf16.mxu0 %v3036
    %3094 = vmatpush1.bf16.msra.mxu0 %v3035
    %3095 = vmatprep.subr.bf16.mxu0 %v3040
    %3096 = vmatpush1.bf16.msra.mxu0 %v3039
    %3097 = vmatprep.subr.bf16.mxu0 %v3044
    %3098 = vmatpush1.bf16.msra.mxu0 %v3043
    %3099 = vmatprep.subr.bf16.mxu0 %v3048
    %3100 = vmatpush1.bf16.msra.mxu0 %v3047
    %3101 = vmatprep.subr.bf16.mxu0 %v3052
    %3102 = vmatpush1.bf16.msra.mxu0 %v3051
    %3103 = vmatprep.subr.bf16.mxu0 0
    %3104 = vmatpush1.bf16.msra.mxu0 0
    %3105 = vmatprep.subr.bf16.mxu0 0
    %3106 = vmatpush1.bf16.msra.mxu0 0
    %3107 = vmatprep.subr.bf16.mxu0 0
    %3108 = vmatpush1.bf16.msra.mxu0 0
    %3109 = vmatprep.subr.bf16.mxu0 0
    %3110 = vmatpush1.bf16.msra.mxu0 0
    %3111 = vmatprep.subr.bf16.mxu0 0
    %3112 = vmatpush1.bf16.msra.mxu0 0
    %3113 = vmatprep.subr.bf16.mxu0 0
    %3114 = vmatpush1.bf16.msra.mxu0 0
    %3115 = vmatprep.subr.bf16.mxu0 0
    %3116 = vmatpush1.bf16.msra.mxu0 0
    %3117 = vmatprep.subr.bf16.mxu0 0
    %3118 = vmatpush1.bf16.msra.mxu0 0
    %3119 = vmatprep.mubr.bf16.mxu0 0
    %3120 = vmatmul.mubr.bf16.gmra.mrb[0].mxu0 %v2894
    %v3121 = vpop.f32.mrb[0].mxu0
    %v3122 = vadd.f32 0.0, %v3121
    %v3123 = vpop.f32.mrb[0].mxu0
    %v3124 = vadd.f32 0.0, %v3123
    %v3125 = vpop.f32.mrb[0].mxu0
    %v3126 = vpop.f32.mrb[0].mxu0
    %3127 = vdwg.mxu0
    %3128 = vmatprep.subr.bf16.mxu0 %v3026
    %3129 = vmatpush1.bf16.msra.mxu0 %v3025
    %3130 = vmatprep.subr.bf16.mxu0 %v3030
    %3131 = vmatpush1.bf16.msra.mxu0 %v3029
    %3132 = vmatprep.subr.bf16.mxu0 %v3034
    %3133 = vmatpush1.bf16.msra.mxu0 %v3033
    %3134 = vmatprep.subr.bf16.mxu0 %v3038
    %3135 = vmatpush1.bf16.msra.mxu0 %v3037
    %3136 = vmatprep.subr.bf16.mxu0 %v3042
    %3137 = vmatpush1.bf16.msra.mxu0 %v3041
    %3138 = vmatprep.subr.bf16.mxu0 %v3046
    %3139 = vmatpush1.bf16.msra.mxu0 %v3045
    %3140 = vmatprep.subr.bf16.mxu0 %v3050
    %3141 = vmatpush1.bf16.msra.mxu0 %v3049
    %3142 = vmatprep.subr.bf16.mxu0 %v3054
    %3143 = vmatpush1.bf16.msra.mxu0 %v3053
    %3144 = vmatprep.subr.bf16.mxu0 0
    %3145 = vmatpush1.bf16.msra.mxu0 0
    %3146 = vmatprep.subr.bf16.mxu0 0
    %3147 = vmatpush1.bf16.msra.mxu0 0
    %3148 = vmatprep.subr.bf16.mxu0 0
    %3149 = vmatpush1.bf16.msra.mxu0 0
    %3150 = vmatprep.subr.bf16.mxu0 0
    %3151 = vmatpush1.bf16.msra.mxu0 0
    %3152 = vmatprep.subr.bf16.mxu0 0
    %3153 = vmatpush1.bf16.msra.mxu0 0
    %3154 = vmatprep.subr.bf16.mxu0 0
    %3155 = vmatpush1.bf16.msra.mxu0 0
    %3156 = vmatprep.subr.bf16.mxu0 0
    %3157 = vmatpush1.bf16.msra.mxu0 0
    %3158 = vmatprep.subr.bf16.mxu0 0
    %3159 = vmatpush1.bf16.msra.mxu0 0
    %3160 = vmatprep.mubr.bf16.mxu0 0
    %3161 = vmatmul.mubr.bf16.gmra.mrb[0].mxu0 %v2894
    %v3162 = vpop.f32.mrb[0].mxu0
    %v3163 = vadd.f32 0.0, %v3162
    %v3164 = vpop.f32.mrb[0].mxu0
    %v3165 = vadd.f32 0.0, %v3164
    %v3166 = vpop.f32.mrb[0].mxu0
    %v3167 = vpop.f32.mrb[0].mxu0
    %3168 = vdwg.mxu0
    %v3169 = vadd.f32 %v2847, %v3122
    %v3170 = vadd.f32 %v2849, %v3124
    %v3171 = vadd.f32 %v2888, %v3163
    %v3172 = vadd.f32 %v2890, %v3165
    %v3173 = vxor.u32 %v3169, 2147483648
    %v3174 = vmul.f32 %v3173, 1.442695
    %v3175 = vpow.pop %v3174
    %v3176 = vadd.f32 %v3175, 1.0
    %v3177 = vrcp.pop %v3176
    %v3178 = vmul.f32 1.0, %v3177
    %v3179 = vxor.u32 %v3170, 2147483648
    %v3180 = vmul.f32 %v3179, 1.442695
    %v3181 = vpow.pop %v3180
    %v3182 = vadd.f32 %v3181, 1.0
    %v3183 = vrcp.pop %v3182
    %v3184 = vmul.f32 1.0, %v3183
    %v3185 = vtanh.pop %v3171
    %v3186 = vxor.u32 %v3172, 2147483648
    %v3187 = vmul.f32 %v3186, 1.442695
    %v3188 = vpow.pop %v3187
    %v3189 = vadd.f32 %v3188, 1.0
    %v3190 = vrcp.pop %v3189
    %v3191 = vmul.f32 1.0, %v3190
    %v3192 = vmul.f32 %v3184, %v2287
    %v3193 = vmul.f32 %v3178, %v3185
    %v3194 = vadd.f32 %v3192, %v3193
    %v3195 = vtanh.pop %v3194
    %v3196 = vmul.f32 %v3191, %v3195
    %3197 = vst [vmem:[#allocation3 + $0x10] sm:$0xff] %v3196
    %v3198 = vld [vmem:[#allocation2 + $0x80] sm:$0xff]
    %v3199 = vld [vmem:[#allocation2 + $0x88] sm:$0xff]
    %v3200 = vld [vmem:[#allocation2 + $0x90] sm:$0xff]
    %v3201 = vld [vmem:[#allocation2 + $0x98] sm:$0xff]
    %v3202 = vpack.c.bf16 %v2597, %v2597
    %v3203 = vld [vmem:[#allocation4] sm:$0xff]
    %v3204 = vld [vmem:[#allocation4 + $0x8] sm:$0xff]
    %v3205 = vld [vmem:[#allocation4 + $0x10] sm:$0xff]
    %v3206 = vld [vmem:[#allocation4 + $0x18] sm:$0xff]
    %v3207 = vld [vmem:[#allocation4 + $0x20] sm:$0xff]
    %v3208 = vld [vmem:[#allocation4 + $0x28] sm:$0xff]
    %v3209 = vld [vmem:[#allocation4 + $0x30] sm:$0xff]
    %v3210 = vld [vmem:[#allocation4 + $0x38] sm:$0xff]
    %v3211 = vld [vmem:[#allocation4 + $0x40] sm:$0xff]
    %v3212 = vld [vmem:[#allocation4 + $0x48] sm:$0xff]
    %v3213 = vld [vmem:[#allocation4 + $0x50] sm:$0xff]
    %v3214 = vld [vmem:[#allocation4 + $0x58] sm:$0xff]
    %v3215 = vld [vmem:[#allocation4 + $0x60] sm:$0xff]
    %v3216 = vld [vmem:[#allocation4 + $0x68] sm:$0xff]
    %v3217 = vld [vmem:[#allocation4 + $0x70] sm:$0xff]
    %v3218 = vld [vmem:[#allocation4 + $0x78] sm:$0xff]
    %v3219 = vld [vmem:[#allocation4 + $0x80] sm:$0xff]
    %v3220 = vld [vmem:[#allocation4 + $0x88] sm:$0xff]
    %v3221 = vld [vmem:[#allocation4 + $0x90] sm:$0xff]
    %v3222 = vld [vmem:[#allocation4 + $0x98] sm:$0xff]
    %v3223 = vld [vmem:[#allocation4 + $0xa0] sm:$0xff]
    %v3224 = vld [vmem:[#allocation4 + $0xa8] sm:$0xff]
    %v3225 = vld [vmem:[#allocation4 + $0xb0] sm:$0xff]
    %v3226 = vld [vmem:[#allocation4 + $0xb8] sm:$0xff]
    %v3227 = vld [vmem:[#allocation4 + $0xc0] sm:$0xff]
    %v3228 = vld [vmem:[#allocation4 + $0xc8] sm:$0xff]
    %v3229 = vld [vmem:[#allocation4 + $0xd0] sm:$0xff]
    %v3230 = vld [vmem:[#allocation4 + $0xd8] sm:$0xff]
    %v3231 = vld [vmem:[#allocation4 + $0xe0] sm:$0xff]
    %v3232 = vld [vmem:[#allocation4 + $0xe8] sm:$0xff]
    %v3233 = vld [vmem:[#allocation4 + $0xf0] sm:$0xff]
    %v3234 = vld [vmem:[#allocation4 + $0xf8] sm:$0xff]
    %v3267 = vunpack.c.l.b16 %v3203
    %v3268 = vunpack.c.h.b16 %v3203
    %v3269 = vunpack.c.l.b16 %v3204
    %v3270 = vunpack.c.h.b16 %v3204
    %v3271 = vunpack.c.l.b16 %v3205
    %v3272 = vunpack.c.h.b16 %v3205
    %v3273 = vunpack.c.l.b16 %v3206
    %v3274 = vunpack.c.h.b16 %v3206
    %v3275 = vunpack.c.l.b16 %v3207
    %v3276 = vunpack.c.h.b16 %v3207
    %v3277 = vunpack.c.l.b16 %v3208
    %v3278 = vunpack.c.h.b16 %v3208
    %v3279 = vunpack.c.l.b16 %v3209
    %v3280 = vunpack.c.h.b16 %v3209
    %v3281 = vunpack.c.l.b16 %v3210
    %v3282 = vunpack.c.h.b16 %v3210
    %v3283 = vunpack.c.l.b16 %v3211
    %v3284 = vunpack.c.h.b16 %v3211
    %v3285 = vunpack.c.l.b16 %v3212
    %v3286 = vunpack.c.h.b16 %v3212
    %v3287 = vunpack.c.l.b16 %v3213
    %v3288 = vunpack.c.h.b16 %v3213
    %v3289 = vunpack.c.l.b16 %v3214
    %v3290 = vunpack.c.h.b16 %v3214
    %v3291 = vunpack.c.l.b16 %v3215
    %v3292 = vunpack.c.h.b16 %v3215
    %v3293 = vunpack.c.l.b16 %v3216
    %v3294 = vunpack.c.h.b16 %v3216
    %v3295 = vunpack.c.l.b16 %v3217
    %v3296 = vunpack.c.h.b16 %v3217
    %v3297 = vunpack.c.l.b16 %v3218
    %v3298 = vunpack.c.h.b16 %v3218
    %v3299 = vunpack.c.l.b16 %v3219
    %v3300 = vunpack.c.h.b16 %v3219
    %v3301 = vunpack.c.l.b16 %v3220
    %v3302 = vunpack.c.h.b16 %v3220
    %v3303 = vunpack.c.l.b16 %v3221
    %v3304 = vunpack.c.h.b16 %v3221
    %v3305 = vunpack.c.l.b16 %v3222
    %v3306 = vunpack.c.h.b16 %v3222
    %v3307 = vunpack.c.l.b16 %v3223
    %v3308 = vunpack.c.h.b16 %v3223
    %v3309 = vunpack.c.l.b16 %v3224
    %v3310 = vunpack.c.h.b16 %v3224
    %v3311 = vunpack.c.l.b16 %v3225
    %v3312 = vunpack.c.h.b16 %v3225
    %v3313 = vunpack.c.l.b16 %v3226
    %v3314 = vunpack.c.h.b16 %v3226
    %v3315 = vunpack.c.l.b16 %v3227
    %v3316 = vunpack.c.h.b16 %v3227
    %v3317 = vunpack.c.l.b16 %v3228
    %v3318 = vunpack.c.h.b16 %v3228
    %v3319 = vunpack.c.l.b16 %v3229
    %v3320 = vunpack.c.h.b16 %v3229
    %v3321 = vunpack.c.l.b16 %v3230
    %v3322 = vunpack.c.h.b16 %v3230
    %v3323 = vunpack.c.l.b16 %v3231
    %v3324 = vunpack.c.h.b16 %v3231
    %v3325 = vunpack.c.l.b16 %v3232
    %v3326 = vunpack.c.h.b16 %v3232
    %v3327 = vunpack.c.l.b16 %v3233
    %v3328 = vunpack.c.h.b16 %v3233
    %v3329 = vunpack.c.l.b16 %v3234
    %v3330 = vunpack.c.h.b16 %v3234
    %v3331 = vpack.c.b16 %v3271, %v3267
    %v3332 = vpack.c.b16 %v3272, %v3268
    %v3333 = vpack.c.b16 %v3273, %v3269
    %v3334 = vpack.c.b16 %v3274, %v3270
    %v3335 = vpack.c.b16 %v3279, %v3275
    %v3336 = vpack.c.b16 %v3280, %v3276
    %v3337 = vpack.c.b16 %v3281, %v3277
    %v3338 = vpack.c.b16 %v3282, %v3278
    %v3339 = vpack.c.b16 %v3287, %v3283
    %v3340 = vpack.c.b16 %v3288, %v3284
    %v3341 = vpack.c.b16 %v3289, %v3285
    %v3342 = vpack.c.b16 %v3290, %v3286
    %v3343 = vpack.c.b16 %v3295, %v3291
    %v3344 = vpack.c.b16 %v3296, %v3292
    %v3345 = vpack.c.b16 %v3297, %v3293
    %v3346 = vpack.c.b16 %v3298, %v3294
    %v3347 = vpack.c.b16 %v3303, %v3299
    %v3348 = vpack.c.b16 %v3304, %v3300
    %v3349 = vpack.c.b16 %v3305, %v3301
    %v3350 = vpack.c.b16 %v3306, %v3302
    %v3351 = vpack.c.b16 %v3311, %v3307
    %v3352 = vpack.c.b16 %v3312, %v3308
    %v3353 = vpack.c.b16 %v3313, %v3309
    %v3354 = vpack.c.b16 %v3314, %v3310
    %v3355 = vpack.c.b16 %v3319, %v3315
    %v3356 = vpack.c.b16 %v3320, %v3316
    %v3357 = vpack.c.b16 %v3321, %v3317
    %v3358 = vpack.c.b16 %v3322, %v3318
    %v3359 = vpack.c.b16 %v3327, %v3323
    %v3360 = vpack.c.b16 %v3328, %v3324
    %v3361 = vpack.c.b16 %v3329, %v3325
    %v3362 = vpack.c.b16 %v3330, %v3326
    %3395 = vmatprep.subr.bf16.mxu0 %v3332
    %3396 = vmatpush1.bf16.msra.mxu0 %v3331
    %3397 = vmatprep.subr.bf16.mxu0 %v3336
    %3398 = vmatpush1.bf16.msra.mxu0 %v3335
    %3399 = vmatprep.subr.bf16.mxu0 %v3340
    %3400 = vmatpush1.bf16.msra.mxu0 %v3339
    %3401 = vmatprep.subr.bf16.mxu0 %v3344
    %3402 = vmatpush1.bf16.msra.mxu0 %v3343
    %3403 = vmatprep.subr.bf16.mxu0 %v3348
    %3404 = vmatpush1.bf16.msra.mxu0 %v3347
    %3405 = vmatprep.subr.bf16.mxu0 %v3352
    %3406 = vmatpush1.bf16.msra.mxu0 %v3351
    %3407 = vmatprep.subr.bf16.mxu0 %v3356
    %3408 = vmatpush1.bf16.msra.mxu0 %v3355
    %3409 = vmatprep.subr.bf16.mxu0 %v3360
    %3410 = vmatpush1.bf16.msra.mxu0 %v3359
    %3411 = vmatprep.subr.bf16.mxu0 0
    %3412 = vmatpush1.bf16.msra.mxu0 0
    %3413 = vmatprep.subr.bf16.mxu0 0
    %3414 = vmatpush1.bf16.msra.mxu0 0
    %3415 = vmatprep.subr.bf16.mxu0 0
    %3416 = vmatpush1.bf16.msra.mxu0 0
    %3417 = vmatprep.subr.bf16.mxu0 0
    %3418 = vmatpush1.bf16.msra.mxu0 0
    %3419 = vmatprep.subr.bf16.mxu0 0
    %3420 = vmatpush1.bf16.msra.mxu0 0
    %3421 = vmatprep.subr.bf16.mxu0 0
    %3422 = vmatpush1.bf16.msra.mxu0 0
    %3423 = vmatprep.subr.bf16.mxu0 0
    %3424 = vmatpush1.bf16.msra.mxu0 0
    %3425 = vmatprep.subr.bf16.mxu0 0
    %3426 = vmatpush1.bf16.msra.mxu0 0
    %3427 = vmatprep.mubr.bf16.mxu0 0
    %3428 = vmatmul.mubr.bf16.gmra.mrb[0].mxu0 %v3202
    %v3429 = vpop.f32.mrb[0].mxu0
    %v3430 = vadd.f32 0.0, %v3429
    %v3431 = vpop.f32.mrb[0].mxu0
    %v3432 = vadd.f32 0.0, %v3431
    %v3433 = vpop.f32.mrb[0].mxu0
    %v3434 = vpop.f32.mrb[0].mxu0
    %3435 = vdwg.mxu0
    %3436 = vmatprep.subr.bf16.mxu0 %v3334
    %3437 = vmatpush1.bf16.msra.mxu0 %v3333
    %3438 = vmatprep.subr.bf16.mxu0 %v3338
    %3439 = vmatpush1.bf16.msra.mxu0 %v3337
    %3440 = vmatprep.subr.bf16.mxu0 %v3342
    %3441 = vmatpush1.bf16.msra.mxu0 %v3341
    %3442 = vmatprep.subr.bf16.mxu0 %v3346
    %3443 = vmatpush1.bf16.msra.mxu0 %v3345
    %3444 = vmatprep.subr.bf16.mxu0 %v3350
    %3445 = vmatpush1.bf16.msra.mxu0 %v3349
    %3446 = vmatprep.subr.bf16.mxu0 %v3354
    %3447 = vmatpush1.bf16.msra.mxu0 %v3353
    %3448 = vmatprep.subr.bf16.mxu0 %v3358
    %3449 = vmatpush1.bf16.msra.mxu0 %v3357
    %3450 = vmatprep.subr.bf16.mxu0 %v3362
    %3451 = vmatpush1.bf16.msra.mxu0 %v3361
    %3452 = vmatprep.subr.bf16.mxu0 0
    %3453 = vmatpush1.bf16.msra.mxu0 0
    %3454 = vmatprep.subr.bf16.mxu0 0
    %3455 = vmatpush1.bf16.msra.mxu0 0
    %3456 = vmatprep.subr.bf16.mxu0 0
    %3457 = vmatpush1.bf16.msra.mxu0 0
    %3458 = vmatprep.subr.bf16.mxu0 0
    %3459 = vmatpush1.bf16.msra.mxu0 0
    %3460 = vmatprep.subr.bf16.mxu0 0
    %3461 = vmatpush1.bf16.msra.mxu0 0
    %3462 = vmatprep.subr.bf16.mxu0 0
    %3463 = vmatpush1.bf16.msra.mxu0 0
    %3464 = vmatprep.subr.bf16.mxu0 0
    %3465 = vmatpush1.bf16.msra.mxu0 0
    %3466 = vmatprep.subr.bf16.mxu0 0
    %3467 = vmatpush1.bf16.msra.mxu0 0
    %3468 = vmatprep.mubr.bf16.mxu0 0
    %3469 = vmatmul.mubr.bf16.gmra.mrb[0].mxu0 %v3202
    %v3470 = vpop.f32.mrb[0].mxu0
    %v3471 = vadd.f32 0.0, %v3470
    %v3472 = vpop.f32.mrb[0].mxu0
    %v3473 = vadd.f32 0.0, %v3472
    %v3474 = vpop.f32.mrb[0].mxu0
    %v3475 = vpop.f32.mrb[0].mxu0
    %3476 = vdwg.mxu0
    %v3477 = vadd.f32 %v3198, %v3430
    %v3478 = vadd.f32 %v3199, %v3432
    %v3479 = vadd.f32 %v3200, %v3471
    %v3480 = vadd.f32 %v3201, %v3473
    %v3481 = vxor.u32 %v3477, 2147483648
    %v3482 = vmul.f32 %v3481, 1.442695
    %v3483 = vpow.pop %v3482
    %v3484 = vadd.f32 %v3483, 1.0
    %v3485 = vrcp.pop %v3484
    %v3486 = vmul.f32 1.0, %v3485
    %v3487 = vxor.u32 %v3478, 2147483648
    %v3488 = vmul.f32 %v3487, 1.442695
    %v3489 = vpow.pop %v3488
    %v3490 = vadd.f32 %v3489, 1.0
    %v3491 = vrcp.pop %v3490
    %v3492 = vmul.f32 1.0, %v3491
    %v3493 = vtanh.pop %v3479
    %v3494 = vxor.u32 %v3480, 2147483648
    %v3495 = vmul.f32 %v3494, 1.442695
    %v3496 = vpow.pop %v3495
    %v3497 = vadd.f32 %v3496, 1.0
    %v3498 = vrcp.pop %v3497
    %v3499 = vmul.f32 1.0, %v3498
    %v3500 = vmul.f32 %v3492, %v2595
    %v3501 = vmul.f32 %v3486, %v3493
    %v3502 = vadd.f32 %v3500, %v3501
    %v3503 = vtanh.pop %v3502
    %v3504 = vmul.f32 %v3499, %v3503
    %v3505 = vld [vmem:[#allocation6] sm:$0xff]
    %v3506 = vld [vmem:[#allocation6 + $0x8] sm:$0xff]
    %v3507 = vld [vmem:[#allocation6 + $0x10] sm:$0xff]
    %v3508 = vld [vmem:[#allocation6 + $0x18] sm:$0xff]
    %v3509 = vld [vmem:[#allocation6 + $0x20] sm:$0xff]
    %v3510 = vld [vmem:[#allocation6 + $0x28] sm:$0xff]
    %v3511 = vld [vmem:[#allocation6 + $0x30] sm:$0xff]
    %v3512 = vld [vmem:[#allocation6 + $0x38] sm:$0xff]
    %v3513 = vld [vmem:[#allocation6 + $0x40] sm:$0xff]
    %v3514 = vld [vmem:[#allocation6 + $0x48] sm:$0xff]
    %v3515 = vld [vmem:[#allocation6 + $0x50] sm:$0xff]
    %v3516 = vld [vmem:[#allocation6 + $0x58] sm:$0xff]
    %v3517 = vld [vmem:[#allocation6 + $0x60] sm:$0xff]
    %v3518 = vld [vmem:[#allocation6 + $0x68] sm:$0xff]
    %v3519 = vld [vmem:[#allocation6 + $0x70] sm:$0xff]
    %v3520 = vld [vmem:[#allocation6 + $0x78] sm:$0xff]
    %v3521 = vld [vmem:[#allocation6 + $0x80] sm:$0xff]
    %v3522 = vld [vmem:[#allocation6 + $0x88] sm:$0xff]
    %v3523 = vld [vmem:[#allocation6 + $0x90] sm:$0xff]
    %v3524 = vld [vmem:[#allocation6 + $0x98] sm:$0xff]
    %v3525 = vld [vmem:[#allocation6 + $0xa0] sm:$0xff]
    %v3526 = vld [vmem:[#allocation6 + $0xa8] sm:$0xff]
    %v3527 = vld [vmem:[#allocation6 + $0xb0] sm:$0xff]
    %v3528 = vld [vmem:[#allocation6 + $0xb8] sm:$0xff]
    %v3529 = vld [vmem:[#allocation6 + $0xc0] sm:$0xff]
    %v3530 = vld [vmem:[#allocation6 + $0xc8] sm:$0xff]
    %v3531 = vld [vmem:[#allocation6 + $0xd0] sm:$0xff]
    %v3532 = vld [vmem:[#allocation6 + $0xd8] sm:$0xff]
    %v3533 = vld [vmem:[#allocation6 + $0xe0] sm:$0xff]
    %v3534 = vld [vmem:[#allocation6 + $0xe8] sm:$0xff]
    %v3535 = vld [vmem:[#allocation6 + $0xf0] sm:$0xff]
    %v3536 = vld [vmem:[#allocation6 + $0xf8] sm:$0xff]
    %v3537 = vld [vmem:[%s6] sm:$0xf]
    %v3539 = vlaneseq
    %v3540 = vshrl.u32 %v3539, 7
    %v3541 = vsub.s32 0, %v3540
    %v3542 = vrot.slane %v3537, %v3541
    %v3543 = vlaneseq
    %v3544 = vshrl.u32 %v3543, 7
    %v3545 = vsub.s32 1, %v3544
    %v3546 = vrot.slane %v3537, %v3545
    %v3547 = vlaneseq
    %v3548 = vshrl.u32 %v3547, 7
    %v3549 = vsub.s32 2, %v3548
    %v3550 = vrot.slane %v3537, %v3549
    %v3551 = vlaneseq
    %v3552 = vshrl.u32 %v3551, 7
    %v3553 = vsub.s32 3, %v3552
    %v3554 = vrot.slane %v3537, %v3553
    %v3591 = vunpack.c.l.b16 %v3505
    %v3592 = vunpack.c.h.b16 %v3505
    %v3593 = vunpack.c.l.b16 %v3506
    %v3594 = vunpack.c.h.b16 %v3506
    %v3595 = vunpack.c.l.b16 %v3507
    %v3596 = vunpack.c.h.b16 %v3507
    %v3597 = vunpack.c.l.b16 %v3508
    %v3598 = vunpack.c.h.b16 %v3508
    %v3599 = vunpack.c.l.b16 %v3509
    %v3600 = vunpack.c.h.b16 %v3509
    %v3601 = vunpack.c.l.b16 %v3510
    %v3602 = vunpack.c.h.b16 %v3510
    %v3603 = vunpack.c.l.b16 %v3511
    %v3604 = vunpack.c.h.b16 %v3511
    %v3605 = vunpack.c.l.b16 %v3512
    %v3606 = vunpack.c.h.b16 %v3512
    %v3607 = vunpack.c.l.b16 %v3513
    %v3608 = vunpack.c.h.b16 %v3513
    %v3609 = vunpack.c.l.b16 %v3514
    %v3610 = vunpack.c.h.b16 %v3514
    %v3611 = vunpack.c.l.b16 %v3515
    %v3612 = vunpack.c.h.b16 %v3515
    %v3613 = vunpack.c.l.b16 %v3516
    %v3614 = vunpack.c.h.b16 %v3516
    %v3615 = vunpack.c.l.b16 %v3517
    %v3616 = vunpack.c.h.b16 %v3517
    %v3617 = vunpack.c.l.b16 %v3518
    %v3618 = vunpack.c.h.b16 %v3518
    %v3619 = vunpack.c.l.b16 %v3519
    %v3620 = vunpack.c.h.b16 %v3519
    %v3621 = vunpack.c.l.b16 %v3520
    %v3622 = vunpack.c.h.b16 %v3520
    %v3623 = vunpack.c.l.b16 %v3521
    %v3624 = vunpack.c.h.b16 %v3521
    %v3625 = vunpack.c.l.b16 %v3522
    %v3626 = vunpack.c.h.b16 %v3522
    %v3627 = vunpack.c.l.b16 %v3523
    %v3628 = vunpack.c.h.b16 %v3523
    %v3629 = vunpack.c.l.b16 %v3524
    %v3630 = vunpack.c.h.b16 %v3524
    %v3631 = vunpack.c.l.b16 %v3525
    %v3632 = vunpack.c.h.b16 %v3525
    %v3633 = vunpack.c.l.b16 %v3526
    %v3634 = vunpack.c.h.b16 %v3526
    %v3635 = vunpack.c.l.b16 %v3527
    %v3636 = vunpack.c.h.b16 %v3527
    %v3637 = vunpack.c.l.b16 %v3528
    %v3638 = vunpack.c.h.b16 %v3528
    %v3639 = vunpack.c.l.b16 %v3529
    %v3640 = vunpack.c.h.b16 %v3529
    %v3641 = vunpack.c.l.b16 %v3530
    %v3642 = vunpack.c.h.b16 %v3530
    %v3643 = vunpack.c.l.b16 %v3531
    %v3644 = vunpack.c.h.b16 %v3531
    %v3645 = vunpack.c.l.b16 %v3532
    %v3646 = vunpack.c.h.b16 %v3532
    %v3647 = vunpack.c.l.b16 %v3533
    %v3648 = vunpack.c.h.b16 %v3533
    %v3649 = vunpack.c.l.b16 %v3534
    %v3650 = vunpack.c.h.b16 %v3534
    %v3651 = vunpack.c.l.b16 %v3535
    %v3652 = vunpack.c.h.b16 %v3535
    %v3653 = vunpack.c.l.b16 %v3536
    %v3654 = vunpack.c.h.b16 %v3536
    %v3655 = vpack.c.b16 %v3595, %v3591
    %v3656 = vpack.c.b16 %v3596, %v3592
    %v3657 = vpack.c.b16 %v3597, %v3593
    %v3658 = vpack.c.b16 %v3598, %v3594
    %v3659 = vpack.c.b16 %v3603, %v3599
    %v3660 = vpack.c.b16 %v3604, %v3600
    %v3661 = vpack.c.b16 %v3605, %v3601
    %v3662 = vpack.c.b16 %v3606, %v3602
    %v3663 = vpack.c.b16 %v3611, %v3607
    %v3664 = vpack.c.b16 %v3612, %v3608
    %v3665 = vpack.c.b16 %v3613, %v3609
    %v3666 = vpack.c.b16 %v3614, %v3610
    %v3667 = vpack.c.b16 %v3619, %v3615
    %v3668 = vpack.c.b16 %v3620, %v3616
    %v3669 = vpack.c.b16 %v3621, %v3617
    %v3670 = vpack.c.b16 %v3622, %v3618
    %v3671 = vpack.c.b16 %v3627, %v3623
    %v3672 = vpack.c.b16 %v3628, %v3624
    %v3673 = vpack.c.b16 %v3629, %v3625
    %v3674 = vpack.c.b16 %v3630, %v3626
    %v3675 = vpack.c.b16 %v3635, %v3631
    %v3676 = vpack.c.b16 %v3636, %v3632
    %v3677 = vpack.c.b16 %v3637, %v3633
    %v3678 = vpack.c.b16 %v3638, %v3634
    %v3679 = vpack.c.b16 %v3643, %v3639
    %v3680 = vpack.c.b16 %v3644, %v3640
    %v3681 = vpack.c.b16 %v3645, %v3641
    %v3682 = vpack.c.b16 %v3646, %v3642
    %v3683 = vpack.c.b16 %v3651, %v3647
    %v3684 = vpack.c.b16 %v3652, %v3648
    %v3685 = vpack.c.b16 %v3653, %v3649
    %v3686 = vpack.c.b16 %v3654, %v3650
    %3719 = vmatprep.subr.bf16.mxu0 %v3656
    %3720 = vmatpush1.bf16.msra.mxu0 %v3655
    %3721 = vmatprep.subr.bf16.mxu0 %v3660
    %3722 = vmatpush1.bf16.msra.mxu0 %v3659
    %3723 = vmatprep.subr.bf16.mxu0 %v3664
    %3724 = vmatpush1.bf16.msra.mxu0 %v3663
    %3725 = vmatprep.subr.bf16.mxu0 %v3668
    %3726 = vmatpush1.bf16.msra.mxu0 %v3667
    %3727 = vmatprep.subr.bf16.mxu0 %v3672
    %3728 = vmatpush1.bf16.msra.mxu0 %v3671
    %3729 = vmatprep.subr.bf16.mxu0 %v3676
    %3730 = vmatpush1.bf16.msra.mxu0 %v3675
    %3731 = vmatprep.subr.bf16.mxu0 %v3680
    %3732 = vmatpush1.bf16.msra.mxu0 %v3679
    %3733 = vmatprep.subr.bf16.mxu0 %v3684
    %3734 = vmatpush1.bf16.msra.mxu0 %v3683
    %3735 = vmatprep.subr.bf16.mxu0 0
    %3736 = vmatpush1.bf16.msra.mxu0 0
    %3737 = vmatprep.subr.bf16.mxu0 0
    %3738 = vmatpush1.bf16.msra.mxu0 0
    %3739 = vmatprep.subr.bf16.mxu0 0
    %3740 = vmatpush1.bf16.msra.mxu0 0
    %3741 = vmatprep.subr.bf16.mxu0 0
    %3742 = vmatpush1.bf16.msra.mxu0 0
    %3743 = vmatprep.subr.bf16.mxu0 0
    %3744 = vmatpush1.bf16.msra.mxu0 0
    %3745 = vmatprep.subr.bf16.mxu0 0
    %3746 = vmatpush1.bf16.msra.mxu0 0
    %3747 = vmatprep.subr.bf16.mxu0 0
    %3748 = vmatpush1.bf16.msra.mxu0 0
    %3749 = vmatprep.subr.bf16.mxu0 0
    %3750 = vmatpush1.bf16.msra.mxu0 0
    %3751 = vmatprep.mubr.bf16.mxu0 0
    %3752 = vmatmul.mubr.bf16.gmra.mrb[0].mxu0 %v3202
    %v3753 = vpop.f32.mrb[0].mxu0
    %v3754 = vadd.f32 %v3542, %v3753
    %v3755 = vpop.f32.mrb[0].mxu0
    %v3756 = vadd.f32 %v3546, %v3755
    %v3757 = vpop.f32.mrb[0].mxu0
    %v3758 = vpop.f32.mrb[0].mxu0
    %3759 = vdwg.mxu0
    %3760 = vmatprep.subr.bf16.mxu0 %v3658
    %3761 = vmatpush1.bf16.msra.mxu0 %v3657
    %3762 = vmatprep.subr.bf16.mxu0 %v3662
    %3763 = vmatpush1.bf16.msra.mxu0 %v3661
    %3764 = vmatprep.subr.bf16.mxu0 %v3666
    %3765 = vmatpush1.bf16.msra.mxu0 %v3665
    %3766 = vmatprep.subr.bf16.mxu0 %v3670
    %3767 = vmatpush1.bf16.msra.mxu0 %v3669
    %3768 = vmatprep.subr.bf16.mxu0 %v3674
    %3769 = vmatpush1.bf16.msra.mxu0 %v3673
    %3770 = vmatprep.subr.bf16.mxu0 %v3678
    %3771 = vmatpush1.bf16.msra.mxu0 %v3677
    %3772 = vmatprep.subr.bf16.mxu0 %v3682
    %3773 = vmatpush1.bf16.msra.mxu0 %v3681
    %3774 = vmatprep.subr.bf16.mxu0 %v3686
    %3775 = vmatpush1.bf16.msra.mxu0 %v3685
    %3776 = vmatprep.subr.bf16.mxu0 0
    %3777 = vmatpush1.bf16.msra.mxu0 0
    %3778 = vmatprep.subr.bf16.mxu0 0
    %3779 = vmatpush1.bf16.msra.mxu0 0
    %3780 = vmatprep.subr.bf16.mxu0 0
    %3781 = vmatpush1.bf16.msra.mxu0 0
    %3782 = vmatprep.subr.bf16.mxu0 0
    %3783 = vmatpush1.bf16.msra.mxu0 0
    %3784 = vmatprep.subr.bf16.mxu0 0
    %3785 = vmatpush1.bf16.msra.mxu0 0
    %3786 = vmatprep.subr.bf16.mxu0 0
    %3787 = vmatpush1.bf16.msra.mxu0 0
    %3788 = vmatprep.subr.bf16.mxu0 0
    %3789 = vmatpush1.bf16.msra.mxu0 0
    %3790 = vmatprep.subr.bf16.mxu0 0
    %3791 = vmatpush1.bf16.msra.mxu0 0
    %3792 = vmatprep.mubr.bf16.mxu0 0
    %3793 = vmatmul.mubr.bf16.gmra.mrb[0].mxu0 %v3202
    %v3794 = vpop.f32.mrb[0].mxu0
    %v3795 = vadd.f32 %v3550, %v3794
    %v3796 = vpop.f32.mrb[0].mxu0
    %v3797 = vadd.f32 %v3554, %v3796
    %v3798 = vpop.f32.mrb[0].mxu0
    %v3799 = vpop.f32.mrb[0].mxu0
    %3800 = vdwg.mxu0
    %v3801 = vpack.c.bf16 %v3196, %v3196
    %v3802 = vld [vmem:[#allocation8] sm:$0xff]
    %v3803 = vld [vmem:[#allocation8 + $0x8] sm:$0xff]
    %v3804 = vld [vmem:[#allocation8 + $0x10] sm:$0xff]
    %v3805 = vld [vmem:[#allocation8 + $0x18] sm:$0xff]
    %v3806 = vld [vmem:[#allocation8 + $0x20] sm:$0xff]
    %v3807 = vld [vmem:[#allocation8 + $0x28] sm:$0xff]
    %v3808 = vld [vmem:[#allocation8 + $0x30] sm:$0xff]
    %v3809 = vld [vmem:[#allocation8 + $0x38] sm:$0xff]
    %v3810 = vld [vmem:[#allocation8 + $0x40] sm:$0xff]
    %v3811 = vld [vmem:[#allocation8 + $0x48] sm:$0xff]
    %v3812 = vld [vmem:[#allocation8 + $0x50] sm:$0xff]
    %v3813 = vld [vmem:[#allocation8 + $0x58] sm:$0xff]
    %v3814 = vld [vmem:[#allocation8 + $0x60] sm:$0xff]
    %v3815 = vld [vmem:[#allocation8 + $0x68] sm:$0xff]
    %v3816 = vld [vmem:[#allocation8 + $0x70] sm:$0xff]
    %v3817 = vld [vmem:[#allocation8 + $0x78] sm:$0xff]
    %v3818 = vld [vmem:[#allocation8 + $0x80] sm:$0xff]
    %v3819 = vld [vmem:[#allocation8 + $0x88] sm:$0xff]
    %v3820 = vld [vmem:[#allocation8 + $0x90] sm:$0xff]
    %v3821 = vld [vmem:[#allocation8 + $0x98] sm:$0xff]
    %v3822 = vld [vmem:[#allocation8 + $0xa0] sm:$0xff]
    %v3823 = vld [vmem:[#allocation8 + $0xa8] sm:$0xff]
    %v3824 = vld [vmem:[#allocation8 + $0xb0] sm:$0xff]
    %v3825 = vld [vmem:[#allocation8 + $0xb8] sm:$0xff]
    %v3826 = vld [vmem:[#allocation8 + $0xc0] sm:$0xff]
    %v3827 = vld [vmem:[#allocation8 + $0xc8] sm:$0xff]
    %v3828 = vld [vmem:[#allocation8 + $0xd0] sm:$0xff]
    %v3829 = vld [vmem:[#allocation8 + $0xd8] sm:$0xff]
    %v3830 = vld [vmem:[#allocation8 + $0xe0] sm:$0xff]
    %v3831 = vld [vmem:[#allocation8 + $0xe8] sm:$0xff]
    %v3832 = vld [vmem:[#allocation8 + $0xf0] sm:$0xff]
    %v3833 = vld [vmem:[#allocation8 + $0xf8] sm:$0xff]
    %v3866 = vunpack.c.l.b16 %v3802
    %v3867 = vunpack.c.h.b16 %v3802
    %v3868 = vunpack.c.l.b16 %v3803
    %v3869 = vunpack.c.h.b16 %v3803
    %v3870 = vunpack.c.l.b16 %v3804
    %v3871 = vunpack.c.h.b16 %v3804
    %v3872 = vunpack.c.l.b16 %v3805
    %v3873 = vunpack.c.h.b16 %v3805
    %v3874 = vunpack.c.l.b16 %v3806
    %v3875 = vunpack.c.h.b16 %v3806
    %v3876 = vunpack.c.l.b16 %v3807
    %v3877 = vunpack.c.h.b16 %v3807
    %v3878 = vunpack.c.l.b16 %v3808
    %v3879 = vunpack.c.h.b16 %v3808
    %v3880 = vunpack.c.l.b16 %v3809
    %v3881 = vunpack.c.h.b16 %v3809
    %v3882 = vunpack.c.l.b16 %v3810
    %v3883 = vunpack.c.h.b16 %v3810
    %v3884 = vunpack.c.l.b16 %v3811
    %v3885 = vunpack.c.h.b16 %v3811
    %v3886 = vunpack.c.l.b16 %v3812
    %v3887 = vunpack.c.h.b16 %v3812
    %v3888 = vunpack.c.l.b16 %v3813
    %v3889 = vunpack.c.h.b16 %v3813
    %v3890 = vunpack.c.l.b16 %v3814
    %v3891 = vunpack.c.h.b16 %v3814
    %v3892 = vunpack.c.l.b16 %v3815
    %v3893 = vunpack.c.h.b16 %v3815
    %v3894 = vunpack.c.l.b16 %v3816
    %v3895 = vunpack.c.h.b16 %v3816
    %v3896 = vunpack.c.l.b16 %v3817
    %v3897 = vunpack.c.h.b16 %v3817
    %v3898 = vunpack.c.l.b16 %v3818
    %v3899 = vunpack.c.h.b16 %v3818
    %v3900 = vunpack.c.l.b16 %v3819
    %v3901 = vunpack.c.h.b16 %v3819
    %v3902 = vunpack.c.l.b16 %v3820
    %v3903 = vunpack.c.h.b16 %v3820
    %v3904 = vunpack.c.l.b16 %v3821
    %v3905 = vunpack.c.h.b16 %v3821
    %v3906 = vunpack.c.l.b16 %v3822
    %v3907 = vunpack.c.h.b16 %v3822
    %v3908 = vunpack.c.l.b16 %v3823
    %v3909 = vunpack.c.h.b16 %v3823
    %v3910 = vunpack.c.l.b16 %v3824
    %v3911 = vunpack.c.h.b16 %v3824
    %v3912 = vunpack.c.l.b16 %v3825
    %v3913 = vunpack.c.h.b16 %v3825
    %v3914 = vunpack.c.l.b16 %v3826
    %v3915 = vunpack.c.h.b16 %v3826
    %v3916 = vunpack.c.l.b16 %v3827
    %v3917 = vunpack.c.h.b16 %v3827
    %v3918 = vunpack.c.l.b16 %v3828
    %v3919 = vunpack.c.h.b16 %v3828
    %v3920 = vunpack.c.l.b16 %v3829
    %v3921 = vunpack.c.h.b16 %v3829
    %v3922 = vunpack.c.l.b16 %v3830
    %v3923 = vunpack.c.h.b16 %v3830
    %v3924 = vunpack.c.l.b16 %v3831
    %v3925 = vunpack.c.h.b16 %v3831
    %v3926 = vunpack.c.l.b16 %v3832
    %v3927 = vunpack.c.h.b16 %v3832
    %v3928 = vunpack.c.l.b16 %v3833
    %v3929 = vunpack.c.h.b16 %v3833
    %v3930 = vpack.c.b16 %v3870, %v3866
    %v3931 = vpack.c.b16 %v3871, %v3867
    %v3932 = vpack.c.b16 %v3872, %v3868
    %v3933 = vpack.c.b16 %v3873, %v3869
    %v3934 = vpack.c.b16 %v3878, %v3874
    %v3935 = vpack.c.b16 %v3879, %v3875
    %v3936 = vpack.c.b16 %v3880, %v3876
    %v3937 = vpack.c.b16 %v3881, %v3877
    %v3938 = vpack.c.b16 %v3886, %v3882
    %v3939 = vpack.c.b16 %v3887, %v3883
    %v3940 = vpack.c.b16 %v3888, %v3884
    %v3941 = vpack.c.b16 %v3889, %v3885
    %v3942 = vpack.c.b16 %v3894, %v3890
    %v3943 = vpack.c.b16 %v3895, %v3891
    %v3944 = vpack.c.b16 %v3896, %v3892
    %v3945 = vpack.c.b16 %v3897, %v3893
    %v3946 = vpack.c.b16 %v3902, %v3898
    %v3947 = vpack.c.b16 %v3903, %v3899
    %v3948 = vpack.c.b16 %v3904, %v3900
    %v3949 = vpack.c.b16 %v3905, %v3901
    %v3950 = vpack.c.b16 %v3910, %v3906
    %v3951 = vpack.c.b16 %v3911, %v3907
    %v3952 = vpack.c.b16 %v3912, %v3908
    %v3953 = vpack.c.b16 %v3913, %v3909
    %v3954 = vpack.c.b16 %v3918, %v3914
    %v3955 = vpack.c.b16 %v3919, %v3915
    %v3956 = vpack.c.b16 %v3920, %v3916
    %v3957 = vpack.c.b16 %v3921, %v3917
    %v3958 = vpack.c.b16 %v3926, %v3922
    %v3959 = vpack.c.b16 %v3927, %v3923
    %v3960 = vpack.c.b16 %v3928, %v3924
    %v3961 = vpack.c.b16 %v3929, %v3925
    %3994 = vmatprep.subr.bf16.mxu0 %v3931
    %3995 = vmatpush1.bf16.msra.mxu0 %v3930
    %3996 = vmatprep.subr.bf16.mxu0 %v3935
    %3997 = vmatpush1.bf16.msra.mxu0 %v3934
    %3998 = vmatprep.subr.bf16.mxu0 %v3939
    %3999 = vmatpush1.bf16.msra.mxu0 %v3938
    %4000 = vmatprep.subr.bf16.mxu0 %v3943
    %4001 = vmatpush1.bf16.msra.mxu0 %v3942
    %4002 = vmatprep.subr.bf16.mxu0 %v3947
    %4003 = vmatpush1.bf16.msra.mxu0 %v3946
    %4004 = vmatprep.subr.bf16.mxu0 %v3951
    %4005 = vmatpush1.bf16.msra.mxu0 %v3950
    %4006 = vmatprep.subr.bf16.mxu0 %v3955
    %4007 = vmatpush1.bf16.msra.mxu0 %v3954
    %4008 = vmatprep.subr.bf16.mxu0 %v3959
    %4009 = vmatpush1.bf16.msra.mxu0 %v3958
    %4010 = vmatprep.subr.bf16.mxu0 0
    %4011 = vmatpush1.bf16.msra.mxu0 0
    %4012 = vmatprep.subr.bf16.mxu0 0
    %4013 = vmatpush1.bf16.msra.mxu0 0
    %4014 = vmatprep.subr.bf16.mxu0 0
    %4015 = vmatpush1.bf16.msra.mxu0 0
    %4016 = vmatprep.subr.bf16.mxu0 0
    %4017 = vmatpush1.bf16.msra.mxu0 0
    %4018 = vmatprep.subr.bf16.mxu0 0
    %4019 = vmatpush1.bf16.msra.mxu0 0
    %4020 = vmatprep.subr.bf16.mxu0 0
    %4021 = vmatpush1.bf16.msra.mxu0 0
    %4022 = vmatprep.subr.bf16.mxu0 0
    %4023 = vmatpush1.bf16.msra.mxu0 0
    %4024 = vmatprep.subr.bf16.mxu0 0
    %4025 = vmatpush1.bf16.msra.mxu0 0
    %4026 = vmatprep.mubr.bf16.mxu0 0
    %4027 = vmatmul.mubr.bf16.gmra.mrb[0].mxu0 %v3801
    %v4028 = vpop.f32.mrb[0].mxu0
    %v4029 = vadd.f32 0.0, %v4028
    %v4030 = vpop.f32.mrb[0].mxu0
    %v4031 = vadd.f32 0.0, %v4030
    %v4032 = vpop.f32.mrb[0].mxu0
    %v4033 = vpop.f32.mrb[0].mxu0
    %4034 = vdwg.mxu0
    %4035 = vmatprep.subr.bf16.mxu0 %v3933
    %4036 = vmatpush1.bf16.msra.mxu0 %v3932
    %4037 = vmatprep.subr.bf16.mxu0 %v3937
    %4038 = vmatpush1.bf16.msra.mxu0 %v3936
    %4039 = vmatprep.subr.bf16.mxu0 %v3941
    %4040 = vmatpush1.bf16.msra.mxu0 %v3940
    %4041 = vmatprep.subr.bf16.mxu0 %v3945
    %4042 = vmatpush1.bf16.msra.mxu0 %v3944
    %4043 = vmatprep.subr.bf16.mxu0 %v3949
    %4044 = vmatpush1.bf16.msra.mxu0 %v3948
    %4045 = vmatprep.subr.bf16.mxu0 %v3953
    %4046 = vmatpush1.bf16.msra.mxu0 %v3952
    %4047 = vmatprep.subr.bf16.mxu0 %v3957
    %4048 = vmatpush1.bf16.msra.mxu0 %v3956
    %4049 = vmatprep.subr.bf16.mxu0 %v3961
    %4050 = vmatpush1.bf16.msra.mxu0 %v3960
    %4051 = vmatprep.subr.bf16.mxu0 0
    %4052 = vmatpush1.bf16.msra.mxu0 0
    %4053 = vmatprep.subr.bf16.mxu0 0
    %4054 = vmatpush1.bf16.msra.mxu0 0
    %4055 = vmatprep.subr.bf16.mxu0 0
    %4056 = vmatpush1.bf16.msra.mxu0 0
    %4057 = vmatprep.subr.bf16.mxu0 0
    %4058 = vmatpush1.bf16.msra.mxu0 0
    %4059 = vmatprep.subr.bf16.mxu0 0
    %4060 = vmatpush1.bf16.msra.mxu0 0
    %4061 = vmatprep.subr.bf16.mxu0 0
    %4062 = vmatpush1.bf16.msra.mxu0 0
    %4063 = vmatprep.subr.bf16.mxu0 0
    %4064 = vmatpush1.bf16.msra.mxu0 0
    %4065 = vmatprep.subr.bf16.mxu0 0
    %4066 = vmatpush1.bf16.msra.mxu0 0
    %4067 = vmatprep.mubr.bf16.mxu0 0
    %4068 = vmatmul.mubr.bf16.gmra.mrb[0].mxu0 %v3801
    %v4069 = vpop.f32.mrb[0].mxu0
    %v4070 = vadd.f32 0.0, %v4069
    %v4071 = vpop.f32.mrb[0].mxu0
    %v4072 = vadd.f32 0.0, %v4071
    %v4073 = vpop.f32.mrb[0].mxu0
    %v4074 = vpop.f32.mrb[0].mxu0
    %4075 = vdwg.mxu0
    %v4076 = vadd.f32 %v3754, %v4029
    %v4077 = vadd.f32 %v3756, %v4031
    %v4078 = vadd.f32 %v3795, %v4070
    %v4079 = vadd.f32 %v3797, %v4072
    %v4080 = vxor.u32 %v4076, 2147483648
    %v4081 = vmul.f32 %v4080, 1.442695
    %v4082 = vpow.pop %v4081
    %v4083 = vadd.f32 %v4082, 1.0
    %v4084 = vrcp.pop %v4083
    %v4085 = vmul.f32 1.0, %v4084
    %v4086 = vxor.u32 %v4077, 2147483648
    %v4087 = vmul.f32 %v4086, 1.442695
    %v4088 = vpow.pop %v4087
    %v4089 = vadd.f32 %v4088, 1.0
    %v4090 = vrcp.pop %v4089
    %v4091 = vmul.f32 1.0, %v4090
    %v4092 = vtanh.pop %v4078
    %v4093 = vxor.u32 %v4079, 2147483648
    %v4094 = vmul.f32 %v4093, 1.442695
    %v4095 = vpow.pop %v4094
    %v4096 = vadd.f32 %v4095, 1.0
    %v4097 = vrcp.pop %v4096
    %v4098 = vmul.f32 1.0, %v4097
    %v4099 = vmul.f32 %v4091, %v3194
    %v4100 = vmul.f32 %v4085, %v4092
    %v4101 = vadd.f32 %v4099, %v4100
    %v4102 = vtanh.pop %v4101
    %v4103 = vmul.f32 %v4098, %v4102
    %4104 = vst [vmem:[#allocation3 + $0x18] sm:$0xff] %v4103
    %v4105 = vld [vmem:[#allocation2 + $0xa0] sm:$0xff]
    %v4106 = vld [vmem:[#allocation2 + $0xa8] sm:$0xff]
    %v4107 = vld [vmem:[#allocation2 + $0xb0] sm:$0xff]
    %v4108 = vld [vmem:[#allocation2 + $0xb8] sm:$0xff]
    %v4109 = vpack.c.bf16 %v3504, %v3504
    %v4110 = vld [vmem:[#allocation4] sm:$0xff]
    %v4111 = vld [vmem:[#allocation4 + $0x8] sm:$0xff]
    %v4112 = vld [vmem:[#allocation4 + $0x10] sm:$0xff]
    %v4113 = vld [vmem:[#allocation4 + $0x18] sm:$0xff]
    %v4114 = vld [vmem:[#allocation4 + $0x20] sm:$0xff]
    %v4115 = vld [vmem:[#allocation4 + $0x28] sm:$0xff]
    %v4116 = vld [vmem:[#allocation4 + $0x30] sm:$0xff]
    %v4117 = vld [vmem:[#allocation4 + $0x38] sm:$0xff]
    %v4118 = vld [vmem:[#allocation4 + $0x40] sm:$0xff]
    %v4119 = vld [vmem:[#allocation4 + $0x48] sm:$0xff]
    %v4120 = vld [vmem:[#allocation4 + $0x50] sm:$0xff]
    %v4121 = vld [vmem:[#allocation4 + $0x58] sm:$0xff]
    %v4122 = vld [vmem:[#allocation4 + $0x60] sm:$0xff]
    %v4123 = vld [vmem:[#allocation4 + $0x68] sm:$0xff]
    %v4124 = vld [vmem:[#allocation4 + $0x70] sm:$0xff]
    %v4125 = vld [vmem:[#allocation4 + $0x78] sm:$0xff]
    %v4126 = vld [vmem:[#allocation4 + $0x80] sm:$0xff]
    %v4127 = vld [vmem:[#allocation4 + $0x88] sm:$0xff]
    %v4128 = vld [vmem:[#allocation4 + $0x90] sm:$0xff]
    %v4129 = vld [vmem:[#allocation4 + $0x98] sm:$0xff]
    %v4130 = vld [vmem:[#allocation4 + $0xa0] sm:$0xff]
    %v4131 = vld [vmem:[#allocation4 + $0xa8] sm:$0xff]
    %v4132 = vld [vmem:[#allocation4 + $0xb0] sm:$0xff]
    %v4133 = vld [vmem:[#allocation4 + $0xb8] sm:$0xff]
    %v4134 = vld [vmem:[#allocation4 + $0xc0] sm:$0xff]
    %v4135 = vld [vmem:[#allocation4 + $0xc8] sm:$0xff]
    %v4136 = vld [vmem:[#allocation4 + $0xd0] sm:$0xff]
    %v4137 = vld [vmem:[#allocation4 + $0xd8] sm:$0xff]
    %v4138 = vld [vmem:[#allocation4 + $0xe0] sm:$0xff]
    %v4139 = vld [vmem:[#allocation4 + $0xe8] sm:$0xff]
    %v4140 = vld [vmem:[#allocation4 + $0xf0] sm:$0xff]
    %v4141 = vld [vmem:[#allocation4 + $0xf8] sm:$0xff]
    %v4174 = vunpack.c.l.b16 %v4110
    %v4175 = vunpack.c.h.b16 %v4110
    %v4176 = vunpack.c.l.b16 %v4111
    %v4177 = vunpack.c.h.b16 %v4111
    %v4178 = vunpack.c.l.b16 %v4112
    %v4179 = vunpack.c.h.b16 %v4112
    %v4180 = vunpack.c.l.b16 %v4113
    %v4181 = vunpack.c.h.b16 %v4113
    %v4182 = vunpack.c.l.b16 %v4114
    %v4183 = vunpack.c.h.b16 %v4114
    %v4184 = vunpack.c.l.b16 %v4115
    %v4185 = vunpack.c.h.b16 %v4115
    %v4186 = vunpack.c.l.b16 %v4116
    %v4187 = vunpack.c.h.b16 %v4116
    %v4188 = vunpack.c.l.b16 %v4117
    %v4189 = vunpack.c.h.b16 %v4117
    %v4190 = vunpack.c.l.b16 %v4118
    %v4191 = vunpack.c.h.b16 %v4118
    %v4192 = vunpack.c.l.b16 %v4119
    %v4193 = vunpack.c.h.b16 %v4119
    %v4194 = vunpack.c.l.b16 %v4120
    %v4195 = vunpack.c.h.b16 %v4120
    %v4196 = vunpack.c.l.b16 %v4121
    %v4197 = vunpack.c.h.b16 %v4121
    %v4198 = vunpack.c.l.b16 %v4122
    %v4199 = vunpack.c.h.b16 %v4122
    %v4200 = vunpack.c.l.b16 %v4123
    %v4201 = vunpack.c.h.b16 %v4123
    %v4202 = vunpack.c.l.b16 %v4124
    %v4203 = vunpack.c.h.b16 %v4124
    %v4204 = vunpack.c.l.b16 %v4125
    %v4205 = vunpack.c.h.b16 %v4125
    %v4206 = vunpack.c.l.b16 %v4126
    %v4207 = vunpack.c.h.b16 %v4126
    %v4208 = vunpack.c.l.b16 %v4127
    %v4209 = vunpack.c.h.b16 %v4127
    %v4210 = vunpack.c.l.b16 %v4128
    %v4211 = vunpack.c.h.b16 %v4128
    %v4212 = vunpack.c.l.b16 %v4129
    %v4213 = vunpack.c.h.b16 %v4129
    %v4214 = vunpack.c.l.b16 %v4130
    %v4215 = vunpack.c.h.b16 %v4130
    %v4216 = vunpack.c.l.b16 %v4131
    %v4217 = vunpack.c.h.b16 %v4131
    %v4218 = vunpack.c.l.b16 %v4132
    %v4219 = vunpack.c.h.b16 %v4132
    %v4220 = vunpack.c.l.b16 %v4133
    %v4221 = vunpack.c.h.b16 %v4133
    %v4222 = vunpack.c.l.b16 %v4134
    %v4223 = vunpack.c.h.b16 %v4134
    %v4224 = vunpack.c.l.b16 %v4135
    %v4225 = vunpack.c.h.b16 %v4135
    %v4226 = vunpack.c.l.b16 %v4136
    %v4227 = vunpack.c.h.b16 %v4136
    %v4228 = vunpack.c.l.b16 %v4137
    %v4229 = vunpack.c.h.b16 %v4137
    %v4230 = vunpack.c.l.b16 %v4138
    %v4231 = vunpack.c.h.b16 %v4138
    %v4232 = vunpack.c.l.b16 %v4139
    %v4233 = vunpack.c.h.b16 %v4139
    %v4234 = vunpack.c.l.b16 %v4140
    %v4235 = vunpack.c.h.b16 %v4140
    %v4236 = vunpack.c.l.b16 %v4141
    %v4237 = vunpack.c.h.b16 %v4141
    %v4238 = vpack.c.b16 %v4178, %v4174
    %v4239 = vpack.c.b16 %v4179, %v4175
    %v4240 = vpack.c.b16 %v4180, %v4176
    %v4241 = vpack.c.b16 %v4181, %v4177
    %v4242 = vpack.c.b16 %v4186, %v4182
    %v4243 = vpack.c.b16 %v4187, %v4183
    %v4244 = vpack.c.b16 %v4188, %v4184
    %v4245 = vpack.c.b16 %v4189, %v4185
    %v4246 = vpack.c.b16 %v4194, %v4190
    %v4247 = vpack.c.b16 %v4195, %v4191
    %v4248 = vpack.c.b16 %v4196, %v4192
    %v4249 = vpack.c.b16 %v4197, %v4193
    %v4250 = vpack.c.b16 %v4202, %v4198
    %v4251 = vpack.c.b16 %v4203, %v4199
    %v4252 = vpack.c.b16 %v4204, %v4200
    %v4253 = vpack.c.b16 %v4205, %v4201
    %v4254 = vpack.c.b16 %v4210, %v4206
    %v4255 = vpack.c.b16 %v4211, %v4207
    %v4256 = vpack.c.b16 %v4212, %v4208
    %v4257 = vpack.c.b16 %v4213, %v4209
    %v4258 = vpack.c.b16 %v4218, %v4214
    %v4259 = vpack.c.b16 %v4219, %v4215
    %v4260 = vpack.c.b16 %v4220, %v4216
    %v4261 = vpack.c.b16 %v4221, %v4217
    %v4262 = vpack.c.b16 %v4226, %v4222
    %v4263 = vpack.c.b16 %v4227, %v4223
    %v4264 = vpack.c.b16 %v4228, %v4224
    %v4265 = vpack.c.b16 %v4229, %v4225
    %v4266 = vpack.c.b16 %v4234, %v4230
    %v4267 = vpack.c.b16 %v4235, %v4231
    %v4268 = vpack.c.b16 %v4236, %v4232
    %v4269 = vpack.c.b16 %v4237, %v4233
    %4302 = vmatprep.subr.bf16.mxu0 %v4239
    %4303 = vmatpush1.bf16.msra.mxu0 %v4238
    %4304 = vmatprep.subr.bf16.mxu0 %v4243
    %4305 = vmatpush1.bf16.msra.mxu0 %v4242
    %4306 = vmatprep.subr.bf16.mxu0 %v4247
    %4307 = vmatpush1.bf16.msra.mxu0 %v4246
    %4308 = vmatprep.subr.bf16.mxu0 %v4251
    %4309 = vmatpush1.bf16.msra.mxu0 %v4250
    %4310 = vmatprep.subr.bf16.mxu0 %v4255
    %4311 = vmatpush1.bf16.msra.mxu0 %v4254
    %4312 = vmatprep.subr.bf16.mxu0 %v4259
    %4313 = vmatpush1.bf16.msra.mxu0 %v4258
    %4314 = vmatprep.subr.bf16.mxu0 %v4263
    %4315 = vmatpush1.bf16.msra.mxu0 %v4262
    %4316 = vmatprep.subr.bf16.mxu0 %v4267
    %4317 = vmatpush1.bf16.msra.mxu0 %v4266
    %4318 = vmatprep.subr.bf16.mxu0 0
    %4319 = vmatpush1.bf16.msra.mxu0 0
    %4320 = vmatprep.subr.bf16.mxu0 0
    %4321 = vmatpush1.bf16.msra.mxu0 0
    %4322 = vmatprep.subr.bf16.mxu0 0
    %4323 = vmatpush1.bf16.msra.mxu0 0
    %4324 = vmatprep.subr.bf16.mxu0 0
    %4325 = vmatpush1.bf16.msra.mxu0 0
    %4326 = vmatprep.subr.bf16.mxu0 0
    %4327 = vmatpush1.bf16.msra.mxu0 0
    %4328 = vmatprep.subr.bf16.mxu0 0
    %4329 = vmatpush1.bf16.msra.mxu0 0
    %4330 = vmatprep.subr.bf16.mxu0 0
    %4331 = vmatpush1.bf16.msra.mxu0 0
    %4332 = vmatprep.subr.bf16.mxu0 0
    %4333 = vmatpush1.bf16.msra.mxu0 0
    %4334 = vmatprep.mubr.bf16.mxu0 0
    %4335 = vmatmul.mubr.bf16.gmra.mrb[0].mxu0 %v4109
    %v4336 = vpop.f32.mrb[0].mxu0
    %v4337 = vadd.f32 0.0, %v4336
    %v4338 = vpop.f32.mrb[0].mxu0
    %v4339 = vadd.f32 0.0, %v4338
    %v4340 = vpop.f32.mrb[0].mxu0
    %v4341 = vpop.f32.mrb[0].mxu0
    %4342 = vdwg.mxu0
    %4343 = vmatprep.subr.bf16.mxu0 %v4241
    %4344 = vmatpush1.bf16.msra.mxu0 %v4240
    %4345 = vmatprep.subr.bf16.mxu0 %v4245
    %4346 = vmatpush1.bf16.msra.mxu0 %v4244
    %4347 = vmatprep.subr.bf16.mxu0 %v4249
    %4348 = vmatpush1.bf16.msra.mxu0 %v4248
    %4349 = vmatprep.subr.bf16.mxu0 %v4253
    %4350 = vmatpush1.bf16.msra.mxu0 %v4252
    %4351 = vmatprep.subr.bf16.mxu0 %v4257
    %4352 = vmatpush1.bf16.msra.mxu0 %v4256
    %4353 = vmatprep.subr.bf16.mxu0 %v4261
    %4354 = vmatpush1.bf16.msra.mxu0 %v4260
    %4355 = vmatprep.subr.bf16.mxu0 %v4265
    %4356 = vmatpush1.bf16.msra.mxu0 %v4264
    %4357 = vmatprep.subr.bf16.mxu0 %v4269
    %4358 = vmatpush1.bf16.msra.mxu0 %v4268
    %4359 = vmatprep.subr.bf16.mxu0 0
    %4360 = vmatpush1.bf16.msra.mxu0 0
    %4361 = vmatprep.subr.bf16.mxu0 0
    %4362 = vmatpush1.bf16.msra.mxu0 0
    %4363 = vmatprep.subr.bf16.mxu0 0
    %4364 = vmatpush1.bf16.msra.mxu0 0
    %4365 = vmatprep.subr.bf16.mxu0 0
    %4366 = vmatpush1.bf16.msra.mxu0 0
    %4367 = vmatprep.subr.bf16.mxu0 0
    %4368 = vmatpush1.bf16.msra.mxu0 0
    %4369 = vmatprep.subr.bf16.mxu0 0
    %4370 = vmatpush1.bf16.msra.mxu0 0
    %4371 = vmatprep.subr.bf16.mxu0 0
    %4372 = vmatpush1.bf16.msra.mxu0 0
    %4373 = vmatprep.subr.bf16.mxu0 0
    %4374 = vmatpush1.bf16.msra.mxu0 0
    %4375 = vmatprep.mubr.bf16.mxu0 0
    %4376 = vmatmul.mubr.bf16.gmra.mrb[0].mxu0 %v4109
    %v4377 = vpop.f32.mrb[0].mxu0
    %v4378 = vadd.f32 0.0, %v4377
    %v4379 = vpop.f32.mrb[0].mxu0
    %v4380 = vadd.f32 0.0, %v4379
    %v4381 = vpop.f32.mrb[0].mxu0
    %v4382 = vpop.f32.mrb[0].mxu0
    %4383 = vdwg.mxu0
    %v4384 = vadd.f32 %v4105, %v4337
    %v4385 = vadd.f32 %v4106, %v4339
    %v4386 = vadd.f32 %v4107, %v4378
    %v4387 = vadd.f32 %v4108, %v4380
    %v4388 = vxor.u32 %v4384, 2147483648
    %v4389 = vmul.f32 %v4388, 1.442695
    %v4390 = vpow.pop %v4389
    %v4391 = vadd.f32 %v4390, 1.0
    %v4392 = vrcp.pop %v4391
    %v4393 = vmul.f32 1.0, %v4392
    %v4394 = vxor.u32 %v4385, 2147483648
    %v4395 = vmul.f32 %v4394, 1.442695
    %v4396 = vpow.pop %v4395
    %v4397 = vadd.f32 %v4396, 1.0
    %v4398 = vrcp.pop %v4397
    %v4399 = vmul.f32 1.0, %v4398
    %v4400 = vtanh.pop %v4386
    %v4401 = vxor.u32 %v4387, 2147483648
    %v4402 = vmul.f32 %v4401, 1.442695
    %v4403 = vpow.pop %v4402
    %v4404 = vadd.f32 %v4403, 1.0
    %v4405 = vrcp.pop %v4404
    %v4406 = vmul.f32 1.0, %v4405
    %v4407 = vmul.f32 %v4399, %v3502
    %v4408 = vmul.f32 %v4393, %v4400
    %v4409 = vadd.f32 %v4407, %v4408
    %v4410 = vtanh.pop %v4409
    %v4411 = vmul.f32 %v4406, %v4410
    %v4412 = vld [vmem:[#allocation6] sm:$0xff]
    %v4413 = vld [vmem:[#allocation6 + $0x8] sm:$0xff]
    %v4414 = vld [vmem:[#allocation6 + $0x10] sm:$0xff]
    %v4415 = vld [vmem:[#allocation6 + $0x18] sm:$0xff]
    %v4416 = vld [vmem:[#allocation6 + $0x20] sm:$0xff]
    %v4417 = vld [vmem:[#allocation6 + $0x28] sm:$0xff]
    %v4418 = vld [vmem:[#allocation6 + $0x30] sm:$0xff]
    %v4419 = vld [vmem:[#allocation6 + $0x38] sm:$0xff]
    %v4420 = vld [vmem:[#allocation6 + $0x40] sm:$0xff]
    %v4421 = vld [vmem:[#allocation6 + $0x48] sm:$0xff]
    %v4422 = vld [vmem:[#allocation6 + $0x50] sm:$0xff]
    %v4423 = vld [vmem:[#allocation6 + $0x58] sm:$0xff]
    %v4424 = vld [vmem:[#allocation6 + $0x60] sm:$0xff]
    %v4425 = vld [vmem:[#allocation6 + $0x68] sm:$0xff]
    %v4426 = vld [vmem:[#allocation6 + $0x70] sm:$0xff]
    %v4427 = vld [vmem:[#allocation6 + $0x78] sm:$0xff]
    %v4428 = vld [vmem:[#allocation6 + $0x80] sm:$0xff]
    %v4429 = vld [vmem:[#allocation6 + $0x88] sm:$0xff]
    %v4430 = vld [vmem:[#allocation6 + $0x90] sm:$0xff]
    %v4431 = vld [vmem:[#allocation6 + $0x98] sm:$0xff]
    %v4432 = vld [vmem:[#allocation6 + $0xa0] sm:$0xff]
    %v4433 = vld [vmem:[#allocation6 + $0xa8] sm:$0xff]
    %v4434 = vld [vmem:[#allocation6 + $0xb0] sm:$0xff]
    %v4435 = vld [vmem:[#allocation6 + $0xb8] sm:$0xff]
    %v4436 = vld [vmem:[#allocation6 + $0xc0] sm:$0xff]
    %v4437 = vld [vmem:[#allocation6 + $0xc8] sm:$0xff]
    %v4438 = vld [vmem:[#allocation6 + $0xd0] sm:$0xff]
    %v4439 = vld [vmem:[#allocation6 + $0xd8] sm:$0xff]
    %v4440 = vld [vmem:[#allocation6 + $0xe0] sm:$0xff]
    %v4441 = vld [vmem:[#allocation6 + $0xe8] sm:$0xff]
    %v4442 = vld [vmem:[#allocation6 + $0xf0] sm:$0xff]
    %v4443 = vld [vmem:[#allocation6 + $0xf8] sm:$0xff]
    %v4444 = vld [vmem:[%s6] sm:$0xf]
    %v4446 = vlaneseq
    %v4447 = vshrl.u32 %v4446, 7
    %v4448 = vsub.s32 0, %v4447
    %v4449 = vrot.slane %v4444, %v4448
    %v4450 = vlaneseq
    %v4451 = vshrl.u32 %v4450, 7
    %v4452 = vsub.s32 1, %v4451
    %v4453 = vrot.slane %v4444, %v4452
    %v4454 = vlaneseq
    %v4455 = vshrl.u32 %v4454, 7
    %v4456 = vsub.s32 2, %v4455
    %v4457 = vrot.slane %v4444, %v4456
    %v4458 = vlaneseq
    %v4459 = vshrl.u32 %v4458, 7
    %v4460 = vsub.s32 3, %v4459
    %v4461 = vrot.slane %v4444, %v4460
    %v4498 = vunpack.c.l.b16 %v4412
    %v4499 = vunpack.c.h.b16 %v4412
    %v4500 = vunpack.c.l.b16 %v4413
    %v4501 = vunpack.c.h.b16 %v4413
    %v4502 = vunpack.c.l.b16 %v4414
    %v4503 = vunpack.c.h.b16 %v4414
    %v4504 = vunpack.c.l.b16 %v4415
    %v4505 = vunpack.c.h.b16 %v4415
    %v4506 = vunpack.c.l.b16 %v4416
    %v4507 = vunpack.c.h.b16 %v4416
    %v4508 = vunpack.c.l.b16 %v4417
    %v4509 = vunpack.c.h.b16 %v4417
    %v4510 = vunpack.c.l.b16 %v4418
    %v4511 = vunpack.c.h.b16 %v4418
    %v4512 = vunpack.c.l.b16 %v4419
    %v4513 = vunpack.c.h.b16 %v4419
    %v4514 = vunpack.c.l.b16 %v4420
    %v4515 = vunpack.c.h.b16 %v4420
    %v4516 = vunpack.c.l.b16 %v4421
    %v4517 = vunpack.c.h.b16 %v4421
    %v4518 = vunpack.c.l.b16 %v4422
    %v4519 = vunpack.c.h.b16 %v4422
    %v4520 = vunpack.c.l.b16 %v4423
    %v4521 = vunpack.c.h.b16 %v4423
    %v4522 = vunpack.c.l.b16 %v4424
    %v4523 = vunpack.c.h.b16 %v4424
    %v4524 = vunpack.c.l.b16 %v4425
    %v4525 = vunpack.c.h.b16 %v4425
    %v4526 = vunpack.c.l.b16 %v4426
    %v4527 = vunpack.c.h.b16 %v4426
    %v4528 = vunpack.c.l.b16 %v4427
    %v4529 = vunpack.c.h.b16 %v4427
    %v4530 = vunpack.c.l.b16 %v4428
    %v4531 = vunpack.c.h.b16 %v4428
    %v4532 = vunpack.c.l.b16 %v4429
    %v4533 = vunpack.c.h.b16 %v4429
    %v4534 = vunpack.c.l.b16 %v4430
    %v4535 = vunpack.c.h.b16 %v4430
    %v4536 = vunpack.c.l.b16 %v4431
    %v4537 = vunpack.c.h.b16 %v4431
    %v4538 = vunpack.c.l.b16 %v4432
    %v4539 = vunpack.c.h.b16 %v4432
    %v4540 = vunpack.c.l.b16 %v4433
    %v4541 = vunpack.c.h.b16 %v4433
    %v4542 = vunpack.c.l.b16 %v4434
    %v4543 = vunpack.c.h.b16 %v4434
    %v4544 = vunpack.c.l.b16 %v4435
    %v4545 = vunpack.c.h.b16 %v4435
    %v4546 = vunpack.c.l.b16 %v4436
    %v4547 = vunpack.c.h.b16 %v4436
    %v4548 = vunpack.c.l.b16 %v4437
    %v4549 = vunpack.c.h.b16 %v4437
    %v4550 = vunpack.c.l.b16 %v4438
    %v4551 = vunpack.c.h.b16 %v4438
    %v4552 = vunpack.c.l.b16 %v4439
    %v4553 = vunpack.c.h.b16 %v4439
    %v4554 = vunpack.c.l.b16 %v4440
    %v4555 = vunpack.c.h.b16 %v4440
    %v4556 = vunpack.c.l.b16 %v4441
    %v4557 = vunpack.c.h.b16 %v4441
    %v4558 = vunpack.c.l.b16 %v4442
    %v4559 = vunpack.c.h.b16 %v4442
    %v4560 = vunpack.c.l.b16 %v4443
    %v4561 = vunpack.c.h.b16 %v4443
    %v4562 = vpack.c.b16 %v4502, %v4498
    %v4563 = vpack.c.b16 %v4503, %v4499
    %v4564 = vpack.c.b16 %v4504, %v4500
    %v4565 = vpack.c.b16 %v4505, %v4501
    %v4566 = vpack.c.b16 %v4510, %v4506
    %v4567 = vpack.c.b16 %v4511, %v4507
    %v4568 = vpack.c.b16 %v4512, %v4508
    %v4569 = vpack.c.b16 %v4513, %v4509
    %v4570 = vpack.c.b16 %v4518, %v4514
    %v4571 = vpack.c.b16 %v4519, %v4515
    %v4572 = vpack.c.b16 %v4520, %v4516
    %v4573 = vpack.c.b16 %v4521, %v4517
    %v4574 = vpack.c.b16 %v4526, %v4522
    %v4575 = vpack.c.b16 %v4527, %v4523
    %v4576 = vpack.c.b16 %v4528, %v4524
    %v4577 = vpack.c.b16 %v4529, %v4525
    %v4578 = vpack.c.b16 %v4534, %v4530
    %v4579 = vpack.c.b16 %v4535, %v4531
    %v4580 = vpack.c.b16 %v4536, %v4532
    %v4581 = vpack.c.b16 %v4537, %v4533
    %v4582 = vpack.c.b16 %v4542, %v4538
    %v4583 = vpack.c.b16 %v4543, %v4539
    %v4584 = vpack.c.b16 %v4544, %v4540
    %v4585 = vpack.c.b16 %v4545, %v4541
    %v4586 = vpack.c.b16 %v4550, %v4546
    %v4587 = vpack.c.b16 %v4551, %v4547
    %v4588 = vpack.c.b16 %v4552, %v4548
    %v4589 = vpack.c.b16 %v4553, %v4549
    %v4590 = vpack.c.b16 %v4558, %v4554
    %v4591 = vpack.c.b16 %v4559, %v4555
    %v4592 = vpack.c.b16 %v4560, %v4556
    %v4593 = vpack.c.b16 %v4561, %v4557
    %4626 = vmatprep.subr.bf16.mxu0 %v4563
    %4627 = vmatpush1.bf16.msra.mxu0 %v4562
    %4628 = vmatprep.subr.bf16.mxu0 %v4567
    %4629 = vmatpush1.bf16.msra.mxu0 %v4566
    %4630 = vmatprep.subr.bf16.mxu0 %v4571
    %4631 = vmatpush1.bf16.msra.mxu0 %v4570
    %4632 = vmatprep.subr.bf16.mxu0 %v4575
    %4633 = vmatpush1.bf16.msra.mxu0 %v4574
    %4634 = vmatprep.subr.bf16.mxu0 %v4579
    %4635 = vmatpush1.bf16.msra.mxu0 %v4578
    %4636 = vmatprep.subr.bf16.mxu0 %v4583
    %4637 = vmatpush1.bf16.msra.mxu0 %v4582
    %4638 = vmatprep.subr.bf16.mxu0 %v4587
    %4639 = vmatpush1.bf16.msra.mxu0 %v4586
    %4640 = vmatprep.subr.bf16.mxu0 %v4591
    %4641 = vmatpush1.bf16.msra.mxu0 %v4590
    %4642 = vmatprep.subr.bf16.mxu0 0
    %4643 = vmatpush1.bf16.msra.mxu0 0
    %4644 = vmatprep.subr.bf16.mxu0 0
    %4645 = vmatpush1.bf16.msra.mxu0 0
    %4646 = vmatprep.subr.bf16.mxu0 0
    %4647 = vmatpush1.bf16.msra.mxu0 0
    %4648 = vmatprep.subr.bf16.mxu0 0
    %4649 = vmatpush1.bf16.msra.mxu0 0
    %4650 = vmatprep.subr.bf16.mxu0 0
    %4651 = vmatpush1.bf16.msra.mxu0 0
    %4652 = vmatprep.subr.bf16.mxu0 0
    %4653 = vmatpush1.bf16.msra.mxu0 0
    %4654 = vmatprep.subr.bf16.mxu0 0
    %4655 = vmatpush1.bf16.msra.mxu0 0
    %4656 = vmatprep.subr.bf16.mxu0 0
    %4657 = vmatpush1.bf16.msra.mxu0 0
    %4658 = vmatprep.mubr.bf16.mxu0 0
    %4659 = vmatmul.mubr.bf16.gmra.mrb[0].mxu0 %v4109
    %v4660 = vpop.f32.mrb[0].mxu0
    %v4661 = vadd.f32 %v4449, %v4660
    %v4662 = vpop.f32.mrb[0].mxu0
    %v4663 = vadd.f32 %v4453, %v4662
    %v4664 = vpop.f32.mrb[0].mxu0
    %v4665 = vpop.f32.mrb[0].mxu0
    %4666 = vdwg.mxu0
    %4667 = vmatprep.subr.bf16.mxu0 %v4565
    %4668 = vmatpush1.bf16.msra.mxu0 %v4564
    %4669 = vmatprep.subr.bf16.mxu0 %v4569
    %4670 = vmatpush1.bf16.msra.mxu0 %v4568
    %4671 = vmatprep.subr.bf16.mxu0 %v4573
    %4672 = vmatpush1.bf16.msra.mxu0 %v4572
    %4673 = vmatprep.subr.bf16.mxu0 %v4577
    %4674 = vmatpush1.bf16.msra.mxu0 %v4576
    %4675 = vmatprep.subr.bf16.mxu0 %v4581
    %4676 = vmatpush1.bf16.msra.mxu0 %v4580
    %4677 = vmatprep.subr.bf16.mxu0 %v4585
    %4678 = vmatpush1.bf16.msra.mxu0 %v4584
    %4679 = vmatprep.subr.bf16.mxu0 %v4589
    %4680 = vmatpush1.bf16.msra.mxu0 %v4588
    %4681 = vmatprep.subr.bf16.mxu0 %v4593
    %4682 = vmatpush1.bf16.msra.mxu0 %v4592
    %4683 = vmatprep.subr.bf16.mxu0 0
    %4684 = vmatpush1.bf16.msra.mxu0 0
    %4685 = vmatprep.subr.bf16.mxu0 0
    %4686 = vmatpush1.bf16.msra.mxu0 0
    %4687 = vmatprep.subr.bf16.mxu0 0
    %4688 = vmatpush1.bf16.msra.mxu0 0
    %4689 = vmatprep.subr.bf16.mxu0 0
    %4690 = vmatpush1.bf16.msra.mxu0 0
    %4691 = vmatprep.subr.bf16.mxu0 0
    %4692 = vmatpush1.bf16.msra.mxu0 0
    %4693 = vmatprep.subr.bf16.mxu0 0
    %4694 = vmatpush1.bf16.msra.mxu0 0
    %4695 = vmatprep.subr.bf16.mxu0 0
    %4696 = vmatpush1.bf16.msra.mxu0 0
    %4697 = vmatprep.subr.bf16.mxu0 0
    %4698 = vmatpush1.bf16.msra.mxu0 0
    %4699 = vmatprep.mubr.bf16.mxu0 0
    %4700 = vmatmul.mubr.bf16.gmra.mrb[0].mxu0 %v4109
    %v4701 = vpop.f32.mrb[0].mxu0
    %v4702 = vadd.f32 %v4457, %v4701
    %v4703 = vpop.f32.mrb[0].mxu0
    %v4704 = vadd.f32 %v4461, %v4703
    %v4705 = vpop.f32.mrb[0].mxu0
    %v4706 = vpop.f32.mrb[0].mxu0
    %4707 = vdwg.mxu0
    %v4708 = vpack.c.bf16 %v4103, %v4103
    %v4709 = vld [vmem:[#allocation8] sm:$0xff]
    %v4710 = vld [vmem:[#allocation8 + $0x8] sm:$0xff]
    %v4711 = vld [vmem:[#allocation8 + $0x10] sm:$0xff]
    %v4712 = vld [vmem:[#allocation8 + $0x18] sm:$0xff]
    %v4713 = vld [vmem:[#allocation8 + $0x20] sm:$0xff]
    %v4714 = vld [vmem:[#allocation8 + $0x28] sm:$0xff]
    %v4715 = vld [vmem:[#allocation8 + $0x30] sm:$0xff]
    %v4716 = vld [vmem:[#allocation8 + $0x38] sm:$0xff]
    %v4717 = vld [vmem:[#allocation8 + $0x40] sm:$0xff]
    %v4718 = vld [vmem:[#allocation8 + $0x48] sm:$0xff]
    %v4719 = vld [vmem:[#allocation8 + $0x50] sm:$0xff]
    %v4720 = vld [vmem:[#allocation8 + $0x58] sm:$0xff]
    %v4721 = vld [vmem:[#allocation8 + $0x60] sm:$0xff]
    %v4722 = vld [vmem:[#allocation8 + $0x68] sm:$0xff]
    %v4723 = vld [vmem:[#allocation8 + $0x70] sm:$0xff]
    %v4724 = vld [vmem:[#allocation8 + $0x78] sm:$0xff]
    %v4725 = vld [vmem:[#allocation8 + $0x80] sm:$0xff]
    %v4726 = vld [vmem:[#allocation8 + $0x88] sm:$0xff]
    %v4727 = vld [vmem:[#allocation8 + $0x90] sm:$0xff]
    %v4728 = vld [vmem:[#allocation8 + $0x98] sm:$0xff]
    %v4729 = vld [vmem:[#allocation8 + $0xa0] sm:$0xff]
    %v4730 = vld [vmem:[#allocation8 + $0xa8] sm:$0xff]
    %v4731 = vld [vmem:[#allocation8 + $0xb0] sm:$0xff]
    %v4732 = vld [vmem:[#allocation8 + $0xb8] sm:$0xff]
    %v4733 = vld [vmem:[#allocation8 + $0xc0] sm:$0xff]
    %v4734 = vld [vmem:[#allocation8 + $0xc8] sm:$0xff]
    %v4735 = vld [vmem:[#allocation8 + $0xd0] sm:$0xff]
    %v4736 = vld [vmem:[#allocation8 + $0xd8] sm:$0xff]
    %v4737 = vld [vmem:[#allocation8 + $0xe0] sm:$0xff]
    %v4738 = vld [vmem:[#allocation8 + $0xe8] sm:$0xff]
    %v4739 = vld [vmem:[#allocation8 + $0xf0] sm:$0xff]
    %v4740 = vld [vmem:[#allocation8 + $0xf8] sm:$0xff]
    %v4773 = vunpack.c.l.b16 %v4709
    %v4774 = vunpack.c.h.b16 %v4709
    %v4775 = vunpack.c.l.b16 %v4710
    %v4776 = vunpack.c.h.b16 %v4710
    %v4777 = vunpack.c.l.b16 %v4711
    %v4778 = vunpack.c.h.b16 %v4711
    %v4779 = vunpack.c.l.b16 %v4712
    %v4780 = vunpack.c.h.b16 %v4712
    %v4781 = vunpack.c.l.b16 %v4713
    %v4782 = vunpack.c.h.b16 %v4713
    %v4783 = vunpack.c.l.b16 %v4714
    %v4784 = vunpack.c.h.b16 %v4714
    %v4785 = vunpack.c.l.b16 %v4715
    %v4786 = vunpack.c.h.b16 %v4715
    %v4787 = vunpack.c.l.b16 %v4716
    %v4788 = vunpack.c.h.b16 %v4716
    %v4789 = vunpack.c.l.b16 %v4717
    %v4790 = vunpack.c.h.b16 %v4717
    %v4791 = vunpack.c.l.b16 %v4718
    %v4792 = vunpack.c.h.b16 %v4718
    %v4793 = vunpack.c.l.b16 %v4719
    %v4794 = vunpack.c.h.b16 %v4719
    %v4795 = vunpack.c.l.b16 %v4720
    %v4796 = vunpack.c.h.b16 %v4720
    %v4797 = vunpack.c.l.b16 %v4721
    %v4798 = vunpack.c.h.b16 %v4721
    %v4799 = vunpack.c.l.b16 %v4722
    %v4800 = vunpack.c.h.b16 %v4722
    %v4801 = vunpack.c.l.b16 %v4723
    %v4802 = vunpack.c.h.b16 %v4723
    %v4803 = vunpack.c.l.b16 %v4724
    %v4804 = vunpack.c.h.b16 %v4724
    %v4805 = vunpack.c.l.b16 %v4725
    %v4806 = vunpack.c.h.b16 %v4725
    %v4807 = vunpack.c.l.b16 %v4726
    %v4808 = vunpack.c.h.b16 %v4726
    %v4809 = vunpack.c.l.b16 %v4727
    %v4810 = vunpack.c.h.b16 %v4727
    %v4811 = vunpack.c.l.b16 %v4728
    %v4812 = vunpack.c.h.b16 %v4728
    %v4813 = vunpack.c.l.b16 %v4729
    %v4814 = vunpack.c.h.b16 %v4729
    %v4815 = vunpack.c.l.b16 %v4730
    %v4816 = vunpack.c.h.b16 %v4730
    %v4817 = vunpack.c.l.b16 %v4731
    %v4818 = vunpack.c.h.b16 %v4731
    %v4819 = vunpack.c.l.b16 %v4732
    %v4820 = vunpack.c.h.b16 %v4732
    %v4821 = vunpack.c.l.b16 %v4733
    %v4822 = vunpack.c.h.b16 %v4733
    %v4823 = vunpack.c.l.b16 %v4734
    %v4824 = vunpack.c.h.b16 %v4734
    %v4825 = vunpack.c.l.b16 %v4735
    %v4826 = vunpack.c.h.b16 %v4735
    %v4827 = vunpack.c.l.b16 %v4736
    %v4828 = vunpack.c.h.b16 %v4736
    %v4829 = vunpack.c.l.b16 %v4737
    %v4830 = vunpack.c.h.b16 %v4737
    %v4831 = vunpack.c.l.b16 %v4738
    %v4832 = vunpack.c.h.b16 %v4738
    %v4833 = vunpack.c.l.b16 %v4739
    %v4834 = vunpack.c.h.b16 %v4739
    %v4835 = vunpack.c.l.b16 %v4740
    %v4836 = vunpack.c.h.b16 %v4740
    %v4837 = vpack.c.b16 %v4777, %v4773
    %v4838 = vpack.c.b16 %v4778, %v4774
    %v4839 = vpack.c.b16 %v4779, %v4775
    %v4840 = vpack.c.b16 %v4780, %v4776
    %v4841 = vpack.c.b16 %v4785, %v4781
    %v4842 = vpack.c.b16 %v4786, %v4782
    %v4843 = vpack.c.b16 %v4787, %v4783
    %v4844 = vpack.c.b16 %v4788, %v4784
    %v4845 = vpack.c.b16 %v4793, %v4789
    %v4846 = vpack.c.b16 %v4794, %v4790
    %v4847 = vpack.c.b16 %v4795, %v4791
    %v4848 = vpack.c.b16 %v4796, %v4792
    %v4849 = vpack.c.b16 %v4801, %v4797
    %v4850 = vpack.c.b16 %v4802, %v4798
    %v4851 = vpack.c.b16 %v4803, %v4799
    %v4852 = vpack.c.b16 %v4804, %v4800
    %v4853 = vpack.c.b16 %v4809, %v4805
    %v4854 = vpack.c.b16 %v4810, %v4806
    %v4855 = vpack.c.b16 %v4811, %v4807
    %v4856 = vpack.c.b16 %v4812, %v4808
    %v4857 = vpack.c.b16 %v4817, %v4813
    %v4858 = vpack.c.b16 %v4818, %v4814
    %v4859 = vpack.c.b16 %v4819, %v4815
    %v4860 = vpack.c.b16 %v4820, %v4816
    %v4861 = vpack.c.b16 %v4825, %v4821
    %v4862 = vpack.c.b16 %v4826, %v4822
    %v4863 = vpack.c.b16 %v4827, %v4823
    %v4864 = vpack.c.b16 %v4828, %v4824
    %v4865 = vpack.c.b16 %v4833, %v4829
    %v4866 = vpack.c.b16 %v4834, %v4830
    %v4867 = vpack.c.b16 %v4835, %v4831
    %v4868 = vpack.c.b16 %v4836, %v4832
    %4901 = vmatprep.subr.bf16.mxu0 %v4838
    %4902 = vmatpush1.bf16.msra.mxu0 %v4837
    %4903 = vmatprep.subr.bf16.mxu0 %v4842
    %4904 = vmatpush1.bf16.msra.mxu0 %v4841
    %4905 = vmatprep.subr.bf16.mxu0 %v4846
    %4906 = vmatpush1.bf16.msra.mxu0 %v4845
    %4907 = vmatprep.subr.bf16.mxu0 %v4850
    %4908 = vmatpush1.bf16.msra.mxu0 %v4849
    %4909 = vmatprep.subr.bf16.mxu0 %v4854
    %4910 = vmatpush1.bf16.msra.mxu0 %v4853
    %4911 = vmatprep.subr.bf16.mxu0 %v4858
    %4912 = vmatpush1.bf16.msra.mxu0 %v4857
    %4913 = vmatprep.subr.bf16.mxu0 %v4862
    %4914 = vmatpush1.bf16.msra.mxu0 %v4861
    %4915 = vmatprep.subr.bf16.mxu0 %v4866
    %4916 = vmatpush1.bf16.msra.mxu0 %v4865
    %4917 = vmatprep.subr.bf16.mxu0 0
    %4918 = vmatpush1.bf16.msra.mxu0 0
    %4919 = vmatprep.subr.bf16.mxu0 0
    %4920 = vmatpush1.bf16.msra.mxu0 0
    %4921 = vmatprep.subr.bf16.mxu0 0
    %4922 = vmatpush1.bf16.msra.mxu0 0
    %4923 = vmatprep.subr.bf16.mxu0 0
    %4924 = vmatpush1.bf16.msra.mxu0 0
    %4925 = vmatprep.subr.bf16.mxu0 0
    %4926 = vmatpush1.bf16.msra.mxu0 0
    %4927 = vmatprep.subr.bf16.mxu0 0
    %4928 = vmatpush1.bf16.msra.mxu0 0
    %4929 = vmatprep.subr.bf16.mxu0 0
    %4930 = vmatpush1.bf16.msra.mxu0 0
    %4931 = vmatprep.subr.bf16.mxu0 0
    %4932 = vmatpush1.bf16.msra.mxu0 0
    %4933 = vmatprep.mubr.bf16.mxu0 0
    %4934 = vmatmul.mubr.bf16.gmra.mrb[0].mxu0 %v4708
    %v4935 = vpop.f32.mrb[0].mxu0
    %v4936 = vadd.f32 0.0, %v4935
    %v4937 = vpop.f32.mrb[0].mxu0
    %v4938 = vadd.f32 0.0, %v4937
    %v4939 = vpop.f32.mrb[0].mxu0
    %v4940 = vpop.f32.mrb[0].mxu0
    %4941 = vdwg.mxu0
    %4942 = vmatprep.subr.bf16.mxu0 %v4840
    %4943 = vmatpush1.bf16.msra.mxu0 %v4839
    %4944 = vmatprep.subr.bf16.mxu0 %v4844
    %4945 = vmatpush1.bf16.msra.mxu0 %v4843
    %4946 = vmatprep.subr.bf16.mxu0 %v4848
    %4947 = vmatpush1.bf16.msra.mxu0 %v4847
    %4948 = vmatprep.subr.bf16.mxu0 %v4852
    %4949 = vmatpush1.bf16.msra.mxu0 %v4851
    %4950 = vmatprep.subr.bf16.mxu0 %v4856
    %4951 = vmatpush1.bf16.msra.mxu0 %v4855
    %4952 = vmatprep.subr.bf16.mxu0 %v4860
    %4953 = vmatpush1.bf16.msra.mxu0 %v4859
    %4954 = vmatprep.subr.bf16.mxu0 %v4864
    %4955 = vmatpush1.bf16.msra.mxu0 %v4863
    %4956 = vmatprep.subr.bf16.mxu0 %v4868
    %4957 = vmatpush1.bf16.msra.mxu0 %v4867
    %4958 = vmatprep.subr.bf16.mxu0 0
    %4959 = vmatpush1.bf16.msra.mxu0 0
    %4960 = vmatprep.subr.bf16.mxu0 0
    %4961 = vmatpush1.bf16.msra.mxu0 0
    %4962 = vmatprep.subr.bf16.mxu0 0
    %4963 = vmatpush1.bf16.msra.mxu0 0
    %4964 = vmatprep.subr.bf16.mxu0 0
    %4965 = vmatpush1.bf16.msra.mxu0 0
    %4966 = vmatprep.subr.bf16.mxu0 0
    %4967 = vmatpush1.bf16.msra.mxu0 0
    %4968 = vmatprep.subr.bf16.mxu0 0
    %4969 = vmatpush1.bf16.msra.mxu0 0
    %4970 = vmatprep.subr.bf16.mxu0 0
    %4971 = vmatpush1.bf16.msra.mxu0 0
    %4972 = vmatprep.subr.bf16.mxu0 0
    %4973 = vmatpush1.bf16.msra.mxu0 0
    %4974 = vmatprep.mubr.bf16.mxu0 0
    %4975 = vmatmul.mubr.bf16.gmra.mrb[0].mxu0 %v4708
    %v4976 = vpop.f32.mrb[0].mxu0
    %v4977 = vadd.f32 0.0, %v4976
    %v4978 = vpop.f32.mrb[0].mxu0
    %v4979 = vadd.f32 0.0, %v4978
    %v4980 = vpop.f32.mrb[0].mxu0
    %v4981 = vpop.f32.mrb[0].mxu0
    %4982 = vdwg.mxu0
    %v4983 = vadd.f32 %v4661, %v4936
    %v4984 = vadd.f32 %v4663, %v4938
    %v4985 = vadd.f32 %v4702, %v4977
    %v4986 = vadd.f32 %v4704, %v4979
    %v4987 = vxor.u32 %v4983, 2147483648
    %v4988 = vmul.f32 %v4987, 1.442695
    %v4989 = vpow.pop %v4988
    %v4990 = vadd.f32 %v4989, 1.0
    %v4991 = vrcp.pop %v4990
    %v4992 = vmul.f32 1.0, %v4991
    %v4993 = vxor.u32 %v4984, 2147483648
    %v4994 = vmul.f32 %v4993, 1.442695
    %v4995 = vpow.pop %v4994
    %v4996 = vadd.f32 %v4995, 1.0
    %v4997 = vrcp.pop %v4996
    %v4998 = vmul.f32 1.0, %v4997
    %v4999 = vtanh.pop %v4985
    %v5000 = vxor.u32 %v4986, 2147483648
    %v5001 = vmul.f32 %v5000, 1.442695
    %v5002 = vpow.pop %v5001
    %v5003 = vadd.f32 %v5002, 1.0
    %v5004 = vrcp.pop %v5003
    %v5005 = vmul.f32 1.0, %v5004
    %v5006 = vmul.f32 %v4998, %v4101
    %v5007 = vmul.f32 %v4992, %v4999
    %v5008 = vadd.f32 %v5006, %v5007
    %v5009 = vtanh.pop %v5008
    %v5010 = vmul.f32 %v5005, %v5009
    %5011 = vst [vmem:[#allocation3 + $0x20] sm:$0xff] %v5010
    %v5012 = vld [vmem:[#allocation2 + $0xc0] sm:$0xff]
    %v5013 = vld [vmem:[#allocation2 + $0xc8] sm:$0xff]
    %v5014 = vld [vmem:[#allocation2 + $0xd0] sm:$0xff]
    %v5015 = vld [vmem:[#allocation2 + $0xd8] sm:$0xff]
    %v5016 = vpack.c.bf16 %v4411, %v4411
    %v5017 = vld [vmem:[#allocation4] sm:$0xff]
    %v5018 = vld [vmem:[#allocation4 + $0x8] sm:$0xff]
    %v5019 = vld [vmem:[#allocation4 + $0x10] sm:$0xff]
    %v5020 = vld [vmem:[#allocation4 + $0x18] sm:$0xff]
    %v5021 = vld [vmem:[#allocation4 + $0x20] sm:$0xff]
    %v5022 = vld [vmem:[#allocation4 + $0x28] sm:$0xff]
    %v5023 = vld [vmem:[#allocation4 + $0x30] sm:$0xff]
    %v5024 = vld [vmem:[#allocation4 + $0x38] sm:$0xff]
    %v5025 = vld [vmem:[#allocation4 + $0x40] sm:$0xff]
    %v5026 = vld [vmem:[#allocation4 + $0x48] sm:$0xff]
    %v5027 = vld [vmem:[#allocation4 + $0x50] sm:$0xff]
    %v5028 = vld [vmem:[#allocation4 + $0x58] sm:$0xff]
    %v5029 = vld [vmem:[#allocation4 + $0x60] sm:$0xff]
    %v5030 = vld [vmem:[#allocation4 + $0x68] sm:$0xff]
    %v5031 = vld [vmem:[#allocation4 + $0x70] sm:$0xff]
    %v5032 = vld [vmem:[#allocation4 + $0x78] sm:$0xff]
    %v5033 = vld [vmem:[#allocation4 + $0x80] sm:$0xff]
    %v5034 = vld [vmem:[#allocation4 + $0x88] sm:$0xff]
    %v5035 = vld [vmem:[#allocation4 + $0x90] sm:$0xff]
    %v5036 = vld [vmem:[#allocation4 + $0x98] sm:$0xff]
    %v5037 = vld [vmem:[#allocation4 + $0xa0] sm:$0xff]
    %v5038 = vld [vmem:[#allocation4 + $0xa8] sm:$0xff]
    %v5039 = vld [vmem:[#allocation4 + $0xb0] sm:$0xff]
    %v5040 = vld [vmem:[#allocation4 + $0xb8] sm:$0xff]
    %v5041 = vld [vmem:[#allocation4 + $0xc0] sm:$0xff]
    %v5042 = vld [vmem:[#allocation4 + $0xc8] sm:$0xff]
    %v5043 = vld [vmem:[#allocation4 + $0xd0] sm:$0xff]
    %v5044 = vld [vmem:[#allocation4 + $0xd8] sm:$0xff]
    %v5045 = vld [vmem:[#allocation4 + $0xe0] sm:$0xff]
    %v5046 = vld [vmem:[#allocation4 + $0xe8] sm:$0xff]
    %v5047 = vld [vmem:[#allocation4 + $0xf0] sm:$0xff]
    %v5048 = vld [vmem:[#allocation4 + $0xf8] sm:$0xff]
    %v5081 = vunpack.c.l.b16 %v5017
    %v5082 = vunpack.c.h.b16 %v5017
    %v5083 = vunpack.c.l.b16 %v5018
    %v5084 = vunpack.c.h.b16 %v5018
    %v5085 = vunpack.c.l.b16 %v5019
    %v5086 = vunpack.c.h.b16 %v5019
    %v5087 = vunpack.c.l.b16 %v5020
    %v5088 = vunpack.c.h.b16 %v5020
    %v5089 = vunpack.c.l.b16 %v5021
    %v5090 = vunpack.c.h.b16 %v5021
    %v5091 = vunpack.c.l.b16 %v5022
    %v5092 = vunpack.c.h.b16 %v5022
    %v5093 = vunpack.c.l.b16 %v5023
    %v5094 = vunpack.c.h.b16 %v5023
    %v5095 = vunpack.c.l.b16 %v5024
    %v5096 = vunpack.c.h.b16 %v5024
    %v5097 = vunpack.c.l.b16 %v5025
    %v5098 = vunpack.c.h.b16 %v5025
    %v5099 = vunpack.c.l.b16 %v5026
    %v5100 = vunpack.c.h.b16 %v5026
    %v5101 = vunpack.c.l.b16 %v5027
    %v5102 = vunpack.c.h.b16 %v5027
    %v5103 = vunpack.c.l.b16 %v5028
    %v5104 = vunpack.c.h.b16 %v5028
    %v5105 = vunpack.c.l.b16 %v5029
    %v5106 = vunpack.c.h.b16 %v5029
    %v5107 = vunpack.c.l.b16 %v5030
    %v5108 = vunpack.c.h.b16 %v5030
    %v5109 = vunpack.c.l.b16 %v5031
    %v5110 = vunpack.c.h.b16 %v5031
    %v5111 = vunpack.c.l.b16 %v5032
    %v5112 = vunpack.c.h.b16 %v5032
    %v5113 = vunpack.c.l.b16 %v5033
    %v5114 = vunpack.c.h.b16 %v5033
    %v5115 = vunpack.c.l.b16 %v5034
    %v5116 = vunpack.c.h.b16 %v5034
    %v5117 = vunpack.c.l.b16 %v5035
    %v5118 = vunpack.c.h.b16 %v5035
    %v5119 = vunpack.c.l.b16 %v5036
    %v5120 = vunpack.c.h.b16 %v5036
    %v5121 = vunpack.c.l.b16 %v5037
    %v5122 = vunpack.c.h.b16 %v5037
    %v5123 = vunpack.c.l.b16 %v5038
    %v5124 = vunpack.c.h.b16 %v5038
    %v5125 = vunpack.c.l.b16 %v5039
    %v5126 = vunpack.c.h.b16 %v5039
    %v5127 = vunpack.c.l.b16 %v5040
    %v5128 = vunpack.c.h.b16 %v5040
    %v5129 = vunpack.c.l.b16 %v5041
    %v5130 = vunpack.c.h.b16 %v5041
    %v5131 = vunpack.c.l.b16 %v5042
    %v5132 = vunpack.c.h.b16 %v5042
    %v5133 = vunpack.c.l.b16 %v5043
    %v5134 = vunpack.c.h.b16 %v5043
    %v5135 = vunpack.c.l.b16 %v5044
    %v5136 = vunpack.c.h.b16 %v5044
    %v5137 = vunpack.c.l.b16 %v5045
    %v5138 = vunpack.c.h.b16 %v5045
    %v5139 = vunpack.c.l.b16 %v5046
    %v5140 = vunpack.c.h.b16 %v5046
    %v5141 = vunpack.c.l.b16 %v5047
    %v5142 = vunpack.c.h.b16 %v5047
    %v5143 = vunpack.c.l.b16 %v5048
    %v5144 = vunpack.c.h.b16 %v5048
    %v5145 = vpack.c.b16 %v5085, %v5081
    %v5146 = vpack.c.b16 %v5086, %v5082
    %v5147 = vpack.c.b16 %v5087, %v5083
    %v5148 = vpack.c.b16 %v5088, %v5084
    %v5149 = vpack.c.b16 %v5093, %v5089
    %v5150 = vpack.c.b16 %v5094, %v5090
    %v5151 = vpack.c.b16 %v5095, %v5091
    %v5152 = vpack.c.b16 %v5096, %v5092
    %v5153 = vpack.c.b16 %v5101, %v5097
    %v5154 = vpack.c.b16 %v5102, %v5098
    %v5155 = vpack.c.b16 %v5103, %v5099
    %v5156 = vpack.c.b16 %v5104, %v5100
    %v5157 = vpack.c.b16 %v5109, %v5105
    %v5158 = vpack.c.b16 %v5110, %v5106
    %v5159 = vpack.c.b16 %v5111, %v5107
    %v5160 = vpack.c.b16 %v5112, %v5108
    %v5161 = vpack.c.b16 %v5117, %v5113
    %v5162 = vpack.c.b16 %v5118, %v5114
    %v5163 = vpack.c.b16 %v5119, %v5115
    %v5164 = vpack.c.b16 %v5120, %v5116
    %v5165 = vpack.c.b16 %v5125, %v5121
    %v5166 = vpack.c.b16 %v5126, %v5122
    %v5167 = vpack.c.b16 %v5127, %v5123
    %v5168 = vpack.c.b16 %v5128, %v5124
    %v5169 = vpack.c.b16 %v5133, %v5129
    %v5170 = vpack.c.b16 %v5134, %v5130
    %v5171 = vpack.c.b16 %v5135, %v5131
    %v5172 = vpack.c.b16 %v5136, %v5132
    %v5173 = vpack.c.b16 %v5141, %v5137
    %v5174 = vpack.c.b16 %v5142, %v5138
    %v5175 = vpack.c.b16 %v5143, %v5139
    %v5176 = vpack.c.b16 %v5144, %v5140
    %5209 = vmatprep.subr.bf16.mxu0 %v5146
    %5210 = vmatpush1.bf16.msra.mxu0 %v5145
    %5211 = vmatprep.subr.bf16.mxu0 %v5150
    %5212 = vmatpush1.bf16.msra.mxu0 %v5149
    %5213 = vmatprep.subr.bf16.mxu0 %v5154
    %5214 = vmatpush1.bf16.msra.mxu0 %v5153
    %5215 = vmatprep.subr.bf16.mxu0 %v5158
    %5216 = vmatpush1.bf16.msra.mxu0 %v5157
    %5217 = vmatprep.subr.bf16.mxu0 %v5162
    %5218 = vmatpush1.bf16.msra.mxu0 %v5161
    %5219 = vmatprep.subr.bf16.mxu0 %v5166
    %5220 = vmatpush1.bf16.msra.mxu0 %v5165
    %5221 = vmatprep.subr.bf16.mxu0 %v5170
    %5222 = vmatpush1.bf16.msra.mxu0 %v5169
    %5223 = vmatprep.subr.bf16.mxu0 %v5174
    %5224 = vmatpush1.bf16.msra.mxu0 %v5173
    %5225 = vmatprep.subr.bf16.mxu0 0
    %5226 = vmatpush1.bf16.msra.mxu0 0
    %5227 = vmatprep.subr.bf16.mxu0 0
    %5228 = vmatpush1.bf16.msra.mxu0 0
    %5229 = vmatprep.subr.bf16.mxu0 0
    %5230 = vmatpush1.bf16.msra.mxu0 0
    %5231 = vmatprep.subr.bf16.mxu0 0
    %5232 = vmatpush1.bf16.msra.mxu0 0
    %5233 = vmatprep.subr.bf16.mxu0 0
    %5234 = vmatpush1.bf16.msra.mxu0 0
    %5235 = vmatprep.subr.bf16.mxu0 0
    %5236 = vmatpush1.bf16.msra.mxu0 0
    %5237 = vmatprep.subr.bf16.mxu0 0
    %5238 = vmatpush1.bf16.msra.mxu0 0
    %5239 = vmatprep.subr.bf16.mxu0 0
    %5240 = vmatpush1.bf16.msra.mxu0 0
    %5241 = vmatprep.mubr.bf16.mxu0 0
    %5242 = vmatmul.mubr.bf16.gmra.mrb[0].mxu0 %v5016
    %v5243 = vpop.f32.mrb[0].mxu0
    %v5244 = vadd.f32 0.0, %v5243
    %v5245 = vpop.f32.mrb[0].mxu0
    %v5246 = vadd.f32 0.0, %v5245
    %v5247 = vpop.f32.mrb[0].mxu0
    %v5248 = vpop.f32.mrb[0].mxu0
    %5249 = vdwg.mxu0
    %5250 = vmatprep.subr.bf16.mxu0 %v5148
    %5251 = vmatpush1.bf16.msra.mxu0 %v5147
    %5252 = vmatprep.subr.bf16.mxu0 %v5152
    %5253 = vmatpush1.bf16.msra.mxu0 %v5151
    %5254 = vmatprep.subr.bf16.mxu0 %v5156
    %5255 = vmatpush1.bf16.msra.mxu0 %v5155
    %5256 = vmatprep.subr.bf16.mxu0 %v5160
    %5257 = vmatpush1.bf16.msra.mxu0 %v5159
    %5258 = vmatprep.subr.bf16.mxu0 %v5164
    %5259 = vmatpush1.bf16.msra.mxu0 %v5163
    %5260 = vmatprep.subr.bf16.mxu0 %v5168
    %5261 = vmatpush1.bf16.msra.mxu0 %v5167
    %5262 = vmatprep.subr.bf16.mxu0 %v5172
    %5263 = vmatpush1.bf16.msra.mxu0 %v5171
    %5264 = vmatprep.subr.bf16.mxu0 %v5176
    %5265 = vmatpush1.bf16.msra.mxu0 %v5175
    %5266 = vmatprep.subr.bf16.mxu0 0
    %5267 = vmatpush1.bf16.msra.mxu0 0
    %5268 = vmatprep.subr.bf16.mxu0 0
    %5269 = vmatpush1.bf16.msra.mxu0 0
    %5270 = vmatprep.subr.bf16.mxu0 0
    %5271 = vmatpush1.bf16.msra.mxu0 0
    %5272 = vmatprep.subr.bf16.mxu0 0
    %5273 = vmatpush1.bf16.msra.mxu0 0
    %5274 = vmatprep.subr.bf16.mxu0 0
    %5275 = vmatpush1.bf16.msra.mxu0 0
    %5276 = vmatprep.subr.bf16.mxu0 0
    %5277 = vmatpush1.bf16.msra.mxu0 0
    %5278 = vmatprep.subr.bf16.mxu0 0
    %5279 = vmatpush1.bf16.msra.mxu0 0
    %5280 = vmatprep.subr.bf16.mxu0 0
    %5281 = vmatpush1.bf16.msra.mxu0 0
    %5282 = vmatprep.mubr.bf16.mxu0 0
    %5283 = vmatmul.mubr.bf16.gmra.mrb[0].mxu0 %v5016
    %v5284 = vpop.f32.mrb[0].mxu0
    %v5285 = vadd.f32 0.0, %v5284
    %v5286 = vpop.f32.mrb[0].mxu0
    %v5287 = vadd.f32 0.0, %v5286
    %v5288 = vpop.f32.mrb[0].mxu0
    %v5289 = vpop.f32.mrb[0].mxu0
    %5290 = vdwg.mxu0
    %v5291 = vadd.f32 %v5012, %v5244
    %v5292 = vadd.f32 %v5013, %v5246
    %v5293 = vadd.f32 %v5014, %v5285
    %v5294 = vadd.f32 %v5015, %v5287
    %v5295 = vxor.u32 %v5291, 2147483648
    %v5296 = vmul.f32 %v5295, 1.442695
    %v5297 = vpow.pop %v5296
    %v5298 = vadd.f32 %v5297, 1.0
    %v5299 = vrcp.pop %v5298
    %v5300 = vmul.f32 1.0, %v5299
    %v5301 = vxor.u32 %v5292, 2147483648
    %v5302 = vmul.f32 %v5301, 1.442695
    %v5303 = vpow.pop %v5302
    %v5304 = vadd.f32 %v5303, 1.0
    %v5305 = vrcp.pop %v5304
    %v5306 = vmul.f32 1.0, %v5305
    %v5307 = vtanh.pop %v5293
    %v5308 = vxor.u32 %v5294, 2147483648
    %v5309 = vmul.f32 %v5308, 1.442695
    %v5310 = vpow.pop %v5309
    %v5311 = vadd.f32 %v5310, 1.0
    %v5312 = vrcp.pop %v5311
    %v5313 = vmul.f32 1.0, %v5312
    %v5314 = vmul.f32 %v5306, %v4409
    %v5315 = vmul.f32 %v5300, %v5307
    %v5316 = vadd.f32 %v5314, %v5315
    %v5317 = vtanh.pop %v5316
    %v5318 = vmul.f32 %v5313, %v5317
    %v5319 = vld [vmem:[#allocation6] sm:$0xff]
    %v5320 = vld [vmem:[#allocation6 + $0x8] sm:$0xff]
    %v5321 = vld [vmem:[#allocation6 + $0x10] sm:$0xff]
    %v5322 = vld [vmem:[#allocation6 + $0x18] sm:$0xff]
    %v5323 = vld [vmem:[#allocation6 + $0x20] sm:$0xff]
    %v5324 = vld [vmem:[#allocation6 + $0x28] sm:$0xff]
    %v5325 = vld [vmem:[#allocation6 + $0x30] sm:$0xff]
    %v5326 = vld [vmem:[#allocation6 + $0x38] sm:$0xff]
    %v5327 = vld [vmem:[#allocation6 + $0x40] sm:$0xff]
    %v5328 = vld [vmem:[#allocation6 + $0x48] sm:$0xff]
    %v5329 = vld [vmem:[#allocation6 + $0x50] sm:$0xff]
    %v5330 = vld [vmem:[#allocation6 + $0x58] sm:$0xff]
    %v5331 = vld [vmem:[#allocation6 + $0x60] sm:$0xff]
    %v5332 = vld [vmem:[#allocation6 + $0x68] sm:$0xff]
    %v5333 = vld [vmem:[#allocation6 + $0x70] sm:$0xff]
    %v5334 = vld [vmem:[#allocation6 + $0x78] sm:$0xff]
    %v5335 = vld [vmem:[#allocation6 + $0x80] sm:$0xff]
    %v5336 = vld [vmem:[#allocation6 + $0x88] sm:$0xff]
    %v5337 = vld [vmem:[#allocation6 + $0x90] sm:$0xff]
    %v5338 = vld [vmem:[#allocation6 + $0x98] sm:$0xff]
    %v5339 = vld [vmem:[#allocation6 + $0xa0] sm:$0xff]
    %v5340 = vld [vmem:[#allocation6 + $0xa8] sm:$0xff]
    %v5341 = vld [vmem:[#allocation6 + $0xb0] sm:$0xff]
    %v5342 = vld [vmem:[#allocation6 + $0xb8] sm:$0xff]
    %v5343 = vld [vmem:[#allocation6 + $0xc0] sm:$0xff]
    %v5344 = vld [vmem:[#allocation6 + $0xc8] sm:$0xff]
    %v5345 = vld [vmem:[#allocation6 + $0xd0] sm:$0xff]
    %v5346 = vld [vmem:[#allocation6 + $0xd8] sm:$0xff]
    %v5347 = vld [vmem:[#allocation6 + $0xe0] sm:$0xff]
    %v5348 = vld [vmem:[#allocation6 + $0xe8] sm:$0xff]
    %v5349 = vld [vmem:[#allocation6 + $0xf0] sm:$0xff]
    %v5350 = vld [vmem:[#allocation6 + $0xf8] sm:$0xff]
    %v5351 = vld [vmem:[%s6] sm:$0xf]
    %v5353 = vlaneseq
    %v5354 = vshrl.u32 %v5353, 7
    %v5355 = vsub.s32 0, %v5354
    %v5356 = vrot.slane %v5351, %v5355
    %v5357 = vlaneseq
    %v5358 = vshrl.u32 %v5357, 7
    %v5359 = vsub.s32 1, %v5358
    %v5360 = vrot.slane %v5351, %v5359
    %v5361 = vlaneseq
    %v5362 = vshrl.u32 %v5361, 7
    %v5363 = vsub.s32 2, %v5362
    %v5364 = vrot.slane %v5351, %v5363
    %v5365 = vlaneseq
    %v5366 = vshrl.u32 %v5365, 7
    %v5367 = vsub.s32 3, %v5366
    %v5368 = vrot.slane %v5351, %v5367
    %v5405 = vunpack.c.l.b16 %v5319
    %v5406 = vunpack.c.h.b16 %v5319
    %v5407 = vunpack.c.l.b16 %v5320
    %v5408 = vunpack.c.h.b16 %v5320
    %v5409 = vunpack.c.l.b16 %v5321
    %v5410 = vunpack.c.h.b16 %v5321
    %v5411 = vunpack.c.l.b16 %v5322
    %v5412 = vunpack.c.h.b16 %v5322
    %v5413 = vunpack.c.l.b16 %v5323
    %v5414 = vunpack.c.h.b16 %v5323
    %v5415 = vunpack.c.l.b16 %v5324
    %v5416 = vunpack.c.h.b16 %v5324
    %v5417 = vunpack.c.l.b16 %v5325
    %v5418 = vunpack.c.h.b16 %v5325
    %v5419 = vunpack.c.l.b16 %v5326
    %v5420 = vunpack.c.h.b16 %v5326
    %v5421 = vunpack.c.l.b16 %v5327
    %v5422 = vunpack.c.h.b16 %v5327
    %v5423 = vunpack.c.l.b16 %v5328
    %v5424 = vunpack.c.h.b16 %v5328
    %v5425 = vunpack.c.l.b16 %v5329
    %v5426 = vunpack.c.h.b16 %v5329
    %v5427 = vunpack.c.l.b16 %v5330
    %v5428 = vunpack.c.h.b16 %v5330
    %v5429 = vunpack.c.l.b16 %v5331
    %v5430 = vunpack.c.h.b16 %v5331
    %v5431 = vunpack.c.l.b16 %v5332
    %v5432 = vunpack.c.h.b16 %v5332
    %v5433 = vunpack.c.l.b16 %v5333
    %v5434 = vunpack.c.h.b16 %v5333
    %v5435 = vunpack.c.l.b16 %v5334
    %v5436 = vunpack.c.h.b16 %v5334
    %v5437 = vunpack.c.l.b16 %v5335
    %v5438 = vunpack.c.h.b16 %v5335
    %v5439 = vunpack.c.l.b16 %v5336
    %v5440 = vunpack.c.h.b16 %v5336
    %v5441 = vunpack.c.l.b16 %v5337
    %v5442 = vunpack.c.h.b16 %v5337
    %v5443 = vunpack.c.l.b16 %v5338
    %v5444 = vunpack.c.h.b16 %v5338
    %v5445 = vunpack.c.l.b16 %v5339
    %v5446 = vunpack.c.h.b16 %v5339
    %v5447 = vunpack.c.l.b16 %v5340
    %v5448 = vunpack.c.h.b16 %v5340
    %v5449 = vunpack.c.l.b16 %v5341
    %v5450 = vunpack.c.h.b16 %v5341
    %v5451 = vunpack.c.l.b16 %v5342
    %v5452 = vunpack.c.h.b16 %v5342
    %v5453 = vunpack.c.l.b16 %v5343
    %v5454 = vunpack.c.h.b16 %v5343
    %v5455 = vunpack.c.l.b16 %v5344
    %v5456 = vunpack.c.h.b16 %v5344
    %v5457 = vunpack.c.l.b16 %v5345
    %v5458 = vunpack.c.h.b16 %v5345
    %v5459 = vunpack.c.l.b16 %v5346
    %v5460 = vunpack.c.h.b16 %v5346
    %v5461 = vunpack.c.l.b16 %v5347
    %v5462 = vunpack.c.h.b16 %v5347
    %v5463 = vunpack.c.l.b16 %v5348
    %v5464 = vunpack.c.h.b16 %v5348
    %v5465 = vunpack.c.l.b16 %v5349
    %v5466 = vunpack.c.h.b16 %v5349
    %v5467 = vunpack.c.l.b16 %v5350
    %v5468 = vunpack.c.h.b16 %v5350
    %v5469 = vpack.c.b16 %v5409, %v5405
    %v5470 = vpack.c.b16 %v5410, %v5406
    %v5471 = vpack.c.b16 %v5411, %v5407
    %v5472 = vpack.c.b16 %v5412, %v5408
    %v5473 = vpack.c.b16 %v5417, %v5413
    %v5474 = vpack.c.b16 %v5418, %v5414
    %v5475 = vpack.c.b16 %v5419, %v5415
    %v5476 = vpack.c.b16 %v5420, %v5416
    %v5477 = vpack.c.b16 %v5425, %v5421
    %v5478 = vpack.c.b16 %v5426, %v5422
    %v5479 = vpack.c.b16 %v5427, %v5423
    %v5480 = vpack.c.b16 %v5428, %v5424
    %v5481 = vpack.c.b16 %v5433, %v5429
    %v5482 = vpack.c.b16 %v5434, %v5430
    %v5483 = vpack.c.b16 %v5435, %v5431
    %v5484 = vpack.c.b16 %v5436, %v5432
    %v5485 = vpack.c.b16 %v5441, %v5437
    %v5486 = vpack.c.b16 %v5442, %v5438
    %v5487 = vpack.c.b16 %v5443, %v5439
    %v5488 = vpack.c.b16 %v5444, %v5440
    %v5489 = vpack.c.b16 %v5449, %v5445
    %v5490 = vpack.c.b16 %v5450, %v5446
    %v5491 = vpack.c.b16 %v5451, %v5447
    %v5492 = vpack.c.b16 %v5452, %v5448
    %v5493 = vpack.c.b16 %v5457, %v5453
    %v5494 = vpack.c.b16 %v5458, %v5454
    %v5495 = vpack.c.b16 %v5459, %v5455
    %v5496 = vpack.c.b16 %v5460, %v5456
    %v5497 = vpack.c.b16 %v5465, %v5461
    %v5498 = vpack.c.b16 %v5466, %v5462
    %v5499 = vpack.c.b16 %v5467, %v5463
    %v5500 = vpack.c.b16 %v5468, %v5464
    %5533 = vmatprep.subr.bf16.mxu0 %v5470
    %5534 = vmatpush1.bf16.msra.mxu0 %v5469
    %5535 = vmatprep.subr.bf16.mxu0 %v5474
    %5536 = vmatpush1.bf16.msra.mxu0 %v5473
    %5537 = vmatprep.subr.bf16.mxu0 %v5478
    %5538 = vmatpush1.bf16.msra.mxu0 %v5477
    %5539 = vmatprep.subr.bf16.mxu0 %v5482
    %5540 = vmatpush1.bf16.msra.mxu0 %v5481
    %5541 = vmatprep.subr.bf16.mxu0 %v5486
    %5542 = vmatpush1.bf16.msra.mxu0 %v5485
    %5543 = vmatprep.subr.bf16.mxu0 %v5490
    %5544 = vmatpush1.bf16.msra.mxu0 %v5489
    %5545 = vmatprep.subr.bf16.mxu0 %v5494
    %5546 = vmatpush1.bf16.msra.mxu0 %v5493
    %5547 = vmatprep.subr.bf16.mxu0 %v5498
    %5548 = vmatpush1.bf16.msra.mxu0 %v5497
    %5549 = vmatprep.subr.bf16.mxu0 0
    %5550 = vmatpush1.bf16.msra.mxu0 0
    %5551 = vmatprep.subr.bf16.mxu0 0
    %5552 = vmatpush1.bf16.msra.mxu0 0
    %5553 = vmatprep.subr.bf16.mxu0 0
    %5554 = vmatpush1.bf16.msra.mxu0 0
    %5555 = vmatprep.subr.bf16.mxu0 0
    %5556 = vmatpush1.bf16.msra.mxu0 0
    %5557 = vmatprep.subr.bf16.mxu0 0
    %5558 = vmatpush1.bf16.msra.mxu0 0
    %5559 = vmatprep.subr.bf16.mxu0 0
    %5560 = vmatpush1.bf16.msra.mxu0 0
    %5561 = vmatprep.subr.bf16.mxu0 0
    %5562 = vmatpush1.bf16.msra.mxu0 0
    %5563 = vmatprep.subr.bf16.mxu0 0
    %5564 = vmatpush1.bf16.msra.mxu0 0
    %5565 = vmatprep.mubr.bf16.mxu0 0
    %5566 = vmatmul.mubr.bf16.gmra.mrb[0].mxu0 %v5016
    %v5567 = vpop.f32.mrb[0].mxu0
    %v5568 = vadd.f32 %v5356, %v5567
    %v5569 = vpop.f32.mrb[0].mxu0
    %v5570 = vadd.f32 %v5360, %v5569
    %v5571 = vpop.f32.mrb[0].mxu0
    %v5572 = vpop.f32.mrb[0].mxu0
    %5573 = vdwg.mxu0
    %5574 = vmatprep.subr.bf16.mxu0 %v5472
    %5575 = vmatpush1.bf16.msra.mxu0 %v5471
    %5576 = vmatprep.subr.bf16.mxu0 %v5476
    %5577 = vmatpush1.bf16.msra.mxu0 %v5475
    %5578 = vmatprep.subr.bf16.mxu0 %v5480
    %5579 = vmatpush1.bf16.msra.mxu0 %v5479
    %5580 = vmatprep.subr.bf16.mxu0 %v5484
    %5581 = vmatpush1.bf16.msra.mxu0 %v5483
    %5582 = vmatprep.subr.bf16.mxu0 %v5488
    %5583 = vmatpush1.bf16.msra.mxu0 %v5487
    %5584 = vmatprep.subr.bf16.mxu0 %v5492
    %5585 = vmatpush1.bf16.msra.mxu0 %v5491
    %5586 = vmatprep.subr.bf16.mxu0 %v5496
    %5587 = vmatpush1.bf16.msra.mxu0 %v5495
    %5588 = vmatprep.subr.bf16.mxu0 %v5500
    %5589 = vmatpush1.bf16.msra.mxu0 %v5499
    %5590 = vmatprep.subr.bf16.mxu0 0
    %5591 = vmatpush1.bf16.msra.mxu0 0
    %5592 = vmatprep.subr.bf16.mxu0 0
    %5593 = vmatpush1.bf16.msra.mxu0 0
    %5594 = vmatprep.subr.bf16.mxu0 0
    %5595 = vmatpush1.bf16.msra.mxu0 0
    %5596 = vmatprep.subr.bf16.mxu0 0
    %5597 = vmatpush1.bf16.msra.mxu0 0
    %5598 = vmatprep.subr.bf16.mxu0 0
    %5599 = vmatpush1.bf16.msra.mxu0 0
    %5600 = vmatprep.subr.bf16.mxu0 0
    %5601 = vmatpush1.bf16.msra.mxu0 0
    %5602 = vmatprep.subr.bf16.mxu0 0
    %5603 = vmatpush1.bf16.msra.mxu0 0
    %5604 = vmatprep.subr.bf16.mxu0 0
    %5605 = vmatpush1.bf16.msra.mxu0 0
    %5606 = vmatprep.mubr.bf16.mxu0 0
    %5607 = vmatmul.mubr.bf16.gmra.mrb[0].mxu0 %v5016
    %v5608 = vpop.f32.mrb[0].mxu0
    %v5609 = vadd.f32 %v5364, %v5608
    %v5610 = vpop.f32.mrb[0].mxu0
    %v5611 = vadd.f32 %v5368, %v5610
    %v5612 = vpop.f32.mrb[0].mxu0
    %v5613 = vpop.f32.mrb[0].mxu0
    %5614 = vdwg.mxu0
    %v5615 = vpack.c.bf16 %v5010, %v5010
    %v5616 = vld [vmem:[#allocation8] sm:$0xff]
    %v5617 = vld [vmem:[#allocation8 + $0x8] sm:$0xff]
    %v5618 = vld [vmem:[#allocation8 + $0x10] sm:$0xff]
    %v5619 = vld [vmem:[#allocation8 + $0x18] sm:$0xff]
    %v5620 = vld [vmem:[#allocation8 + $0x20] sm:$0xff]
    %v5621 = vld [vmem:[#allocation8 + $0x28] sm:$0xff]
    %v5622 = vld [vmem:[#allocation8 + $0x30] sm:$0xff]
    %v5623 = vld [vmem:[#allocation8 + $0x38] sm:$0xff]
    %v5624 = vld [vmem:[#allocation8 + $0x40] sm:$0xff]
    %v5625 = vld [vmem:[#allocation8 + $0x48] sm:$0xff]
    %v5626 = vld [vmem:[#allocation8 + $0x50] sm:$0xff]
    %v5627 = vld [vmem:[#allocation8 + $0x58] sm:$0xff]
    %v5628 = vld [vmem:[#allocation8 + $0x60] sm:$0xff]
    %v5629 = vld [vmem:[#allocation8 + $0x68] sm:$0xff]
    %v5630 = vld [vmem:[#allocation8 + $0x70] sm:$0xff]
    %v5631 = vld [vmem:[#allocation8 + $0x78] sm:$0xff]
    %v5632 = vld [vmem:[#allocation8 + $0x80] sm:$0xff]
    %v5633 = vld [vmem:[#allocation8 + $0x88] sm:$0xff]
    %v5634 = vld [vmem:[#allocation8 + $0x90] sm:$0xff]
    %v5635 = vld [vmem:[#allocation8 + $0x98] sm:$0xff]
    %v5636 = vld [vmem:[#allocation8 + $0xa0] sm:$0xff]
    %v5637 = vld [vmem:[#allocation8 + $0xa8] sm:$0xff]
    %v5638 = vld [vmem:[#allocation8 + $0xb0] sm:$0xff]
    %v5639 = vld [vmem:[#allocation8 + $0xb8] sm:$0xff]
    %v5640 = vld [vmem:[#allocation8 + $0xc0] sm:$0xff]
    %v5641 = vld [vmem:[#allocation8 + $0xc8] sm:$0xff]
    %v5642 = vld [vmem:[#allocation8 + $0xd0] sm:$0xff]
    %v5643 = vld [vmem:[#allocation8 + $0xd8] sm:$0xff]
    %v5644 = vld [vmem:[#allocation8 + $0xe0] sm:$0xff]
    %v5645 = vld [vmem:[#allocation8 + $0xe8] sm:$0xff]
    %v5646 = vld [vmem:[#allocation8 + $0xf0] sm:$0xff]
    %v5647 = vld [vmem:[#allocation8 + $0xf8] sm:$0xff]
    %v5680 = vunpack.c.l.b16 %v5616
    %v5681 = vunpack.c.h.b16 %v5616
    %v5682 = vunpack.c.l.b16 %v5617
    %v5683 = vunpack.c.h.b16 %v5617
    %v5684 = vunpack.c.l.b16 %v5618
    %v5685 = vunpack.c.h.b16 %v5618
    %v5686 = vunpack.c.l.b16 %v5619
    %v5687 = vunpack.c.h.b16 %v5619
    %v5688 = vunpack.c.l.b16 %v5620
    %v5689 = vunpack.c.h.b16 %v5620
    %v5690 = vunpack.c.l.b16 %v5621
    %v5691 = vunpack.c.h.b16 %v5621
    %v5692 = vunpack.c.l.b16 %v5622
    %v5693 = vunpack.c.h.b16 %v5622
    %v5694 = vunpack.c.l.b16 %v5623
    %v5695 = vunpack.c.h.b16 %v5623
    %v5696 = vunpack.c.l.b16 %v5624
    %v5697 = vunpack.c.h.b16 %v5624
    %v5698 = vunpack.c.l.b16 %v5625
    %v5699 = vunpack.c.h.b16 %v5625
    %v5700 = vunpack.c.l.b16 %v5626
    %v5701 = vunpack.c.h.b16 %v5626
    %v5702 = vunpack.c.l.b16 %v5627
    %v5703 = vunpack.c.h.b16 %v5627
    %v5704 = vunpack.c.l.b16 %v5628
    %v5705 = vunpack.c.h.b16 %v5628
    %v5706 = vunpack.c.l.b16 %v5629
    %v5707 = vunpack.c.h.b16 %v5629
    %v5708 = vunpack.c.l.b16 %v5630
    %v5709 = vunpack.c.h.b16 %v5630
    %v5710 = vunpack.c.l.b16 %v5631
    %v5711 = vunpack.c.h.b16 %v5631
    %v5712 = vunpack.c.l.b16 %v5632
    %v5713 = vunpack.c.h.b16 %v5632
    %v5714 = vunpack.c.l.b16 %v5633
    %v5715 = vunpack.c.h.b16 %v5633
    %v5716 = vunpack.c.l.b16 %v5634
    %v5717 = vunpack.c.h.b16 %v5634
    %v5718 = vunpack.c.l.b16 %v5635
    %v5719 = vunpack.c.h.b16 %v5635
    %v5720 = vunpack.c.l.b16 %v5636
    %v5721 = vunpack.c.h.b16 %v5636
    %v5722 = vunpack.c.l.b16 %v5637
    %v5723 = vunpack.c.h.b16 %v5637
    %v5724 = vunpack.c.l.b16 %v5638
    %v5725 = vunpack.c.h.b16 %v5638
    %v5726 = vunpack.c.l.b16 %v5639
    %v5727 = vunpack.c.h.b16 %v5639
    %v5728 = vunpack.c.l.b16 %v5640
    %v5729 = vunpack.c.h.b16 %v5640
    %v5730 = vunpack.c.l.b16 %v5641
    %v5731 = vunpack.c.h.b16 %v5641
    %v5732 = vunpack.c.l.b16 %v5642
    %v5733 = vunpack.c.h.b16 %v5642
    %v5734 = vunpack.c.l.b16 %v5643
    %v5735 = vunpack.c.h.b16 %v5643
    %v5736 = vunpack.c.l.b16 %v5644
    %v5737 = vunpack.c.h.b16 %v5644
    %v5738 = vunpack.c.l.b16 %v5645
    %v5739 = vunpack.c.h.b16 %v5645
    %v5740 = vunpack.c.l.b16 %v5646
    %v5741 = vunpack.c.h.b16 %v5646
    %v5742 = vunpack.c.l.b16 %v5647
    %v5743 = vunpack.c.h.b16 %v5647
    %v5744 = vpack.c.b16 %v5684, %v5680
    %v5745 = vpack.c.b16 %v5685, %v5681
    %v5746 = vpack.c.b16 %v5686, %v5682
    %v5747 = vpack.c.b16 %v5687, %v5683
    %v5748 = vpack.c.b16 %v5692, %v5688
    %v5749 = vpack.c.b16 %v5693, %v5689
    %v5750 = vpack.c.b16 %v5694, %v5690
    %v5751 = vpack.c.b16 %v5695, %v5691
    %v5752 = vpack.c.b16 %v5700, %v5696
    %v5753 = vpack.c.b16 %v5701, %v5697
    %v5754 = vpack.c.b16 %v5702, %v5698
    %v5755 = vpack.c.b16 %v5703, %v5699
    %v5756 = vpack.c.b16 %v5708, %v5704
    %v5757 = vpack.c.b16 %v5709, %v5705
    %v5758 = vpack.c.b16 %v5710, %v5706
    %v5759 = vpack.c.b16 %v5711, %v5707
    %v5760 = vpack.c.b16 %v5716, %v5712
    %v5761 = vpack.c.b16 %v5717, %v5713
    %v5762 = vpack.c.b16 %v5718, %v5714
    %v5763 = vpack.c.b16 %v5719, %v5715
    %v5764 = vpack.c.b16 %v5724, %v5720
    %v5765 = vpack.c.b16 %v5725, %v5721
    %v5766 = vpack.c.b16 %v5726, %v5722
    %v5767 = vpack.c.b16 %v5727, %v5723
    %v5768 = vpack.c.b16 %v5732, %v5728
    %v5769 = vpack.c.b16 %v5733, %v5729
    %v5770 = vpack.c.b16 %v5734, %v5730
    %v5771 = vpack.c.b16 %v5735, %v5731
    %v5772 = vpack.c.b16 %v5740, %v5736
    %v5773 = vpack.c.b16 %v5741, %v5737
    %v5774 = vpack.c.b16 %v5742, %v5738
    %v5775 = vpack.c.b16 %v5743, %v5739
    %5808 = vmatprep.subr.bf16.mxu0 %v5745
    %5809 = vmatpush1.bf16.msra.mxu0 %v5744
    %5810 = vmatprep.subr.bf16.mxu0 %v5749
    %5811 = vmatpush1.bf16.msra.mxu0 %v5748
    %5812 = vmatprep.subr.bf16.mxu0 %v5753
    %5813 = vmatpush1.bf16.msra.mxu0 %v5752
    %5814 = vmatprep.subr.bf16.mxu0 %v5757
    %5815 = vmatpush1.bf16.msra.mxu0 %v5756
    %5816 = vmatprep.subr.bf16.mxu0 %v5761
    %5817 = vmatpush1.bf16.msra.mxu0 %v5760
    %5818 = vmatprep.subr.bf16.mxu0 %v5765
    %5819 = vmatpush1.bf16.msra.mxu0 %v5764
    %5820 = vmatprep.subr.bf16.mxu0 %v5769
    %5821 = vmatpush1.bf16.msra.mxu0 %v5768
    %5822 = vmatprep.subr.bf16.mxu0 %v5773
    %5823 = vmatpush1.bf16.msra.mxu0 %v5772
    %5824 = vmatprep.subr.bf16.mxu0 0
    %5825 = vmatpush1.bf16.msra.mxu0 0
    %5826 = vmatprep.subr.bf16.mxu0 0
    %5827 = vmatpush1.bf16.msra.mxu0 0
    %5828 = vmatprep.subr.bf16.mxu0 0
    %5829 = vmatpush1.bf16.msra.mxu0 0
    %5830 = vmatprep.subr.bf16.mxu0 0
    %5831 = vmatpush1.bf16.msra.mxu0 0
    %5832 = vmatprep.subr.bf16.mxu0 0
    %5833 = vmatpush1.bf16.msra.mxu0 0
    %5834 = vmatprep.subr.bf16.mxu0 0
    %5835 = vmatpush1.bf16.msra.mxu0 0
    %5836 = vmatprep.subr.bf16.mxu0 0
    %5837 = vmatpush1.bf16.msra.mxu0 0
    %5838 = vmatprep.subr.bf16.mxu0 0
    %5839 = vmatpush1.bf16.msra.mxu0 0
    %5840 = vmatprep.mubr.bf16.mxu0 0
    %5841 = vmatmul.mubr.bf16.gmra.mrb[0].mxu0 %v5615
    %v5842 = vpop.f32.mrb[0].mxu0
    %v5843 = vadd.f32 0.0, %v5842
    %v5844 = vpop.f32.mrb[0].mxu0
    %v5845 = vadd.f32 0.0, %v5844
    %v5846 = vpop.f32.mrb[0].mxu0
    %v5847 = vpop.f32.mrb[0].mxu0
    %5848 = vdwg.mxu0
    %5849 = vmatprep.subr.bf16.mxu0 %v5747
    %5850 = vmatpush1.bf16.msra.mxu0 %v5746
    %5851 = vmatprep.subr.bf16.mxu0 %v5751
    %5852 = vmatpush1.bf16.msra.mxu0 %v5750
    %5853 = vmatprep.subr.bf16.mxu0 %v5755
    %5854 = vmatpush1.bf16.msra.mxu0 %v5754
    %5855 = vmatprep.subr.bf16.mxu0 %v5759
    %5856 = vmatpush1.bf16.msra.mxu0 %v5758
    %5857 = vmatprep.subr.bf16.mxu0 %v5763
    %5858 = vmatpush1.bf16.msra.mxu0 %v5762
    %5859 = vmatprep.subr.bf16.mxu0 %v5767
    %5860 = vmatpush1.bf16.msra.mxu0 %v5766
    %5861 = vmatprep.subr.bf16.mxu0 %v5771
    %5862 = vmatpush1.bf16.msra.mxu0 %v5770
    %5863 = vmatprep.subr.bf16.mxu0 %v5775
    %5864 = vmatpush1.bf16.msra.mxu0 %v5774
    %5865 = vmatprep.subr.bf16.mxu0 0
    %5866 = vmatpush1.bf16.msra.mxu0 0
    %5867 = vmatprep.subr.bf16.mxu0 0
    %5868 = vmatpush1.bf16.msra.mxu0 0
    %5869 = vmatprep.subr.bf16.mxu0 0
    %5870 = vmatpush1.bf16.msra.mxu0 0
    %5871 = vmatprep.subr.bf16.mxu0 0
    %5872 = vmatpush1.bf16.msra.mxu0 0
    %5873 = vmatprep.subr.bf16.mxu0 0
    %5874 = vmatpush1.bf16.msra.mxu0 0
    %5875 = vmatprep.subr.bf16.mxu0 0
    %5876 = vmatpush1.bf16.msra.mxu0 0
    %5877 = vmatprep.subr.bf16.mxu0 0
    %5878 = vmatpush1.bf16.msra.mxu0 0
    %5879 = vmatprep.subr.bf16.mxu0 0
    %5880 = vmatpush1.bf16.msra.mxu0 0
    %5881 = vmatprep.mubr.bf16.mxu0 0
    %5882 = vmatmul.mubr.bf16.gmra.mrb[0].mxu0 %v5615
    %v5883 = vpop.f32.mrb[0].mxu0
    %v5884 = vadd.f32 0.0, %v5883
    %v5885 = vpop.f32.mrb[0].mxu0
    %v5886 = vadd.f32 0.0, %v5885
    %v5887 = vpop.f32.mrb[0].mxu0
    %v5888 = vpop.f32.mrb[0].mxu0
    %5889 = vdwg.mxu0
    %v5890 = vadd.f32 %v5568, %v5843
    %v5891 = vadd.f32 %v5570, %v5845
    %v5892 = vadd.f32 %v5609, %v5884
    %v5893 = vadd.f32 %v5611, %v5886
    %v5894 = vxor.u32 %v5890, 2147483648
    %v5895 = vmul.f32 %v5894, 1.442695
    %v5896 = vpow.pop %v5895
    %v5897 = vadd.f32 %v5896, 1.0
    %v5898 = vrcp.pop %v5897
    %v5899 = vmul.f32 1.0, %v5898
    %v5900 = vxor.u32 %v5891, 2147483648
    %v5901 = vmul.f32 %v5900, 1.442695
    %v5902 = vpow.pop %v5901
    %v5903 = vadd.f32 %v5902, 1.0
    %v5904 = vrcp.pop %v5903
    %v5905 = vmul.f32 1.0, %v5904
    %v5906 = vtanh.pop %v5892
    %v5907 = vxor.u32 %v5893, 2147483648
    %v5908 = vmul.f32 %v5907, 1.442695
    %v5909 = vpow.pop %v5908
    %v5910 = vadd.f32 %v5909, 1.0
    %v5911 = vrcp.pop %v5910
    %v5912 = vmul.f32 1.0, %v5911
    %v5913 = vmul.f32 %v5905, %v5008
    %v5914 = vmul.f32 %v5899, %v5906
    %v5915 = vadd.f32 %v5913, %v5914
    %v5916 = vtanh.pop %v5915
    %v5917 = vmul.f32 %v5912, %v5916
    %5918 = vst [vmem:[#allocation3 + $0x28] sm:$0xff] %v5917
    %v5919 = vld [vmem:[#allocation2 + $0xe0] sm:$0xff]
    %v5920 = vld [vmem:[#allocation2 + $0xe8] sm:$0xff]
    %v5921 = vld [vmem:[#allocation2 + $0xf0] sm:$0xff]
    %v5922 = vld [vmem:[#allocation2 + $0xf8] sm:$0xff]
    %v5923 = vpack.c.bf16 %v5318, %v5318
    %v5924 = vld [vmem:[#allocation4] sm:$0xff]
    %v5925 = vld [vmem:[#allocation4 + $0x8] sm:$0xff]
    %v5926 = vld [vmem:[#allocation4 + $0x10] sm:$0xff]
    %v5927 = vld [vmem:[#allocation4 + $0x18] sm:$0xff]
    %v5928 = vld [vmem:[#allocation4 + $0x20] sm:$0xff]
    %v5929 = vld [vmem:[#allocation4 + $0x28] sm:$0xff]
    %v5930 = vld [vmem:[#allocation4 + $0x30] sm:$0xff]
    %v5931 = vld [vmem:[#allocation4 + $0x38] sm:$0xff]
    %v5932 = vld [vmem:[#allocation4 + $0x40] sm:$0xff]
    %v5933 = vld [vmem:[#allocation4 + $0x48] sm:$0xff]
    %v5934 = vld [vmem:[#allocation4 + $0x50] sm:$0xff]
    %v5935 = vld [vmem:[#allocation4 + $0x58] sm:$0xff]
    %v5936 = vld [vmem:[#allocation4 + $0x60] sm:$0xff]
    %v5937 = vld [vmem:[#allocation4 + $0x68] sm:$0xff]
    %v5938 = vld [vmem:[#allocation4 + $0x70] sm:$0xff]
    %v5939 = vld [vmem:[#allocation4 + $0x78] sm:$0xff]
    %v5940 = vld [vmem:[#allocation4 + $0x80] sm:$0xff]
    %v5941 = vld [vmem:[#allocation4 + $0x88] sm:$0xff]
    %v5942 = vld [vmem:[#allocation4 + $0x90] sm:$0xff]
    %v5943 = vld [vmem:[#allocation4 + $0x98] sm:$0xff]
    %v5944 = vld [vmem:[#allocation4 + $0xa0] sm:$0xff]
    %v5945 = vld [vmem:[#allocation4 + $0xa8] sm:$0xff]
    %v5946 = vld [vmem:[#allocation4 + $0xb0] sm:$0xff]
    %v5947 = vld [vmem:[#allocation4 + $0xb8] sm:$0xff]
    %v5948 = vld [vmem:[#allocation4 + $0xc0] sm:$0xff]
    %v5949 = vld [vmem:[#allocation4 + $0xc8] sm:$0xff]
    %v5950 = vld [vmem:[#allocation4 + $0xd0] sm:$0xff]
    %v5951 = vld [vmem:[#allocation4 + $0xd8] sm:$0xff]
    %v5952 = vld [vmem:[#allocation4 + $0xe0] sm:$0xff]
    %v5953 = vld [vmem:[#allocation4 + $0xe8] sm:$0xff]
    %v5954 = vld [vmem:[#allocation4 + $0xf0] sm:$0xff]
    %v5955 = vld [vmem:[#allocation4 + $0xf8] sm:$0xff]
    %v5988 = vunpack.c.l.b16 %v5924
    %v5989 = vunpack.c.h.b16 %v5924
    %v5990 = vunpack.c.l.b16 %v5925
    %v5991 = vunpack.c.h.b16 %v5925
    %v5992 = vunpack.c.l.b16 %v5926
    %v5993 = vunpack.c.h.b16 %v5926
    %v5994 = vunpack.c.l.b16 %v5927
    %v5995 = vunpack.c.h.b16 %v5927
    %v5996 = vunpack.c.l.b16 %v5928
    %v5997 = vunpack.c.h.b16 %v5928
    %v5998 = vunpack.c.l.b16 %v5929
    %v5999 = vunpack.c.h.b16 %v5929
    %v6000 = vunpack.c.l.b16 %v5930
    %v6001 = vunpack.c.h.b16 %v5930
    %v6002 = vunpack.c.l.b16 %v5931
    %v6003 = vunpack.c.h.b16 %v5931
    %v6004 = vunpack.c.l.b16 %v5932
    %v6005 = vunpack.c.h.b16 %v5932
    %v6006 = vunpack.c.l.b16 %v5933
    %v6007 = vunpack.c.h.b16 %v5933
    %v6008 = vunpack.c.l.b16 %v5934
    %v6009 = vunpack.c.h.b16 %v5934
    %v6010 = vunpack.c.l.b16 %v5935
    %v6011 = vunpack.c.h.b16 %v5935
    %v6012 = vunpack.c.l.b16 %v5936
    %v6013 = vunpack.c.h.b16 %v5936
    %v6014 = vunpack.c.l.b16 %v5937
    %v6015 = vunpack.c.h.b16 %v5937
    %v6016 = vunpack.c.l.b16 %v5938
    %v6017 = vunpack.c.h.b16 %v5938
    %v6018 = vunpack.c.l.b16 %v5939
    %v6019 = vunpack.c.h.b16 %v5939
    %v6020 = vunpack.c.l.b16 %v5940
    %v6021 = vunpack.c.h.b16 %v5940
    %v6022 = vunpack.c.l.b16 %v5941
    %v6023 = vunpack.c.h.b16 %v5941
    %v6024 = vunpack.c.l.b16 %v5942
    %v6025 = vunpack.c.h.b16 %v5942
    %v6026 = vunpack.c.l.b16 %v5943
    %v6027 = vunpack.c.h.b16 %v5943
    %v6028 = vunpack.c.l.b16 %v5944
    %v6029 = vunpack.c.h.b16 %v5944
    %v6030 = vunpack.c.l.b16 %v5945
    %v6031 = vunpack.c.h.b16 %v5945
    %v6032 = vunpack.c.l.b16 %v5946
    %v6033 = vunpack.c.h.b16 %v5946
    %v6034 = vunpack.c.l.b16 %v5947
    %v6035 = vunpack.c.h.b16 %v5947
    %v6036 = vunpack.c.l.b16 %v5948
    %v6037 = vunpack.c.h.b16 %v5948
    %v6038 = vunpack.c.l.b16 %v5949
    %v6039 = vunpack.c.h.b16 %v5949
    %v6040 = vunpack.c.l.b16 %v5950
    %v6041 = vunpack.c.h.b16 %v5950
    %v6042 = vunpack.c.l.b16 %v5951
    %v6043 = vunpack.c.h.b16 %v5951
    %v6044 = vunpack.c.l.b16 %v5952
    %v6045 = vunpack.c.h.b16 %v5952
    %v6046 = vunpack.c.l.b16 %v5953
    %v6047 = vunpack.c.h.b16 %v5953
    %v6048 = vunpack.c.l.b16 %v5954
    %v6049 = vunpack.c.h.b16 %v5954
    %v6050 = vunpack.c.l.b16 %v5955
    %v6051 = vunpack.c.h.b16 %v5955
    %v6052 = vpack.c.b16 %v5992, %v5988
    %v6053 = vpack.c.b16 %v5993, %v5989
    %v6054 = vpack.c.b16 %v5994, %v5990
    %v6055 = vpack.c.b16 %v5995, %v5991
    %v6056 = vpack.c.b16 %v6000, %v5996
    %v6057 = vpack.c.b16 %v6001, %v5997
    %v6058 = vpack.c.b16 %v6002, %v5998
    %v6059 = vpack.c.b16 %v6003, %v5999
    %v6060 = vpack.c.b16 %v6008, %v6004
    %v6061 = vpack.c.b16 %v6009, %v6005
    %v6062 = vpack.c.b16 %v6010, %v6006
    %v6063 = vpack.c.b16 %v6011, %v6007
    %v6064 = vpack.c.b16 %v6016, %v6012
    %v6065 = vpack.c.b16 %v6017, %v6013
    %v6066 = vpack.c.b16 %v6018, %v6014
    %v6067 = vpack.c.b16 %v6019, %v6015
    %v6068 = vpack.c.b16 %v6024, %v6020
    %v6069 = vpack.c.b16 %v6025, %v6021
    %v6070 = vpack.c.b16 %v6026, %v6022
    %v6071 = vpack.c.b16 %v6027, %v6023
    %v6072 = vpack.c.b16 %v6032, %v6028
    %v6073 = vpack.c.b16 %v6033, %v6029
    %v6074 = vpack.c.b16 %v6034, %v6030
    %v6075 = vpack.c.b16 %v6035, %v6031
    %v6076 = vpack.c.b16 %v6040, %v6036
    %v6077 = vpack.c.b16 %v6041, %v6037
    %v6078 = vpack.c.b16 %v6042, %v6038
    %v6079 = vpack.c.b16 %v6043, %v6039
    %v6080 = vpack.c.b16 %v6048, %v6044
    %v6081 = vpack.c.b16 %v6049, %v6045
    %v6082 = vpack.c.b16 %v6050, %v6046
    %v6083 = vpack.c.b16 %v6051, %v6047
    %6116 = vmatprep.subr.bf16.mxu0 %v6053
    %6117 = vmatpush1.bf16.msra.mxu0 %v6052
    %6118 = vmatprep.subr.bf16.mxu0 %v6057
    %6119 = vmatpush1.bf16.msra.mxu0 %v6056
    %6120 = vmatprep.subr.bf16.mxu0 %v6061
    %6121 = vmatpush1.bf16.msra.mxu0 %v6060
    %6122 = vmatprep.subr.bf16.mxu0 %v6065
    %6123 = vmatpush1.bf16.msra.mxu0 %v6064
    %6124 = vmatprep.subr.bf16.mxu0 %v6069
    %6125 = vmatpush1.bf16.msra.mxu0 %v6068
    %6126 = vmatprep.subr.bf16.mxu0 %v6073
    %6127 = vmatpush1.bf16.msra.mxu0 %v6072
    %6128 = vmatprep.subr.bf16.mxu0 %v6077
    %6129 = vmatpush1.bf16.msra.mxu0 %v6076
    %6130 = vmatprep.subr.bf16.mxu0 %v6081
    %6131 = vmatpush1.bf16.msra.mxu0 %v6080
    %6132 = vmatprep.subr.bf16.mxu0 0
    %6133 = vmatpush1.bf16.msra.mxu0 0
    %6134 = vmatprep.subr.bf16.mxu0 0
    %6135 = vmatpush1.bf16.msra.mxu0 0
    %6136 = vmatprep.subr.bf16.mxu0 0
    %6137 = vmatpush1.bf16.msra.mxu0 0
    %6138 = vmatprep.subr.bf16.mxu0 0
    %6139 = vmatpush1.bf16.msra.mxu0 0
    %6140 = vmatprep.subr.bf16.mxu0 0
    %6141 = vmatpush1.bf16.msra.mxu0 0
    %6142 = vmatprep.subr.bf16.mxu0 0
    %6143 = vmatpush1.bf16.msra.mxu0 0
    %6144 = vmatprep.subr.bf16.mxu0 0
    %6145 = vmatpush1.bf16.msra.mxu0 0
    %6146 = vmatprep.subr.bf16.mxu0 0
    %6147 = vmatpush1.bf16.msra.mxu0 0
    %6148 = vmatprep.mubr.bf16.mxu0 0
    %6149 = vmatmul.mubr.bf16.gmra.mrb[0].mxu0 %v5923
    %v6150 = vpop.f32.mrb[0].mxu0
    %v6151 = vadd.f32 0.0, %v6150
    %v6152 = vpop.f32.mrb[0].mxu0
    %v6153 = vadd.f32 0.0, %v6152
    %v6154 = vpop.f32.mrb[0].mxu0
    %v6155 = vpop.f32.mrb[0].mxu0
    %6156 = vdwg.mxu0
    %6157 = vmatprep.subr.bf16.mxu0 %v6055
    %6158 = vmatpush1.bf16.msra.mxu0 %v6054
    %6159 = vmatprep.subr.bf16.mxu0 %v6059
    %6160 = vmatpush1.bf16.msra.mxu0 %v6058
    %6161 = vmatprep.subr.bf16.mxu0 %v6063
    %6162 = vmatpush1.bf16.msra.mxu0 %v6062
    %6163 = vmatprep.subr.bf16.mxu0 %v6067
    %6164 = vmatpush1.bf16.msra.mxu0 %v6066
    %6165 = vmatprep.subr.bf16.mxu0 %v6071
    %6166 = vmatpush1.bf16.msra.mxu0 %v6070
    %6167 = vmatprep.subr.bf16.mxu0 %v6075
    %6168 = vmatpush1.bf16.msra.mxu0 %v6074
    %6169 = vmatprep.subr.bf16.mxu0 %v6079
    %6170 = vmatpush1.bf16.msra.mxu0 %v6078
    %6171 = vmatprep.subr.bf16.mxu0 %v6083
    %6172 = vmatpush1.bf16.msra.mxu0 %v6082
    %6173 = vmatprep.subr.bf16.mxu0 0
    %6174 = vmatpush1.bf16.msra.mxu0 0
    %6175 = vmatprep.subr.bf16.mxu0 0
    %6176 = vmatpush1.bf16.msra.mxu0 0
    %6177 = vmatprep.subr.bf16.mxu0 0
    %6178 = vmatpush1.bf16.msra.mxu0 0
    %6179 = vmatprep.subr.bf16.mxu0 0
    %6180 = vmatpush1.bf16.msra.mxu0 0
    %6181 = vmatprep.subr.bf16.mxu0 0
    %6182 = vmatpush1.bf16.msra.mxu0 0
    %6183 = vmatprep.subr.bf16.mxu0 0
    %6184 = vmatpush1.bf16.msra.mxu0 0
    %6185 = vmatprep.subr.bf16.mxu0 0
    %6186 = vmatpush1.bf16.msra.mxu0 0
    %6187 = vmatprep.subr.bf16.mxu0 0
    %6188 = vmatpush1.bf16.msra.mxu0 0
    %6189 = vmatprep.mubr.bf16.mxu0 0
    %6190 = vmatmul.mubr.bf16.gmra.mrb[0].mxu0 %v5923
    %v6191 = vpop.f32.mrb[0].mxu0
    %v6192 = vadd.f32 0.0, %v6191
    %v6193 = vpop.f32.mrb[0].mxu0
    %v6194 = vadd.f32 0.0, %v6193
    %v6195 = vpop.f32.mrb[0].mxu0
    %v6196 = vpop.f32.mrb[0].mxu0
    %6197 = vdwg.mxu0
    %v6198 = vadd.f32 %v5919, %v6151
    %v6199 = vadd.f32 %v5920, %v6153
    %v6200 = vadd.f32 %v5921, %v6192
    %v6201 = vadd.f32 %v5922, %v6194
    %v6202 = vxor.u32 %v6198, 2147483648
    %v6203 = vmul.f32 %v6202, 1.442695
    %v6204 = vpow.pop %v6203
    %v6205 = vadd.f32 %v6204, 1.0
    %v6206 = vrcp.pop %v6205
    %v6207 = vmul.f32 1.0, %v6206
    %v6208 = vxor.u32 %v6199, 2147483648
    %v6209 = vmul.f32 %v6208, 1.442695
    %v6210 = vpow.pop %v6209
    %v6211 = vadd.f32 %v6210, 1.0
    %v6212 = vrcp.pop %v6211
    %v6213 = vmul.f32 1.0, %v6212
    %v6214 = vtanh.pop %v6200
    %v6215 = vxor.u32 %v6201, 2147483648
    %v6216 = vmul.f32 %v6215, 1.442695
    %v6217 = vpow.pop %v6216
    %v6218 = vadd.f32 %v6217, 1.0
    %v6219 = vrcp.pop %v6218
    %v6220 = vmul.f32 1.0, %v6219
    %v6221 = vmul.f32 %v6213, %v5316
    %v6222 = vmul.f32 %v6207, %v6214
    %v6223 = vadd.f32 %v6221, %v6222
    %v6224 = vtanh.pop %v6223
    %v6225 = vmul.f32 %v6220, %v6224
    %v6226 = vld [vmem:[#allocation6] sm:$0xff]
    %v6227 = vld [vmem:[#allocation6 + $0x8] sm:$0xff]
    %v6228 = vld [vmem:[#allocation6 + $0x10] sm:$0xff]
    %v6229 = vld [vmem:[#allocation6 + $0x18] sm:$0xff]
    %v6230 = vld [vmem:[#allocation6 + $0x20] sm:$0xff]
    %v6231 = vld [vmem:[#allocation6 + $0x28] sm:$0xff]
    %v6232 = vld [vmem:[#allocation6 + $0x30] sm:$0xff]
    %v6233 = vld [vmem:[#allocation6 + $0x38] sm:$0xff]
    %v6234 = vld [vmem:[#allocation6 + $0x40] sm:$0xff]
    %v6235 = vld [vmem:[#allocation6 + $0x48] sm:$0xff]
    %v6236 = vld [vmem:[#allocation6 + $0x50] sm:$0xff]
    %v6237 = vld [vmem:[#allocation6 + $0x58] sm:$0xff]
    %v6238 = vld [vmem:[#allocation6 + $0x60] sm:$0xff]
    %v6239 = vld [vmem:[#allocation6 + $0x68] sm:$0xff]
    %v6240 = vld [vmem:[#allocation6 + $0x70] sm:$0xff]
    %v6241 = vld [vmem:[#allocation6 + $0x78] sm:$0xff]
    %v6242 = vld [vmem:[#allocation6 + $0x80] sm:$0xff]
    %v6243 = vld [vmem:[#allocation6 + $0x88] sm:$0xff]
    %v6244 = vld [vmem:[#allocation6 + $0x90] sm:$0xff]
    %v6245 = vld [vmem:[#allocation6 + $0x98] sm:$0xff]
    %v6246 = vld [vmem:[#allocation6 + $0xa0] sm:$0xff]
    %v6247 = vld [vmem:[#allocation6 + $0xa8] sm:$0xff]
    %v6248 = vld [vmem:[#allocation6 + $0xb0] sm:$0xff]
    %v6249 = vld [vmem:[#allocation6 + $0xb8] sm:$0xff]
    %v6250 = vld [vmem:[#allocation6 + $0xc0] sm:$0xff]
    %v6251 = vld [vmem:[#allocation6 + $0xc8] sm:$0xff]
    %v6252 = vld [vmem:[#allocation6 + $0xd0] sm:$0xff]
    %v6253 = vld [vmem:[#allocation6 + $0xd8] sm:$0xff]
    %v6254 = vld [vmem:[#allocation6 + $0xe0] sm:$0xff]
    %v6255 = vld [vmem:[#allocation6 + $0xe8] sm:$0xff]
    %v6256 = vld [vmem:[#allocation6 + $0xf0] sm:$0xff]
    %v6257 = vld [vmem:[#allocation6 + $0xf8] sm:$0xff]
    %v6258 = vld [vmem:[%s6] sm:$0xf]
    %v6260 = vlaneseq
    %v6261 = vshrl.u32 %v6260, 7
    %v6262 = vsub.s32 0, %v6261
    %v6263 = vrot.slane %v6258, %v6262
    %v6264 = vlaneseq
    %v6265 = vshrl.u32 %v6264, 7
    %v6266 = vsub.s32 1, %v6265
    %v6267 = vrot.slane %v6258, %v6266
    %v6268 = vlaneseq
    %v6269 = vshrl.u32 %v6268, 7
    %v6270 = vsub.s32 2, %v6269
    %v6271 = vrot.slane %v6258, %v6270
    %v6272 = vlaneseq
    %v6273 = vshrl.u32 %v6272, 7
    %v6274 = vsub.s32 3, %v6273
    %v6275 = vrot.slane %v6258, %v6274
    %v6312 = vunpack.c.l.b16 %v6226
    %v6313 = vunpack.c.h.b16 %v6226
    %v6314 = vunpack.c.l.b16 %v6227
    %v6315 = vunpack.c.h.b16 %v6227
    %v6316 = vunpack.c.l.b16 %v6228
    %v6317 = vunpack.c.h.b16 %v6228
    %v6318 = vunpack.c.l.b16 %v6229
    %v6319 = vunpack.c.h.b16 %v6229
    %v6320 = vunpack.c.l.b16 %v6230
    %v6321 = vunpack.c.h.b16 %v6230
    %v6322 = vunpack.c.l.b16 %v6231
    %v6323 = vunpack.c.h.b16 %v6231
    %v6324 = vunpack.c.l.b16 %v6232
    %v6325 = vunpack.c.h.b16 %v6232
    %v6326 = vunpack.c.l.b16 %v6233
    %v6327 = vunpack.c.h.b16 %v6233
    %v6328 = vunpack.c.l.b16 %v6234
    %v6329 = vunpack.c.h.b16 %v6234
    %v6330 = vunpack.c.l.b16 %v6235
    %v6331 = vunpack.c.h.b16 %v6235
    %v6332 = vunpack.c.l.b16 %v6236
    %v6333 = vunpack.c.h.b16 %v6236
    %v6334 = vunpack.c.l.b16 %v6237
    %v6335 = vunpack.c.h.b16 %v6237
    %v6336 = vunpack.c.l.b16 %v6238
    %v6337 = vunpack.c.h.b16 %v6238
    %v6338 = vunpack.c.l.b16 %v6239
    %v6339 = vunpack.c.h.b16 %v6239
    %v6340 = vunpack.c.l.b16 %v6240
    %v6341 = vunpack.c.h.b16 %v6240
    %v6342 = vunpack.c.l.b16 %v6241
    %v6343 = vunpack.c.h.b16 %v6241
    %v6344 = vunpack.c.l.b16 %v6242
    %v6345 = vunpack.c.h.b16 %v6242
    %v6346 = vunpack.c.l.b16 %v6243
    %v6347 = vunpack.c.h.b16 %v6243
    %v6348 = vunpack.c.l.b16 %v6244
    %v6349 = vunpack.c.h.b16 %v6244
    %v6350 = vunpack.c.l.b16 %v6245
    %v6351 = vunpack.c.h.b16 %v6245
    %v6352 = vunpack.c.l.b16 %v6246
    %v6353 = vunpack.c.h.b16 %v6246
    %v6354 = vunpack.c.l.b16 %v6247
    %v6355 = vunpack.c.h.b16 %v6247
    %v6356 = vunpack.c.l.b16 %v6248
    %v6357 = vunpack.c.h.b16 %v6248
    %v6358 = vunpack.c.l.b16 %v6249
    %v6359 = vunpack.c.h.b16 %v6249
    %v6360 = vunpack.c.l.b16 %v6250
    %v6361 = vunpack.c.h.b16 %v6250
    %v6362 = vunpack.c.l.b16 %v6251
    %v6363 = vunpack.c.h.b16 %v6251
    %v6364 = vunpack.c.l.b16 %v6252
    %v6365 = vunpack.c.h.b16 %v6252
    %v6366 = vunpack.c.l.b16 %v6253
    %v6367 = vunpack.c.h.b16 %v6253
    %v6368 = vunpack.c.l.b16 %v6254
    %v6369 = vunpack.c.h.b16 %v6254
    %v6370 = vunpack.c.l.b16 %v6255
    %v6371 = vunpack.c.h.b16 %v6255
    %v6372 = vunpack.c.l.b16 %v6256
    %v6373 = vunpack.c.h.b16 %v6256
    %v6374 = vunpack.c.l.b16 %v6257
    %v6375 = vunpack.c.h.b16 %v6257
    %v6376 = vpack.c.b16 %v6316, %v6312
    %v6377 = vpack.c.b16 %v6317, %v6313
    %v6378 = vpack.c.b16 %v6318, %v6314
    %v6379 = vpack.c.b16 %v6319, %v6315
    %v6380 = vpack.c.b16 %v6324, %v6320
    %v6381 = vpack.c.b16 %v6325, %v6321
    %v6382 = vpack.c.b16 %v6326, %v6322
    %v6383 = vpack.c.b16 %v6327, %v6323
    %v6384 = vpack.c.b16 %v6332, %v6328
    %v6385 = vpack.c.b16 %v6333, %v6329
    %v6386 = vpack.c.b16 %v6334, %v6330
    %v6387 = vpack.c.b16 %v6335, %v6331
    %v6388 = vpack.c.b16 %v6340, %v6336
    %v6389 = vpack.c.b16 %v6341, %v6337
    %v6390 = vpack.c.b16 %v6342, %v6338
    %v6391 = vpack.c.b16 %v6343, %v6339
    %v6392 = vpack.c.b16 %v6348, %v6344
    %v6393 = vpack.c.b16 %v6349, %v6345
    %v6394 = vpack.c.b16 %v6350, %v6346
    %v6395 = vpack.c.b16 %v6351, %v6347
    %v6396 = vpack.c.b16 %v6356, %v6352
    %v6397 = vpack.c.b16 %v6357, %v6353
    %v6398 = vpack.c.b16 %v6358, %v6354
    %v6399 = vpack.c.b16 %v6359, %v6355
    %v6400 = vpack.c.b16 %v6364, %v6360
    %v6401 = vpack.c.b16 %v6365, %v6361
    %v6402 = vpack.c.b16 %v6366, %v6362
    %v6403 = vpack.c.b16 %v6367, %v6363
    %v6404 = vpack.c.b16 %v6372, %v6368
    %v6405 = vpack.c.b16 %v6373, %v6369
    %v6406 = vpack.c.b16 %v6374, %v6370
    %v6407 = vpack.c.b16 %v6375, %v6371
    %6440 = vmatprep.subr.bf16.mxu0 %v6377
    %6441 = vmatpush1.bf16.msra.mxu0 %v6376
    %6442 = vmatprep.subr.bf16.mxu0 %v6381
    %6443 = vmatpush1.bf16.msra.mxu0 %v6380
    %6444 = vmatprep.subr.bf16.mxu0 %v6385
    %6445 = vmatpush1.bf16.msra.mxu0 %v6384
    %6446 = vmatprep.subr.bf16.mxu0 %v6389
    %6447 = vmatpush1.bf16.msra.mxu0 %v6388
    %6448 = vmatprep.subr.bf16.mxu0 %v6393
    %6449 = vmatpush1.bf16.msra.mxu0 %v6392
    %6450 = vmatprep.subr.bf16.mxu0 %v6397
    %6451 = vmatpush1.bf16.msra.mxu0 %v6396
    %6452 = vmatprep.subr.bf16.mxu0 %v6401
    %6453 = vmatpush1.bf16.msra.mxu0 %v6400
    %6454 = vmatprep.subr.bf16.mxu0 %v6405
    %6455 = vmatpush1.bf16.msra.mxu0 %v6404
    %6456 = vmatprep.subr.bf16.mxu0 0
    %6457 = vmatpush1.bf16.msra.mxu0 0
    %6458 = vmatprep.subr.bf16.mxu0 0
    %6459 = vmatpush1.bf16.msra.mxu0 0
    %6460 = vmatprep.subr.bf16.mxu0 0
    %6461 = vmatpush1.bf16.msra.mxu0 0
    %6462 = vmatprep.subr.bf16.mxu0 0
    %6463 = vmatpush1.bf16.msra.mxu0 0
    %6464 = vmatprep.subr.bf16.mxu0 0
    %6465 = vmatpush1.bf16.msra.mxu0 0
    %6466 = vmatprep.subr.bf16.mxu0 0
    %6467 = vmatpush1.bf16.msra.mxu0 0
    %6468 = vmatprep.subr.bf16.mxu0 0
    %6469 = vmatpush1.bf16.msra.mxu0 0
    %6470 = vmatprep.subr.bf16.mxu0 0
    %6471 = vmatpush1.bf16.msra.mxu0 0
    %6472 = vmatprep.mubr.bf16.mxu0 0
    %6473 = vmatmul.mubr.bf16.gmra.mrb[0].mxu0 %v5923
    %v6474 = vpop.f32.mrb[0].mxu0
    %v6475 = vadd.f32 %v6263, %v6474
    %v6476 = vpop.f32.mrb[0].mxu0
    %v6477 = vadd.f32 %v6267, %v6476
    %v6478 = vpop.f32.mrb[0].mxu0
    %v6479 = vpop.f32.mrb[0].mxu0
    %6480 = vdwg.mxu0
    %6481 = vmatprep.subr.bf16.mxu0 %v6379
    %6482 = vmatpush1.bf16.msra.mxu0 %v6378
    %6483 = vmatprep.subr.bf16.mxu0 %v6383
    %6484 = vmatpush1.bf16.msra.mxu0 %v6382
    %6485 = vmatprep.subr.bf16.mxu0 %v6387
    %6486 = vmatpush1.bf16.msra.mxu0 %v6386
    %6487 = vmatprep.subr.bf16.mxu0 %v6391
    %6488 = vmatpush1.bf16.msra.mxu0 %v6390
    %6489 = vmatprep.subr.bf16.mxu0 %v6395
    %6490 = vmatpush1.bf16.msra.mxu0 %v6394
    %6491 = vmatprep.subr.bf16.mxu0 %v6399
    %6492 = vmatpush1.bf16.msra.mxu0 %v6398
    %6493 = vmatprep.subr.bf16.mxu0 %v6403
    %6494 = vmatpush1.bf16.msra.mxu0 %v6402
    %6495 = vmatprep.subr.bf16.mxu0 %v6407
    %6496 = vmatpush1.bf16.msra.mxu0 %v6406
    %6497 = vmatprep.subr.bf16.mxu0 0
    %6498 = vmatpush1.bf16.msra.mxu0 0
    %6499 = vmatprep.subr.bf16.mxu0 0
    %6500 = vmatpush1.bf16.msra.mxu0 0
    %6501 = vmatprep.subr.bf16.mxu0 0
    %6502 = vmatpush1.bf16.msra.mxu0 0
    %6503 = vmatprep.subr.bf16.mxu0 0
    %6504 = vmatpush1.bf16.msra.mxu0 0
    %6505 = vmatprep.subr.bf16.mxu0 0
    %6506 = vmatpush1.bf16.msra.mxu0 0
    %6507 = vmatprep.subr.bf16.mxu0 0
    %6508 = vmatpush1.bf16.msra.mxu0 0
    %6509 = vmatprep.subr.bf16.mxu0 0
    %6510 = vmatpush1.bf16.msra.mxu0 0
    %6511 = vmatprep.subr.bf16.mxu0 0
    %6512 = vmatpush1.bf16.msra.mxu0 0
    %6513 = vmatprep.mubr.bf16.mxu0 0
    %6514 = vmatmul.mubr.bf16.gmra.mrb[0].mxu0 %v5923
    %v6515 = vpop.f32.mrb[0].mxu0
    %v6516 = vadd.f32 %v6271, %v6515
    %v6517 = vpop.f32.mrb[0].mxu0
    %v6518 = vadd.f32 %v6275, %v6517
    %v6519 = vpop.f32.mrb[0].mxu0
    %v6520 = vpop.f32.mrb[0].mxu0
    %6521 = vdwg.mxu0
    %v6522 = vpack.c.bf16 %v5917, %v5917
    %v6523 = vld [vmem:[#allocation8] sm:$0xff]
    %v6524 = vld [vmem:[#allocation8 + $0x8] sm:$0xff]
    %v6525 = vld [vmem:[#allocation8 + $0x10] sm:$0xff]
    %v6526 = vld [vmem:[#allocation8 + $0x18] sm:$0xff]
    %v6527 = vld [vmem:[#allocation8 + $0x20] sm:$0xff]
    %v6528 = vld [vmem:[#allocation8 + $0x28] sm:$0xff]
    %v6529 = vld [vmem:[#allocation8 + $0x30] sm:$0xff]
    %v6530 = vld [vmem:[#allocation8 + $0x38] sm:$0xff]
    %v6531 = vld [vmem:[#allocation8 + $0x40] sm:$0xff]
    %v6532 = vld [vmem:[#allocation8 + $0x48] sm:$0xff]
    %v6533 = vld [vmem:[#allocation8 + $0x50] sm:$0xff]
    %v6534 = vld [vmem:[#allocation8 + $0x58] sm:$0xff]
    %v6535 = vld [vmem:[#allocation8 + $0x60] sm:$0xff]
    %v6536 = vld [vmem:[#allocation8 + $0x68] sm:$0xff]
    %v6537 = vld [vmem:[#allocation8 + $0x70] sm:$0xff]
    %v6538 = vld [vmem:[#allocation8 + $0x78] sm:$0xff]
    %v6539 = vld [vmem:[#allocation8 + $0x80] sm:$0xff]
    %v6540 = vld [vmem:[#allocation8 + $0x88] sm:$0xff]
    %v6541 = vld [vmem:[#allocation8 + $0x90] sm:$0xff]
    %v6542 = vld [vmem:[#allocation8 + $0x98] sm:$0xff]
    %v6543 = vld [vmem:[#allocation8 + $0xa0] sm:$0xff]
    %v6544 = vld [vmem:[#allocation8 + $0xa8] sm:$0xff]
    %v6545 = vld [vmem:[#allocation8 + $0xb0] sm:$0xff]
    %v6546 = vld [vmem:[#allocation8 + $0xb8] sm:$0xff]
    %v6547 = vld [vmem:[#allocation8 + $0xc0] sm:$0xff]
    %v6548 = vld [vmem:[#allocation8 + $0xc8] sm:$0xff]
    %v6549 = vld [vmem:[#allocation8 + $0xd0] sm:$0xff]
    %v6550 = vld [vmem:[#allocation8 + $0xd8] sm:$0xff]
    %v6551 = vld [vmem:[#allocation8 + $0xe0] sm:$0xff]
    %v6552 = vld [vmem:[#allocation8 + $0xe8] sm:$0xff]
    %v6553 = vld [vmem:[#allocation8 + $0xf0] sm:$0xff]
    %v6554 = vld [vmem:[#allocation8 + $0xf8] sm:$0xff]
    %v6587 = vunpack.c.l.b16 %v6523
    %v6588 = vunpack.c.h.b16 %v6523
    %v6589 = vunpack.c.l.b16 %v6524
    %v6590 = vunpack.c.h.b16 %v6524
    %v6591 = vunpack.c.l.b16 %v6525
    %v6592 = vunpack.c.h.b16 %v6525
    %v6593 = vunpack.c.l.b16 %v6526
    %v6594 = vunpack.c.h.b16 %v6526
    %v6595 = vunpack.c.l.b16 %v6527
    %v6596 = vunpack.c.h.b16 %v6527
    %v6597 = vunpack.c.l.b16 %v6528
    %v6598 = vunpack.c.h.b16 %v6528
    %v6599 = vunpack.c.l.b16 %v6529
    %v6600 = vunpack.c.h.b16 %v6529
    %v6601 = vunpack.c.l.b16 %v6530
    %v6602 = vunpack.c.h.b16 %v6530
    %v6603 = vunpack.c.l.b16 %v6531
    %v6604 = vunpack.c.h.b16 %v6531
    %v6605 = vunpack.c.l.b16 %v6532
    %v6606 = vunpack.c.h.b16 %v6532
    %v6607 = vunpack.c.l.b16 %v6533
    %v6608 = vunpack.c.h.b16 %v6533
    %v6609 = vunpack.c.l.b16 %v6534
    %v6610 = vunpack.c.h.b16 %v6534
    %v6611 = vunpack.c.l.b16 %v6535
    %v6612 = vunpack.c.h.b16 %v6535
    %v6613 = vunpack.c.l.b16 %v6536
    %v6614 = vunpack.c.h.b16 %v6536
    %v6615 = vunpack.c.l.b16 %v6537
    %v6616 = vunpack.c.h.b16 %v6537
    %v6617 = vunpack.c.l.b16 %v6538
    %v6618 = vunpack.c.h.b16 %v6538
    %v6619 = vunpack.c.l.b16 %v6539
    %v6620 = vunpack.c.h.b16 %v6539
    %v6621 = vunpack.c.l.b16 %v6540
    %v6622 = vunpack.c.h.b16 %v6540
    %v6623 = vunpack.c.l.b16 %v6541
    %v6624 = vunpack.c.h.b16 %v6541
    %v6625 = vunpack.c.l.b16 %v6542
    %v6626 = vunpack.c.h.b16 %v6542
    %v6627 = vunpack.c.l.b16 %v6543
    %v6628 = vunpack.c.h.b16 %v6543
    %v6629 = vunpack.c.l.b16 %v6544
    %v6630 = vunpack.c.h.b16 %v6544
    %v6631 = vunpack.c.l.b16 %v6545
    %v6632 = vunpack.c.h.b16 %v6545
    %v6633 = vunpack.c.l.b16 %v6546
    %v6634 = vunpack.c.h.b16 %v6546
    %v6635 = vunpack.c.l.b16 %v6547
    %v6636 = vunpack.c.h.b16 %v6547
    %v6637 = vunpack.c.l.b16 %v6548
    %v6638 = vunpack.c.h.b16 %v6548
    %v6639 = vunpack.c.l.b16 %v6549
    %v6640 = vunpack.c.h.b16 %v6549
    %v6641 = vunpack.c.l.b16 %v6550
    %v6642 = vunpack.c.h.b16 %v6550
    %v6643 = vunpack.c.l.b16 %v6551
    %v6644 = vunpack.c.h.b16 %v6551
    %v6645 = vunpack.c.l.b16 %v6552
    %v6646 = vunpack.c.h.b16 %v6552
    %v6647 = vunpack.c.l.b16 %v6553
    %v6648 = vunpack.c.h.b16 %v6553
    %v6649 = vunpack.c.l.b16 %v6554
    %v6650 = vunpack.c.h.b16 %v6554
    %v6651 = vpack.c.b16 %v6591, %v6587
    %v6652 = vpack.c.b16 %v6592, %v6588
    %v6653 = vpack.c.b16 %v6593, %v6589
    %v6654 = vpack.c.b16 %v6594, %v6590
    %v6655 = vpack.c.b16 %v6599, %v6595
    %v6656 = vpack.c.b16 %v6600, %v6596
    %v6657 = vpack.c.b16 %v6601, %v6597
    %v6658 = vpack.c.b16 %v6602, %v6598
    %v6659 = vpack.c.b16 %v6607, %v6603
    %v6660 = vpack.c.b16 %v6608, %v6604
    %v6661 = vpack.c.b16 %v6609, %v6605
    %v6662 = vpack.c.b16 %v6610, %v6606
    %v6663 = vpack.c.b16 %v6615, %v6611
    %v6664 = vpack.c.b16 %v6616, %v6612
    %v6665 = vpack.c.b16 %v6617, %v6613
    %v6666 = vpack.c.b16 %v6618, %v6614
    %v6667 = vpack.c.b16 %v6623, %v6619
    %v6668 = vpack.c.b16 %v6624, %v6620
    %v6669 = vpack.c.b16 %v6625, %v6621
    %v6670 = vpack.c.b16 %v6626, %v6622
    %v6671 = vpack.c.b16 %v6631, %v6627
    %v6672 = vpack.c.b16 %v6632, %v6628
    %v6673 = vpack.c.b16 %v6633, %v6629
    %v6674 = vpack.c.b16 %v6634, %v6630
    %v6675 = vpack.c.b16 %v6639, %v6635
    %v6676 = vpack.c.b16 %v6640, %v6636
    %v6677 = vpack.c.b16 %v6641, %v6637
    %v6678 = vpack.c.b16 %v6642, %v6638
    %v6679 = vpack.c.b16 %v6647, %v6643
    %v6680 = vpack.c.b16 %v6648, %v6644
    %v6681 = vpack.c.b16 %v6649, %v6645
    %v6682 = vpack.c.b16 %v6650, %v6646
    %6715 = vmatprep.subr.bf16.mxu0 %v6652
    %6716 = vmatpush1.bf16.msra.mxu0 %v6651
    %6717 = vmatprep.subr.bf16.mxu0 %v6656
    %6718 = vmatpush1.bf16.msra.mxu0 %v6655
    %6719 = vmatprep.subr.bf16.mxu0 %v6660
    %6720 = vmatpush1.bf16.msra.mxu0 %v6659
    %6721 = vmatprep.subr.bf16.mxu0 %v6664
    %6722 = vmatpush1.bf16.msra.mxu0 %v6663
    %6723 = vmatprep.subr.bf16.mxu0 %v6668
    %6724 = vmatpush1.bf16.msra.mxu0 %v6667
    %6725 = vmatprep.subr.bf16.mxu0 %v6672
    %6726 = vmatpush1.bf16.msra.mxu0 %v6671
    %6727 = vmatprep.subr.bf16.mxu0 %v6676
    %6728 = vmatpush1.bf16.msra.mxu0 %v6675
    %6729 = vmatprep.subr.bf16.mxu0 %v6680
    %6730 = vmatpush1.bf16.msra.mxu0 %v6679
    %6731 = vmatprep.subr.bf16.mxu0 0
    %6732 = vmatpush1.bf16.msra.mxu0 0
    %6733 = vmatprep.subr.bf16.mxu0 0
    %6734 = vmatpush1.bf16.msra.mxu0 0
    %6735 = vmatprep.subr.bf16.mxu0 0
    %6736 = vmatpush1.bf16.msra.mxu0 0
    %6737 = vmatprep.subr.bf16.mxu0 0
    %6738 = vmatpush1.bf16.msra.mxu0 0
    %6739 = vmatprep.subr.bf16.mxu0 0
    %6740 = vmatpush1.bf16.msra.mxu0 0
    %6741 = vmatprep.subr.bf16.mxu0 0
    %6742 = vmatpush1.bf16.msra.mxu0 0
    %6743 = vmatprep.subr.bf16.mxu0 0
    %6744 = vmatpush1.bf16.msra.mxu0 0
    %6745 = vmatprep.subr.bf16.mxu0 0
    %6746 = vmatpush1.bf16.msra.mxu0 0
    %6747 = vmatprep.mubr.bf16.mxu0 0
    %6748 = vmatmul.mubr.bf16.gmra.mrb[0].mxu0 %v6522
    %v6749 = vpop.f32.mrb[0].mxu0
    %v6750 = vadd.f32 0.0, %v6749
    %v6751 = vpop.f32.mrb[0].mxu0
    %v6752 = vadd.f32 0.0, %v6751
    %v6753 = vpop.f32.mrb[0].mxu0
    %v6754 = vpop.f32.mrb[0].mxu0
    %6755 = vdwg.mxu0
    %6756 = vmatprep.subr.bf16.mxu0 %v6654
    %6757 = vmatpush1.bf16.msra.mxu0 %v6653
    %6758 = vmatprep.subr.bf16.mxu0 %v6658
    %6759 = vmatpush1.bf16.msra.mxu0 %v6657
    %6760 = vmatprep.subr.bf16.mxu0 %v6662
    %6761 = vmatpush1.bf16.msra.mxu0 %v6661
    %6762 = vmatprep.subr.bf16.mxu0 %v6666
    %6763 = vmatpush1.bf16.msra.mxu0 %v6665
    %6764 = vmatprep.subr.bf16.mxu0 %v6670
    %6765 = vmatpush1.bf16.msra.mxu0 %v6669
    %6766 = vmatprep.subr.bf16.mxu0 %v6674
    %6767 = vmatpush1.bf16.msra.mxu0 %v6673
    %6768 = vmatprep.subr.bf16.mxu0 %v6678
    %6769 = vmatpush1.bf16.msra.mxu0 %v6677
    %6770 = vmatprep.subr.bf16.mxu0 %v6682
    %6771 = vmatpush1.bf16.msra.mxu0 %v6681
    %6772 = vmatprep.subr.bf16.mxu0 0
    %6773 = vmatpush1.bf16.msra.mxu0 0
    %6774 = vmatprep.subr.bf16.mxu0 0
    %6775 = vmatpush1.bf16.msra.mxu0 0
    %6776 = vmatprep.subr.bf16.mxu0 0
    %6777 = vmatpush1.bf16.msra.mxu0 0
    %6778 = vmatprep.subr.bf16.mxu0 0
    %6779 = vmatpush1.bf16.msra.mxu0 0
    %6780 = vmatprep.subr.bf16.mxu0 0
    %6781 = vmatpush1.bf16.msra.mxu0 0
    %6782 = vmatprep.subr.bf16.mxu0 0
    %6783 = vmatpush1.bf16.msra.mxu0 0
    %6784 = vmatprep.subr.bf16.mxu0 0
    %6785 = vmatpush1.bf16.msra.mxu0 0
    %6786 = vmatprep.subr.bf16.mxu0 0
    %6787 = vmatpush1.bf16.msra.mxu0 0
    %6788 = vmatprep.mubr.bf16.mxu0 0
    %6789 = vmatmul.mubr.bf16.gmra.mrb[0].mxu0 %v6522
    %v6790 = vpop.f32.mrb[0].mxu0
    %v6791 = vadd.f32 0.0, %v6790
    %v6792 = vpop.f32.mrb[0].mxu0
    %v6793 = vadd.f32 0.0, %v6792
    %v6794 = vpop.f32.mrb[0].mxu0
    %v6795 = vpop.f32.mrb[0].mxu0
    %6796 = vdwg.mxu0
    %v6797 = vadd.f32 %v6475, %v6750
    %v6798 = vadd.f32 %v6477, %v6752
    %v6799 = vadd.f32 %v6516, %v6791
    %v6800 = vadd.f32 %v6518, %v6793
    %v6801 = vxor.u32 %v6797, 2147483648
    %v6802 = vmul.f32 %v6801, 1.442695
    %v6803 = vpow.pop %v6802
    %v6804 = vadd.f32 %v6803, 1.0
    %v6805 = vrcp.pop %v6804
    %v6806 = vmul.f32 1.0, %v6805
    %v6807 = vxor.u32 %v6798, 2147483648
    %v6808 = vmul.f32 %v6807, 1.442695
    %v6809 = vpow.pop %v6808
    %v6810 = vadd.f32 %v6809, 1.0
    %v6811 = vrcp.pop %v6810
    %v6812 = vmul.f32 1.0, %v6811
    %v6813 = vtanh.pop %v6799
    %v6814 = vxor.u32 %v6800, 2147483648
    %v6815 = vmul.f32 %v6814, 1.442695
    %v6816 = vpow.pop %v6815
    %v6817 = vadd.f32 %v6816, 1.0
    %v6818 = vrcp.pop %v6817
    %v6819 = vmul.f32 1.0, %v6818
    %v6820 = vmul.f32 %v6812, %v5915
    %v6821 = vmul.f32 %v6806, %v6813
    %v6822 = vadd.f32 %v6820, %v6821
    %v6823 = vtanh.pop %v6822
    %v6824 = vmul.f32 %v6819, %v6823
    %6825 = vst [vmem:[#allocation3 + $0x30] sm:$0xff] %v6824
    %v6826 = vpack.c.bf16 %v6225, %v6225
    %v6827 = vld [vmem:[#allocation6] sm:$0xff]
    %v6828 = vld [vmem:[#allocation6 + $0x8] sm:$0xff]
    %v6829 = vld [vmem:[#allocation6 + $0x10] sm:$0xff]
    %v6830 = vld [vmem:[#allocation6 + $0x18] sm:$0xff]
    %v6831 = vld [vmem:[#allocation6 + $0x20] sm:$0xff]
    %v6832 = vld [vmem:[#allocation6 + $0x28] sm:$0xff]
    %v6833 = vld [vmem:[#allocation6 + $0x30] sm:$0xff]
    %v6834 = vld [vmem:[#allocation6 + $0x38] sm:$0xff]
    %v6835 = vld [vmem:[#allocation6 + $0x40] sm:$0xff]
    %v6836 = vld [vmem:[#allocation6 + $0x48] sm:$0xff]
    %v6837 = vld [vmem:[#allocation6 + $0x50] sm:$0xff]
    %v6838 = vld [vmem:[#allocation6 + $0x58] sm:$0xff]
    %v6839 = vld [vmem:[#allocation6 + $0x60] sm:$0xff]
    %v6840 = vld [vmem:[#allocation6 + $0x68] sm:$0xff]
    %v6841 = vld [vmem:[#allocation6 + $0x70] sm:$0xff]
    %v6842 = vld [vmem:[#allocation6 + $0x78] sm:$0xff]
    %v6843 = vld [vmem:[#allocation6 + $0x80] sm:$0xff]
    %v6844 = vld [vmem:[#allocation6 + $0x88] sm:$0xff]
    %v6845 = vld [vmem:[#allocation6 + $0x90] sm:$0xff]
    %v6846 = vld [vmem:[#allocation6 + $0x98] sm:$0xff]
    %v6847 = vld [vmem:[#allocation6 + $0xa0] sm:$0xff]
    %v6848 = vld [vmem:[#allocation6 + $0xa8] sm:$0xff]
    %v6849 = vld [vmem:[#allocation6 + $0xb0] sm:$0xff]
    %v6850 = vld [vmem:[#allocation6 + $0xb8] sm:$0xff]
    %v6851 = vld [vmem:[#allocation6 + $0xc0] sm:$0xff]
    %v6852 = vld [vmem:[#allocation6 + $0xc8] sm:$0xff]
    %v6853 = vld [vmem:[#allocation6 + $0xd0] sm:$0xff]
    %v6854 = vld [vmem:[#allocation6 + $0xd8] sm:$0xff]
    %v6855 = vld [vmem:[#allocation6 + $0xe0] sm:$0xff]
    %v6856 = vld [vmem:[#allocation6 + $0xe8] sm:$0xff]
    %v6857 = vld [vmem:[#allocation6 + $0xf0] sm:$0xff]
    %v6858 = vld [vmem:[#allocation6 + $0xf8] sm:$0xff]
    %v6859 = vld [vmem:[%s6] sm:$0xf]
    %v6861 = vlaneseq
    %v6862 = vshrl.u32 %v6861, 7
    %v6863 = vsub.s32 0, %v6862
    %v6864 = vrot.slane %v6859, %v6863
    %v6865 = vlaneseq
    %v6866 = vshrl.u32 %v6865, 7
    %v6867 = vsub.s32 1, %v6866
    %v6868 = vrot.slane %v6859, %v6867
    %v6869 = vlaneseq
    %v6870 = vshrl.u32 %v6869, 7
    %v6871 = vsub.s32 2, %v6870
    %v6872 = vrot.slane %v6859, %v6871
    %v6873 = vlaneseq
    %v6874 = vshrl.u32 %v6873, 7
    %v6875 = vsub.s32 3, %v6874
    %v6876 = vrot.slane %v6859, %v6875
    %v6913 = vunpack.c.l.b16 %v6827
    %v6914 = vunpack.c.h.b16 %v6827
    %v6915 = vunpack.c.l.b16 %v6828
    %v6916 = vunpack.c.h.b16 %v6828
    %v6917 = vunpack.c.l.b16 %v6829
    %v6918 = vunpack.c.h.b16 %v6829
    %v6919 = vunpack.c.l.b16 %v6830
    %v6920 = vunpack.c.h.b16 %v6830
    %v6921 = vunpack.c.l.b16 %v6831
    %v6922 = vunpack.c.h.b16 %v6831
    %v6923 = vunpack.c.l.b16 %v6832
    %v6924 = vunpack.c.h.b16 %v6832
    %v6925 = vunpack.c.l.b16 %v6833
    %v6926 = vunpack.c.h.b16 %v6833
    %v6927 = vunpack.c.l.b16 %v6834
    %v6928 = vunpack.c.h.b16 %v6834
    %v6929 = vunpack.c.l.b16 %v6835
    %v6930 = vunpack.c.h.b16 %v6835
    %v6931 = vunpack.c.l.b16 %v6836
    %v6932 = vunpack.c.h.b16 %v6836
    %v6933 = vunpack.c.l.b16 %v6837
    %v6934 = vunpack.c.h.b16 %v6837
    %v6935 = vunpack.c.l.b16 %v6838
    %v6936 = vunpack.c.h.b16 %v6838
    %v6937 = vunpack.c.l.b16 %v6839
    %v6938 = vunpack.c.h.b16 %v6839
    %v6939 = vunpack.c.l.b16 %v6840
    %v6940 = vunpack.c.h.b16 %v6840
    %v6941 = vunpack.c.l.b16 %v6841
    %v6942 = vunpack.c.h.b16 %v6841
    %v6943 = vunpack.c.l.b16 %v6842
    %v6944 = vunpack.c.h.b16 %v6842
    %v6945 = vunpack.c.l.b16 %v6843
    %v6946 = vunpack.c.h.b16 %v6843
    %v6947 = vunpack.c.l.b16 %v6844
    %v6948 = vunpack.c.h.b16 %v6844
    %v6949 = vunpack.c.l.b16 %v6845
    %v6950 = vunpack.c.h.b16 %v6845
    %v6951 = vunpack.c.l.b16 %v6846
    %v6952 = vunpack.c.h.b16 %v6846
    %v6953 = vunpack.c.l.b16 %v6847
    %v6954 = vunpack.c.h.b16 %v6847
    %v6955 = vunpack.c.l.b16 %v6848
    %v6956 = vunpack.c.h.b16 %v6848
    %v6957 = vunpack.c.l.b16 %v6849
    %v6958 = vunpack.c.h.b16 %v6849
    %v6959 = vunpack.c.l.b16 %v6850
    %v6960 = vunpack.c.h.b16 %v6850
    %v6961 = vunpack.c.l.b16 %v6851
    %v6962 = vunpack.c.h.b16 %v6851
    %v6963 = vunpack.c.l.b16 %v6852
    %v6964 = vunpack.c.h.b16 %v6852
    %v6965 = vunpack.c.l.b16 %v6853
    %v6966 = vunpack.c.h.b16 %v6853
    %v6967 = vunpack.c.l.b16 %v6854
    %v6968 = vunpack.c.h.b16 %v6854
    %v6969 = vunpack.c.l.b16 %v6855
    %v6970 = vunpack.c.h.b16 %v6855
    %v6971 = vunpack.c.l.b16 %v6856
    %v6972 = vunpack.c.h.b16 %v6856
    %v6973 = vunpack.c.l.b16 %v6857
    %v6974 = vunpack.c.h.b16 %v6857
    %v6975 = vunpack.c.l.b16 %v6858
    %v6976 = vunpack.c.h.b16 %v6858
    %v6977 = vpack.c.b16 %v6917, %v6913
    %v6978 = vpack.c.b16 %v6918, %v6914
    %v6979 = vpack.c.b16 %v6919, %v6915
    %v6980 = vpack.c.b16 %v6920, %v6916
    %v6981 = vpack.c.b16 %v6925, %v6921
    %v6982 = vpack.c.b16 %v6926, %v6922
    %v6983 = vpack.c.b16 %v6927, %v6923
    %v6984 = vpack.c.b16 %v6928, %v6924
    %v6985 = vpack.c.b16 %v6933, %v6929
    %v6986 = vpack.c.b16 %v6934, %v6930
    %v6987 = vpack.c.b16 %v6935, %v6931
    %v6988 = vpack.c.b16 %v6936, %v6932
    %v6989 = vpack.c.b16 %v6941, %v6937
    %v6990 = vpack.c.b16 %v6942, %v6938
    %v6991 = vpack.c.b16 %v6943, %v6939
    %v6992 = vpack.c.b16 %v6944, %v6940
    %v6993 = vpack.c.b16 %v6949, %v6945
    %v6994 = vpack.c.b16 %v6950, %v6946
    %v6995 = vpack.c.b16 %v6951, %v6947
    %v6996 = vpack.c.b16 %v6952, %v6948
    %v6997 = vpack.c.b16 %v6957, %v6953
    %v6998 = vpack.c.b16 %v6958, %v6954
    %v6999 = vpack.c.b16 %v6959, %v6955
    %v7000 = vpack.c.b16 %v6960, %v6956
    %v7001 = vpack.c.b16 %v6965, %v6961
    %v7002 = vpack.c.b16 %v6966, %v6962
    %v7003 = vpack.c.b16 %v6967, %v6963
    %v7004 = vpack.c.b16 %v6968, %v6964
    %v7005 = vpack.c.b16 %v6973, %v6969
    %v7006 = vpack.c.b16 %v6974, %v6970
    %v7007 = vpack.c.b16 %v6975, %v6971
    %v7008 = vpack.c.b16 %v6976, %v6972
    %7041 = vmatprep.subr.bf16.mxu0 %v6978
    %7042 = vmatpush1.bf16.msra.mxu0 %v6977
    %7043 = vmatprep.subr.bf16.mxu0 %v6982
    %7044 = vmatpush1.bf16.msra.mxu0 %v6981
    %7045 = vmatprep.subr.bf16.mxu0 %v6986
    %7046 = vmatpush1.bf16.msra.mxu0 %v6985
    %7047 = vmatprep.subr.bf16.mxu0 %v6990
    %7048 = vmatpush1.bf16.msra.mxu0 %v6989
    %7049 = vmatprep.subr.bf16.mxu0 %v6994
    %7050 = vmatpush1.bf16.msra.mxu0 %v6993
    %7051 = vmatprep.subr.bf16.mxu0 %v6998
    %7052 = vmatpush1.bf16.msra.mxu0 %v6997
    %7053 = vmatprep.subr.bf16.mxu0 %v7002
    %7054 = vmatpush1.bf16.msra.mxu0 %v7001
    %7055 = vmatprep.subr.bf16.mxu0 %v7006
    %7056 = vmatpush1.bf16.msra.mxu0 %v7005
    %7057 = vmatprep.subr.bf16.mxu0 0
    %7058 = vmatpush1.bf16.msra.mxu0 0
    %7059 = vmatprep.subr.bf16.mxu0 0
    %7060 = vmatpush1.bf16.msra.mxu0 0
    %7061 = vmatprep.subr.bf16.mxu0 0
    %7062 = vmatpush1.bf16.msra.mxu0 0
    %7063 = vmatprep.subr.bf16.mxu0 0
    %7064 = vmatpush1.bf16.msra.mxu0 0
    %7065 = vmatprep.subr.bf16.mxu0 0
    %7066 = vmatpush1.bf16.msra.mxu0 0
    %7067 = vmatprep.subr.bf16.mxu0 0
    %7068 = vmatpush1.bf16.msra.mxu0 0
    %7069 = vmatprep.subr.bf16.mxu0 0
    %7070 = vmatpush1.bf16.msra.mxu0 0
    %7071 = vmatprep.subr.bf16.mxu0 0
    %7072 = vmatpush1.bf16.msra.mxu0 0
    %7073 = vmatprep.mubr.bf16.mxu0 0
    %7074 = vmatmul.mubr.bf16.gmra.mrb[0].mxu0 %v6826
    %v7075 = vpop.f32.mrb[0].mxu0
    %v7076 = vadd.f32 %v6864, %v7075
    %v7077 = vpop.f32.mrb[0].mxu0
    %v7078 = vadd.f32 %v6868, %v7077
    %v7079 = vpop.f32.mrb[0].mxu0
    %v7080 = vpop.f32.mrb[0].mxu0
    %7081 = vdwg.mxu0
    %7082 = vmatprep.subr.bf16.mxu0 %v6980
    %7083 = vmatpush1.bf16.msra.mxu0 %v6979
    %7084 = vmatprep.subr.bf16.mxu0 %v6984
    %7085 = vmatpush1.bf16.msra.mxu0 %v6983
    %7086 = vmatprep.subr.bf16.mxu0 %v6988
    %7087 = vmatpush1.bf16.msra.mxu0 %v6987
    %7088 = vmatprep.subr.bf16.mxu0 %v6992
    %7089 = vmatpush1.bf16.msra.mxu0 %v6991
    %7090 = vmatprep.subr.bf16.mxu0 %v6996
    %7091 = vmatpush1.bf16.msra.mxu0 %v6995
    %7092 = vmatprep.subr.bf16.mxu0 %v7000
    %7093 = vmatpush1.bf16.msra.mxu0 %v6999
    %7094 = vmatprep.subr.bf16.mxu0 %v7004
    %7095 = vmatpush1.bf16.msra.mxu0 %v7003
    %7096 = vmatprep.subr.bf16.mxu0 %v7008
    %7097 = vmatpush1.bf16.msra.mxu0 %v7007
    %7098 = vmatprep.subr.bf16.mxu0 0
    %7099 = vmatpush1.bf16.msra.mxu0 0
    %7100 = vmatprep.subr.bf16.mxu0 0
    %7101 = vmatpush1.bf16.msra.mxu0 0
    %7102 = vmatprep.subr.bf16.mxu0 0
    %7103 = vmatpush1.bf16.msra.mxu0 0
    %7104 = vmatprep.subr.bf16.mxu0 0
    %7105 = vmatpush1.bf16.msra.mxu0 0
    %7106 = vmatprep.subr.bf16.mxu0 0
    %7107 = vmatpush1.bf16.msra.mxu0 0
    %7108 = vmatprep.subr.bf16.mxu0 0
    %7109 = vmatpush1.bf16.msra.mxu0 0
    %7110 = vmatprep.subr.bf16.mxu0 0
    %7111 = vmatpush1.bf16.msra.mxu0 0
    %7112 = vmatprep.subr.bf16.mxu0 0
    %7113 = vmatpush1.bf16.msra.mxu0 0
    %7114 = vmatprep.mubr.bf16.mxu0 0
    %7115 = vmatmul.mubr.bf16.gmra.mrb[0].mxu0 %v6826
    %v7116 = vpop.f32.mrb[0].mxu0
    %v7117 = vadd.f32 %v6872, %v7116
    %v7118 = vpop.f32.mrb[0].mxu0
    %v7119 = vadd.f32 %v6876, %v7118
    %v7120 = vpop.f32.mrb[0].mxu0
    %v7121 = vpop.f32.mrb[0].mxu0
    %7122 = vdwg.mxu0
    %v7123 = vpack.c.bf16 %v6824, %v6824
    %v7124 = vld [vmem:[#allocation8] sm:$0xff]
    %v7125 = vld [vmem:[#allocation8 + $0x8] sm:$0xff]
    %v7126 = vld [vmem:[#allocation8 + $0x10] sm:$0xff]
    %v7127 = vld [vmem:[#allocation8 + $0x18] sm:$0xff]
    %v7128 = vld [vmem:[#allocation8 + $0x20] sm:$0xff]
    %v7129 = vld [vmem:[#allocation8 + $0x28] sm:$0xff]
    %v7130 = vld [vmem:[#allocation8 + $0x30] sm:$0xff]
    %v7131 = vld [vmem:[#allocation8 + $0x38] sm:$0xff]
    %v7132 = vld [vmem:[#allocation8 + $0x40] sm:$0xff]
    %v7133 = vld [vmem:[#allocation8 + $0x48] sm:$0xff]
    %v7134 = vld [vmem:[#allocation8 + $0x50] sm:$0xff]
    %v7135 = vld [vmem:[#allocation8 + $0x58] sm:$0xff]
    %v7136 = vld [vmem:[#allocation8 + $0x60] sm:$0xff]
    %v7137 = vld [vmem:[#allocation8 + $0x68] sm:$0xff]
    %v7138 = vld [vmem:[#allocation8 + $0x70] sm:$0xff]
    %v7139 = vld [vmem:[#allocation8 + $0x78] sm:$0xff]
    %v7140 = vld [vmem:[#allocation8 + $0x80] sm:$0xff]
    %v7141 = vld [vmem:[#allocation8 + $0x88] sm:$0xff]
    %v7142 = vld [vmem:[#allocation8 + $0x90] sm:$0xff]
    %v7143 = vld [vmem:[#allocation8 + $0x98] sm:$0xff]
    %v7144 = vld [vmem:[#allocation8 + $0xa0] sm:$0xff]
    %v7145 = vld [vmem:[#allocation8 + $0xa8] sm:$0xff]
    %v7146 = vld [vmem:[#allocation8 + $0xb0] sm:$0xff]
    %v7147 = vld [vmem:[#allocation8 + $0xb8] sm:$0xff]
    %v7148 = vld [vmem:[#allocation8 + $0xc0] sm:$0xff]
    %v7149 = vld [vmem:[#allocation8 + $0xc8] sm:$0xff]
    %v7150 = vld [vmem:[#allocation8 + $0xd0] sm:$0xff]
    %v7151 = vld [vmem:[#allocation8 + $0xd8] sm:$0xff]
    %v7152 = vld [vmem:[#allocation8 + $0xe0] sm:$0xff]
    %v7153 = vld [vmem:[#allocation8 + $0xe8] sm:$0xff]
    %v7154 = vld [vmem:[#allocation8 + $0xf0] sm:$0xff]
    %v7155 = vld [vmem:[#allocation8 + $0xf8] sm:$0xff]
    %v7188 = vunpack.c.l.b16 %v7124
    %v7189 = vunpack.c.h.b16 %v7124
    %v7190 = vunpack.c.l.b16 %v7125
    %v7191 = vunpack.c.h.b16 %v7125
    %v7192 = vunpack.c.l.b16 %v7126
    %v7193 = vunpack.c.h.b16 %v7126
    %v7194 = vunpack.c.l.b16 %v7127
    %v7195 = vunpack.c.h.b16 %v7127
    %v7196 = vunpack.c.l.b16 %v7128
    %v7197 = vunpack.c.h.b16 %v7128
    %v7198 = vunpack.c.l.b16 %v7129
    %v7199 = vunpack.c.h.b16 %v7129
    %v7200 = vunpack.c.l.b16 %v7130
    %v7201 = vunpack.c.h.b16 %v7130
    %v7202 = vunpack.c.l.b16 %v7131
    %v7203 = vunpack.c.h.b16 %v7131
    %v7204 = vunpack.c.l.b16 %v7132
    %v7205 = vunpack.c.h.b16 %v7132
    %v7206 = vunpack.c.l.b16 %v7133
    %v7207 = vunpack.c.h.b16 %v7133
    %v7208 = vunpack.c.l.b16 %v7134
    %v7209 = vunpack.c.h.b16 %v7134
    %v7210 = vunpack.c.l.b16 %v7135
    %v7211 = vunpack.c.h.b16 %v7135
    %v7212 = vunpack.c.l.b16 %v7136
    %v7213 = vunpack.c.h.b16 %v7136
    %v7214 = vunpack.c.l.b16 %v7137
    %v7215 = vunpack.c.h.b16 %v7137
    %v7216 = vunpack.c.l.b16 %v7138
    %v7217 = vunpack.c.h.b16 %v7138
    %v7218 = vunpack.c.l.b16 %v7139
    %v7219 = vunpack.c.h.b16 %v7139
    %v7220 = vunpack.c.l.b16 %v7140
    %v7221 = vunpack.c.h.b16 %v7140
    %v7222 = vunpack.c.l.b16 %v7141
    %v7223 = vunpack.c.h.b16 %v7141
    %v7224 = vunpack.c.l.b16 %v7142
    %v7225 = vunpack.c.h.b16 %v7142
    %v7226 = vunpack.c.l.b16 %v7143
    %v7227 = vunpack.c.h.b16 %v7143
    %v7228 = vunpack.c.l.b16 %v7144
    %v7229 = vunpack.c.h.b16 %v7144
    %v7230 = vunpack.c.l.b16 %v7145
    %v7231 = vunpack.c.h.b16 %v7145
    %v7232 = vunpack.c.l.b16 %v7146
    %v7233 = vunpack.c.h.b16 %v7146
    %v7234 = vunpack.c.l.b16 %v7147
    %v7235 = vunpack.c.h.b16 %v7147
    %v7236 = vunpack.c.l.b16 %v7148
    %v7237 = vunpack.c.h.b16 %v7148
    %v7238 = vunpack.c.l.b16 %v7149
    %v7239 = vunpack.c.h.b16 %v7149
    %v7240 = vunpack.c.l.b16 %v7150
    %v7241 = vunpack.c.h.b16 %v7150
    %v7242 = vunpack.c.l.b16 %v7151
    %v7243 = vunpack.c.h.b16 %v7151
    %v7244 = vunpack.c.l.b16 %v7152
    %v7245 = vunpack.c.h.b16 %v7152
    %v7246 = vunpack.c.l.b16 %v7153
    %v7247 = vunpack.c.h.b16 %v7153
    %v7248 = vunpack.c.l.b16 %v7154
    %v7249 = vunpack.c.h.b16 %v7154
    %v7250 = vunpack.c.l.b16 %v7155
    %v7251 = vunpack.c.h.b16 %v7155
    %v7252 = vpack.c.b16 %v7192, %v7188
    %v7253 = vpack.c.b16 %v7193, %v7189
    %v7254 = vpack.c.b16 %v7194, %v7190
    %v7255 = vpack.c.b16 %v7195, %v7191
    %v7256 = vpack.c.b16 %v7200, %v7196
    %v7257 = vpack.c.b16 %v7201, %v7197
    %v7258 = vpack.c.b16 %v7202, %v7198
    %v7259 = vpack.c.b16 %v7203, %v7199
    %v7260 = vpack.c.b16 %v7208, %v7204
    %v7261 = vpack.c.b16 %v7209, %v7205
    %v7262 = vpack.c.b16 %v7210, %v7206
    %v7263 = vpack.c.b16 %v7211, %v7207
    %v7264 = vpack.c.b16 %v7216, %v7212
    %v7265 = vpack.c.b16 %v7217, %v7213
    %v7266 = vpack.c.b16 %v7218, %v7214
    %v7267 = vpack.c.b16 %v7219, %v7215
    %v7268 = vpack.c.b16 %v7224, %v7220
    %v7269 = vpack.c.b16 %v7225, %v7221
    %v7270 = vpack.c.b16 %v7226, %v7222
    %v7271 = vpack.c.b16 %v7227, %v7223
    %v7272 = vpack.c.b16 %v7232, %v7228
    %v7273 = vpack.c.b16 %v7233, %v7229
    %v7274 = vpack.c.b16 %v7234, %v7230
    %v7275 = vpack.c.b16 %v7235, %v7231
    %v7276 = vpack.c.b16 %v7240, %v7236
    %v7277 = vpack.c.b16 %v7241, %v7237
    %v7278 = vpack.c.b16 %v7242, %v7238
    %v7279 = vpack.c.b16 %v7243, %v7239
    %v7280 = vpack.c.b16 %v7248, %v7244
    %v7281 = vpack.c.b16 %v7249, %v7245
    %v7282 = vpack.c.b16 %v7250, %v7246
    %v7283 = vpack.c.b16 %v7251, %v7247
    %7316 = vmatprep.subr.bf16.mxu0 %v7253
    %7317 = vmatpush1.bf16.msra.mxu0 %v7252
    %7318 = vmatprep.subr.bf16.mxu0 %v7257
    %7319 = vmatpush1.bf16.msra.mxu0 %v7256
    %7320 = vmatprep.subr.bf16.mxu0 %v7261
    %7321 = vmatpush1.bf16.msra.mxu0 %v7260
    %7322 = vmatprep.subr.bf16.mxu0 %v7265
    %7323 = vmatpush1.bf16.msra.mxu0 %v7264
    %7324 = vmatprep.subr.bf16.mxu0 %v7269
    %7325 = vmatpush1.bf16.msra.mxu0 %v7268
    %7326 = vmatprep.subr.bf16.mxu0 %v7273
    %7327 = vmatpush1.bf16.msra.mxu0 %v7272
    %7328 = vmatprep.subr.bf16.mxu0 %v7277
    %7329 = vmatpush1.bf16.msra.mxu0 %v7276
    %7330 = vmatprep.subr.bf16.mxu0 %v7281
    %7331 = vmatpush1.bf16.msra.mxu0 %v7280
    %7332 = vmatprep.subr.bf16.mxu0 0
    %7333 = vmatpush1.bf16.msra.mxu0 0
    %7334 = vmatprep.subr.bf16.mxu0 0
    %7335 = vmatpush1.bf16.msra.mxu0 0
    %7336 = vmatprep.subr.bf16.mxu0 0
    %7337 = vmatpush1.bf16.msra.mxu0 0
    %7338 = vmatprep.subr.bf16.mxu0 0
    %7339 = vmatpush1.bf16.msra.mxu0 0
    %7340 = vmatprep.subr.bf16.mxu0 0
    %7341 = vmatpush1.bf16.msra.mxu0 0
    %7342 = vmatprep.subr.bf16.mxu0 0
    %7343 = vmatpush1.bf16.msra.mxu0 0
    %7344 = vmatprep.subr.bf16.mxu0 0
    %7345 = vmatpush1.bf16.msra.mxu0 0
    %7346 = vmatprep.subr.bf16.mxu0 0
    %7347 = vmatpush1.bf16.msra.mxu0 0
    %7348 = vmatprep.mubr.bf16.mxu0 0
    %7349 = vmatmul.mubr.bf16.gmra.mrb[0].mxu0 %v7123
    %v7350 = vpop.f32.mrb[0].mxu0
    %v7351 = vadd.f32 0.0, %v7350
    %v7352 = vpop.f32.mrb[0].mxu0
    %v7353 = vadd.f32 0.0, %v7352
    %v7354 = vpop.f32.mrb[0].mxu0
    %v7355 = vpop.f32.mrb[0].mxu0
    %7356 = vdwg.mxu0
    %7357 = vmatprep.subr.bf16.mxu0 %v7255
    %7358 = vmatpush1.bf16.msra.mxu0 %v7254
    %7359 = vmatprep.subr.bf16.mxu0 %v7259
    %7360 = vmatpush1.bf16.msra.mxu0 %v7258
    %7361 = vmatprep.subr.bf16.mxu0 %v7263
    %7362 = vmatpush1.bf16.msra.mxu0 %v7262
    %7363 = vmatprep.subr.bf16.mxu0 %v7267
    %7364 = vmatpush1.bf16.msra.mxu0 %v7266
    %7365 = vmatprep.subr.bf16.mxu0 %v7271
    %7366 = vmatpush1.bf16.msra.mxu0 %v7270
    %7367 = vmatprep.subr.bf16.mxu0 %v7275
    %7368 = vmatpush1.bf16.msra.mxu0 %v7274
    %7369 = vmatprep.subr.bf16.mxu0 %v7279
    %7370 = vmatpush1.bf16.msra.mxu0 %v7278
    %7371 = vmatprep.subr.bf16.mxu0 %v7283
    %7372 = vmatpush1.bf16.msra.mxu0 %v7282
    %7373 = vmatprep.subr.bf16.mxu0 0
    %7374 = vmatpush1.bf16.msra.mxu0 0
    %7375 = vmatprep.subr.bf16.mxu0 0
    %7376 = vmatpush1.bf16.msra.mxu0 0
    %7377 = vmatprep.subr.bf16.mxu0 0
    %7378 = vmatpush1.bf16.msra.mxu0 0
    %7379 = vmatprep.subr.bf16.mxu0 0
    %7380 = vmatpush1.bf16.msra.mxu0 0
    %7381 = vmatprep.subr.bf16.mxu0 0
    %7382 = vmatpush1.bf16.msra.mxu0 0
    %7383 = vmatprep.subr.bf16.mxu0 0
    %7384 = vmatpush1.bf16.msra.mxu0 0
    %7385 = vmatprep.subr.bf16.mxu0 0
    %7386 = vmatpush1.bf16.msra.mxu0 0
    %7387 = vmatprep.subr.bf16.mxu0 0
    %7388 = vmatpush1.bf16.msra.mxu0 0
    %7389 = vmatprep.mubr.bf16.mxu0 0
    %7390 = vmatmul.mubr.bf16.gmra.mrb[0].mxu0 %v7123
    %v7391 = vpop.f32.mrb[0].mxu0
    %v7392 = vadd.f32 0.0, %v7391
    %v7393 = vpop.f32.mrb[0].mxu0
    %v7394 = vadd.f32 0.0, %v7393
    %v7395 = vpop.f32.mrb[0].mxu0
    %v7396 = vpop.f32.mrb[0].mxu0
    %7397 = vdwg.mxu0
    %v7398 = vadd.f32 %v7076, %v7351
    %v7399 = vadd.f32 %v7078, %v7353
    %v7400 = vadd.f32 %v7117, %v7392
    %v7401 = vadd.f32 %v7119, %v7394
    %v7402 = vxor.u32 %v7398, 2147483648
    %v7403 = vmul.f32 %v7402, 1.442695
    %v7404 = vpow.pop %v7403
    %v7405 = vadd.f32 %v7404, 1.0
    %v7406 = vrcp.pop %v7405
    %v7407 = vmul.f32 1.0, %v7406
    %v7408 = vxor.u32 %v7399, 2147483648
    %v7409 = vmul.f32 %v7408, 1.442695
    %v7410 = vpow.pop %v7409
    %v7411 = vadd.f32 %v7410, 1.0
    %v7412 = vrcp.pop %v7411
    %v7413 = vmul.f32 1.0, %v7412
    %v7414 = vtanh.pop %v7400
    %v7415 = vxor.u32 %v7401, 2147483648
    %v7416 = vmul.f32 %v7415, 1.442695
    %v7417 = vpow.pop %v7416
    %v7418 = vadd.f32 %v7417, 1.0
    %v7419 = vrcp.pop %v7418
    %v7420 = vmul.f32 1.0, %v7419
    %v7421 = vmul.f32 %v7413, %v6822
    %v7422 = vmul.f32 %v7407, %v7414
    %v7423 = vadd.f32 %v7421, %v7422
    %v7424 = vtanh.pop %v7423
    %v7425 = vmul.f32 %v7420, %v7424
    %7426 = vst [vmem:[#allocation3 + $0x38] sm:$0xff] %v7425
    %7427 = vst [vmem:[%s12] sm:$0xff] %v6225
    %7428 = vst [vmem:[%s13] sm:$0xff] %v6223
    %s7429 = scalar_lea.vmem %s12, 8
    %7430 = vst [vmem:[%s7429] sm:$0xff] %v7425
    %s7431 = scalar_lea.vmem %s13, 8
    %7432 = vst [vmem:[%s7431] sm:$0xff] %v7423
    %v7433 = vld [vmem:[#allocation3] sm:$0xff]
    %v7434 = vld [vmem:[#allocation3 + $0x8] sm:$0xff]
    %v7435 = vld [vmem:[#allocation3 + $0x10] sm:$0xff]
    %v7436 = vld [vmem:[#allocation3 + $0x18] sm:$0xff]
    %v7437 = vld [vmem:[#allocation3 + $0x20] sm:$0xff]
    %v7438 = vld [vmem:[#allocation3 + $0x28] sm:$0xff]
    %v7439 = vld [vmem:[#allocation3 + $0x30] sm:$0xff]
    %v7440 = vld [vmem:[#allocation3 + $0x38] sm:$0xff]
    %v7441 = vpack.c.bf16 %v7434, %v7433
    %v7442 = vpack.c.bf16 %v7436, %v7435
    %v7443 = vpack.c.bf16 %v7438, %v7437
    %v7444 = vpack.c.bf16 %v7440, %v7439
    %v7445 = vld [vmem:[%s7] sm:$0xf]
    %v7446 = vld [vmem:[%s7 + $0x4] sm:$0xf]
    %v7447 = vld [vmem:[%s7 + $0x8] sm:$0xf]
    %v7448 = vld [vmem:[%s7 + $0xc] sm:$0xf]
    %v7449 = vld [vmem:[%s7 + $0x10] sm:$0xf]
    %v7450 = vld [vmem:[%s7 + $0x14] sm:$0xf]
    %v7451 = vld [vmem:[%s7 + $0x18] sm:$0xf]
    %v7452 = vld [vmem:[%s7 + $0x1c] sm:$0xf]
    %v7453 = vld [vmem:[%s7 + $0x20] sm:$0xf]
    %v7454 = vld [vmem:[%s7 + $0x24] sm:$0xf]
    %v7455 = vld [vmem:[%s7 + $0x28] sm:$0xf]
    %v7456 = vld [vmem:[%s7 + $0x2c] sm:$0xf]
    %v7457 = vld [vmem:[%s7 + $0x30] sm:$0xf]
    %v7458 = vld [vmem:[%s7 + $0x34] sm:$0xf]
    %v7459 = vld [vmem:[%s7 + $0x38] sm:$0xf]
    %v7460 = vld [vmem:[%s7 + $0x3c] sm:$0xf]
    %v7461 = vld [vmem:[%s8] sm:$0x1]
    %v7463 = vlaneseq
    %v7464 = vshrl.u32 %v7463, 7
    %v7465 = vsub.s32 0, %v7464
    %v7466 = vrot.slane %v7461, %v7465
    %v7484 = vunpack.c.l.b16 %v7445
    %v7485 = vunpack.c.l.b16 %v7446
    %v7486 = vunpack.c.l.b16 %v7447
    %v7487 = vunpack.c.l.b16 %v7448
    %v7488 = vunpack.c.l.b16 %v7449
    %v7489 = vunpack.c.l.b16 %v7450
    %v7490 = vunpack.c.l.b16 %v7451
    %v7491 = vunpack.c.l.b16 %v7452
    %v7492 = vunpack.c.l.b16 %v7453
    %v7493 = vunpack.c.l.b16 %v7454
    %v7494 = vunpack.c.l.b16 %v7455
    %v7495 = vunpack.c.l.b16 %v7456
    %v7496 = vunpack.c.l.b16 %v7457
    %v7497 = vunpack.c.l.b16 %v7458
    %v7498 = vunpack.c.l.b16 %v7459
    %v7499 = vunpack.c.l.b16 %v7460
    %v7500 = vpack.c.b16 %v7485, %v7484
    %v7501 = vpack.c.b16 %v7487, %v7486
    %v7502 = vpack.c.b16 %v7489, %v7488
    %v7503 = vpack.c.b16 %v7491, %v7490
    %v7504 = vpack.c.b16 %v7493, %v7492
    %v7505 = vpack.c.b16 %v7495, %v7494
    %v7506 = vpack.c.b16 %v7497, %v7496
    %v7507 = vpack.c.b16 %v7499, %v7498
    %7516 = vmatprep.subr.bf16.mxu0 0
    %7517 = vmatpush1.bf16.msra.mxu0 %v7500
    %7518 = vmatprep.subr.bf16.mxu0 0
    %7519 = vmatpush1.bf16.msra.mxu0 %v7501
    %7520 = vmatprep.subr.bf16.mxu0 0
    %7521 = vmatpush1.bf16.msra.mxu0 %v7502
    %7522 = vmatprep.subr.bf16.mxu0 0
    %7523 = vmatpush1.bf16.msra.mxu0 %v7503
    %7524 = vmatprep.subr.bf16.mxu0 0
    %7525 = vmatpush1.bf16.msra.mxu0 %v7504
    %7526 = vmatprep.subr.bf16.mxu0 0
    %7527 = vmatpush1.bf16.msra.mxu0 %v7505
    %7528 = vmatprep.subr.bf16.mxu0 0
    %7529 = vmatpush1.bf16.msra.mxu0 %v7506
    %7530 = vmatprep.subr.bf16.mxu0 0
    %7531 = vmatpush1.bf16.msra.mxu0 %v7507
    %7532 = vmatprep.subr.bf16.mxu0 0
    %7533 = vmatpush1.bf16.msra.mxu0 0
    %7534 = vmatprep.subr.bf16.mxu0 0
    %7535 = vmatpush1.bf16.msra.mxu0 0
    %7536 = vmatprep.subr.bf16.mxu0 0
    %7537 = vmatpush1.bf16.msra.mxu0 0
    %7538 = vmatprep.subr.bf16.mxu0 0
    %7539 = vmatpush1.bf16.msra.mxu0 0
    %7540 = vmatprep.subr.bf16.mxu0 0
    %7541 = vmatpush1.bf16.msra.mxu0 0
    %7542 = vmatprep.subr.bf16.mxu0 0
    %7543 = vmatpush1.bf16.msra.mxu0 0
    %7544 = vmatprep.subr.bf16.mxu0 0
    %7545 = vmatpush1.bf16.msra.mxu0 0
    %7546 = vmatprep.subr.bf16.mxu0 0
    %7547 = vmatpush1.bf16.msra.mxu0 0
    %7548 = vmatprep.mubr.bf16.mxu0 0
    %7549 = vmatmul.mubr.bf16.gmra.mrb[0].mxu0 %v7441
    %v7550 = vpop.f32.mrb[0].mxu0
    %v7551 = vadd.f32 %v7466, %v7550
    %v7552 = vpop.f32.mrb[0].mxu0
    %v7553 = vpop.f32.mrb[0].mxu0
    %v7554 = vadd.f32 %v7466, %v7553
    %v7555 = vpop.f32.mrb[0].mxu0
    %7556 = vmatprep.mubr.bf16.mxu0 0
    %7557 = vmatmul.mubr.bf16.gmra.mrb[0].mxu0 %v7442
    %v7558 = vpop.f32.mrb[0].mxu0
    %v7559 = vadd.f32 %v7466, %v7558
    %v7560 = vpop.f32.mrb[0].mxu0
    %v7561 = vpop.f32.mrb[0].mxu0
    %v7562 = vadd.f32 %v7466, %v7561
    %v7563 = vpop.f32.mrb[0].mxu0
    %7564 = vmatprep.mubr.bf16.mxu0 0
    %7565 = vmatmul.mubr.bf16.gmra.mrb[0].mxu0 %v7443
    %v7566 = vpop.f32.mrb[0].mxu0
    %v7567 = vadd.f32 %v7466, %v7566
    %v7568 = vpop.f32.mrb[0].mxu0
    %v7569 = vpop.f32.mrb[0].mxu0
    %v7570 = vadd.f32 %v7466, %v7569
    %v7571 = vpop.f32.mrb[0].mxu0
    %7572 = vmatprep.mubr.bf16.mxu0 0
    %7573 = vmatmul.mubr.bf16.gmra.mrb[0].mxu0 %v7444
    %v7574 = vpop.f32.mrb[0].mxu0
    %v7575 = vadd.f32 %v7466, %v7574
    %v7576 = vpop.f32.mrb[0].mxu0
    %v7577 = vpop.f32.mrb[0].mxu0
    %v7578 = vadd.f32 %v7466, %v7577
    %v7579 = vpop.f32.mrb[0].mxu0
    %7580 = vdwg.mxu0
    %7581 = vst [vmem:[%s11] sm:$0xff] %v7551
    %7582 = vst [vmem:[%s11 + $0x8] sm:$0xff] %v7554
    %7583 = vst [vmem:[%s11 + $0x10] sm:$0xff] %v7559
    %7584 = vst [vmem:[%s11 + $0x18] sm:$0xff] %v7562
    %7585 = vst [vmem:[%s11 + $0x20] sm:$0xff] %v7567
    %7586 = vst [vmem:[%s11 + $0x28] sm:$0xff] %v7570
    %7587 = vst [vmem:[%s11 + $0x30] sm:$0xff] %v7575
    %7588 = vst [vmem:[%s11 + $0x38] sm:$0xff] %v7578
    // Predicated region
    $region58: #{net_forward.1} parent=1 // pred_check
      _
    $region59: #{net_forward.1} parent=1 // pred_check_branch
      %7590 = sbr.rel (0) target = $region61
    $region60: #{net_forward.1} parent=1 // pred_region
      _
    $region61: #{net_forward.1} parent=1 // pred_fallthru
      _
    // Predicated region
    $region62: #{net_forward.1} parent=1 // pred_check
      _
    $region63: #{net_forward.1} parent=1 // pred_check_branch
      %7592 = sbr.rel (0) target = $region65
    $region64: #{net_forward.1} parent=1 // pred_region
      _
    $region65: #{net_forward.1} parent=1 // pred_fallthru
      _
    // Predicated region
    $region66: #{net_forward.1} parent=1 // pred_check
      _
    $region67: #{net_forward.1} parent=1 // pred_check_branch
      %7594 = sbr.rel (0) target = $region69
    $region68: #{net_forward.1} parent=1 // pred_region
      _
    $region69: #{net_forward.1} parent=1 // pred_fallthru
      _
    // Predicated region
    $region70: #{net_forward.1} parent=1 // pred_check
      _
    $region71: #{net_forward.1} parent=1 // pred_check_branch
      %7596 = sbr.rel (0) target = $region73
    $region72: #{net_forward.1} parent=1 // pred_region
      _
    $region73: #{net_forward.1} parent=1 // pred_fallthru
      _
    // Predicated region
    $region74: #{net_forward.1} parent=1 // pred_check
      _
    $region75: #{net_forward.1} parent=1 // pred_check_branch
      %7598 = sbr.rel (0) target = $region77
    $region76: #{net_forward.1} parent=1 // pred_region
      _
    $region77: #{net_forward.1} parent=1 // pred_fallthru
      _
    // Predicated region
    $region78: #{net_forward.1} parent=1 // pred_check
      _
    $region79: #{net_forward.1} parent=1 // pred_check_branch
      %7600 = sbr.rel (0) target = $region81
    $region80: #{net_forward.1} parent=1 // pred_region
      _
    $region81: #{net_forward.1} parent=1 // pred_fallthru
      _
    %7601 = vsyncpa [#allocation5], 1
    %7602 = vsyncpa [#allocation7], 1

</llo_original>
